<compile_context>
chip_gen: v7x
topology: tpu7x:2x2x1
jax: 0.10.0
libtpu: 0.0.40
codegen_flags: <defaults>
</compile_context>

<pallas_src>
import functools

import numpy as np
import jax
import jax.numpy as jnp
from jax.experimental import pallas as pl
from jax.experimental.pallas import tpu as pltpu

# ---------------------------------------------------------------------------
# Small synthetic sizes (convnext_small would give feature_dim = 768).
# ---------------------------------------------------------------------------
NUM_CLASSES = 5
FEATURE_DIM = 128          # stand-in for backbone.num_features
REDUCTION = 8              # LesionAttentionModule reduction_ratio
SPATIAL_K = 7              # spatial-attention conv kernel size
BN_EPS = 1e-5
H_FEAT, W_FEAT = 8, 8      # spatial size of backbone feature map

PACK_W = 128               # lane-dense packed head-output width
LOGITS_OFF, GRADE_OFF, ORD_OFF, DOM_OFF = 0, 32, 64, 96

# Scoped-VMEM request: raises v5e's 16 MiB default, equals v6e/v7x default.
# Sized for this demo config (weights ~2.3 MiB, bf16 activation tiles); for the
# real C=768 backbone re-derive per-generation (v7x physical VMEM is 64 MiB).
VMEM_LIMIT_BYTES = 32 * 1024 * 1024


# ---------------------------------------------------------------------------
# Elementwise helpers usable inside Mosaic kernels.
# erf via Abramowitz–Stegun 7.1.26 (|err| < 1.5e-7), so _gelu matches
# torch.nn.GELU() (exact, erf-based) default semantics.  Elementwise math is
# kept in f32 (v5e VPU/EUP have no bf16); only MXU operands are cast to bf16.
# ---------------------------------------------------------------------------
def _erf(x):
    a1, a2, a3, a4, a5 = 0.254829592, -0.284496736, 1.421413741, -1.453152027, 1.061405429
    p = 0.3275911
    sgn = jnp.where(x >= 0.0, 1.0, -1.0)
    ax = jnp.abs(x)
    t = 1.0 / (1.0 + p * ax)
    poly = ((((a5 * t + a4) * t + a3) * t + a2) * t + a1) * t
    return sgn * (1.0 - poly * jnp.exp(-ax * ax))


def _gelu(x):
    return 0.5 * x * (1.0 + _erf(x * np.float32(1.0 / np.sqrt(2.0))))


def _round_up(n, m):
    return ((n + m - 1) // m) * m


# ---------------------------------------------------------------------------
# Fused kernel body: LesionAttentionModule + mean(H,W) + all MLP heads.
# Runs once per batch tile (grid axis 0); weights are VMEM-resident.
# ---------------------------------------------------------------------------
def _fused_body(x_ref, w1t_ref, w2t_ref, mcat_ref,
                W1_ref, b1_ref, cw2_ref, cb2_ref, gw2_ref, gb2_ref,
                W3_ref, b3_ref, packed_ref, h_ref, att_ref):
    f32 = jnp.float32
    bf16 = jnp.bfloat16

    x = x_ref[...]                                           # (Bt, S, C) bf16
    Bt = x.shape[0]
    xf = x.astype(f32)

    # ---- channel attention: shared MLP on avg/max pooled vectors, batched ----
    avg_c = jnp.mean(xf, axis=1)                             # (Bt, C)
    max_c = jnp.max(xf, axis=1)                              # (Bt, C)
    pooled = jnp.concatenate([avg_c, max_c], axis=0).astype(bf16)          # (2Bt, C)
    hid = jnp.maximum(
        jnp.dot(pooled, w1t_ref[...], preferred_element_type=f32), 0.0)    # (2Bt, C//r)
    mlp = jnp.dot(hid.astype(bf16), w2t_ref[...], preferred_element_type=f32)  # (2Bt, C)
    channel_att = jax.nn.sigmoid(mlp[:Bt] + mlp[Bt:])        # (Bt, C)

    # Single live (Bt, S, C) f32 product; attended reuses it below.
    x_ch = xf * channel_att[:, None, :]                      # (Bt, S, C)

    # ---- spatial attention: 7x7 "same" conv as ONE lane-dense matmul ----
    avg_sp = jnp.mean(x_ch, axis=2)                          # (Bt, S)
    max_sp = jnp.max(x_ch, axis=2)                           # (Bt, S)
    spc = jnp.concatenate([avg_sp, max_sp], axis=1).astype(bf16)           # (Bt, 2S)
    spatial_att = jax.nn.sigmoid(
        jnp.dot(spc, mcat_ref[...], preferred_element_type=f32))           # (Bt, S)

    attended = x_ch * spatial_att[:, :, None]                # (Bt, S, C)
    h = jnp.mean(attended, axis=1)                           # (Bt, C) == torch.mean(dim=(2,3))

    if att_ref is not None:
        att_ref[...] = attended.astype(att_ref.dtype)        # bf16 writeback (halves DMA)
    if h_ref is not None:
        h_ref[...] = h

    # ---- heads (BN folded, first layers concatenated, outputs packed) ----
    hb = h.astype(bf16)
    z1 = jnp.dot(hb, W1_ref[...], preferred_element_type=f32) + b1_ref[...]  # (Bt, 2048)
    # One GELU over the classifier|grade|ordinal slab, ReLU on the domain slab.
    act1 = _gelu(z1[:, 0:1792])
    c1 = act1[:, 0:1024]
    g1 = act1[:, 1024:1536]
    o1 = act1[:, 1536:1792]
    d1 = jnp.maximum(z1[:, 1792:2048], 0.0)

    c2p = jnp.dot(c1.astype(bf16), cw2_ref[...], preferred_element_type=f32) + cb2_ref[...]
    g2p = jnp.dot(g1.astype(bf16), gw2_ref[...], preferred_element_type=f32) + gb2_ref[...]
    act2 = _gelu(jnp.concatenate([c2p, g2p], axis=1))        # one GELU over (Bt, 768)
    c2 = act2[:, 0:512]
    g2 = act2[:, 512:768]

    # Final layers: one block-diagonal matmul -> packed lane-dense output.
    cat = jnp.concatenate([c2, g2, o1, d1], axis=1).astype(bf16)            # (Bt, 1280)
    packed_ref[...] = (jnp.dot(cat, W3_ref[...], preferred_element_type=f32)
                       + b3_ref[...])                                       # (Bt, 128)


def _kernel_with_attention(x_ref, w1t_ref, w2t_ref, mcat_ref, W1_ref, b1_ref,
                           cw2_ref, cb2_ref, gw2_ref, gb2_ref, W3_ref, b3_ref,
                           packed_ref, h_ref, att_ref):
    _fused_body(x_ref, w1t_ref, w2t_ref, mcat_ref, W1_ref, b1_ref,
                cw2_ref, cb2_ref, gw2_ref, gb2_ref, W3_ref, b3_ref,
                packed_ref, h_ref, att_ref)


def _kernel_no_attention(x_ref, w1t_ref, w2t_ref, mcat_ref, W1_ref, b1_ref,
                         cw2_ref, cb2_ref, gw2_ref, gb2_ref, W3_ref, b3_ref,
                         packed_ref):
    _fused_body(x_ref, w1t_ref, w2t_ref, mcat_ref, W1_ref, b1_ref,
                cw2_ref, cb2_ref, gw2_ref, gb2_ref, W3_ref, b3_ref,
                packed_ref, None, None)


# ---------------------------------------------------------------------------
# pallas_call builder: batch-tile grid, resident weights, cost estimate.
# ---------------------------------------------------------------------------
@functools.lru_cache(maxsize=None)
def _build_call(B_pad, B_tile, S, C, want_attention):
    grid = (B_pad // B_tile,)
    vmem = pltpu.MemorySpace.VMEM
    c_red = C // REDUCTION

    bmap3 = lambda b: (b, 0, 0)     # activation blocks follow the batch tile
    bmap2 = lambda b: (b, 0)
    cmap2 = lambda b: (0, 0)        # weights: constant block -> fetched once, VMEM-resident

    in_specs = [
        pl.BlockSpec((B_tile, S, C), bmap3, memory_space=vmem),   # x (bf16)
        pl.BlockSpec((C, c_red), cmap2, memory_space=vmem),       # attn_w1t
        pl.BlockSpec((c_red, C), cmap2, memory_space=vmem),       # attn_w2t
        pl.BlockSpec((2 * S, S), cmap2, memory_space=vmem),       # conv_mat
        pl.BlockSpec((C, 2048), cmap2, memory_space=vmem),        # W1_cat
        pl.BlockSpec((1, 2048), cmap2, memory_space=vmem),        # b1_cat
        pl.BlockSpec((1024, 512), cmap2, memory_space=vmem),      # cw2t
        pl.BlockSpec((1, 512), cmap2, memory_space=vmem),         # cb2f
        pl.BlockSpec((512, 256), cmap2, memory_space=vmem),       # gw2t
        pl.BlockSpec((1, 256), cmap2, memory_space=vmem),         # gb2f
        pl.BlockSpec((1280, PACK_W), cmap2, memory_space=vmem),   # W3_cat
        pl.BlockSpec((1, PACK_W), cmap2, memory_space=vmem),      # b3_cat
    ]

    packed_spec = pl.BlockSpec((B_tile, PACK_W), bmap2, memory_space=vmem)
    if want_attention:
        out_shape = (jax.ShapeDtypeStruct((B_pad, PACK_W), jnp.float32),
                     jax.ShapeDtypeStruct((B_pad, C), jnp.float32),
                     jax.ShapeDtypeStruct((B_pad, S, C), jnp.bfloat16))
        out_specs = (packed_spec,
                     pl.BlockSpec((B_tile, C), bmap2, memory_space=vmem),
                     pl.BlockSpec((B_tile, S, C), bmap3, memory_space=vmem))
        kernel = _kernel_with_attention
    else:
        out_shape = jax.ShapeDtypeStruct((B_pad, PACK_W), jnp.float32)
        out_specs = packed_spec
        kernel = _kernel_no_attention

    # Advisory cost estimate so XLA schedules this call sensibly vs. the backbone.
    mm_flops = 2 * B_pad * (2 * C * c_red + 2 * c_red * C + 2 * S * S
                            + C * 2048 + 1024 * 512 + 512 * 256 + 1280 * PACK_W)
    elem_flops = 10 * B_pad * S * C
    transcendentals = B_pad * (C + S + 1792 + 768)
    weight_bytes = 2 * (2 * C * c_red + 2 * S * S + C * 2048
                        + 1024 * 512 + 512 * 256 + 1280 * PACK_W) \
                   + 4 * (2048 + 512 + 256 + PACK_W)
    bytes_accessed = (B_pad * S * C * 2 + weight_bytes + B_pad * PACK_W * 4
                      + (B_pad * C * 4 + B_pad * S * C * 2 if want_attention else 0))
    cost = pl.CostEstimate(flops=int(mm_flops + elem_flops),
                           transcendentals=int(transcendentals),
                           bytes_accessed=int(bytes_accessed))

    return pl.pallas_call(
        kernel,
        grid=grid,
        in_specs=in_specs,
        out_specs=out_specs,
        out_shape=out_shape,
        compiler_params=pltpu.CompilerParams(
            dimension_semantics=("parallel",),        # v7x: split batch tiles across 2 TCs
            vmem_limit_bytes=VMEM_LIMIT_BYTES),
        cost_estimate=cost,
    )


# ---------------------------------------------------------------------------
# Host-side parameter construction: conv->matrix reformulation, BN folding,
# head-weight concatenation/packing, bf16 weight storage.
# ---------------------------------------------------------------------------
def conv7x7_same_to_matrix(w_kk, H, W):
    """Exact dense (H*W, H*W) matrix for a single-in-channel 'same' conv."""
    K = w_kk.shape[-1]
    P = (K - 1) // 2
    S = H * W
    M = np.zeros((S, S), np.float32)
    for i in range(H):
        for j in range(W):
            for ki in range(K):
                for kj in range(K):
                    p, q = i + ki - P, j + kj - P
                    if 0 <= p < H and 0 <= q < W:
                        M[i * W + j, p * W + q] = w_kk[ki, kj]
    return M


def init_params(key, feature_dim=FEATURE_DIM, num_classes=NUM_CLASSES, H=H_FEAT, W=W_FEAT):
    keys = iter(jax.random.split(key, 64))

    def nrm(shape, scale=0.05):
        return scale * jax.random.normal(next(keys), shape, jnp.float32)

    def linear(in_dim, out_dim):
        w = nrm((out_dim, in_dim), scale=float(np.sqrt(2.0 / out_dim)))  # kaiming fan_out
        b = nrm((out_dim,), scale=0.01)
        return w, b

    def batchnorm(dim):
        gamma = 1.0 + nrm((dim,), 0.1)
        beta = nrm((dim,), 0.1)
        rmean = nrm((dim,), 0.1)
        rvar = 1.0 + jnp.abs(nrm((dim,), 0.1))
        scale = gamma / jnp.sqrt(rvar + BN_EPS)     # eval-mode BN
        shift = beta - rmean * scale
        return scale, shift

    def fold(w, b, scale, shift):
        # y = (x @ w.T + b) * scale + shift  ==  x @ (w.T * scale) + (b*scale + shift)
        return w.T * scale[None, :], b * scale + shift

    p = {}

    # ---- LesionAttentionModule ----
    c_red = feature_dim // REDUCTION
    w1 = nrm((c_red, feature_dim))                      # Conv2d(C, C//r, 1, bias=False)
    w2 = nrm((feature_dim, c_red))                      # Conv2d(C//r, C, 1, bias=False)
    wsp = np.asarray(nrm((2, SPATIAL_K, SPATIAL_K)))    # Conv2d(2, 1, 7, pad=3, bias=False)
    m_avg = conv7x7_same_to_matrix(wsp[0], H, W)        # (S, S)
    m_max = conv7x7_same_to_matrix(wsp[1], H, W)
    p["attn_w1t"] = jnp.asarray(w1).T.astype(jnp.bfloat16)                  # (C, C//r)
    p["attn_w2t"] = jnp.asarray(w2).T.astype(jnp.bfloat16)                  # (C//r, C)
    # row-vector conv form: [avg | max] @ vstack(M_avg.T, M_max.T)  -> (B, S)
    p["conv_mat"] = jnp.asarray(
        np.concatenate([m_avg.T, m_max.T], axis=0)).astype(jnp.bfloat16)    # (2S, S)

    # ---- raw PyTorch-style head parameters ----
    cw1, cb1 = linear(feature_dim, 1024); cs1, ch1 = batchnorm(1024)
    cw2, cb2 = linear(1024, 512);         cs2, ch2 = batchnorm(512)
    cw3, cb3 = linear(512, num_classes)
    gw1, gb1 = linear(feature_dim, 512);  gs1, gh1 = batchnorm(512)
    gw2, gb2 = linear(512, 256);          gs2, gh2 = batchnorm(256)
    gw3, gb3 = linear(256, num_classes)
    ow1, ob1 = linear(feature_dim, 256)                 # ordinal_encoder (no BN)
    ow2, ob2 = linear(256, num_classes - 1)
    dw1, db1 = linear(feature_dim, 256)                 # domain_classifier (no BN)
    dw2, db2 = linear(256, 5)

    # ---- fold BN into the preceding Linear ----
    cw1t, cb1f = fold(cw1, cb1, cs1, ch1)               # (C, 1024), (1024,)
    gw1t, gb1f = fold(gw1, gb1, gs1, gh1)               # (C, 512),  (512,)
    cw2t, cb2f = fold(cw2, cb2, cs2, ch2)               # (1024, 512), (512,)
    gw2t, gb2f = fold(gw2, gb2, gs2, gh2)               # (512, 256),  (256,)

    # ---- concatenate all first layers: one (C, 2048) matmul ----
    W1_cat = jnp.concatenate([cw1t, gw1t, ow1.T, dw1.T], axis=1)            # (C, 2048)
    b1_cat = jnp.concatenate([cb1f, gb1f, ob1, db1])[None, :]               # (1, 2048)

    # ---- block-diagonal final layer -> packed lane-dense (B, 128) output ----
    W3 = np.zeros((512 + 256 + 256 + 256, PACK_W), np.float32)
    b3 = np.zeros((1, PACK_W), np.float32)
    W3[0:512,     LOGITS_OFF:LOGITS_OFF + num_classes] = np.asarray(cw3).T
    b3[0,         LOGITS_OFF:LOGITS_OFF + num_classes] = np.asarray(cb3)
    W3[512:768,   GRADE_OFF:GRADE_OFF + num_classes] = np.asarray(gw3).T
    b3[0,         GRADE_OFF:GRADE_OFF + num_classes] = np.asarray(gb3)
    W3[768:1024,  ORD_OFF:ORD_OFF + num_classes - 1] = np.asarray(ow2).T
    b3[0,         ORD_OFF:ORD_OFF + num_classes - 1] = np.asarray(ob2)
    W3[1024:1280, DOM_OFF:DOM_OFF + 5] = np.asarray(dw2).T
    b3[0,         DOM_OFF:DOM_OFF + 5] = np.asarray(db2)

    p["W1_cat"] = W1_cat.astype(jnp.bfloat16)
    p["b1_cat"] = b1_cat.astype(jnp.float32)
    p["cw2t"] = cw2t.astype(jnp.bfloat16)
    p["cb2f"] = cb2f[None, :].astype(jnp.float32)
    p["gw2t"] = gw2t.astype(jnp.bfloat16)
    p["gb2f"] = gb2f[None, :].astype(jnp.float32)
    p["W3_cat"] = jnp.asarray(W3).astype(jnp.bfloat16)
    p["b3_cat"] = jnp.asarray(b3)
    return p


# ---------------------------------------------------------------------------
# Forward wrapper (features stand in for backbone.forward_features(x)).
# Preferred production path: backbone emits channels-last bf16 (data_format
# "NHWC") so no host-side transpose / f32 inflation occurs before the kernel.
# ---------------------------------------------------------------------------
def enhanced_dr_classifier_forward(features, params, alpha=0.0, get_attention=False,
                                   data_format="NCHW", batch_tile=None):
    if data_format == "NCHW":
        B, C, H, W = features.shape
        # cast first (halves transpose bytes), single relayout to channels-last
        x = jnp.transpose(features.astype(jnp.bfloat16), (0, 2, 3, 1))
    else:  # "NHWC"
        B, H, W, C = features.shape
        x = features.astype(jnp.bfloat16)
    S = H * W
    x = x.reshape(B, S, C)

    if batch_tile is None:
        batch_tile = max(8, min(64, _round_up(B, 8)))   # sublane-multiple, MXU-friendly M
    B_pad = _round_up(B, batch_tile)
    if B_pad != B:
        x = jnp.pad(x, ((0, B_pad - B), (0, 0), (0, 0)))

    args = (x, params["attn_w1t"], params["attn_w2t"], params["conv_mat"],
            params["W1_cat"], params["b1_cat"], params["cw2t"], params["cb2f"],
            params["gw2t"], params["gb2f"], params["W3_cat"], params["b3_cat"])

    call = _build_call(B_pad, batch_tile, S, C, bool(get_attention))
    if get_attention:
        packed, h, attended = call(*args)
    else:
        packed = call(*args)

    packed = packed[:B]
    logits = packed[:, LOGITS_OFF:LOGITS_OFF + NUM_CLASSES]
    grade_logits = packed[:, GRADE_OFF:GRADE_OFF + NUM_CLASSES]
    ordinal = packed[:, ORD_OFF:ORD_OFF + NUM_CLASSES - 1]
    grade_probs = (grade_logits, ordinal)                   # GradeConsistencyHead returns a tuple
    # GRL forward = identity; alpha is a concrete python float here.
    domain_logits = packed[:, DOM_OFF:DOM_OFF + 5] if alpha > 0 else None

    if get_attention:
        # attended returned NCHW (module layout) but kept bf16 to halve DMA.
        attended_nchw = jnp.transpose(attended[:B].reshape(B, H, W, C), (0, 3, 1, 2))
        return logits, grade_probs, domain_logits, h[:B], attended_nchw
    return logits, grade_probs, domain_logits


if __name__ == "__main__":
    key = jax.random.PRNGKey(0)
    pkey, xkey = jax.random.split(key)
    params = init_params(pkey)

    # Backbone feature-map stand-in: (B, C, H, W) = (2, 128, 8, 8), NCHW.
    x = jax.random.normal(xkey, (2, FEATURE_DIM, H_FEAT, W_FEAT), jnp.float32)

    logits, (grade_logits, ordinal), domain = enhanced_dr_classifier_forward(x, params, alpha=0.0)
    out_att = enhanced_dr_classifier_forward(x, params, alpha=1.0, get_attention=True)

    jax.block_until_ready((logits, grade_logits, ordinal, out_att))

    assert logits.shape == (2, NUM_CLASSES)
    assert grade_logits.shape == (2, NUM_CLASSES)
    assert ordinal.shape == (2, NUM_CLASSES - 1)
    assert domain is None
    assert out_att[2].shape == (2, 5)                            # domain logits when alpha > 0
    assert out_att[3].shape == (2, FEATURE_DIM)                  # h
    assert out_att[4].shape == (2, FEATURE_DIM, H_FEAT, W_FEAT)  # attended features (NCHW)
    print("KERNEL_OK")
</pallas_src>

<mosaic_0001>
module attributes {stable_mosaic.version = 11 : i64} {
  func.func @_kernel_no_attention(%arg0: i32, %arg1: memref<8x64x128xbf16, #tpu.memory_space<vmem>>, %arg2: memref<128x16xbf16, #tpu.memory_space<vmem>>, %arg3: memref<16x128xbf16, #tpu.memory_space<vmem>>, %arg4: memref<128x64xbf16, #tpu.memory_space<vmem>>, %arg5: memref<128x2048xbf16, #tpu.memory_space<vmem>>, %arg6: memref<1x2048xf32, #tpu.memory_space<vmem>>, %arg7: memref<1024x512xbf16, #tpu.memory_space<vmem>>, %arg8: memref<1x512xf32, #tpu.memory_space<vmem>>, %arg9: memref<512x256xbf16, #tpu.memory_space<vmem>>, %arg10: memref<1x256xf32, #tpu.memory_space<vmem>>, %arg11: memref<1280x128xbf16, #tpu.memory_space<vmem>>, %arg12: memref<1x128xf32, #tpu.memory_space<vmem>>, %arg13: memref<8x128xf32, #tpu.memory_space<vmem>>) attributes {dimension_semantics = [#tpu.dimension_semantics<parallel>], iteration_bounds = array<i64: 1>, scalar_prefetch = 0 : i64, scratch_operands = 0 : i64, tpu.core_type = #tpu.core_type<tc>, window_params = [{transform_indices = @transform_0, window_bounds = array<i64: 8, 64, 128>}, {pipeline_mode = #tpu.pipeline_mode<synchronous>, transform_indices = @transform_1, window_bounds = array<i64: 128, 16>}, {pipeline_mode = #tpu.pipeline_mode<synchronous>, transform_indices = @transform_2, window_bounds = array<i64: 16, 128>}, {pipeline_mode = #tpu.pipeline_mode<synchronous>, transform_indices = @transform_3, window_bounds = array<i64: 128, 64>}, {pipeline_mode = #tpu.pipeline_mode<synchronous>, transform_indices = @transform_4, window_bounds = array<i64: 128, 2048>}, {pipeline_mode = #tpu.pipeline_mode<synchronous>, transform_indices = @transform_5, window_bounds = array<i64: 1, 2048>}, {pipeline_mode = #tpu.pipeline_mode<synchronous>, transform_indices = @transform_6, window_bounds = array<i64: 1024, 512>}, {pipeline_mode = #tpu.pipeline_mode<synchronous>, transform_indices = @transform_7, window_bounds = array<i64: 1, 512>}, {pipeline_mode = #tpu.pipeline_mode<synchronous>, transform_indices = @transform_8, window_bounds = array<i64: 512, 256>}, {pipeline_mode = #tpu.pipeline_mode<synchronous>, transform_indices = @transform_9, window_bounds = array<i64: 1, 256>}, {pipeline_mode = #tpu.pipeline_mode<synchronous>, transform_indices = @transform_10, window_bounds = array<i64: 1280, 128>}, {pipeline_mode = #tpu.pipeline_mode<synchronous>, transform_indices = @transform_11, window_bounds = array<i64: 1, 128>}, {transform_indices = @transform_12, window_bounds = array<i64: 8, 128>}]} {
    %c0 = arith.constant 0 : index
    %c0_0 = arith.constant 0 : index
    %c0_1 = arith.constant 0 : index
    %0 = vector.load %arg1[%c0, %c0_0, %c0_1] : memref<8x64x128xbf16, #tpu.memory_space<vmem>>, vector<8x64x128xbf16>
    %1 = arith.extf %0 : vector<8x64x128xbf16> to vector<8x64x128xf32>
    %cst = arith.constant dense<0.000000e+00> : vector<8x128xf32>
    %2 = vector.multi_reduction <add>, %1, %cst [1] : vector<8x64x128xf32> to vector<8x128xf32>
    %cst_2 = arith.constant 6.400000e+01 : f32
    %3 = vector.broadcast %cst_2 : f32 to vector<8x128xf32>
    %4 = arith.divf %2, %3 : vector<8x128xf32>
    %cst_3 = arith.constant dense<0xFF800000> : vector<8x128xf32>
    %5 = vector.multi_reduction <maximumf>, %1, %cst_3 [1] : vector<8x64x128xf32> to vector<8x128xf32>
    %6 = tpu.concatenate %4, %5 in 0 : vector<8x128xf32>, vector<8x128xf32> -> vector<16x128xf32>
    %7 = arith.truncf %6 : vector<16x128xf32> to vector<16x128xbf16>
    %c0_4 = arith.constant 0 : index
    %c0_5 = arith.constant 0 : index
    %8 = vector.load %arg2[%c0_4, %c0_5] : memref<128x16xbf16, #tpu.memory_space<vmem>>, vector<128x16xbf16>
    %cst_6 = arith.constant dense<0.000000e+00> : vector<16x16xf32>
    %9 = tpu.matmul %7, %8, %cst_6 {dimension_numbers = #tpu.dot_dimension_numbers<[1], [0], [0], [1], [0, 0, 1, 1], [], []>} : vector<16x128xbf16>, vector<128x16xbf16>, vector<16x16xf32> -> vector<16x16xf32>
    %cst_7 = arith.constant 0.000000e+00 : f32
    %10 = vector.broadcast %cst_7 : f32 to vector<16x16xf32>
    %11 = arith.maximumf %9, %10 : vector<16x16xf32>
    %12 = arith.truncf %11 : vector<16x16xf32> to vector<16x16xbf16>
    %c0_8 = arith.constant 0 : index
    %c0_9 = arith.constant 0 : index
    %13 = vector.load %arg3[%c0_8, %c0_9] : memref<16x128xbf16, #tpu.memory_space<vmem>>, vector<16x128xbf16>
    %cst_10 = arith.constant dense<0.000000e+00> : vector<16x128xf32>
    %14 = tpu.matmul %12, %13, %cst_10 {dimension_numbers = #tpu.dot_dimension_numbers<[1], [0], [0], [1], [0, 0, 1, 1], [], []>} : vector<16x16xbf16>, vector<16x128xbf16>, vector<16x128xf32> -> vector<16x128xf32>
    %15 = vector.extract_strided_slice %14 {offsets = [0, 0], sizes = [8, 128], strides = [1, 1]} : vector<16x128xf32> to vector<8x128xf32>
    %16 = vector.extract_strided_slice %14 {offsets = [8, 0], sizes = [8, 128], strides = [1, 1]} : vector<16x128xf32> to vector<8x128xf32>
    %17 = arith.addf %15, %16 : vector<8x128xf32>
    %18 = arith.negf %17 : vector<8x128xf32>
    %19 = math.exp %18 : vector<8x128xf32>
    %cst_11 = arith.constant 1.000000e+00 : f32
    %20 = vector.broadcast %cst_11 : f32 to vector<8x128xf32>
    %21 = arith.addf %20, %19 : vector<8x128xf32>
    %22 = arith.divf %20, %21 : vector<8x128xf32>
    %23 = vector.shape_cast %22 : vector<8x128xf32> to vector<8x1x128xf32>
    %24 = vector.broadcast %23 : vector<8x1x128xf32> to vector<8x64x128xf32>
    %25 = arith.mulf %1, %24 : vector<8x64x128xf32>
    %cst_12 = arith.constant dense<0.000000e+00> : vector<8x64xf32>
    %26 = vector.multi_reduction <add>, %25, %cst_12 [2] : vector<8x64x128xf32> to vector<8x64xf32>
    %cst_13 = arith.constant 1.280000e+02 : f32
    %27 = vector.broadcast %cst_13 : f32 to vector<8x64xf32>
    %28 = arith.divf %26, %27 : vector<8x64xf32>
    %cst_14 = arith.constant dense<0xFF800000> : vector<8x64xf32>
    %29 = vector.multi_reduction <maximumf>, %25, %cst_14 [2] : vector<8x64x128xf32> to vector<8x64xf32>
    %30 = tpu.concatenate %28, %29 in 1 : vector<8x64xf32>, vector<8x64xf32> -> vector<8x128xf32>
    %31 = arith.truncf %30 : vector<8x128xf32> to vector<8x128xbf16>
    %c0_15 = arith.constant 0 : index
    %c0_16 = arith.constant 0 : index
    %32 = vector.load %arg4[%c0_15, %c0_16] : memref<128x64xbf16, #tpu.memory_space<vmem>>, vector<128x64xbf16>
    %cst_17 = arith.constant dense<0.000000e+00> : vector<8x64xf32>
    %33 = tpu.matmul %31, %32, %cst_17 {dimension_numbers = #tpu.dot_dimension_numbers<[1], [0], [0], [1], [0, 0, 1, 1], [], []>} : vector<8x128xbf16>, vector<128x64xbf16>, vector<8x64xf32> -> vector<8x64xf32>
    %34 = arith.negf %33 : vector<8x64xf32>
    %35 = math.exp %34 : vector<8x64xf32>
    %cst_18 = arith.constant 1.000000e+00 : f32
    %36 = vector.broadcast %cst_18 : f32 to vector<8x64xf32>
    %37 = arith.addf %36, %35 : vector<8x64xf32>
    %38 = arith.divf %36, %37 : vector<8x64xf32>
    %39 = vector.shape_cast %38 : vector<8x64xf32> to vector<8x64x1xf32>
    %40 = vector.broadcast %39 : vector<8x64x1xf32> to vector<8x64x128xf32>
    %41 = arith.mulf %25, %40 : vector<8x64x128xf32>
    %cst_19 = arith.constant dense<0.000000e+00> : vector<8x128xf32>
    %42 = vector.multi_reduction <add>, %41, %cst_19 [1] : vector<8x64x128xf32> to vector<8x128xf32>
    %cst_20 = arith.constant 6.400000e+01 : f32
    %43 = vector.broadcast %cst_20 : f32 to vector<8x128xf32>
    %44 = arith.divf %42, %43 : vector<8x128xf32>
    %45 = arith.truncf %44 : vector<8x128xf32> to vector<8x128xbf16>
    %c0_21 = arith.constant 0 : index
    %c0_22 = arith.constant 0 : index
    %46 = vector.load %arg5[%c0_21, %c0_22] : memref<128x2048xbf16, #tpu.memory_space<vmem>>, vector<128x2048xbf16>
    %cst_23 = arith.constant dense<0.000000e+00> : vector<8x2048xf32>
    %47 = tpu.matmul %45, %46, %cst_23 {dimension_numbers = #tpu.dot_dimension_numbers<[1], [0], [0], [1], [0, 0, 1, 1], [], []>} : vector<8x128xbf16>, vector<128x2048xbf16>, vector<8x2048xf32> -> vector<8x2048xf32>
    %c0_24 = arith.constant 0 : index
    %c0_25 = arith.constant 0 : index
    %48 = vector.load %arg6[%c0_24, %c0_25] : memref<1x2048xf32, #tpu.memory_space<vmem>>, vector<1x2048xf32>
    %49 = vector.broadcast %48 : vector<1x2048xf32> to vector<8x2048xf32>
    %50 = arith.addf %47, %49 : vector<8x2048xf32>
    %51 = vector.extract_strided_slice %50 {offsets = [0, 0], sizes = [8, 1792], strides = [1, 1]} : vector<8x2048xf32> to vector<8x1792xf32>
    %cst_26 = arith.constant 5.000000e-01 : f32
    %52 = vector.broadcast %cst_26 : f32 to vector<8x1792xf32>
    %53 = arith.mulf %52, %51 : vector<8x1792xf32>
    %cst_27 = arith.constant 0.707106769 : f32
    %54 = vector.broadcast %cst_27 : f32 to vector<8x1792xf32>
    %55 = arith.mulf %51, %54 : vector<8x1792xf32>
    %cst_28 = arith.constant 0.000000e+00 : f32
    %56 = vector.broadcast %cst_28 : f32 to vector<8x1792xf32>
    %57 = arith.cmpf oge, %55, %56 : vector<8x1792xf32>
    %cst_29 = arith.constant 1.000000e+00 : f32
    %cst_30 = arith.constant -1.000000e+00 : f32
    %58 = vector.broadcast %cst_29 : f32 to vector<8x1792xf32>
    %59 = vector.broadcast %cst_30 : f32 to vector<8x1792xf32>
    %60 = arith.select %57, %58, %59 : vector<8x1792xi1>, vector<8x1792xf32>
    %61 = math.absf %55 : vector<8x1792xf32>
    %cst_31 = arith.constant 0.327591091 : f32
    %62 = vector.broadcast %cst_31 : f32 to vector<8x1792xf32>
    %63 = arith.mulf %62, %61 : vector<8x1792xf32>
    %cst_32 = arith.constant 1.000000e+00 : f32
    %64 = vector.broadcast %cst_32 : f32 to vector<8x1792xf32>
    %65 = arith.addf %64, %63 : vector<8x1792xf32>
    %cst_33 = arith.constant 1.000000e+00 : f32
    %66 = vector.broadcast %cst_33 : f32 to vector<8x1792xf32>
    %67 = arith.divf %66, %65 : vector<8x1792xf32>
    %cst_34 = arith.constant 1.06140542 : f32
    %68 = vector.broadcast %cst_34 : f32 to vector<8x1792xf32>
    %69 = arith.mulf %68, %67 : vector<8x1792xf32>
    %cst_35 = arith.constant -1.45315206 : f32
    %70 = vector.broadcast %cst_35 : f32 to vector<8x1792xf32>
    %71 = arith.addf %69, %70 : vector<8x1792xf32>
    %72 = arith.mulf %71, %67 : vector<8x1792xf32>
    %cst_36 = arith.constant 1.42141378 : f32
    %73 = vector.broadcast %cst_36 : f32 to vector<8x1792xf32>
    %74 = arith.addf %72, %73 : vector<8x1792xf32>
    %75 = arith.mulf %74, %67 : vector<8x1792xf32>
    %cst_37 = arith.constant -0.284496725 : f32
    %76 = vector.broadcast %cst_37 : f32 to vector<8x1792xf32>
    %77 = arith.addf %75, %76 : vector<8x1792xf32>
    %78 = arith.mulf %77, %67 : vector<8x1792xf32>
    %cst_38 = arith.constant 0.254829586 : f32
    %79 = vector.broadcast %cst_38 : f32 to vector<8x1792xf32>
    %80 = arith.addf %78, %79 : vector<8x1792xf32>
    %81 = arith.mulf %80, %67 : vector<8x1792xf32>
    %cst_39 = arith.constant 0.000000e+00 : f32
    %82 = vector.broadcast %cst_39 : f32 to vector<8x1792xf32>
    %83 = arith.subf %82, %61 : vector<8x1792xf32>
    %84 = arith.mulf %83, %61 : vector<8x1792xf32>
    %85 = math.exp %84 : vector<8x1792xf32>
    %86 = arith.mulf %81, %85 : vector<8x1792xf32>
    %cst_40 = arith.constant 1.000000e+00 : f32
    %87 = vector.broadcast %cst_40 : f32 to vector<8x1792xf32>
    %88 = arith.subf %87, %86 : vector<8x1792xf32>
    %89 = arith.mulf %60, %88 : vector<8x1792xf32>
    %cst_41 = arith.constant 1.000000e+00 : f32
    %90 = vector.broadcast %cst_41 : f32 to vector<8x1792xf32>
    %91 = arith.addf %90, %89 : vector<8x1792xf32>
    %92 = arith.mulf %53, %91 : vector<8x1792xf32>
    %93 = vector.extract_strided_slice %92 {offsets = [0, 0], sizes = [8, 1024], strides = [1, 1]} : vector<8x1792xf32> to vector<8x1024xf32>
    %94 = vector.extract_strided_slice %92 {offsets = [0, 1024], sizes = [8, 512], strides = [1, 1]} : vector<8x1792xf32> to vector<8x512xf32>
    %95 = vector.extract_strided_slice %92 {offsets = [0, 1536], sizes = [8, 256], strides = [1, 1]} : vector<8x1792xf32> to vector<8x256xf32>
    %96 = vector.extract_strided_slice %50 {offsets = [0, 1792], sizes = [8, 256], strides = [1, 1]} : vector<8x2048xf32> to vector<8x256xf32>
    %cst_42 = arith.constant 0.000000e+00 : f32
    %97 = vector.broadcast %cst_42 : f32 to vector<8x256xf32>
    %98 = arith.maximumf %96, %97 : vector<8x256xf32>
    %99 = arith.truncf %93 : vector<8x1024xf32> to vector<8x1024xbf16>
    %c0_43 = arith.constant 0 : index
    %c0_44 = arith.constant 0 : index
    %100 = vector.load %arg7[%c0_43, %c0_44] : memref<1024x512xbf16, #tpu.memory_space<vmem>>, vector<1024x512xbf16>
    %cst_45 = arith.constant dense<0.000000e+00> : vector<8x512xf32>
    %101 = tpu.matmul %99, %100, %cst_45 {dimension_numbers = #tpu.dot_dimension_numbers<[1], [0], [0], [1], [0, 0, 1, 1], [], []>} : vector<8x1024xbf16>, vector<1024x512xbf16>, vector<8x512xf32> -> vector<8x512xf32>
    %c0_46 = arith.constant 0 : index
    %c0_47 = arith.constant 0 : index
    %102 = vector.load %arg8[%c0_46, %c0_47] : memref<1x512xf32, #tpu.memory_space<vmem>>, vector<1x512xf32>
    %103 = vector.broadcast %102 : vector<1x512xf32> to vector<8x512xf32>
    %104 = arith.addf %101, %103 : vector<8x512xf32>
    %105 = arith.truncf %94 : vector<8x512xf32> to vector<8x512xbf16>
    %c0_48 = arith.constant 0 : index
    %c0_49 = arith.constant 0 : index
    %106 = vector.load %arg9[%c0_48, %c0_49] : memref<512x256xbf16, #tpu.memory_space<vmem>>, vector<512x256xbf16>
    %cst_50 = arith.constant dense<0.000000e+00> : vector<8x256xf32>
    %107 = tpu.matmul %105, %106, %cst_50 {dimension_numbers = #tpu.dot_dimension_numbers<[1], [0], [0], [1], [0, 0, 1, 1], [], []>} : vector<8x512xbf16>, vector<512x256xbf16>, vector<8x256xf32> -> vector<8x256xf32>
    %c0_51 = arith.constant 0 : index
    %c0_52 = arith.constant 0 : index
    %108 = vector.load %arg10[%c0_51, %c0_52] : memref<1x256xf32, #tpu.memory_space<vmem>>, vector<1x256xf32>
    %109 = vector.broadcast %108 : vector<1x256xf32> to vector<8x256xf32>
    %110 = arith.addf %107, %109 : vector<8x256xf32>
    %111 = tpu.concatenate %104, %110 in 1 : vector<8x512xf32>, vector<8x256xf32> -> vector<8x768xf32>
    %cst_53 = arith.constant 5.000000e-01 : f32
    %112 = vector.broadcast %cst_53 : f32 to vector<8x768xf32>
    %113 = arith.mulf %112, %111 : vector<8x768xf32>
    %cst_54 = arith.constant 0.707106769 : f32
    %114 = vector.broadcast %cst_54 : f32 to vector<8x768xf32>
    %115 = arith.mulf %111, %114 : vector<8x768xf32>
    %cst_55 = arith.constant 0.000000e+00 : f32
    %116 = vector.broadcast %cst_55 : f32 to vector<8x768xf32>
    %117 = arith.cmpf oge, %115, %116 : vector<8x768xf32>
    %cst_56 = arith.constant 1.000000e+00 : f32
    %cst_57 = arith.constant -1.000000e+00 : f32
    %118 = vector.broadcast %cst_56 : f32 to vector<8x768xf32>
    %119 = vector.broadcast %cst_57 : f32 to vector<8x768xf32>
    %120 = arith.select %117, %118, %119 : vector<8x768xi1>, vector<8x768xf32>
    %121 = math.absf %115 : vector<8x768xf32>
    %cst_58 = arith.constant 0.327591091 : f32
    %122 = vector.broadcast %cst_58 : f32 to vector<8x768xf32>
    %123 = arith.mulf %122, %121 : vector<8x768xf32>
    %cst_59 = arith.constant 1.000000e+00 : f32
    %124 = vector.broadcast %cst_59 : f32 to vector<8x768xf32>
    %125 = arith.addf %124, %123 : vector<8x768xf32>
    %cst_60 = arith.constant 1.000000e+00 : f32
    %126 = vector.broadcast %cst_60 : f32 to vector<8x768xf32>
    %127 = arith.divf %126, %125 : vector<8x768xf32>
    %cst_61 = arith.constant 1.06140542 : f32
    %128 = vector.broadcast %cst_61 : f32 to vector<8x768xf32>
    %129 = arith.mulf %128, %127 : vector<8x768xf32>
    %cst_62 = arith.constant -1.45315206 : f32
    %130 = vector.broadcast %cst_62 : f32 to vector<8x768xf32>
    %131 = arith.addf %129, %130 : vector<8x768xf32>
    %132 = arith.mulf %131, %127 : vector<8x768xf32>
    %cst_63 = arith.constant 1.42141378 : f32
    %133 = vector.broadcast %cst_63 : f32 to vector<8x768xf32>
    %134 = arith.addf %132, %133 : vector<8x768xf32>
    %135 = arith.mulf %134, %127 : vector<8x768xf32>
    %cst_64 = arith.constant -0.284496725 : f32
    %136 = vector.broadcast %cst_64 : f32 to vector<8x768xf32>
    %137 = arith.addf %135, %136 : vector<8x768xf32>
    %138 = arith.mulf %137, %127 : vector<8x768xf32>
    %cst_65 = arith.constant 0.254829586 : f32
    %139 = vector.broadcast %cst_65 : f32 to vector<8x768xf32>
    %140 = arith.addf %138, %139 : vector<8x768xf32>
    %141 = arith.mulf %140, %127 : vector<8x768xf32>
    %cst_66 = arith.constant 0.000000e+00 : f32
    %142 = vector.broadcast %cst_66 : f32 to vector<8x768xf32>
    %143 = arith.subf %142, %121 : vector<8x768xf32>
    %144 = arith.mulf %143, %121 : vector<8x768xf32>
    %145 = math.exp %144 : vector<8x768xf32>
    %146 = arith.mulf %141, %145 : vector<8x768xf32>
    %cst_67 = arith.constant 1.000000e+00 : f32
    %147 = vector.broadcast %cst_67 : f32 to vector<8x768xf32>
    %148 = arith.subf %147, %146 : vector<8x768xf32>
    %149 = arith.mulf %120, %148 : vector<8x768xf32>
    %cst_68 = arith.constant 1.000000e+00 : f32
    %150 = vector.broadcast %cst_68 : f32 to vector<8x768xf32>
    %151 = arith.addf %150, %149 : vector<8x768xf32>
    %152 = arith.mulf %113, %151 : vector<8x768xf32>
    %153 = vector.extract_strided_slice %152 {offsets = [0, 0], sizes = [8, 512], strides = [1, 1]} : vector<8x768xf32> to vector<8x512xf32>
    %154 = vector.extract_strided_slice %152 {offsets = [0, 512], sizes = [8, 256], strides = [1, 1]} : vector<8x768xf32> to vector<8x256xf32>
    %155 = tpu.concatenate %153, %154, %95, %98 in 1 : vector<8x512xf32>, vector<8x256xf32>, vector<8x256xf32>, vector<8x256xf32> -> vector<8x1280xf32>
    %156 = arith.truncf %155 : vector<8x1280xf32> to vector<8x1280xbf16>
    %c0_69 = arith.constant 0 : index
    %c0_70 = arith.constant 0 : index
    %157 = vector.load %arg11[%c0_69, %c0_70] : memref<1280x128xbf16, #tpu.memory_space<vmem>>, vector<1280x128xbf16>
    %cst_71 = arith.constant dense<0.000000e+00> : vector<8x128xf32>
    %158 = tpu.matmul %156, %157, %cst_71 {dimension_numbers = #tpu.dot_dimension_numbers<[1], [0], [0], [1], [0, 0, 1, 1], [], []>} : vector<8x1280xbf16>, vector<1280x128xbf16>, vector<8x128xf32> -> vector<8x128xf32>
    %c0_72 = arith.constant 0 : index
    %c0_73 = arith.constant 0 : index
    %159 = vector.load %arg12[%c0_72, %c0_73] : memref<1x128xf32, #tpu.memory_space<vmem>>, vector<1x128xf32>
    %160 = vector.broadcast %159 : vector<1x128xf32> to vector<8x128xf32>
    %161 = arith.addf %158, %160 : vector<8x128xf32>
    %c0_74 = arith.constant 0 : index
    %c0_75 = arith.constant 0 : index
    %162 = vector.load %arg13[%c0_74, %c0_75] : memref<8x128xf32, #tpu.memory_space<vmem>>, vector<8x128xf32>
    tpu.vector_store %arg13[%c0_74, %c0_75], %161 {strides = array<i32>} : memref<8x128xf32, #tpu.memory_space<vmem>>, vector<8x128xf32>,
    return
  }
  func.func @transform_0(%arg0: i32) -> (i32, i32, i32) {
    %c0_i32 = arith.constant 0 : i32
    %c0_i32_0 = arith.constant 0 : i32
    %c0_i32_1 = arith.constant 0 : i32
    return %arg0, %c0_i32, %c0_i32_0 : i32, i32, i32
  }
  func.func @transform_1(%arg0: i32) -> (i32, i32) {
    %c0_i32 = arith.constant 0 : i32
    %c0_i32_0 = arith.constant 0 : i32
    %c0_i32_1 = arith.constant 0 : i32
    return %c0_i32, %c0_i32_0 : i32, i32
  }
  func.func @transform_2(%arg0: i32) -> (i32, i32) {
    %c0_i32 = arith.constant 0 : i32
    %c0_i32_0 = arith.constant 0 : i32
    %c0_i32_1 = arith.constant 0 : i32
    return %c0_i32, %c0_i32_0 : i32, i32
  }
  func.func @transform_3(%arg0: i32) -> (i32, i32) {
    %c0_i32 = arith.constant 0 : i32
    %c0_i32_0 = arith.constant 0 : i32
    %c0_i32_1 = arith.constant 0 : i32
    return %c0_i32, %c0_i32_0 : i32, i32
  }
  func.func @transform_4(%arg0: i32) -> (i32, i32) {
    %c0_i32 = arith.constant 0 : i32
    %c0_i32_0 = arith.constant 0 : i32
    %c0_i32_1 = arith.constant 0 : i32
    return %c0_i32, %c0_i32_0 : i32, i32
  }
  func.func @transform_5(%arg0: i32) -> (i32, i32) {
    %c0_i32 = arith.constant 0 : i32
    %c0_i32_0 = arith.constant 0 : i32
    %c0_i32_1 = arith.constant 0 : i32
    return %c0_i32, %c0_i32_0 : i32, i32
  }
  func.func @transform_6(%arg0: i32) -> (i32, i32) {
    %c0_i32 = arith.constant 0 : i32
    %c0_i32_0 = arith.constant 0 : i32
    %c0_i32_1 = arith.constant 0 : i32
    return %c0_i32, %c0_i32_0 : i32, i32
  }
  func.func @transform_7(%arg0: i32) -> (i32, i32) {
    %c0_i32 = arith.constant 0 : i32
    %c0_i32_0 = arith.constant 0 : i32
    %c0_i32_1 = arith.constant 0 : i32
    return %c0_i32, %c0_i32_0 : i32, i32
  }
  func.func @transform_8(%arg0: i32) -> (i32, i32) {
    %c0_i32 = arith.constant 0 : i32
    %c0_i32_0 = arith.constant 0 : i32
    %c0_i32_1 = arith.constant 0 : i32
    return %c0_i32, %c0_i32_0 : i32, i32
  }
  func.func @transform_9(%arg0: i32) -> (i32, i32) {
    %c0_i32 = arith.constant 0 : i32
    %c0_i32_0 = arith.constant 0 : i32
    %c0_i32_1 = arith.constant 0 : i32
    return %c0_i32, %c0_i32_0 : i32, i32
  }
  func.func @transform_10(%arg0: i32) -> (i32, i32) {
    %c0_i32 = arith.constant 0 : i32
    %c0_i32_0 = arith.constant 0 : i32
    %c0_i32_1 = arith.constant 0 : i32
    return %c0_i32, %c0_i32_0 : i32, i32
  }
  func.func @transform_11(%arg0: i32) -> (i32, i32) {
    %c0_i32 = arith.constant 0 : i32
    %c0_i32_0 = arith.constant 0 : i32
    %c0_i32_1 = arith.constant 0 : i32
    return %c0_i32, %c0_i32_0 : i32, i32
  }
  func.func @transform_12(%arg0: i32) -> (i32, i32) {
    %c0_i32 = arith.constant 0 : i32
    %c0_i32_0 = arith.constant 0 : i32
    return %arg0, %c0_i32 : i32, i32
  }
}

</mosaic_0001>

<llo_original>
// kernel: tpu_custom_call.1
$region0: #{tpu_custom_call.1}
  #allocation0 [shape = 'u32[]', space=smem, size = 0x4, offset = 0x4, fixed_abs, tag = 'smem constant byte address 0x4 - core index']
  #allocation1 [shape = 'u32[144,128]{1,0:T(1,128)}', space=vmem, size = 0x12000, scoped, tag = 'internal scratch']
  %s0 = inlined_call_operand.hbm [shape: bf16[8,64,128], index: 0, kind: input, shape index: {}]
  %s1 = inlined_call_operand.vmem [shape: bf16[128,16], index: 1, kind: input, shape index: {}]
  %s2 = inlined_call_operand.vmem [shape: bf16[16,128], index: 2, kind: input, shape index: {}]
  %s3 = inlined_call_operand.vmem [shape: bf16[128,64], index: 3, kind: input, shape index: {}]
  %s4 = inlined_call_operand.hbm [shape: bf16[128,2048], index: 4, kind: input, shape index: {}]
  %s5 = inlined_call_operand.vmem [shape: f32[1,2048], index: 5, kind: input, shape index: {}]
  %s6 = inlined_call_operand.hbm [shape: bf16[1024,512], index: 6, kind: input, shape index: {}]
  %s7 = inlined_call_operand.vmem [shape: f32[1,512], index: 7, kind: input, shape index: {}]
  %s8 = inlined_call_operand.hbm [shape: bf16[512,256], index: 8, kind: input, shape index: {}]
  %s9 = inlined_call_operand.vmem [shape: f32[1,256], index: 9, kind: input, shape index: {}]
  %s10 = inlined_call_operand.hbm [shape: bf16[1280,128], index: 10, kind: input, shape index: {}]
  %s11 = inlined_call_operand.vmem [shape: f32[1,128], index: 11, kind: input, shape index: {}]
  %s12 = inlined_call_operand.hbm [shape: f32[8,128], index: 12, kind: output, shape index: {}]
  %s13 = sld [smem:[#allocation0]]
  $region78: #{tpu_custom_call.1} parent=0
    _
  %s15 = ssub.s32 1, %s13
  %s16 = scalar_select 0, %s15, %s13
  $region1: #{tpu_custom_call.1} parent=0
    #allocation2 [shape = 'u8[131072]{0}', space=vmem, size = 0x20000, scoped, tag = 'input window, operand 0, single buffered']
    #allocation3 [shape = 's32[1]{0}', space=sflag, size = 0x4, scoped, tag = 'scoped memory for tpu_custom_call.1']
    #allocation4 [shape = 's32[1]{0}', space=sflag, size = 0x4, scoped, tag = 'scoped memory for tpu_custom_call.1']
    #allocation5 [shape = 'u8[524288]{0}', space=vmem, size = 0x80000, scoped, tag = 'input window, operand 4, single buffered']
    #allocation6 [shape = 's32[1]{0}', space=sflag, size = 0x4, scoped, tag = 'scoped memory for tpu_custom_call.1']
    #allocation7 [shape = 'u8[1048576]{0}', space=vmem, size = 0x100000, scoped, tag = 'input window, operand 6, single buffered']
    #allocation8 [shape = 'u8[262144]{0}', space=vmem, size = 0x40000, scoped, tag = 'input window, operand 8, single buffered']
    #allocation9 [shape = 's32[1]{0}', space=sflag, size = 0x4, scoped, tag = 'scoped memory for tpu_custom_call.1']
    #allocation10 [shape = 'u8[327680]{0}', space=vmem, size = 0x50000, scoped, tag = 'input window, operand 10, single buffered']
    #allocation11 [shape = 'u8[4096]{0}', space=vmem, size = 0x1000, scoped, tag = 'output window, operand 0, single buffered']
    %17 = vsyncpa [#allocation3], 0
    %18 = vsyncpa [#allocation6], 0
    %19 = vsyncpa [#allocation9], 0
    %20 = vsyncpa [#allocation4], 0
    // Predicated region
    $region2: #{tpu_custom_call.1} parent=1 // pred_check
      _
    $region3: #{tpu_custom_call.1} parent=1 // pred_check_branch
      %22 = sbr.rel (0) target = $region5
    $region4: #{tpu_custom_call.1} parent=1 // pred_region
      %s24 = ssub.s32 4096, 4096
      %25 = vsyncadd [#allocation3], %s24
      %s26 = sshll.u32 [#allocation2], 4
      %s27 = int_to_ptr.vmem [resolvable:$true] %s26
      %32 = dma.hbm_to_vmem [thread:$0]  %s0, 4096, %s27, [#allocation3], 64, 64, 4
    $region5: #{tpu_custom_call.1} parent=1 // pred_fallthru
      _
    // Predicated region
    $region6: #{tpu_custom_call.1} parent=1 // pred_check
      _
    $region7: #{tpu_custom_call.1} parent=1 // pred_check_branch
      %34 = sbr.rel (0) target = $region9
    $region8: #{tpu_custom_call.1} parent=1 // pred_region
      _
    $region9: #{tpu_custom_call.1} parent=1 // pred_fallthru
      _
    // Predicated region
    $region10: #{tpu_custom_call.1} parent=1 // pred_check
      _
    $region11: #{tpu_custom_call.1} parent=1 // pred_check_branch
      %36 = sbr.rel (0) target = $region13
    $region12: #{tpu_custom_call.1} parent=1 // pred_region
      _
    $region13: #{tpu_custom_call.1} parent=1 // pred_fallthru
      _
    // Predicated region
    $region14: #{tpu_custom_call.1} parent=1 // pred_check
      _
    $region15: #{tpu_custom_call.1} parent=1 // pred_check_branch
      %38 = sbr.rel (0) target = $region17
    $region16: #{tpu_custom_call.1} parent=1 // pred_region
      _
    $region17: #{tpu_custom_call.1} parent=1 // pred_fallthru
      _
    // Predicated region
    $region18: #{tpu_custom_call.1} parent=1 // pred_check
      _
    $region19: #{tpu_custom_call.1} parent=1 // pred_check_branch
      %40 = sbr.rel (0) target = $region21
    $region20: #{tpu_custom_call.1} parent=1 // pred_region
      %s42 = ssub.s32 16384, 16384
      %43 = vsyncadd [#allocation6], %s42
      %s44 = sshll.u32 [#allocation5], 4
      %s45 = int_to_ptr.vmem [resolvable:$true] %s44
      %50 = dma.hbm_to_vmem [thread:$0]  %s4, 16384, %s45, [#allocation6], 1024, 1024, 64
    $region21: #{tpu_custom_call.1} parent=1 // pred_fallthru
      _
    // Predicated region
    $region22: #{tpu_custom_call.1} parent=1 // pred_check
      _
    $region23: #{tpu_custom_call.1} parent=1 // pred_check_branch
      %52 = sbr.rel (0) target = $region25
    $region24: #{tpu_custom_call.1} parent=1 // pred_region
      _
    $region25: #{tpu_custom_call.1} parent=1 // pred_fallthru
      _
    // Predicated region
    $region26: #{tpu_custom_call.1} parent=1 // pred_check
      _
    $region27: #{tpu_custom_call.1} parent=1 // pred_check_branch
      %54 = sbr.rel (0) target = $region29
    $region28: #{tpu_custom_call.1} parent=1 // pred_region
      %s56 = ssub.s32 32768, 32768
      %57 = vsyncadd [#allocation6], %s56
      %s58 = sshll.u32 [#allocation7], 4
      %s59 = int_to_ptr.vmem [resolvable:$true] %s58
      %64 = dma.hbm_to_vmem [thread:$0]  %s6, 32768, %s59, [#allocation6], 256, 256, 16
    $region29: #{tpu_custom_call.1} parent=1 // pred_fallthru
      _
    // Predicated region
    $region30: #{tpu_custom_call.1} parent=1 // pred_check
      _
    $region31: #{tpu_custom_call.1} parent=1 // pred_check_branch
      %66 = sbr.rel (0) target = $region33
    $region32: #{tpu_custom_call.1} parent=1 // pred_region
      _
    $region33: #{tpu_custom_call.1} parent=1 // pred_fallthru
      _
    // Predicated region
    $region34: #{tpu_custom_call.1} parent=1 // pred_check
      _
    $region35: #{tpu_custom_call.1} parent=1 // pred_check_branch
      %68 = sbr.rel (0) target = $region37
    $region36: #{tpu_custom_call.1} parent=1 // pred_region
      %s70 = ssub.s32 8192, 8192
      %71 = vsyncadd [#allocation9], %s70
      %s72 = sshll.u32 [#allocation8], 4
      %s73 = int_to_ptr.vmem [resolvable:$true] %s72
      %78 = dma.hbm_to_vmem [thread:$0]  %s8, 8192, %s73, [#allocation9], 128, 128, 8
    $region37: #{tpu_custom_call.1} parent=1 // pred_fallthru
      _
    // Predicated region
    $region38: #{tpu_custom_call.1} parent=1 // pred_check
      _
    $region39: #{tpu_custom_call.1} parent=1 // pred_check_branch
      %80 = sbr.rel (0) target = $region41
    $region40: #{tpu_custom_call.1} parent=1 // pred_region
      _
    $region41: #{tpu_custom_call.1} parent=1 // pred_fallthru
      _
    // Predicated region
    $region42: #{tpu_custom_call.1} parent=1 // pred_check
      _
    $region43: #{tpu_custom_call.1} parent=1 // pred_check_branch
      %82 = sbr.rel (0) target = $region45
    $region44: #{tpu_custom_call.1} parent=1 // pred_region
      %s84 = ssub.s32 10240, 10240
      %85 = vsyncadd [#allocation9], %s84
      %s86 = sshll.u32 [#allocation10], 4
      %s87 = int_to_ptr.vmem [resolvable:$true] %s86
      %92 = dma.hbm_to_vmem [thread:$0]  %s10, 10240, %s87, [#allocation9], 64, 64, 4
    $region45: #{tpu_custom_call.1} parent=1 // pred_fallthru
      _
    // Predicated region
    $region46: #{tpu_custom_call.1} parent=1 // pred_check
      _
    $region47: #{tpu_custom_call.1} parent=1 // pred_check_branch
      %94 = sbr.rel (0) target = $region49
    $region48: #{tpu_custom_call.1} parent=1 // pred_region
      _
    $region49: #{tpu_custom_call.1} parent=1 // pred_fallthru
      _
    // Predicated region
    $region50: #{tpu_custom_call.1} parent=1 // pred_check
      _
    $region51: #{tpu_custom_call.1} parent=1 // pred_check_branch
      %96 = sbr.rel (0) target = $region53
    $region52: #{tpu_custom_call.1} parent=1 // pred_region
      %97 = dma.done [#allocation3], 4096
    $region53: #{tpu_custom_call.1} parent=1 // pred_fallthru
      _
    // Predicated region
    $region54: #{tpu_custom_call.1} parent=1 // pred_check
      _
    $region55: #{tpu_custom_call.1} parent=1 // pred_check_branch
      %99 = sbr.rel (0) target = $region57
    $region56: #{tpu_custom_call.1} parent=1 // pred_region
      %100 = dma.done [#allocation6], 16384
    $region57: #{tpu_custom_call.1} parent=1 // pred_fallthru
      _
    // Predicated region
    $region58: #{tpu_custom_call.1} parent=1 // pred_check
      _
    $region59: #{tpu_custom_call.1} parent=1 // pred_check_branch
      %102 = sbr.rel (0) target = $region61
    $region60: #{tpu_custom_call.1} parent=1 // pred_region
      %103 = dma.done [#allocation6], 32768
    $region61: #{tpu_custom_call.1} parent=1 // pred_fallthru
      _
    // Predicated region
    $region62: #{tpu_custom_call.1} parent=1 // pred_check
      _
    $region63: #{tpu_custom_call.1} parent=1 // pred_check_branch
      %105 = sbr.rel (0) target = $region65
    $region64: #{tpu_custom_call.1} parent=1 // pred_region
      %106 = dma.done [#allocation9], 8192
    $region65: #{tpu_custom_call.1} parent=1 // pred_fallthru
      _
    // Predicated region
    $region66: #{tpu_custom_call.1} parent=1 // pred_check
      _
    $region67: #{tpu_custom_call.1} parent=1 // pred_check_branch
      %108 = sbr.rel (0) target = $region69
    $region68: #{tpu_custom_call.1} parent=1 // pred_region
      %109 = dma.done [#allocation9], 10240
    $region69: #{tpu_custom_call.1} parent=1 // pred_fallthru
      _
    %v111 = vld [vmem:[#allocation2] sm:$0xf]
    %v112 = vld [vmem:[#allocation2 + $0x4] sm:$0xf]
    %v113 = vld [vmem:[#allocation2 + $0x8] sm:$0xf]
    %v114 = vld [vmem:[#allocation2 + $0xc] sm:$0xf]
    %v115 = vld [vmem:[#allocation2 + $0x10] sm:$0xf]
    %v116 = vld [vmem:[#allocation2 + $0x14] sm:$0xf]
    %v117 = vld [vmem:[#allocation2 + $0x18] sm:$0xf]
    %v118 = vld [vmem:[#allocation2 + $0x1c] sm:$0xf]
    %v119 = vld [vmem:[#allocation2 + $0x20] sm:$0xf]
    %v120 = vld [vmem:[#allocation2 + $0x24] sm:$0xf]
    %v121 = vld [vmem:[#allocation2 + $0x28] sm:$0xf]
    %v122 = vld [vmem:[#allocation2 + $0x2c] sm:$0xf]
    %v123 = vld [vmem:[#allocation2 + $0x30] sm:$0xf]
    %v124 = vld [vmem:[#allocation2 + $0x34] sm:$0xf]
    %v125 = vld [vmem:[#allocation2 + $0x38] sm:$0xf]
    %v126 = vld [vmem:[#allocation2 + $0x3c] sm:$0xf]
    %v127 = vld [vmem:[#allocation2 + $0x40] sm:$0xf]
    %v128 = vld [vmem:[#allocation2 + $0x44] sm:$0xf]
    %v129 = vld [vmem:[#allocation2 + $0x48] sm:$0xf]
    %v130 = vld [vmem:[#allocation2 + $0x4c] sm:$0xf]
    %v131 = vld [vmem:[#allocation2 + $0x50] sm:$0xf]
    %v132 = vld [vmem:[#allocation2 + $0x54] sm:$0xf]
    %v133 = vld [vmem:[#allocation2 + $0x58] sm:$0xf]
    %v134 = vld [vmem:[#allocation2 + $0x5c] sm:$0xf]
    %v135 = vld [vmem:[#allocation2 + $0x60] sm:$0xf]
    %v136 = vld [vmem:[#allocation2 + $0x64] sm:$0xf]
    %v137 = vld [vmem:[#allocation2 + $0x68] sm:$0xf]
    %v138 = vld [vmem:[#allocation2 + $0x6c] sm:$0xf]
    %v139 = vld [vmem:[#allocation2 + $0x70] sm:$0xf]
    %v140 = vld [vmem:[#allocation2 + $0x74] sm:$0xf]
    %v141 = vld [vmem:[#allocation2 + $0x78] sm:$0xf]
    %v142 = vld [vmem:[#allocation2 + $0x7c] sm:$0xf]
    %v143 = vld [vmem:[#allocation2 + $0x80] sm:$0xf]
    %v144 = vld [vmem:[#allocation2 + $0x84] sm:$0xf]
    %v145 = vld [vmem:[#allocation2 + $0x88] sm:$0xf]
    %v146 = vld [vmem:[#allocation2 + $0x8c] sm:$0xf]
    %v147 = vld [vmem:[#allocation2 + $0x90] sm:$0xf]
    %v148 = vld [vmem:[#allocation2 + $0x94] sm:$0xf]
    %v149 = vld [vmem:[#allocation2 + $0x98] sm:$0xf]
    %v150 = vld [vmem:[#allocation2 + $0x9c] sm:$0xf]
    %v151 = vld [vmem:[#allocation2 + $0xa0] sm:$0xf]
    %v152 = vld [vmem:[#allocation2 + $0xa4] sm:$0xf]
    %v153 = vld [vmem:[#allocation2 + $0xa8] sm:$0xf]
    %v154 = vld [vmem:[#allocation2 + $0xac] sm:$0xf]
    %v155 = vld [vmem:[#allocation2 + $0xb0] sm:$0xf]
    %v156 = vld [vmem:[#allocation2 + $0xb4] sm:$0xf]
    %v157 = vld [vmem:[#allocation2 + $0xb8] sm:$0xf]
    %v158 = vld [vmem:[#allocation2 + $0xbc] sm:$0xf]
    %v159 = vld [vmem:[#allocation2 + $0xc0] sm:$0xf]
    %v160 = vld [vmem:[#allocation2 + $0xc4] sm:$0xf]
    %v161 = vld [vmem:[#allocation2 + $0xc8] sm:$0xf]
    %v162 = vld [vmem:[#allocation2 + $0xcc] sm:$0xf]
    %v163 = vld [vmem:[#allocation2 + $0xd0] sm:$0xf]
    %v164 = vld [vmem:[#allocation2 + $0xd4] sm:$0xf]
    %v165 = vld [vmem:[#allocation2 + $0xd8] sm:$0xf]
    %v166 = vld [vmem:[#allocation2 + $0xdc] sm:$0xf]
    %v167 = vld [vmem:[#allocation2 + $0xe0] sm:$0xf]
    %v168 = vld [vmem:[#allocation2 + $0xe4] sm:$0xf]
    %v169 = vld [vmem:[#allocation2 + $0xe8] sm:$0xf]
    %v170 = vld [vmem:[#allocation2 + $0xec] sm:$0xf]
    %v171 = vld [vmem:[#allocation2 + $0xf0] sm:$0xf]
    %v172 = vld [vmem:[#allocation2 + $0xf4] sm:$0xf]
    %v173 = vld [vmem:[#allocation2 + $0xf8] sm:$0xf]
    %v174 = vld [vmem:[#allocation2 + $0xfc] sm:$0xf]
    %v175 = vunpack.c.l.bf16 %v111
    %v176 = vunpack.c.l.bf16 %v112
    %v177 = vunpack.c.l.bf16 %v113
    %v178 = vunpack.c.l.bf16 %v114
    %v179 = vunpack.c.l.bf16 %v115
    %v180 = vunpack.c.l.bf16 %v116
    %v181 = vunpack.c.l.bf16 %v117
    %v182 = vunpack.c.l.bf16 %v118
    %v183 = vunpack.c.l.bf16 %v119
    %v184 = vunpack.c.l.bf16 %v120
    %v185 = vunpack.c.l.bf16 %v121
    %v186 = vunpack.c.l.bf16 %v122
    %v187 = vunpack.c.l.bf16 %v123
    %v188 = vunpack.c.l.bf16 %v124
    %v189 = vunpack.c.l.bf16 %v125
    %v190 = vunpack.c.l.bf16 %v126
    %v191 = vunpack.c.l.bf16 %v127
    %v192 = vunpack.c.l.bf16 %v128
    %v193 = vunpack.c.l.bf16 %v129
    %v194 = vunpack.c.l.bf16 %v130
    %v195 = vunpack.c.l.bf16 %v131
    %v196 = vunpack.c.l.bf16 %v132
    %v197 = vunpack.c.l.bf16 %v133
    %v198 = vunpack.c.l.bf16 %v134
    %v199 = vunpack.c.l.bf16 %v135
    %v200 = vunpack.c.l.bf16 %v136
    %v201 = vunpack.c.l.bf16 %v137
    %v202 = vunpack.c.l.bf16 %v138
    %v203 = vunpack.c.l.bf16 %v139
    %v204 = vunpack.c.l.bf16 %v140
    %v205 = vunpack.c.l.bf16 %v141
    %v206 = vunpack.c.l.bf16 %v142
    %v207 = vunpack.c.l.bf16 %v143
    %v208 = vunpack.c.l.bf16 %v144
    %v209 = vunpack.c.l.bf16 %v145
    %v210 = vunpack.c.l.bf16 %v146
    %v211 = vunpack.c.l.bf16 %v147
    %v212 = vunpack.c.l.bf16 %v148
    %v213 = vunpack.c.l.bf16 %v149
    %v214 = vunpack.c.l.bf16 %v150
    %v215 = vunpack.c.l.bf16 %v151
    %v216 = vunpack.c.l.bf16 %v152
    %v217 = vunpack.c.l.bf16 %v153
    %v218 = vunpack.c.l.bf16 %v154
    %v219 = vunpack.c.l.bf16 %v155
    %v220 = vunpack.c.l.bf16 %v156
    %v221 = vunpack.c.l.bf16 %v157
    %v222 = vunpack.c.l.bf16 %v158
    %v223 = vunpack.c.l.bf16 %v159
    %v224 = vunpack.c.l.bf16 %v160
    %v225 = vunpack.c.l.bf16 %v161
    %v226 = vunpack.c.l.bf16 %v162
    %v227 = vunpack.c.l.bf16 %v163
    %v228 = vunpack.c.l.bf16 %v164
    %v229 = vunpack.c.l.bf16 %v165
    %v230 = vunpack.c.l.bf16 %v166
    %v231 = vunpack.c.l.bf16 %v167
    %v232 = vunpack.c.l.bf16 %v168
    %v233 = vunpack.c.l.bf16 %v169
    %v234 = vunpack.c.l.bf16 %v170
    %v235 = vunpack.c.l.bf16 %v171
    %v236 = vunpack.c.l.bf16 %v172
    %v237 = vunpack.c.l.bf16 %v173
    %v238 = vunpack.c.l.bf16 %v174
    %v239 = vadd.f32 %v175, %v176
    %v240 = vadd.f32 %v239, %v177
    %v241 = vadd.f32 %v240, %v178
    %v242 = vadd.f32 %v241, %v179
    %v243 = vadd.f32 %v242, %v180
    %v244 = vadd.f32 %v243, %v181
    %v245 = vadd.f32 %v244, %v182
    %v246 = vrot.slane %v245, 4
    %v247 = vadd.f32 %v245, %v246
    %v248 = vrot.slane %v247, 2
    %v249 = vadd.f32 %v247, %v248
    %v250 = vrot.slane %v249, 1
    %v251 = vadd.f32 %v249, %v250
    %v252 = vadd.f32 %v183, %v184
    %v253 = vadd.f32 %v252, %v185
    %v254 = vadd.f32 %v253, %v186
    %v255 = vadd.f32 %v254, %v187
    %v256 = vadd.f32 %v255, %v188
    %v257 = vadd.f32 %v256, %v189
    %v258 = vadd.f32 %v257, %v190
    %v259 = vrot.slane %v258, 4
    %v260 = vadd.f32 %v258, %v259
    %v261 = vrot.slane %v260, 2
    %v262 = vadd.f32 %v260, %v261
    %v263 = vrot.slane %v262, 1
    %v264 = vadd.f32 %v262, %v263
    %v265 = vadd.f32 %v191, %v192
    %v266 = vadd.f32 %v265, %v193
    %v267 = vadd.f32 %v266, %v194
    %v268 = vadd.f32 %v267, %v195
    %v269 = vadd.f32 %v268, %v196
    %v270 = vadd.f32 %v269, %v197
    %v271 = vadd.f32 %v270, %v198
    %v272 = vrot.slane %v271, 4
    %v273 = vadd.f32 %v271, %v272
    %v274 = vrot.slane %v273, 2
    %v275 = vadd.f32 %v273, %v274
    %v276 = vrot.slane %v275, 1
    %v277 = vadd.f32 %v275, %v276
    %v278 = vadd.f32 %v199, %v200
    %v279 = vadd.f32 %v278, %v201
    %v280 = vadd.f32 %v279, %v202
    %v281 = vadd.f32 %v280, %v203
    %v282 = vadd.f32 %v281, %v204
    %v283 = vadd.f32 %v282, %v205
    %v284 = vadd.f32 %v283, %v206
    %v285 = vrot.slane %v284, 4
    %v286 = vadd.f32 %v284, %v285
    %v287 = vrot.slane %v286, 2
    %v288 = vadd.f32 %v286, %v287
    %v289 = vrot.slane %v288, 1
    %v290 = vadd.f32 %v288, %v289
    %v291 = vadd.f32 %v207, %v208
    %v292 = vadd.f32 %v291, %v209
    %v293 = vadd.f32 %v292, %v210
    %v294 = vadd.f32 %v293, %v211
    %v295 = vadd.f32 %v294, %v212
    %v296 = vadd.f32 %v295, %v213
    %v297 = vadd.f32 %v296, %v214
    %v298 = vrot.slane %v297, 4
    %v299 = vadd.f32 %v297, %v298
    %v300 = vrot.slane %v299, 2
    %v301 = vadd.f32 %v299, %v300
    %v302 = vrot.slane %v301, 1
    %v303 = vadd.f32 %v301, %v302
    %v304 = vadd.f32 %v215, %v216
    %v305 = vadd.f32 %v304, %v217
    %v306 = vadd.f32 %v305, %v218
    %v307 = vadd.f32 %v306, %v219
    %v308 = vadd.f32 %v307, %v220
    %v309 = vadd.f32 %v308, %v221
    %v310 = vadd.f32 %v309, %v222
    %v311 = vrot.slane %v310, 4
    %v312 = vadd.f32 %v310, %v311
    %v313 = vrot.slane %v312, 2
    %v314 = vadd.f32 %v312, %v313
    %v315 = vrot.slane %v314, 1
    %v316 = vadd.f32 %v314, %v315
    %v317 = vadd.f32 %v223, %v224
    %v318 = vadd.f32 %v317, %v225
    %v319 = vadd.f32 %v318, %v226
    %v320 = vadd.f32 %v319, %v227
    %v321 = vadd.f32 %v320, %v228
    %v322 = vadd.f32 %v321, %v229
    %v323 = vadd.f32 %v322, %v230
    %v324 = vrot.slane %v323, 4
    %v325 = vadd.f32 %v323, %v324
    %v326 = vrot.slane %v325, 2
    %v327 = vadd.f32 %v325, %v326
    %v328 = vrot.slane %v327, 1
    %v329 = vadd.f32 %v327, %v328
    %v330 = vadd.f32 %v231, %v232
    %v331 = vadd.f32 %v330, %v233
    %v332 = vadd.f32 %v331, %v234
    %v333 = vadd.f32 %v332, %v235
    %v334 = vadd.f32 %v333, %v236
    %v335 = vadd.f32 %v334, %v237
    %v336 = vadd.f32 %v335, %v238
    %v337 = vrot.slane %v336, 4
    %v338 = vadd.f32 %v336, %v337
    %v339 = vrot.slane %v338, 2
    %v340 = vadd.f32 %v338, %v339
    %v341 = vrot.slane %v340, 1
    %v342 = vadd.f32 %v340, %v341
    %v343 = vrcp.pop 64.0
    %v344 = vmul.f32 %v251, %v343
    %v345 = vmul.f32 %v264, %v343
    %v346 = vmul.f32 %v277, %v343
    %v347 = vmul.f32 %v290, %v343
    %v348 = vmul.f32 %v303, %v343
    %v349 = vmul.f32 %v316, %v343
    %v350 = vmul.f32 %v329, %v343
    %v351 = vmul.f32 %v342, %v343
    %v352 = vmax.f32 %v175, %v176
    %v353 = vmax.f32 %v352, %v177
    %v354 = vmax.f32 %v353, %v178
    %v355 = vmax.f32 %v354, %v179
    %v356 = vmax.f32 %v355, %v180
    %v357 = vmax.f32 %v356, %v181
    %v358 = vmax.f32 %v357, %v182
    %v359 = vrot.slane %v358, 4
    %v360 = vmax.f32 %v358, %v359
    %v361 = vrot.slane %v360, 2
    %v362 = vmax.f32 %v360, %v361
    %v363 = vrot.slane %v362, 1
    %v364 = vmax.f32 %v362, %v363
    %v365 = vmax.f32 %v183, %v184
    %v366 = vmax.f32 %v365, %v185
    %v367 = vmax.f32 %v366, %v186
    %v368 = vmax.f32 %v367, %v187
    %v369 = vmax.f32 %v368, %v188
    %v370 = vmax.f32 %v369, %v189
    %v371 = vmax.f32 %v370, %v190
    %v372 = vrot.slane %v371, 4
    %v373 = vmax.f32 %v371, %v372
    %v374 = vrot.slane %v373, 2
    %v375 = vmax.f32 %v373, %v374
    %v376 = vrot.slane %v375, 1
    %v377 = vmax.f32 %v375, %v376
    %v378 = vmax.f32 %v191, %v192
    %v379 = vmax.f32 %v378, %v193
    %v380 = vmax.f32 %v379, %v194
    %v381 = vmax.f32 %v380, %v195
    %v382 = vmax.f32 %v381, %v196
    %v383 = vmax.f32 %v382, %v197
    %v384 = vmax.f32 %v383, %v198
    %v385 = vrot.slane %v384, 4
    %v386 = vmax.f32 %v384, %v385
    %v387 = vrot.slane %v386, 2
    %v388 = vmax.f32 %v386, %v387
    %v389 = vrot.slane %v388, 1
    %v390 = vmax.f32 %v388, %v389
    %v391 = vmax.f32 %v199, %v200
    %v392 = vmax.f32 %v391, %v201
    %v393 = vmax.f32 %v392, %v202
    %v394 = vmax.f32 %v393, %v203
    %v395 = vmax.f32 %v394, %v204
    %v396 = vmax.f32 %v395, %v205
    %v397 = vmax.f32 %v396, %v206
    %v398 = vrot.slane %v397, 4
    %v399 = vmax.f32 %v397, %v398
    %v400 = vrot.slane %v399, 2
    %v401 = vmax.f32 %v399, %v400
    %v402 = vrot.slane %v401, 1
    %v403 = vmax.f32 %v401, %v402
    %v404 = vmax.f32 %v207, %v208
    %v405 = vmax.f32 %v404, %v209
    %v406 = vmax.f32 %v405, %v210
    %v407 = vmax.f32 %v406, %v211
    %v408 = vmax.f32 %v407, %v212
    %v409 = vmax.f32 %v408, %v213
    %v410 = vmax.f32 %v409, %v214
    %v411 = vrot.slane %v410, 4
    %v412 = vmax.f32 %v410, %v411
    %v413 = vrot.slane %v412, 2
    %v414 = vmax.f32 %v412, %v413
    %v415 = vrot.slane %v414, 1
    %v416 = vmax.f32 %v414, %v415
    %v417 = vmax.f32 %v215, %v216
    %v418 = vmax.f32 %v417, %v217
    %v419 = vmax.f32 %v418, %v218
    %v420 = vmax.f32 %v419, %v219
    %v421 = vmax.f32 %v420, %v220
    %v422 = vmax.f32 %v421, %v221
    %v423 = vmax.f32 %v422, %v222
    %v424 = vrot.slane %v423, 4
    %v425 = vmax.f32 %v423, %v424
    %v426 = vrot.slane %v425, 2
    %v427 = vmax.f32 %v425, %v426
    %v428 = vrot.slane %v427, 1
    %v429 = vmax.f32 %v427, %v428
    %v430 = vmax.f32 %v223, %v224
    %v431 = vmax.f32 %v430, %v225
    %v432 = vmax.f32 %v431, %v226
    %v433 = vmax.f32 %v432, %v227
    %v434 = vmax.f32 %v433, %v228
    %v435 = vmax.f32 %v434, %v229
    %v436 = vmax.f32 %v435, %v230
    %v437 = vrot.slane %v436, 4
    %v438 = vmax.f32 %v436, %v437
    %v439 = vrot.slane %v438, 2
    %v440 = vmax.f32 %v438, %v439
    %v441 = vrot.slane %v440, 1
    %v442 = vmax.f32 %v440, %v441
    %v443 = vmax.f32 %v231, %v232
    %v444 = vmax.f32 %v443, %v233
    %v445 = vmax.f32 %v444, %v234
    %v446 = vmax.f32 %v445, %v235
    %v447 = vmax.f32 %v446, %v236
    %v448 = vmax.f32 %v447, %v237
    %v449 = vmax.f32 %v448, %v238
    %v450 = vrot.slane %v449, 4
    %v451 = vmax.f32 %v449, %v450
    %v452 = vrot.slane %v451, 2
    %v453 = vmax.f32 %v451, %v452
    %v454 = vrot.slane %v453, 1
    %v455 = vmax.f32 %v453, %v454
    %vm464 = vcmask 1041409
    %v465 = vsel %vm464, %v345, %v344
    %vm466 = vcmask 1042434
    %v467 = vsel %vm466, %v346, %v465
    %vm468 = vcmask 1043459
    %v469 = vsel %vm468, %v347, %v467
    %vm470 = vcmask 1044484
    %v471 = vsel %vm470, %v348, %v469
    %vm472 = vcmask 1045509
    %v473 = vsel %vm472, %v349, %v471
    %vm474 = vcmask 1046534
    %v475 = vsel %vm474, %v350, %v473
    %vm476 = vcmask 1047559
    %v477 = vsel %vm476, %v351, %v475
    %v487 = vsel %vm464, %v377, %v364
    %v488 = vsel %vm466, %v390, %v487
    %v489 = vsel %vm468, %v403, %v488
    %v490 = vsel %vm470, %v416, %v489
    %v491 = vsel %vm472, %v429, %v490
    %v492 = vsel %vm474, %v442, %v491
    %v493 = vsel %vm476, %v455, %v492
    %v495 = vpack.c.bf16 %v493, %v477
    %v496 = vld [vmem:[%s1] sm:$0xf]
    %v497 = vld [vmem:[%s1 + $0x4] sm:$0xf]
    %v498 = vld [vmem:[%s1 + $0x8] sm:$0xf]
    %v499 = vld [vmem:[%s1 + $0xc] sm:$0xf]
    %v500 = vld [vmem:[%s1 + $0x10] sm:$0xf]
    %v501 = vld [vmem:[%s1 + $0x14] sm:$0xf]
    %v502 = vld [vmem:[%s1 + $0x18] sm:$0xf]
    %v503 = vld [vmem:[%s1 + $0x1c] sm:$0xf]
    %v504 = vld [vmem:[%s1 + $0x20] sm:$0xf]
    %v505 = vld [vmem:[%s1 + $0x24] sm:$0xf]
    %v506 = vld [vmem:[%s1 + $0x28] sm:$0xf]
    %v507 = vld [vmem:[%s1 + $0x2c] sm:$0xf]
    %v508 = vld [vmem:[%s1 + $0x30] sm:$0xf]
    %v509 = vld [vmem:[%s1 + $0x34] sm:$0xf]
    %v510 = vld [vmem:[%s1 + $0x38] sm:$0xf]
    %v511 = vld [vmem:[%s1 + $0x3c] sm:$0xf]
    %v528 = vunpack.c.l.b16 %v496
    %v529 = vunpack.c.l.b16 %v497
    %v530 = vunpack.c.l.b16 %v498
    %v531 = vunpack.c.l.b16 %v499
    %v532 = vunpack.c.l.b16 %v500
    %v533 = vunpack.c.l.b16 %v501
    %v534 = vunpack.c.l.b16 %v502
    %v535 = vunpack.c.l.b16 %v503
    %v536 = vunpack.c.l.b16 %v504
    %v537 = vunpack.c.l.b16 %v505
    %v538 = vunpack.c.l.b16 %v506
    %v539 = vunpack.c.l.b16 %v507
    %v540 = vunpack.c.l.b16 %v508
    %v541 = vunpack.c.l.b16 %v509
    %v542 = vunpack.c.l.b16 %v510
    %v543 = vunpack.c.l.b16 %v511
    %v544 = vpack.c.b16 %v529, %v528
    %v545 = vpack.c.b16 %v531, %v530
    %v546 = vpack.c.b16 %v533, %v532
    %v547 = vpack.c.b16 %v535, %v534
    %v548 = vpack.c.b16 %v537, %v536
    %v549 = vpack.c.b16 %v539, %v538
    %v550 = vpack.c.b16 %v541, %v540
    %v551 = vpack.c.b16 %v543, %v542
    %560 = vmatprep.subr.bf16.mxu0 0
    %561 = vmatpush1.bf16.msra.mxu0 %v544
    %562 = vmatprep.subr.bf16.mxu0 0
    %563 = vmatpush1.bf16.msra.mxu0 %v545
    %564 = vmatprep.subr.bf16.mxu0 0
    %565 = vmatpush1.bf16.msra.mxu0 %v546
    %566 = vmatprep.subr.bf16.mxu0 0
    %567 = vmatpush1.bf16.msra.mxu0 %v547
    %568 = vmatprep.subr.bf16.mxu0 0
    %569 = vmatpush1.bf16.msra.mxu0 %v548
    %570 = vmatprep.subr.bf16.mxu0 0
    %571 = vmatpush1.bf16.msra.mxu0 %v549
    %572 = vmatprep.subr.bf16.mxu0 0
    %573 = vmatpush1.bf16.msra.mxu0 %v550
    %574 = vmatprep.subr.bf16.mxu0 0
    %575 = vmatpush1.bf16.msra.mxu0 %v551
    %576 = vmatprep.subr.bf16.mxu0 0
    %577 = vmatpush1.bf16.msra.mxu0 0
    %578 = vmatprep.subr.bf16.mxu0 0
    %579 = vmatpush1.bf16.msra.mxu0 0
    %580 = vmatprep.subr.bf16.mxu0 0
    %581 = vmatpush1.bf16.msra.mxu0 0
    %582 = vmatprep.subr.bf16.mxu0 0
    %583 = vmatpush1.bf16.msra.mxu0 0
    %584 = vmatprep.subr.bf16.mxu0 0
    %585 = vmatpush1.bf16.msra.mxu0 0
    %586 = vmatprep.subr.bf16.mxu0 0
    %587 = vmatpush1.bf16.msra.mxu0 0
    %588 = vmatprep.subr.bf16.mxu0 0
    %589 = vmatpush1.bf16.msra.mxu0 0
    %590 = vmatprep.subr.bf16.mxu0 0
    %591 = vmatpush1.bf16.msra.mxu0 0
    %592 = vmatprep.mubr.bf16.mxu0 0
    %593 = vmatmul.mubr.bf16.gmra.mrb[0].mxu0 %v495
    %v594 = vpop.f32.mrb[0].mxu0
    %v595 = vadd.f32 0.0, %v594
    %v596 = vpop.f32.mrb[0].mxu0
    %v597 = vpop.f32.mrb[0].mxu0
    %v598 = vadd.f32 0.0, %v597
    %v599 = vpop.f32.mrb[0].mxu0
    %600 = vdwg.mxu0
    %v601 = vmax.f32 %v595, 0.0
    %v602 = vmax.f32 %v598, 0.0
    %v603 = vpack.c.bf16 %v602, %v601
    %v604 = vld [vmem:[%s2] sm:$0xf]
    %v605 = vld [vmem:[%s2 + $0x4] sm:$0xf]
    %v608 = vunpack.c.l.b16 %v604
    %v609 = vunpack.c.l.b16 %v605
    %v610 = vpack.c.b16 %v609, %v608
    %vm612 = vcmask 130048
    %v614 = vsel %vm612, %v603, 0
    %616 = vmatprep.subr.bf16.mxu0 0
    %617 = vmatpush1.bf16.msra.mxu0 %v610
    %618 = vmatprep.subr.bf16.mxu0 0
    %619 = vmatpush1.bf16.msra.mxu0 0
    %620 = vmatprep.subr.bf16.mxu0 0
    %621 = vmatpush1.bf16.msra.mxu0 0
    %622 = vmatprep.subr.bf16.mxu0 0
    %623 = vmatpush1.bf16.msra.mxu0 0
    %624 = vmatprep.subr.bf16.mxu0 0
    %625 = vmatpush1.bf16.msra.mxu0 0
    %626 = vmatprep.subr.bf16.mxu0 0
    %627 = vmatpush1.bf16.msra.mxu0 0
    %628 = vmatprep.subr.bf16.mxu0 0
    %629 = vmatpush1.bf16.msra.mxu0 0
    %630 = vmatprep.subr.bf16.mxu0 0
    %631 = vmatpush1.bf16.msra.mxu0 0
    %632 = vmatprep.subr.bf16.mxu0 0
    %633 = vmatpush1.bf16.msra.mxu0 0
    %634 = vmatprep.subr.bf16.mxu0 0
    %635 = vmatpush1.bf16.msra.mxu0 0
    %636 = vmatprep.subr.bf16.mxu0 0
    %637 = vmatpush1.bf16.msra.mxu0 0
    %638 = vmatprep.subr.bf16.mxu0 0
    %639 = vmatpush1.bf16.msra.mxu0 0
    %640 = vmatprep.subr.bf16.mxu0 0
    %641 = vmatpush1.bf16.msra.mxu0 0
    %642 = vmatprep.subr.bf16.mxu0 0
    %643 = vmatpush1.bf16.msra.mxu0 0
    %644 = vmatprep.subr.bf16.mxu0 0
    %645 = vmatpush1.bf16.msra.mxu0 0
    %646 = vmatprep.subr.bf16.mxu0 0
    %647 = vmatpush1.bf16.msra.mxu0 0
    %648 = vmatprep.mubr.bf16.mxu0 0
    %649 = vmatmul.mubr.bf16.gmra.mrb[0].mxu0 %v614
    %v650 = vpop.f32.mrb[0].mxu0
    %v651 = vadd.f32 0.0, %v650
    %v652 = vpop.f32.mrb[0].mxu0
    %v653 = vpop.f32.mrb[0].mxu0
    %v654 = vadd.f32 0.0, %v653
    %v655 = vpop.f32.mrb[0].mxu0
    %656 = vdwg.mxu0
    %v657 = vadd.f32 %v651, %v654
    %v658 = vxor.u32 %v657, 2147483648
    %v659 = vmul.f32 %v658, 1.442695
    %v660 = vpow.pop %v659
    %v661 = vadd.f32 %v660, 1.0
    %v662 = vrcp.pop %v661
    %v663 = vmul.f32 1.0, %v662
    %v665 = vcombine.high %v663, %v663
    %v667 = vunpack.c.l.s4 1966171168
    %v668 = vunpack.c.0.s8 %v667
    %v669 = vlaneseq
    %v670 = vshrl.u32 %v669, 7
    %v671 = vsub.s32 %v668, %v670
    %v672 = vrot.slane %v663, %v671
    %v674 = vunpack.c.l.s4 1966171168
    %v675 = vunpack.c.0.s8 %v674
    %v676 = vlaneseq
    %v677 = vshrl.u32 %v676, 7
    %v678 = vsub.s32 %v675, %v677
    %v679 = vrot.slane %v665, %v678
    %v680 = vcombine.high %v672, %v672
    %v681 = vcombine.high %v679, %v679
    %v683 = vunpack.c.l.s4 1966171168
    %v684 = vunpack.c.0.s8 %v683
    %v685 = vlaneseq
    %v686 = vshrl.u32 %v685, 7
    %v687 = vsub.s32 %v684, %v686
    %v688 = vrot.slane %v672, %v687
    %v690 = vunpack.c.l.s4 1966171168
    %v691 = vunpack.c.0.s8 %v690
    %v692 = vlaneseq
    %v693 = vshrl.u32 %v692, 7
    %v694 = vsub.s32 %v691, %v693
    %v695 = vrot.slane %v679, %v694
    %v697 = vunpack.c.l.s4 1966171168
    %v698 = vunpack.c.0.s8 %v697
    %v699 = vlaneseq
    %v700 = vshrl.u32 %v699, 7
    %v701 = vsub.s32 %v698, %v700
    %v702 = vrot.slane %v680, %v701
    %v704 = vunpack.c.l.s4 1966171168
    %v705 = vunpack.c.0.s8 %v704
    %v706 = vlaneseq
    %v707 = vshrl.u32 %v706, 7
    %v708 = vsub.s32 %v705, %v707
    %v709 = vrot.slane %v681, %v708
    %v710 = vcombine.high %v688, %v688
    %v711 = vcombine.high %v695, %v695
    %v712 = vcombine.high %v702, %v702
    %v713 = vcombine.high %v709, %v709
    %v714 = vlaneseq
    %v715 = vshrl.u32 %v714, 7
    %v716 = vsub.s32 0, %v715
    %v717 = vrot.slane %v688, %v716
    %v718 = vlaneseq
    %v719 = vshrl.u32 %v718, 7
    %v720 = vsub.s32 0, %v719
    %v721 = vrot.slane %v702, %v720
    %v722 = vlaneseq
    %v723 = vshrl.u32 %v722, 7
    %v724 = vsub.s32 0, %v723
    %v725 = vrot.slane %v710, %v724
    %v726 = vlaneseq
    %v727 = vshrl.u32 %v726, 7
    %v728 = vsub.s32 0, %v727
    %v729 = vrot.slane %v712, %v728
    %v730 = vlaneseq
    %v731 = vshrl.u32 %v730, 7
    %v732 = vsub.s32 0, %v731
    %v733 = vrot.slane %v695, %v732
    %v734 = vlaneseq
    %v735 = vshrl.u32 %v734, 7
    %v736 = vsub.s32 0, %v735
    %v737 = vrot.slane %v709, %v736
    %v738 = vlaneseq
    %v739 = vshrl.u32 %v738, 7
    %v740 = vsub.s32 0, %v739
    %v741 = vrot.slane %v711, %v740
    %v742 = vlaneseq
    %v743 = vshrl.u32 %v742, 7
    %v744 = vsub.s32 0, %v743
    %v745 = vrot.slane %v713, %v744
    %v754 = vmul.f32 %v175, %v717
    %v755 = vmul.f32 %v176, %v717
    %v756 = vmul.f32 %v177, %v717
    %v757 = vmul.f32 %v178, %v717
    %v758 = vmul.f32 %v179, %v717
    %v759 = vmul.f32 %v180, %v717
    %v760 = vmul.f32 %v181, %v717
    %v761 = vmul.f32 %v182, %v717
    %v762 = vmul.f32 %v183, %v721
    %v763 = vmul.f32 %v184, %v721
    %v764 = vmul.f32 %v185, %v721
    %v765 = vmul.f32 %v186, %v721
    %v766 = vmul.f32 %v187, %v721
    %v767 = vmul.f32 %v188, %v721
    %v768 = vmul.f32 %v189, %v721
    %v769 = vmul.f32 %v190, %v721
    %v770 = vmul.f32 %v191, %v725
    %v771 = vmul.f32 %v192, %v725
    %v772 = vmul.f32 %v193, %v725
    %v773 = vmul.f32 %v194, %v725
    %v774 = vmul.f32 %v195, %v725
    %v775 = vmul.f32 %v196, %v725
    %v776 = vmul.f32 %v197, %v725
    %v777 = vmul.f32 %v198, %v725
    %v778 = vmul.f32 %v199, %v729
    %v779 = vmul.f32 %v200, %v729
    %v780 = vmul.f32 %v201, %v729
    %v781 = vmul.f32 %v202, %v729
    %v782 = vmul.f32 %v203, %v729
    %v783 = vmul.f32 %v204, %v729
    %v784 = vmul.f32 %v205, %v729
    %v785 = vmul.f32 %v206, %v729
    %v786 = vmul.f32 %v207, %v733
    %v787 = vmul.f32 %v208, %v733
    %v788 = vmul.f32 %v209, %v733
    %v789 = vmul.f32 %v210, %v733
    %v790 = vmul.f32 %v211, %v733
    %v791 = vmul.f32 %v212, %v733
    %v792 = vmul.f32 %v213, %v733
    %v793 = vmul.f32 %v214, %v733
    %v794 = vmul.f32 %v215, %v737
    %v795 = vmul.f32 %v216, %v737
    %v796 = vmul.f32 %v217, %v737
    %v797 = vmul.f32 %v218, %v737
    %v798 = vmul.f32 %v219, %v737
    %v799 = vmul.f32 %v220, %v737
    %v800 = vmul.f32 %v221, %v737
    %v801 = vmul.f32 %v222, %v737
    %v802 = vmul.f32 %v223, %v741
    %v803 = vmul.f32 %v224, %v741
    %v804 = vmul.f32 %v225, %v741
    %v805 = vmul.f32 %v226, %v741
    %v806 = vmul.f32 %v227, %v741
    %v807 = vmul.f32 %v228, %v741
    %v808 = vmul.f32 %v229, %v741
    %v809 = vmul.f32 %v230, %v741
    %v810 = vmul.f32 %v231, %v745
    %v811 = vmul.f32 %v232, %v745
    %v812 = vmul.f32 %v233, %v745
    %v813 = vmul.f32 %v234, %v745
    %v814 = vmul.f32 %v235, %v745
    %v815 = vmul.f32 %v236, %v745
    %v816 = vmul.f32 %v237, %v745
    %v817 = vmul.f32 %v238, %v745
    %818 = vadd.xlane.f32.xlu0 %v754
    %v819 = vpop.xlane.xlu0 %818
    %820 = vadd.xlane.f32.xlu0 %v755
    %v821 = vpop.xlane.xlu0 %820
    %822 = vadd.xlane.f32.xlu0 %v756
    %v823 = vpop.xlane.xlu0 %822
    %824 = vadd.xlane.f32.xlu0 %v757
    %v825 = vpop.xlane.xlu0 %824
    %826 = vadd.xlane.f32.xlu0 %v758
    %v827 = vpop.xlane.xlu0 %826
    %828 = vadd.xlane.f32.xlu0 %v759
    %v829 = vpop.xlane.xlu0 %828
    %830 = vadd.xlane.f32.xlu0 %v760
    %v831 = vpop.xlane.xlu0 %830
    %832 = vadd.xlane.f32.xlu0 %v761
    %v833 = vpop.xlane.xlu0 %832
    %834 = vadd.xlane.f32.xlu0 %v762
    %v835 = vpop.xlane.xlu0 %834
    %836 = vadd.xlane.f32.xlu0 %v763
    %v837 = vpop.xlane.xlu0 %836
    %838 = vadd.xlane.f32.xlu0 %v764
    %v839 = vpop.xlane.xlu0 %838
    %840 = vadd.xlane.f32.xlu0 %v765
    %v841 = vpop.xlane.xlu0 %840
    %842 = vadd.xlane.f32.xlu0 %v766
    %v843 = vpop.xlane.xlu0 %842
    %844 = vadd.xlane.f32.xlu0 %v767
    %v845 = vpop.xlane.xlu0 %844
    %846 = vadd.xlane.f32.xlu0 %v768
    %v847 = vpop.xlane.xlu0 %846
    %848 = vadd.xlane.f32.xlu0 %v769
    %v849 = vpop.xlane.xlu0 %848
    %850 = vadd.xlane.f32.xlu0 %v770
    %v851 = vpop.xlane.xlu0 %850
    %852 = vadd.xlane.f32.xlu0 %v771
    %v853 = vpop.xlane.xlu0 %852
    %854 = vadd.xlane.f32.xlu0 %v772
    %v855 = vpop.xlane.xlu0 %854
    %856 = vadd.xlane.f32.xlu0 %v773
    %v857 = vpop.xlane.xlu0 %856
    %858 = vadd.xlane.f32.xlu0 %v774
    %v859 = vpop.xlane.xlu0 %858
    %860 = vadd.xlane.f32.xlu0 %v775
    %v861 = vpop.xlane.xlu0 %860
    %862 = vadd.xlane.f32.xlu0 %v776
    %v863 = vpop.xlane.xlu0 %862
    %864 = vadd.xlane.f32.xlu0 %v777
    %v865 = vpop.xlane.xlu0 %864
    %866 = vadd.xlane.f32.xlu0 %v778
    %v867 = vpop.xlane.xlu0 %866
    %868 = vadd.xlane.f32.xlu0 %v779
    %v869 = vpop.xlane.xlu0 %868
    %870 = vadd.xlane.f32.xlu0 %v780
    %v871 = vpop.xlane.xlu0 %870
    %872 = vadd.xlane.f32.xlu0 %v781
    %v873 = vpop.xlane.xlu0 %872
    %874 = vadd.xlane.f32.xlu0 %v782
    %v875 = vpop.xlane.xlu0 %874
    %876 = vadd.xlane.f32.xlu0 %v783
    %v877 = vpop.xlane.xlu0 %876
    %878 = vadd.xlane.f32.xlu0 %v784
    %v879 = vpop.xlane.xlu0 %878
    %880 = vadd.xlane.f32.xlu0 %v785
    %v881 = vpop.xlane.xlu0 %880
    %882 = vadd.xlane.f32.xlu0 %v786
    %v883 = vpop.xlane.xlu0 %882
    %884 = vadd.xlane.f32.xlu0 %v787
    %v885 = vpop.xlane.xlu0 %884
    %886 = vadd.xlane.f32.xlu0 %v788
    %v887 = vpop.xlane.xlu0 %886
    %888 = vadd.xlane.f32.xlu0 %v789
    %v889 = vpop.xlane.xlu0 %888
    %890 = vadd.xlane.f32.xlu0 %v790
    %v891 = vpop.xlane.xlu0 %890
    %892 = vadd.xlane.f32.xlu0 %v791
    %v893 = vpop.xlane.xlu0 %892
    %894 = vadd.xlane.f32.xlu0 %v792
    %v895 = vpop.xlane.xlu0 %894
    %896 = vadd.xlane.f32.xlu0 %v793
    %v897 = vpop.xlane.xlu0 %896
    %898 = vadd.xlane.f32.xlu0 %v794
    %v899 = vpop.xlane.xlu0 %898
    %900 = vadd.xlane.f32.xlu0 %v795
    %v901 = vpop.xlane.xlu0 %900
    %902 = vadd.xlane.f32.xlu0 %v796
    %v903 = vpop.xlane.xlu0 %902
    %904 = vadd.xlane.f32.xlu0 %v797
    %v905 = vpop.xlane.xlu0 %904
    %906 = vadd.xlane.f32.xlu0 %v798
    %v907 = vpop.xlane.xlu0 %906
    %908 = vadd.xlane.f32.xlu0 %v799
    %v909 = vpop.xlane.xlu0 %908
    %910 = vadd.xlane.f32.xlu0 %v800
    %v911 = vpop.xlane.xlu0 %910
    %912 = vadd.xlane.f32.xlu0 %v801
    %v913 = vpop.xlane.xlu0 %912
    %914 = vadd.xlane.f32.xlu0 %v802
    %v915 = vpop.xlane.xlu0 %914
    %916 = vadd.xlane.f32.xlu0 %v803
    %v917 = vpop.xlane.xlu0 %916
    %918 = vadd.xlane.f32.xlu0 %v804
    %v919 = vpop.xlane.xlu0 %918
    %920 = vadd.xlane.f32.xlu0 %v805
    %v921 = vpop.xlane.xlu0 %920
    %922 = vadd.xlane.f32.xlu0 %v806
    %v923 = vpop.xlane.xlu0 %922
    %924 = vadd.xlane.f32.xlu0 %v807
    %v925 = vpop.xlane.xlu0 %924
    %926 = vadd.xlane.f32.xlu0 %v808
    %v927 = vpop.xlane.xlu0 %926
    %928 = vadd.xlane.f32.xlu0 %v809
    %v929 = vpop.xlane.xlu0 %928
    %930 = vadd.xlane.f32.xlu0 %v810
    %v931 = vpop.xlane.xlu0 %930
    %932 = vadd.xlane.f32.xlu0 %v811
    %v933 = vpop.xlane.xlu0 %932
    %934 = vadd.xlane.f32.xlu0 %v812
    %v935 = vpop.xlane.xlu0 %934
    %936 = vadd.xlane.f32.xlu0 %v813
    %v937 = vpop.xlane.xlu0 %936
    %938 = vadd.xlane.f32.xlu0 %v814
    %v939 = vpop.xlane.xlu0 %938
    %940 = vadd.xlane.f32.xlu0 %v815
    %v941 = vpop.xlane.xlu0 %940
    %942 = vadd.xlane.f32.xlu0 %v816
    %v943 = vpop.xlane.xlu0 %942
    %944 = vadd.xlane.f32.xlu0 %v817
    %v945 = vpop.xlane.xlu0 %944
    %v946 = vrcp.pop 128.0
    %v947 = vmul.f32 %v819, %v946
    %v948 = vmul.f32 %v821, %v946
    %v949 = vmul.f32 %v823, %v946
    %v950 = vmul.f32 %v825, %v946
    %v951 = vmul.f32 %v827, %v946
    %v952 = vmul.f32 %v829, %v946
    %v953 = vmul.f32 %v831, %v946
    %v954 = vmul.f32 %v833, %v946
    %v955 = vmul.f32 %v835, %v946
    %v956 = vmul.f32 %v837, %v946
    %v957 = vmul.f32 %v839, %v946
    %v958 = vmul.f32 %v841, %v946
    %v959 = vmul.f32 %v843, %v946
    %v960 = vmul.f32 %v845, %v946
    %v961 = vmul.f32 %v847, %v946
    %v962 = vmul.f32 %v849, %v946
    %v963 = vmul.f32 %v851, %v946
    %v964 = vmul.f32 %v853, %v946
    %v965 = vmul.f32 %v855, %v946
    %v966 = vmul.f32 %v857, %v946
    %v967 = vmul.f32 %v859, %v946
    %v968 = vmul.f32 %v861, %v946
    %v969 = vmul.f32 %v863, %v946
    %v970 = vmul.f32 %v865, %v946
    %v971 = vmul.f32 %v867, %v946
    %v972 = vmul.f32 %v869, %v946
    %v973 = vmul.f32 %v871, %v946
    %v974 = vmul.f32 %v873, %v946
    %v975 = vmul.f32 %v875, %v946
    %v976 = vmul.f32 %v877, %v946
    %v977 = vmul.f32 %v879, %v946
    %v978 = vmul.f32 %v881, %v946
    %v979 = vmul.f32 %v883, %v946
    %v980 = vmul.f32 %v885, %v946
    %v981 = vmul.f32 %v887, %v946
    %v982 = vmul.f32 %v889, %v946
    %v983 = vmul.f32 %v891, %v946
    %v984 = vmul.f32 %v893, %v946
    %v985 = vmul.f32 %v895, %v946
    %v986 = vmul.f32 %v897, %v946
    %v987 = vmul.f32 %v899, %v946
    %v988 = vmul.f32 %v901, %v946
    %v989 = vmul.f32 %v903, %v946
    %v990 = vmul.f32 %v905, %v946
    %v991 = vmul.f32 %v907, %v946
    %v992 = vmul.f32 %v909, %v946
    %v993 = vmul.f32 %v911, %v946
    %v994 = vmul.f32 %v913, %v946
    %v995 = vmul.f32 %v915, %v946
    %v996 = vmul.f32 %v917, %v946
    %v997 = vmul.f32 %v919, %v946
    %v998 = vmul.f32 %v921, %v946
    %v999 = vmul.f32 %v923, %v946
    %v1000 = vmul.f32 %v925, %v946
    %v1001 = vmul.f32 %v927, %v946
    %v1002 = vmul.f32 %v929, %v946
    %v1003 = vmul.f32 %v931, %v946
    %v1004 = vmul.f32 %v933, %v946
    %v1005 = vmul.f32 %v935, %v946
    %v1006 = vmul.f32 %v937, %v946
    %v1007 = vmul.f32 %v939, %v946
    %v1008 = vmul.f32 %v941, %v946
    %v1009 = vmul.f32 %v943, %v946
    %v1010 = vmul.f32 %v945, %v946
    %1011 = vmax.xlane.f32.xlu0 %v754
    %v1012 = vpop.xlane.xlu0 %1011
    %1013 = vmax.xlane.f32.xlu0 %v755
    %v1014 = vpop.xlane.xlu0 %1013
    %1015 = vmax.xlane.f32.xlu0 %v756
    %v1016 = vpop.xlane.xlu0 %1015
    %1017 = vmax.xlane.f32.xlu0 %v757
    %v1018 = vpop.xlane.xlu0 %1017
    %1019 = vmax.xlane.f32.xlu0 %v758
    %v1020 = vpop.xlane.xlu0 %1019
    %1021 = vmax.xlane.f32.xlu0 %v759
    %v1022 = vpop.xlane.xlu0 %1021
    %1023 = vmax.xlane.f32.xlu0 %v760
    %v1024 = vpop.xlane.xlu0 %1023
    %1025 = vmax.xlane.f32.xlu0 %v761
    %v1026 = vpop.xlane.xlu0 %1025
    %1027 = vmax.xlane.f32.xlu0 %v762
    %v1028 = vpop.xlane.xlu0 %1027
    %1029 = vmax.xlane.f32.xlu0 %v763
    %v1030 = vpop.xlane.xlu0 %1029
    %1031 = vmax.xlane.f32.xlu0 %v764
    %v1032 = vpop.xlane.xlu0 %1031
    %1033 = vmax.xlane.f32.xlu0 %v765
    %v1034 = vpop.xlane.xlu0 %1033
    %1035 = vmax.xlane.f32.xlu0 %v766
    %v1036 = vpop.xlane.xlu0 %1035
    %1037 = vmax.xlane.f32.xlu0 %v767
    %v1038 = vpop.xlane.xlu0 %1037
    %1039 = vmax.xlane.f32.xlu0 %v768
    %v1040 = vpop.xlane.xlu0 %1039
    %1041 = vmax.xlane.f32.xlu0 %v769
    %v1042 = vpop.xlane.xlu0 %1041
    %1043 = vmax.xlane.f32.xlu0 %v770
    %v1044 = vpop.xlane.xlu0 %1043
    %1045 = vmax.xlane.f32.xlu0 %v771
    %v1046 = vpop.xlane.xlu0 %1045
    %1047 = vmax.xlane.f32.xlu0 %v772
    %v1048 = vpop.xlane.xlu0 %1047
    %1049 = vmax.xlane.f32.xlu0 %v773
    %v1050 = vpop.xlane.xlu0 %1049
    %1051 = vmax.xlane.f32.xlu0 %v774
    %v1052 = vpop.xlane.xlu0 %1051
    %1053 = vmax.xlane.f32.xlu0 %v775
    %v1054 = vpop.xlane.xlu0 %1053
    %1055 = vmax.xlane.f32.xlu0 %v776
    %v1056 = vpop.xlane.xlu0 %1055
    %1057 = vmax.xlane.f32.xlu0 %v777
    %v1058 = vpop.xlane.xlu0 %1057
    %1059 = vmax.xlane.f32.xlu0 %v778
    %v1060 = vpop.xlane.xlu0 %1059
    %1061 = vmax.xlane.f32.xlu0 %v779
    %v1062 = vpop.xlane.xlu0 %1061
    %1063 = vmax.xlane.f32.xlu0 %v780
    %v1064 = vpop.xlane.xlu0 %1063
    %1065 = vmax.xlane.f32.xlu0 %v781
    %v1066 = vpop.xlane.xlu0 %1065
    %1067 = vmax.xlane.f32.xlu0 %v782
    %v1068 = vpop.xlane.xlu0 %1067
    %1069 = vmax.xlane.f32.xlu0 %v783
    %v1070 = vpop.xlane.xlu0 %1069
    %1071 = vmax.xlane.f32.xlu0 %v784
    %v1072 = vpop.xlane.xlu0 %1071
    %1073 = vmax.xlane.f32.xlu0 %v785
    %v1074 = vpop.xlane.xlu0 %1073
    %1075 = vmax.xlane.f32.xlu0 %v786
    %v1076 = vpop.xlane.xlu0 %1075
    %1077 = vmax.xlane.f32.xlu0 %v787
    %v1078 = vpop.xlane.xlu0 %1077
    %1079 = vmax.xlane.f32.xlu0 %v788
    %v1080 = vpop.xlane.xlu0 %1079
    %1081 = vmax.xlane.f32.xlu0 %v789
    %v1082 = vpop.xlane.xlu0 %1081
    %1083 = vmax.xlane.f32.xlu0 %v790
    %v1084 = vpop.xlane.xlu0 %1083
    %1085 = vmax.xlane.f32.xlu0 %v791
    %v1086 = vpop.xlane.xlu0 %1085
    %1087 = vmax.xlane.f32.xlu0 %v792
    %v1088 = vpop.xlane.xlu0 %1087
    %1089 = vmax.xlane.f32.xlu0 %v793
    %v1090 = vpop.xlane.xlu0 %1089
    %1091 = vmax.xlane.f32.xlu0 %v794
    %v1092 = vpop.xlane.xlu0 %1091
    %1093 = vmax.xlane.f32.xlu0 %v795
    %v1094 = vpop.xlane.xlu0 %1093
    %1095 = vmax.xlane.f32.xlu0 %v796
    %v1096 = vpop.xlane.xlu0 %1095
    %1097 = vmax.xlane.f32.xlu0 %v797
    %v1098 = vpop.xlane.xlu0 %1097
    %1099 = vmax.xlane.f32.xlu0 %v798
    %v1100 = vpop.xlane.xlu0 %1099
    %1101 = vmax.xlane.f32.xlu0 %v799
    %v1102 = vpop.xlane.xlu0 %1101
    %1103 = vmax.xlane.f32.xlu0 %v800
    %v1104 = vpop.xlane.xlu0 %1103
    %1105 = vmax.xlane.f32.xlu0 %v801
    %v1106 = vpop.xlane.xlu0 %1105
    %1107 = vmax.xlane.f32.xlu0 %v802
    %v1108 = vpop.xlane.xlu0 %1107
    %1109 = vmax.xlane.f32.xlu0 %v803
    %v1110 = vpop.xlane.xlu0 %1109
    %1111 = vmax.xlane.f32.xlu0 %v804
    %v1112 = vpop.xlane.xlu0 %1111
    %1113 = vmax.xlane.f32.xlu0 %v805
    %v1114 = vpop.xlane.xlu0 %1113
    %1115 = vmax.xlane.f32.xlu0 %v806
    %v1116 = vpop.xlane.xlu0 %1115
    %1117 = vmax.xlane.f32.xlu0 %v807
    %v1118 = vpop.xlane.xlu0 %1117
    %1119 = vmax.xlane.f32.xlu0 %v808
    %v1120 = vpop.xlane.xlu0 %1119
    %1121 = vmax.xlane.f32.xlu0 %v809
    %v1122 = vpop.xlane.xlu0 %1121
    %1123 = vmax.xlane.f32.xlu0 %v810
    %v1124 = vpop.xlane.xlu0 %1123
    %1125 = vmax.xlane.f32.xlu0 %v811
    %v1126 = vpop.xlane.xlu0 %1125
    %1127 = vmax.xlane.f32.xlu0 %v812
    %v1128 = vpop.xlane.xlu0 %1127
    %1129 = vmax.xlane.f32.xlu0 %v813
    %v1130 = vpop.xlane.xlu0 %1129
    %1131 = vmax.xlane.f32.xlu0 %v814
    %v1132 = vpop.xlane.xlu0 %1131
    %1133 = vmax.xlane.f32.xlu0 %v815
    %v1134 = vpop.xlane.xlu0 %1133
    %1135 = vmax.xlane.f32.xlu0 %v816
    %v1136 = vpop.xlane.xlu0 %1135
    %1137 = vmax.xlane.f32.xlu0 %v817
    %v1138 = vpop.xlane.xlu0 %1137
    %v1203 = vlaneseq
    %v1204 = vand.u32 %v1203, 127
    %v1205 = vlaneseq
    %v1206 = vshrl.u32 %v1205, 7
    %v1207 = vsub.s32 %v1204, %v1206
    %v1208 = vrot.slane %v947, %v1207
    %v1209 = vadd.s32 %v1204, 4294967288
    %v1210 = vlaneseq
    %v1211 = vshrl.u32 %v1210, 7
    %v1212 = vsub.s32 %v1209, %v1211
    %v1213 = vrot.slane %v948, %v1212
    %vm1214 = vcmask 130112
    %v1215 = vsel %vm1214, %v1213, %v1208
    %v1216 = vadd.s32 %v1204, 4294967280
    %v1217 = vlaneseq
    %v1218 = vshrl.u32 %v1217, 7
    %v1219 = vsub.s32 %v1216, %v1218
    %v1220 = vrot.slane %v949, %v1219
    %vm1221 = vcmask 195712
    %v1222 = vsel %vm1221, %v1220, %v1215
    %v1223 = vadd.s32 %v1204, 4294967272
    %v1224 = vlaneseq
    %v1225 = vshrl.u32 %v1224, 7
    %v1226 = vsub.s32 %v1223, %v1225
    %v1227 = vrot.slane %v950, %v1226
    %vm1228 = vcmask 261312
    %v1229 = vsel %vm1228, %v1227, %v1222
    %v1230 = vadd.s32 %v1204, 4294967264
    %v1231 = vlaneseq
    %v1232 = vshrl.u32 %v1231, 7
    %v1233 = vsub.s32 %v1230, %v1232
    %v1234 = vrot.slane %v951, %v1233
    %vm1235 = vcmask 326912
    %v1236 = vsel %vm1235, %v1234, %v1229
    %v1237 = vadd.s32 %v1204, 4294967256
    %v1238 = vlaneseq
    %v1239 = vshrl.u32 %v1238, 7
    %v1240 = vsub.s32 %v1237, %v1239
    %v1241 = vrot.slane %v952, %v1240
    %vm1242 = vcmask 392512
    %v1243 = vsel %vm1242, %v1241, %v1236
    %v1244 = vadd.s32 %v1204, 4294967248
    %v1245 = vlaneseq
    %v1246 = vshrl.u32 %v1245, 7
    %v1247 = vsub.s32 %v1244, %v1246
    %v1248 = vrot.slane %v953, %v1247
    %vm1249 = vcmask 458112
    %v1250 = vsel %vm1249, %v1248, %v1243
    %v1251 = vadd.s32 %v1204, 4294967240
    %v1252 = vlaneseq
    %v1253 = vshrl.u32 %v1252, 7
    %v1254 = vsub.s32 %v1251, %v1253
    %v1255 = vrot.slane %v954, %v1254
    %vm1256 = vcmask 523712
    %v1257 = vsel %vm1256, %v1255, %v1250
    %v1258 = vlaneseq
    %v1259 = vshrl.u32 %v1258, 7
    %v1260 = vsub.s32 %v1204, %v1259
    %v1261 = vrot.slane %v955, %v1260
    %v1262 = vlaneseq
    %v1263 = vshrl.u32 %v1262, 7
    %v1264 = vsub.s32 %v1209, %v1263
    %v1265 = vrot.slane %v956, %v1264
    %v1266 = vsel %vm1214, %v1265, %v1261
    %v1267 = vlaneseq
    %v1268 = vshrl.u32 %v1267, 7
    %v1269 = vsub.s32 %v1216, %v1268
    %v1270 = vrot.slane %v957, %v1269
    %v1271 = vsel %vm1221, %v1270, %v1266
    %v1272 = vlaneseq
    %v1273 = vshrl.u32 %v1272, 7
    %v1274 = vsub.s32 %v1223, %v1273
    %v1275 = vrot.slane %v958, %v1274
    %v1276 = vsel %vm1228, %v1275, %v1271
    %v1277 = vlaneseq
    %v1278 = vshrl.u32 %v1277, 7
    %v1279 = vsub.s32 %v1230, %v1278
    %v1280 = vrot.slane %v959, %v1279
    %v1281 = vsel %vm1235, %v1280, %v1276
    %v1282 = vlaneseq
    %v1283 = vshrl.u32 %v1282, 7
    %v1284 = vsub.s32 %v1237, %v1283
    %v1285 = vrot.slane %v960, %v1284
    %v1286 = vsel %vm1242, %v1285, %v1281
    %v1287 = vlaneseq
    %v1288 = vshrl.u32 %v1287, 7
    %v1289 = vsub.s32 %v1244, %v1288
    %v1290 = vrot.slane %v961, %v1289
    %v1291 = vsel %vm1249, %v1290, %v1286
    %v1292 = vlaneseq
    %v1293 = vshrl.u32 %v1292, 7
    %v1294 = vsub.s32 %v1251, %v1293
    %v1295 = vrot.slane %v962, %v1294
    %v1296 = vsel %vm1256, %v1295, %v1291
    %v1297 = vlaneseq
    %v1298 = vshrl.u32 %v1297, 7
    %v1299 = vsub.s32 %v1204, %v1298
    %v1300 = vrot.slane %v963, %v1299
    %v1301 = vlaneseq
    %v1302 = vshrl.u32 %v1301, 7
    %v1303 = vsub.s32 %v1209, %v1302
    %v1304 = vrot.slane %v964, %v1303
    %v1305 = vsel %vm1214, %v1304, %v1300
    %v1306 = vlaneseq
    %v1307 = vshrl.u32 %v1306, 7
    %v1308 = vsub.s32 %v1216, %v1307
    %v1309 = vrot.slane %v965, %v1308
    %v1310 = vsel %vm1221, %v1309, %v1305
    %v1311 = vlaneseq
    %v1312 = vshrl.u32 %v1311, 7
    %v1313 = vsub.s32 %v1223, %v1312
    %v1314 = vrot.slane %v966, %v1313
    %v1315 = vsel %vm1228, %v1314, %v1310
    %v1316 = vlaneseq
    %v1317 = vshrl.u32 %v1316, 7
    %v1318 = vsub.s32 %v1230, %v1317
    %v1319 = vrot.slane %v967, %v1318
    %v1320 = vsel %vm1235, %v1319, %v1315
    %v1321 = vlaneseq
    %v1322 = vshrl.u32 %v1321, 7
    %v1323 = vsub.s32 %v1237, %v1322
    %v1324 = vrot.slane %v968, %v1323
    %v1325 = vsel %vm1242, %v1324, %v1320
    %v1326 = vlaneseq
    %v1327 = vshrl.u32 %v1326, 7
    %v1328 = vsub.s32 %v1244, %v1327
    %v1329 = vrot.slane %v969, %v1328
    %v1330 = vsel %vm1249, %v1329, %v1325
    %v1331 = vlaneseq
    %v1332 = vshrl.u32 %v1331, 7
    %v1333 = vsub.s32 %v1251, %v1332
    %v1334 = vrot.slane %v970, %v1333
    %v1335 = vsel %vm1256, %v1334, %v1330
    %v1336 = vlaneseq
    %v1337 = vshrl.u32 %v1336, 7
    %v1338 = vsub.s32 %v1204, %v1337
    %v1339 = vrot.slane %v971, %v1338
    %v1340 = vlaneseq
    %v1341 = vshrl.u32 %v1340, 7
    %v1342 = vsub.s32 %v1209, %v1341
    %v1343 = vrot.slane %v972, %v1342
    %v1344 = vsel %vm1214, %v1343, %v1339
    %v1345 = vlaneseq
    %v1346 = vshrl.u32 %v1345, 7
    %v1347 = vsub.s32 %v1216, %v1346
    %v1348 = vrot.slane %v973, %v1347
    %v1349 = vsel %vm1221, %v1348, %v1344
    %v1350 = vlaneseq
    %v1351 = vshrl.u32 %v1350, 7
    %v1352 = vsub.s32 %v1223, %v1351
    %v1353 = vrot.slane %v974, %v1352
    %v1354 = vsel %vm1228, %v1353, %v1349
    %v1355 = vlaneseq
    %v1356 = vshrl.u32 %v1355, 7
    %v1357 = vsub.s32 %v1230, %v1356
    %v1358 = vrot.slane %v975, %v1357
    %v1359 = vsel %vm1235, %v1358, %v1354
    %v1360 = vlaneseq
    %v1361 = vshrl.u32 %v1360, 7
    %v1362 = vsub.s32 %v1237, %v1361
    %v1363 = vrot.slane %v976, %v1362
    %v1364 = vsel %vm1242, %v1363, %v1359
    %v1365 = vlaneseq
    %v1366 = vshrl.u32 %v1365, 7
    %v1367 = vsub.s32 %v1244, %v1366
    %v1368 = vrot.slane %v977, %v1367
    %v1369 = vsel %vm1249, %v1368, %v1364
    %v1370 = vlaneseq
    %v1371 = vshrl.u32 %v1370, 7
    %v1372 = vsub.s32 %v1251, %v1371
    %v1373 = vrot.slane %v978, %v1372
    %v1374 = vsel %vm1256, %v1373, %v1369
    %v1375 = vlaneseq
    %v1376 = vshrl.u32 %v1375, 7
    %v1377 = vsub.s32 %v1204, %v1376
    %v1378 = vrot.slane %v979, %v1377
    %v1379 = vlaneseq
    %v1380 = vshrl.u32 %v1379, 7
    %v1381 = vsub.s32 %v1209, %v1380
    %v1382 = vrot.slane %v980, %v1381
    %v1383 = vsel %vm1214, %v1382, %v1378
    %v1384 = vlaneseq
    %v1385 = vshrl.u32 %v1384, 7
    %v1386 = vsub.s32 %v1216, %v1385
    %v1387 = vrot.slane %v981, %v1386
    %v1388 = vsel %vm1221, %v1387, %v1383
    %v1389 = vlaneseq
    %v1390 = vshrl.u32 %v1389, 7
    %v1391 = vsub.s32 %v1223, %v1390
    %v1392 = vrot.slane %v982, %v1391
    %v1393 = vsel %vm1228, %v1392, %v1388
    %v1394 = vlaneseq
    %v1395 = vshrl.u32 %v1394, 7
    %v1396 = vsub.s32 %v1230, %v1395
    %v1397 = vrot.slane %v983, %v1396
    %v1398 = vsel %vm1235, %v1397, %v1393
    %v1399 = vlaneseq
    %v1400 = vshrl.u32 %v1399, 7
    %v1401 = vsub.s32 %v1237, %v1400
    %v1402 = vrot.slane %v984, %v1401
    %v1403 = vsel %vm1242, %v1402, %v1398
    %v1404 = vlaneseq
    %v1405 = vshrl.u32 %v1404, 7
    %v1406 = vsub.s32 %v1244, %v1405
    %v1407 = vrot.slane %v985, %v1406
    %v1408 = vsel %vm1249, %v1407, %v1403
    %v1409 = vlaneseq
    %v1410 = vshrl.u32 %v1409, 7
    %v1411 = vsub.s32 %v1251, %v1410
    %v1412 = vrot.slane %v986, %v1411
    %v1413 = vsel %vm1256, %v1412, %v1408
    %v1414 = vlaneseq
    %v1415 = vshrl.u32 %v1414, 7
    %v1416 = vsub.s32 %v1204, %v1415
    %v1417 = vrot.slane %v987, %v1416
    %v1418 = vlaneseq
    %v1419 = vshrl.u32 %v1418, 7
    %v1420 = vsub.s32 %v1209, %v1419
    %v1421 = vrot.slane %v988, %v1420
    %v1422 = vsel %vm1214, %v1421, %v1417
    %v1423 = vlaneseq
    %v1424 = vshrl.u32 %v1423, 7
    %v1425 = vsub.s32 %v1216, %v1424
    %v1426 = vrot.slane %v989, %v1425
    %v1427 = vsel %vm1221, %v1426, %v1422
    %v1428 = vlaneseq
    %v1429 = vshrl.u32 %v1428, 7
    %v1430 = vsub.s32 %v1223, %v1429
    %v1431 = vrot.slane %v990, %v1430
    %v1432 = vsel %vm1228, %v1431, %v1427
    %v1433 = vlaneseq
    %v1434 = vshrl.u32 %v1433, 7
    %v1435 = vsub.s32 %v1230, %v1434
    %v1436 = vrot.slane %v991, %v1435
    %v1437 = vsel %vm1235, %v1436, %v1432
    %v1438 = vlaneseq
    %v1439 = vshrl.u32 %v1438, 7
    %v1440 = vsub.s32 %v1237, %v1439
    %v1441 = vrot.slane %v992, %v1440
    %v1442 = vsel %vm1242, %v1441, %v1437
    %v1443 = vlaneseq
    %v1444 = vshrl.u32 %v1443, 7
    %v1445 = vsub.s32 %v1244, %v1444
    %v1446 = vrot.slane %v993, %v1445
    %v1447 = vsel %vm1249, %v1446, %v1442
    %v1448 = vlaneseq
    %v1449 = vshrl.u32 %v1448, 7
    %v1450 = vsub.s32 %v1251, %v1449
    %v1451 = vrot.slane %v994, %v1450
    %v1452 = vsel %vm1256, %v1451, %v1447
    %v1453 = vlaneseq
    %v1454 = vshrl.u32 %v1453, 7
    %v1455 = vsub.s32 %v1204, %v1454
    %v1456 = vrot.slane %v995, %v1455
    %v1457 = vlaneseq
    %v1458 = vshrl.u32 %v1457, 7
    %v1459 = vsub.s32 %v1209, %v1458
    %v1460 = vrot.slane %v996, %v1459
    %v1461 = vsel %vm1214, %v1460, %v1456
    %v1462 = vlaneseq
    %v1463 = vshrl.u32 %v1462, 7
    %v1464 = vsub.s32 %v1216, %v1463
    %v1465 = vrot.slane %v997, %v1464
    %v1466 = vsel %vm1221, %v1465, %v1461
    %v1467 = vlaneseq
    %v1468 = vshrl.u32 %v1467, 7
    %v1469 = vsub.s32 %v1223, %v1468
    %v1470 = vrot.slane %v998, %v1469
    %v1471 = vsel %vm1228, %v1470, %v1466
    %v1472 = vlaneseq
    %v1473 = vshrl.u32 %v1472, 7
    %v1474 = vsub.s32 %v1230, %v1473
    %v1475 = vrot.slane %v999, %v1474
    %v1476 = vsel %vm1235, %v1475, %v1471
    %v1477 = vlaneseq
    %v1478 = vshrl.u32 %v1477, 7
    %v1479 = vsub.s32 %v1237, %v1478
    %v1480 = vrot.slane %v1000, %v1479
    %v1481 = vsel %vm1242, %v1480, %v1476
    %v1482 = vlaneseq
    %v1483 = vshrl.u32 %v1482, 7
    %v1484 = vsub.s32 %v1244, %v1483
    %v1485 = vrot.slane %v1001, %v1484
    %v1486 = vsel %vm1249, %v1485, %v1481
    %v1487 = vlaneseq
    %v1488 = vshrl.u32 %v1487, 7
    %v1489 = vsub.s32 %v1251, %v1488
    %v1490 = vrot.slane %v1002, %v1489
    %v1491 = vsel %vm1256, %v1490, %v1486
    %v1492 = vlaneseq
    %v1493 = vshrl.u32 %v1492, 7
    %v1494 = vsub.s32 %v1204, %v1493
    %v1495 = vrot.slane %v1003, %v1494
    %v1496 = vlaneseq
    %v1497 = vshrl.u32 %v1496, 7
    %v1498 = vsub.s32 %v1209, %v1497
    %v1499 = vrot.slane %v1004, %v1498
    %v1500 = vsel %vm1214, %v1499, %v1495
    %v1501 = vlaneseq
    %v1502 = vshrl.u32 %v1501, 7
    %v1503 = vsub.s32 %v1216, %v1502
    %v1504 = vrot.slane %v1005, %v1503
    %v1505 = vsel %vm1221, %v1504, %v1500
    %v1506 = vlaneseq
    %v1507 = vshrl.u32 %v1506, 7
    %v1508 = vsub.s32 %v1223, %v1507
    %v1509 = vrot.slane %v1006, %v1508
    %v1510 = vsel %vm1228, %v1509, %v1505
    %v1511 = vlaneseq
    %v1512 = vshrl.u32 %v1511, 7
    %v1513 = vsub.s32 %v1230, %v1512
    %v1514 = vrot.slane %v1007, %v1513
    %v1515 = vsel %vm1235, %v1514, %v1510
    %v1516 = vlaneseq
    %v1517 = vshrl.u32 %v1516, 7
    %v1518 = vsub.s32 %v1237, %v1517
    %v1519 = vrot.slane %v1008, %v1518
    %v1520 = vsel %vm1242, %v1519, %v1515
    %v1521 = vlaneseq
    %v1522 = vshrl.u32 %v1521, 7
    %v1523 = vsub.s32 %v1244, %v1522
    %v1524 = vrot.slane %v1009, %v1523
    %v1525 = vsel %vm1249, %v1524, %v1520
    %v1526 = vlaneseq
    %v1527 = vshrl.u32 %v1526, 7
    %v1528 = vsub.s32 %v1251, %v1527
    %v1529 = vrot.slane %v1010, %v1528
    %v1530 = vsel %vm1256, %v1529, %v1525
    %v1531 = vsel %vm464, %v1296, %v1257
    %v1532 = vsel %vm466, %v1335, %v1531
    %v1533 = vsel %vm468, %v1374, %v1532
    %v1534 = vsel %vm470, %v1413, %v1533
    %v1535 = vsel %vm472, %v1452, %v1534
    %v1536 = vsel %vm474, %v1491, %v1535
    %v1537 = vsel %vm476, %v1530, %v1536
    %v1603 = vadd.s32 %v1204, 4294967232
    %v1604 = vlaneseq
    %v1605 = vshrl.u32 %v1604, 7
    %v1606 = vsub.s32 %v1603, %v1605
    %v1607 = vrot.slane %v1012, %v1606
    %v1608 = vadd.s32 %v1204, 4294967224
    %v1609 = vlaneseq
    %v1610 = vshrl.u32 %v1609, 7
    %v1611 = vsub.s32 %v1608, %v1610
    %v1612 = vrot.slane %v1014, %v1611
    %vm1613 = vcmask 654912
    %v1614 = vsel %vm1613, %v1612, %v1607
    %v1615 = vadd.s32 %v1204, 4294967216
    %v1616 = vlaneseq
    %v1617 = vshrl.u32 %v1616, 7
    %v1618 = vsub.s32 %v1615, %v1617
    %v1619 = vrot.slane %v1016, %v1618
    %vm1620 = vcmask 720512
    %v1621 = vsel %vm1620, %v1619, %v1614
    %v1622 = vadd.s32 %v1204, 4294967208
    %v1623 = vlaneseq
    %v1624 = vshrl.u32 %v1623, 7
    %v1625 = vsub.s32 %v1622, %v1624
    %v1626 = vrot.slane %v1018, %v1625
    %vm1627 = vcmask 786112
    %v1628 = vsel %vm1627, %v1626, %v1621
    %v1629 = vadd.s32 %v1204, 4294967200
    %v1630 = vlaneseq
    %v1631 = vshrl.u32 %v1630, 7
    %v1632 = vsub.s32 %v1629, %v1631
    %v1633 = vrot.slane %v1020, %v1632
    %vm1634 = vcmask 851712
    %v1635 = vsel %vm1634, %v1633, %v1628
    %v1636 = vadd.s32 %v1204, 4294967192
    %v1637 = vlaneseq
    %v1638 = vshrl.u32 %v1637, 7
    %v1639 = vsub.s32 %v1636, %v1638
    %v1640 = vrot.slane %v1022, %v1639
    %vm1641 = vcmask 917312
    %v1642 = vsel %vm1641, %v1640, %v1635
    %v1643 = vadd.s32 %v1204, 4294967184
    %v1644 = vlaneseq
    %v1645 = vshrl.u32 %v1644, 7
    %v1646 = vsub.s32 %v1643, %v1645
    %v1647 = vrot.slane %v1024, %v1646
    %vm1648 = vcmask 982912
    %v1649 = vsel %vm1648, %v1647, %v1642
    %v1650 = vadd.s32 %v1204, 4294967176
    %v1651 = vlaneseq
    %v1652 = vshrl.u32 %v1651, 7
    %v1653 = vsub.s32 %v1650, %v1652
    %v1654 = vrot.slane %v1026, %v1653
    %vm1655 = vcmask 1048512
    %v1656 = vsel %vm1655, %v1654, %v1649
    %v1657 = vlaneseq
    %v1658 = vshrl.u32 %v1657, 7
    %v1659 = vsub.s32 %v1603, %v1658
    %v1660 = vrot.slane %v1028, %v1659
    %v1661 = vlaneseq
    %v1662 = vshrl.u32 %v1661, 7
    %v1663 = vsub.s32 %v1608, %v1662
    %v1664 = vrot.slane %v1030, %v1663
    %v1665 = vsel %vm1613, %v1664, %v1660
    %v1666 = vlaneseq
    %v1667 = vshrl.u32 %v1666, 7
    %v1668 = vsub.s32 %v1615, %v1667
    %v1669 = vrot.slane %v1032, %v1668
    %v1670 = vsel %vm1620, %v1669, %v1665
    %v1671 = vlaneseq
    %v1672 = vshrl.u32 %v1671, 7
    %v1673 = vsub.s32 %v1622, %v1672
    %v1674 = vrot.slane %v1034, %v1673
    %v1675 = vsel %vm1627, %v1674, %v1670
    %v1676 = vlaneseq
    %v1677 = vshrl.u32 %v1676, 7
    %v1678 = vsub.s32 %v1629, %v1677
    %v1679 = vrot.slane %v1036, %v1678
    %v1680 = vsel %vm1634, %v1679, %v1675
    %v1681 = vlaneseq
    %v1682 = vshrl.u32 %v1681, 7
    %v1683 = vsub.s32 %v1636, %v1682
    %v1684 = vrot.slane %v1038, %v1683
    %v1685 = vsel %vm1641, %v1684, %v1680
    %v1686 = vlaneseq
    %v1687 = vshrl.u32 %v1686, 7
    %v1688 = vsub.s32 %v1643, %v1687
    %v1689 = vrot.slane %v1040, %v1688
    %v1690 = vsel %vm1648, %v1689, %v1685
    %v1691 = vlaneseq
    %v1692 = vshrl.u32 %v1691, 7
    %v1693 = vsub.s32 %v1650, %v1692
    %v1694 = vrot.slane %v1042, %v1693
    %v1695 = vsel %vm1655, %v1694, %v1690
    %v1696 = vlaneseq
    %v1697 = vshrl.u32 %v1696, 7
    %v1698 = vsub.s32 %v1603, %v1697
    %v1699 = vrot.slane %v1044, %v1698
    %v1700 = vlaneseq
    %v1701 = vshrl.u32 %v1700, 7
    %v1702 = vsub.s32 %v1608, %v1701
    %v1703 = vrot.slane %v1046, %v1702
    %v1704 = vsel %vm1613, %v1703, %v1699
    %v1705 = vlaneseq
    %v1706 = vshrl.u32 %v1705, 7
    %v1707 = vsub.s32 %v1615, %v1706
    %v1708 = vrot.slane %v1048, %v1707
    %v1709 = vsel %vm1620, %v1708, %v1704
    %v1710 = vlaneseq
    %v1711 = vshrl.u32 %v1710, 7
    %v1712 = vsub.s32 %v1622, %v1711
    %v1713 = vrot.slane %v1050, %v1712
    %v1714 = vsel %vm1627, %v1713, %v1709
    %v1715 = vlaneseq
    %v1716 = vshrl.u32 %v1715, 7
    %v1717 = vsub.s32 %v1629, %v1716
    %v1718 = vrot.slane %v1052, %v1717
    %v1719 = vsel %vm1634, %v1718, %v1714
    %v1720 = vlaneseq
    %v1721 = vshrl.u32 %v1720, 7
    %v1722 = vsub.s32 %v1636, %v1721
    %v1723 = vrot.slane %v1054, %v1722
    %v1724 = vsel %vm1641, %v1723, %v1719
    %v1725 = vlaneseq
    %v1726 = vshrl.u32 %v1725, 7
    %v1727 = vsub.s32 %v1643, %v1726
    %v1728 = vrot.slane %v1056, %v1727
    %v1729 = vsel %vm1648, %v1728, %v1724
    %v1730 = vlaneseq
    %v1731 = vshrl.u32 %v1730, 7
    %v1732 = vsub.s32 %v1650, %v1731
    %v1733 = vrot.slane %v1058, %v1732
    %v1734 = vsel %vm1655, %v1733, %v1729
    %v1735 = vlaneseq
    %v1736 = vshrl.u32 %v1735, 7
    %v1737 = vsub.s32 %v1603, %v1736
    %v1738 = vrot.slane %v1060, %v1737
    %v1739 = vlaneseq
    %v1740 = vshrl.u32 %v1739, 7
    %v1741 = vsub.s32 %v1608, %v1740
    %v1742 = vrot.slane %v1062, %v1741
    %v1743 = vsel %vm1613, %v1742, %v1738
    %v1744 = vlaneseq
    %v1745 = vshrl.u32 %v1744, 7
    %v1746 = vsub.s32 %v1615, %v1745
    %v1747 = vrot.slane %v1064, %v1746
    %v1748 = vsel %vm1620, %v1747, %v1743
    %v1749 = vlaneseq
    %v1750 = vshrl.u32 %v1749, 7
    %v1751 = vsub.s32 %v1622, %v1750
    %v1752 = vrot.slane %v1066, %v1751
    %v1753 = vsel %vm1627, %v1752, %v1748
    %v1754 = vlaneseq
    %v1755 = vshrl.u32 %v1754, 7
    %v1756 = vsub.s32 %v1629, %v1755
    %v1757 = vrot.slane %v1068, %v1756
    %v1758 = vsel %vm1634, %v1757, %v1753
    %v1759 = vlaneseq
    %v1760 = vshrl.u32 %v1759, 7
    %v1761 = vsub.s32 %v1636, %v1760
    %v1762 = vrot.slane %v1070, %v1761
    %v1763 = vsel %vm1641, %v1762, %v1758
    %v1764 = vlaneseq
    %v1765 = vshrl.u32 %v1764, 7
    %v1766 = vsub.s32 %v1643, %v1765
    %v1767 = vrot.slane %v1072, %v1766
    %v1768 = vsel %vm1648, %v1767, %v1763
    %v1769 = vlaneseq
    %v1770 = vshrl.u32 %v1769, 7
    %v1771 = vsub.s32 %v1650, %v1770
    %v1772 = vrot.slane %v1074, %v1771
    %v1773 = vsel %vm1655, %v1772, %v1768
    %v1774 = vlaneseq
    %v1775 = vshrl.u32 %v1774, 7
    %v1776 = vsub.s32 %v1603, %v1775
    %v1777 = vrot.slane %v1076, %v1776
    %v1778 = vlaneseq
    %v1779 = vshrl.u32 %v1778, 7
    %v1780 = vsub.s32 %v1608, %v1779
    %v1781 = vrot.slane %v1078, %v1780
    %v1782 = vsel %vm1613, %v1781, %v1777
    %v1783 = vlaneseq
    %v1784 = vshrl.u32 %v1783, 7
    %v1785 = vsub.s32 %v1615, %v1784
    %v1786 = vrot.slane %v1080, %v1785
    %v1787 = vsel %vm1620, %v1786, %v1782
    %v1788 = vlaneseq
    %v1789 = vshrl.u32 %v1788, 7
    %v1790 = vsub.s32 %v1622, %v1789
    %v1791 = vrot.slane %v1082, %v1790
    %v1792 = vsel %vm1627, %v1791, %v1787
    %v1793 = vlaneseq
    %v1794 = vshrl.u32 %v1793, 7
    %v1795 = vsub.s32 %v1629, %v1794
    %v1796 = vrot.slane %v1084, %v1795
    %v1797 = vsel %vm1634, %v1796, %v1792
    %v1798 = vlaneseq
    %v1799 = vshrl.u32 %v1798, 7
    %v1800 = vsub.s32 %v1636, %v1799
    %v1801 = vrot.slane %v1086, %v1800
    %v1802 = vsel %vm1641, %v1801, %v1797
    %v1803 = vlaneseq
    %v1804 = vshrl.u32 %v1803, 7
    %v1805 = vsub.s32 %v1643, %v1804
    %v1806 = vrot.slane %v1088, %v1805
    %v1807 = vsel %vm1648, %v1806, %v1802
    %v1808 = vlaneseq
    %v1809 = vshrl.u32 %v1808, 7
    %v1810 = vsub.s32 %v1650, %v1809
    %v1811 = vrot.slane %v1090, %v1810
    %v1812 = vsel %vm1655, %v1811, %v1807
    %v1813 = vlaneseq
    %v1814 = vshrl.u32 %v1813, 7
    %v1815 = vsub.s32 %v1603, %v1814
    %v1816 = vrot.slane %v1092, %v1815
    %v1817 = vlaneseq
    %v1818 = vshrl.u32 %v1817, 7
    %v1819 = vsub.s32 %v1608, %v1818
    %v1820 = vrot.slane %v1094, %v1819
    %v1821 = vsel %vm1613, %v1820, %v1816
    %v1822 = vlaneseq
    %v1823 = vshrl.u32 %v1822, 7
    %v1824 = vsub.s32 %v1615, %v1823
    %v1825 = vrot.slane %v1096, %v1824
    %v1826 = vsel %vm1620, %v1825, %v1821
    %v1827 = vlaneseq
    %v1828 = vshrl.u32 %v1827, 7
    %v1829 = vsub.s32 %v1622, %v1828
    %v1830 = vrot.slane %v1098, %v1829
    %v1831 = vsel %vm1627, %v1830, %v1826
    %v1832 = vlaneseq
    %v1833 = vshrl.u32 %v1832, 7
    %v1834 = vsub.s32 %v1629, %v1833
    %v1835 = vrot.slane %v1100, %v1834
    %v1836 = vsel %vm1634, %v1835, %v1831
    %v1837 = vlaneseq
    %v1838 = vshrl.u32 %v1837, 7
    %v1839 = vsub.s32 %v1636, %v1838
    %v1840 = vrot.slane %v1102, %v1839
    %v1841 = vsel %vm1641, %v1840, %v1836
    %v1842 = vlaneseq
    %v1843 = vshrl.u32 %v1842, 7
    %v1844 = vsub.s32 %v1643, %v1843
    %v1845 = vrot.slane %v1104, %v1844
    %v1846 = vsel %vm1648, %v1845, %v1841
    %v1847 = vlaneseq
    %v1848 = vshrl.u32 %v1847, 7
    %v1849 = vsub.s32 %v1650, %v1848
    %v1850 = vrot.slane %v1106, %v1849
    %v1851 = vsel %vm1655, %v1850, %v1846
    %v1852 = vlaneseq
    %v1853 = vshrl.u32 %v1852, 7
    %v1854 = vsub.s32 %v1603, %v1853
    %v1855 = vrot.slane %v1108, %v1854
    %v1856 = vlaneseq
    %v1857 = vshrl.u32 %v1856, 7
    %v1858 = vsub.s32 %v1608, %v1857
    %v1859 = vrot.slane %v1110, %v1858
    %v1860 = vsel %vm1613, %v1859, %v1855
    %v1861 = vlaneseq
    %v1862 = vshrl.u32 %v1861, 7
    %v1863 = vsub.s32 %v1615, %v1862
    %v1864 = vrot.slane %v1112, %v1863
    %v1865 = vsel %vm1620, %v1864, %v1860
    %v1866 = vlaneseq
    %v1867 = vshrl.u32 %v1866, 7
    %v1868 = vsub.s32 %v1622, %v1867
    %v1869 = vrot.slane %v1114, %v1868
    %v1870 = vsel %vm1627, %v1869, %v1865
    %v1871 = vlaneseq
    %v1872 = vshrl.u32 %v1871, 7
    %v1873 = vsub.s32 %v1629, %v1872
    %v1874 = vrot.slane %v1116, %v1873
    %v1875 = vsel %vm1634, %v1874, %v1870
    %v1876 = vlaneseq
    %v1877 = vshrl.u32 %v1876, 7
    %v1878 = vsub.s32 %v1636, %v1877
    %v1879 = vrot.slane %v1118, %v1878
    %v1880 = vsel %vm1641, %v1879, %v1875
    %v1881 = vlaneseq
    %v1882 = vshrl.u32 %v1881, 7
    %v1883 = vsub.s32 %v1643, %v1882
    %v1884 = vrot.slane %v1120, %v1883
    %v1885 = vsel %vm1648, %v1884, %v1880
    %v1886 = vlaneseq
    %v1887 = vshrl.u32 %v1886, 7
    %v1888 = vsub.s32 %v1650, %v1887
    %v1889 = vrot.slane %v1122, %v1888
    %v1890 = vsel %vm1655, %v1889, %v1885
    %v1891 = vlaneseq
    %v1892 = vshrl.u32 %v1891, 7
    %v1893 = vsub.s32 %v1603, %v1892
    %v1894 = vrot.slane %v1124, %v1893
    %v1895 = vlaneseq
    %v1896 = vshrl.u32 %v1895, 7
    %v1897 = vsub.s32 %v1608, %v1896
    %v1898 = vrot.slane %v1126, %v1897
    %v1899 = vsel %vm1613, %v1898, %v1894
    %v1900 = vlaneseq
    %v1901 = vshrl.u32 %v1900, 7
    %v1902 = vsub.s32 %v1615, %v1901
    %v1903 = vrot.slane %v1128, %v1902
    %v1904 = vsel %vm1620, %v1903, %v1899
    %v1905 = vlaneseq
    %v1906 = vshrl.u32 %v1905, 7
    %v1907 = vsub.s32 %v1622, %v1906
    %v1908 = vrot.slane %v1130, %v1907
    %v1909 = vsel %vm1627, %v1908, %v1904
    %v1910 = vlaneseq
    %v1911 = vshrl.u32 %v1910, 7
    %v1912 = vsub.s32 %v1629, %v1911
    %v1913 = vrot.slane %v1132, %v1912
    %v1914 = vsel %vm1634, %v1913, %v1909
    %v1915 = vlaneseq
    %v1916 = vshrl.u32 %v1915, 7
    %v1917 = vsub.s32 %v1636, %v1916
    %v1918 = vrot.slane %v1134, %v1917
    %v1919 = vsel %vm1641, %v1918, %v1914
    %v1920 = vlaneseq
    %v1921 = vshrl.u32 %v1920, 7
    %v1922 = vsub.s32 %v1643, %v1921
    %v1923 = vrot.slane %v1136, %v1922
    %v1924 = vsel %vm1648, %v1923, %v1919
    %v1925 = vlaneseq
    %v1926 = vshrl.u32 %v1925, 7
    %v1927 = vsub.s32 %v1650, %v1926
    %v1928 = vrot.slane %v1138, %v1927
    %v1929 = vsel %vm1655, %v1928, %v1924
    %v1930 = vsel %vm464, %v1695, %v1656
    %v1931 = vsel %vm466, %v1734, %v1930
    %v1932 = vsel %vm468, %v1773, %v1931
    %v1933 = vsel %vm470, %v1812, %v1932
    %v1934 = vsel %vm472, %v1851, %v1933
    %v1935 = vsel %vm474, %v1890, %v1934
    %v1936 = vsel %vm476, %v1929, %v1935
    %vm1938 = vcmask 523264
    %v1939 = vsel %vm1938, %v1537, %v1936
    %v1940 = vpack.c.bf16 %v1939, %v1939
    %v1941 = vld [vmem:[%s3] sm:$0xf]
    %v1942 = vld [vmem:[%s3 + $0x4] sm:$0xf]
    %v1943 = vld [vmem:[%s3 + $0x8] sm:$0xf]
    %v1944 = vld [vmem:[%s3 + $0xc] sm:$0xf]
    %v1945 = vld [vmem:[%s3 + $0x10] sm:$0xf]
    %v1946 = vld [vmem:[%s3 + $0x14] sm:$0xf]
    %v1947 = vld [vmem:[%s3 + $0x18] sm:$0xf]
    %v1948 = vld [vmem:[%s3 + $0x1c] sm:$0xf]
    %v1949 = vld [vmem:[%s3 + $0x20] sm:$0xf]
    %v1950 = vld [vmem:[%s3 + $0x24] sm:$0xf]
    %v1951 = vld [vmem:[%s3 + $0x28] sm:$0xf]
    %v1952 = vld [vmem:[%s3 + $0x2c] sm:$0xf]
    %v1953 = vld [vmem:[%s3 + $0x30] sm:$0xf]
    %v1954 = vld [vmem:[%s3 + $0x34] sm:$0xf]
    %v1955 = vld [vmem:[%s3 + $0x38] sm:$0xf]
    %v1956 = vld [vmem:[%s3 + $0x3c] sm:$0xf]
    %v1973 = vunpack.c.l.b16 %v1941
    %v1974 = vunpack.c.l.b16 %v1942
    %v1975 = vunpack.c.l.b16 %v1943
    %v1976 = vunpack.c.l.b16 %v1944
    %v1977 = vunpack.c.l.b16 %v1945
    %v1978 = vunpack.c.l.b16 %v1946
    %v1979 = vunpack.c.l.b16 %v1947
    %v1980 = vunpack.c.l.b16 %v1948
    %v1981 = vunpack.c.l.b16 %v1949
    %v1982 = vunpack.c.l.b16 %v1950
    %v1983 = vunpack.c.l.b16 %v1951
    %v1984 = vunpack.c.l.b16 %v1952
    %v1985 = vunpack.c.l.b16 %v1953
    %v1986 = vunpack.c.l.b16 %v1954
    %v1987 = vunpack.c.l.b16 %v1955
    %v1988 = vunpack.c.l.b16 %v1956
    %v1989 = vpack.c.b16 %v1974, %v1973
    %v1990 = vpack.c.b16 %v1976, %v1975
    %v1991 = vpack.c.b16 %v1978, %v1977
    %v1992 = vpack.c.b16 %v1980, %v1979
    %v1993 = vpack.c.b16 %v1982, %v1981
    %v1994 = vpack.c.b16 %v1984, %v1983
    %v1995 = vpack.c.b16 %v1986, %v1985
    %v1996 = vpack.c.b16 %v1988, %v1987
    %2005 = vmatprep.subr.bf16.mxu0 0
    %2006 = vmatpush1.bf16.msra.mxu0 %v1989
    %2007 = vmatprep.subr.bf16.mxu0 0
    %2008 = vmatpush1.bf16.msra.mxu0 %v1990
    %2009 = vmatprep.subr.bf16.mxu0 0
    %2010 = vmatpush1.bf16.msra.mxu0 %v1991
    %2011 = vmatprep.subr.bf16.mxu0 0
    %2012 = vmatpush1.bf16.msra.mxu0 %v1992
    %2013 = vmatprep.subr.bf16.mxu0 0
    %2014 = vmatpush1.bf16.msra.mxu0 %v1993
    %2015 = vmatprep.subr.bf16.mxu0 0
    %2016 = vmatpush1.bf16.msra.mxu0 %v1994
    %2017 = vmatprep.subr.bf16.mxu0 0
    %2018 = vmatpush1.bf16.msra.mxu0 %v1995
    %2019 = vmatprep.subr.bf16.mxu0 0
    %2020 = vmatpush1.bf16.msra.mxu0 %v1996
    %2021 = vmatprep.subr.bf16.mxu0 0
    %2022 = vmatpush1.bf16.msra.mxu0 0
    %2023 = vmatprep.subr.bf16.mxu0 0
    %2024 = vmatpush1.bf16.msra.mxu0 0
    %2025 = vmatprep.subr.bf16.mxu0 0
    %2026 = vmatpush1.bf16.msra.mxu0 0
    %2027 = vmatprep.subr.bf16.mxu0 0
    %2028 = vmatpush1.bf16.msra.mxu0 0
    %2029 = vmatprep.subr.bf16.mxu0 0
    %2030 = vmatpush1.bf16.msra.mxu0 0
    %2031 = vmatprep.subr.bf16.mxu0 0
    %2032 = vmatpush1.bf16.msra.mxu0 0
    %2033 = vmatprep.subr.bf16.mxu0 0
    %2034 = vmatpush1.bf16.msra.mxu0 0
    %2035 = vmatprep.subr.bf16.mxu0 0
    %2036 = vmatpush1.bf16.msra.mxu0 0
    %2037 = vmatprep.mubr.bf16.mxu0 0
    %2038 = vmatmul.mubr.bf16.gmra.mrb[0].mxu0 %v1940
    %v2039 = vpop.f32.mrb[0].mxu0
    %v2040 = vadd.f32 0.0, %v2039
    %v2041 = vpop.f32.mrb[0].mxu0
    %v2042 = vpop.f32.mrb[0].mxu0
    %v2043 = vpop.f32.mrb[0].mxu0
    %2044 = vdwg.mxu0
    %v2045 = vxor.u32 %v2040, 2147483648
    %v2046 = vmul.f32 %v2045, 1.442695
    %v2047 = vpow.pop %v2046
    %v2048 = vadd.f32 %v2047, 1.0
    %v2049 = vrcp.pop %v2048
    %v2050 = vmul.f32 1.0, %v2049
    %v2051 = vlaneseq
    %v2052 = vshrl.u32 %v2051, 7
    %v2053 = vsub.s32 0, %v2052
    %v2054 = vrot.slane %v2050, %v2053
    %2056 = vbcast.lane.b32.xlu0 %v2054, 256
    %v2057 = vpop.permute.xlu0 %2056
    %s2059 = sor.u32 256, 8
    %2060 = vbcast.lane.b32.xlu0 %v2054, %s2059
    %v2061 = vpop.permute.xlu0 %2060
    %s2063 = sor.u32 256, 16
    %2064 = vbcast.lane.b32.xlu0 %v2054, %s2063
    %v2065 = vpop.permute.xlu0 %2064
    %s2067 = sor.u32 256, 24
    %2068 = vbcast.lane.b32.xlu0 %v2054, %s2067
    %v2069 = vpop.permute.xlu0 %2068
    %s2071 = sor.u32 256, 32
    %2072 = vbcast.lane.b32.xlu0 %v2054, %s2071
    %v2073 = vpop.permute.xlu0 %2072
    %s2075 = sor.u32 256, 40
    %2076 = vbcast.lane.b32.xlu0 %v2054, %s2075
    %v2077 = vpop.permute.xlu0 %2076
    %s2079 = sor.u32 256, 48
    %2080 = vbcast.lane.b32.xlu0 %v2054, %s2079
    %v2081 = vpop.permute.xlu0 %2080
    %s2083 = sor.u32 256, 56
    %2084 = vbcast.lane.b32.xlu0 %v2054, %s2083
    %v2085 = vpop.permute.xlu0 %2084
    %v2086 = vlaneseq
    %v2087 = vshrl.u32 %v2086, 7
    %v2088 = vsub.s32 1, %v2087
    %v2089 = vrot.slane %v2050, %v2088
    %2091 = vbcast.lane.b32.xlu0 %v2089, 256
    %v2092 = vpop.permute.xlu0 %2091
    %s2094 = sor.u32 256, 8
    %2095 = vbcast.lane.b32.xlu0 %v2089, %s2094
    %v2096 = vpop.permute.xlu0 %2095
    %s2098 = sor.u32 256, 16
    %2099 = vbcast.lane.b32.xlu0 %v2089, %s2098
    %v2100 = vpop.permute.xlu0 %2099
    %s2102 = sor.u32 256, 24
    %2103 = vbcast.lane.b32.xlu0 %v2089, %s2102
    %v2104 = vpop.permute.xlu0 %2103
    %s2106 = sor.u32 256, 32
    %2107 = vbcast.lane.b32.xlu0 %v2089, %s2106
    %v2108 = vpop.permute.xlu0 %2107
    %s2110 = sor.u32 256, 40
    %2111 = vbcast.lane.b32.xlu0 %v2089, %s2110
    %v2112 = vpop.permute.xlu0 %2111
    %s2114 = sor.u32 256, 48
    %2115 = vbcast.lane.b32.xlu0 %v2089, %s2114
    %v2116 = vpop.permute.xlu0 %2115
    %s2118 = sor.u32 256, 56
    %2119 = vbcast.lane.b32.xlu0 %v2089, %s2118
    %v2120 = vpop.permute.xlu0 %2119
    %v2121 = vlaneseq
    %v2122 = vshrl.u32 %v2121, 7
    %v2123 = vsub.s32 2, %v2122
    %v2124 = vrot.slane %v2050, %v2123
    %2126 = vbcast.lane.b32.xlu0 %v2124, 256
    %v2127 = vpop.permute.xlu0 %2126
    %s2129 = sor.u32 256, 8
    %2130 = vbcast.lane.b32.xlu0 %v2124, %s2129
    %v2131 = vpop.permute.xlu0 %2130
    %s2133 = sor.u32 256, 16
    %2134 = vbcast.lane.b32.xlu0 %v2124, %s2133
    %v2135 = vpop.permute.xlu0 %2134
    %s2137 = sor.u32 256, 24
    %2138 = vbcast.lane.b32.xlu0 %v2124, %s2137
    %v2139 = vpop.permute.xlu0 %2138
    %s2141 = sor.u32 256, 32
    %2142 = vbcast.lane.b32.xlu0 %v2124, %s2141
    %v2143 = vpop.permute.xlu0 %2142
    %s2145 = sor.u32 256, 40
    %2146 = vbcast.lane.b32.xlu0 %v2124, %s2145
    %v2147 = vpop.permute.xlu0 %2146
    %s2149 = sor.u32 256, 48
    %2150 = vbcast.lane.b32.xlu0 %v2124, %s2149
    %v2151 = vpop.permute.xlu0 %2150
    %s2153 = sor.u32 256, 56
    %2154 = vbcast.lane.b32.xlu0 %v2124, %s2153
    %v2155 = vpop.permute.xlu0 %2154
    %v2156 = vlaneseq
    %v2157 = vshrl.u32 %v2156, 7
    %v2158 = vsub.s32 3, %v2157
    %v2159 = vrot.slane %v2050, %v2158
    %2161 = vbcast.lane.b32.xlu0 %v2159, 256
    %v2162 = vpop.permute.xlu0 %2161
    %s2164 = sor.u32 256, 8
    %2165 = vbcast.lane.b32.xlu0 %v2159, %s2164
    %v2166 = vpop.permute.xlu0 %2165
    %s2168 = sor.u32 256, 16
    %2169 = vbcast.lane.b32.xlu0 %v2159, %s2168
    %v2170 = vpop.permute.xlu0 %2169
    %s2172 = sor.u32 256, 24
    %2173 = vbcast.lane.b32.xlu0 %v2159, %s2172
    %v2174 = vpop.permute.xlu0 %2173
    %s2176 = sor.u32 256, 32
    %2177 = vbcast.lane.b32.xlu0 %v2159, %s2176
    %v2178 = vpop.permute.xlu0 %2177
    %s2180 = sor.u32 256, 40
    %2181 = vbcast.lane.b32.xlu0 %v2159, %s2180
    %v2182 = vpop.permute.xlu0 %2181
    %s2184 = sor.u32 256, 48
    %2185 = vbcast.lane.b32.xlu0 %v2159, %s2184
    %v2186 = vpop.permute.xlu0 %2185
    %s2188 = sor.u32 256, 56
    %2189 = vbcast.lane.b32.xlu0 %v2159, %s2188
    %v2190 = vpop.permute.xlu0 %2189
    %v2191 = vlaneseq
    %v2192 = vshrl.u32 %v2191, 7
    %v2193 = vsub.s32 4, %v2192
    %v2194 = vrot.slane %v2050, %v2193
    %2196 = vbcast.lane.b32.xlu0 %v2194, 256
    %v2197 = vpop.permute.xlu0 %2196
    %s2199 = sor.u32 256, 8
    %2200 = vbcast.lane.b32.xlu0 %v2194, %s2199
    %v2201 = vpop.permute.xlu0 %2200
    %s2203 = sor.u32 256, 16
    %2204 = vbcast.lane.b32.xlu0 %v2194, %s2203
    %v2205 = vpop.permute.xlu0 %2204
    %s2207 = sor.u32 256, 24
    %2208 = vbcast.lane.b32.xlu0 %v2194, %s2207
    %v2209 = vpop.permute.xlu0 %2208
    %s2211 = sor.u32 256, 32
    %2212 = vbcast.lane.b32.xlu0 %v2194, %s2211
    %v2213 = vpop.permute.xlu0 %2212
    %s2215 = sor.u32 256, 40
    %2216 = vbcast.lane.b32.xlu0 %v2194, %s2215
    %v2217 = vpop.permute.xlu0 %2216
    %s2219 = sor.u32 256, 48
    %2220 = vbcast.lane.b32.xlu0 %v2194, %s2219
    %v2221 = vpop.permute.xlu0 %2220
    %s2223 = sor.u32 256, 56
    %2224 = vbcast.lane.b32.xlu0 %v2194, %s2223
    %v2225 = vpop.permute.xlu0 %2224
    %v2226 = vlaneseq
    %v2227 = vshrl.u32 %v2226, 7
    %v2228 = vsub.s32 5, %v2227
    %v2229 = vrot.slane %v2050, %v2228
    %2231 = vbcast.lane.b32.xlu0 %v2229, 256
    %v2232 = vpop.permute.xlu0 %2231
    %s2234 = sor.u32 256, 8
    %2235 = vbcast.lane.b32.xlu0 %v2229, %s2234
    %v2236 = vpop.permute.xlu0 %2235
    %s2238 = sor.u32 256, 16
    %2239 = vbcast.lane.b32.xlu0 %v2229, %s2238
    %v2240 = vpop.permute.xlu0 %2239
    %s2242 = sor.u32 256, 24
    %2243 = vbcast.lane.b32.xlu0 %v2229, %s2242
    %v2244 = vpop.permute.xlu0 %2243
    %s2246 = sor.u32 256, 32
    %2247 = vbcast.lane.b32.xlu0 %v2229, %s2246
    %v2248 = vpop.permute.xlu0 %2247
    %s2250 = sor.u32 256, 40
    %2251 = vbcast.lane.b32.xlu0 %v2229, %s2250
    %v2252 = vpop.permute.xlu0 %2251
    %s2254 = sor.u32 256, 48
    %2255 = vbcast.lane.b32.xlu0 %v2229, %s2254
    %v2256 = vpop.permute.xlu0 %2255
    %s2258 = sor.u32 256, 56
    %2259 = vbcast.lane.b32.xlu0 %v2229, %s2258
    %v2260 = vpop.permute.xlu0 %2259
    %v2261 = vlaneseq
    %v2262 = vshrl.u32 %v2261, 7
    %v2263 = vsub.s32 6, %v2262
    %v2264 = vrot.slane %v2050, %v2263
    %2266 = vbcast.lane.b32.xlu0 %v2264, 256
    %v2267 = vpop.permute.xlu0 %2266
    %s2269 = sor.u32 256, 8
    %2270 = vbcast.lane.b32.xlu0 %v2264, %s2269
    %v2271 = vpop.permute.xlu0 %2270
    %s2273 = sor.u32 256, 16
    %2274 = vbcast.lane.b32.xlu0 %v2264, %s2273
    %v2275 = vpop.permute.xlu0 %2274
    %s2277 = sor.u32 256, 24
    %2278 = vbcast.lane.b32.xlu0 %v2264, %s2277
    %v2279 = vpop.permute.xlu0 %2278
    %s2281 = sor.u32 256, 32
    %2282 = vbcast.lane.b32.xlu0 %v2264, %s2281
    %v2283 = vpop.permute.xlu0 %2282
    %s2285 = sor.u32 256, 40
    %2286 = vbcast.lane.b32.xlu0 %v2264, %s2285
    %v2287 = vpop.permute.xlu0 %2286
    %s2289 = sor.u32 256, 48
    %2290 = vbcast.lane.b32.xlu0 %v2264, %s2289
    %v2291 = vpop.permute.xlu0 %2290
    %s2293 = sor.u32 256, 56
    %2294 = vbcast.lane.b32.xlu0 %v2264, %s2293
    %v2295 = vpop.permute.xlu0 %2294
    %v2296 = vlaneseq
    %v2297 = vshrl.u32 %v2296, 7
    %v2298 = vsub.s32 7, %v2297
    %v2299 = vrot.slane %v2050, %v2298
    %2301 = vbcast.lane.b32.xlu0 %v2299, 256
    %v2302 = vpop.permute.xlu0 %2301
    %s2304 = sor.u32 256, 8
    %2305 = vbcast.lane.b32.xlu0 %v2299, %s2304
    %v2306 = vpop.permute.xlu0 %2305
    %s2308 = sor.u32 256, 16
    %2309 = vbcast.lane.b32.xlu0 %v2299, %s2308
    %v2310 = vpop.permute.xlu0 %2309
    %s2312 = sor.u32 256, 24
    %2313 = vbcast.lane.b32.xlu0 %v2299, %s2312
    %v2314 = vpop.permute.xlu0 %2313
    %s2316 = sor.u32 256, 32
    %2317 = vbcast.lane.b32.xlu0 %v2299, %s2316
    %v2318 = vpop.permute.xlu0 %2317
    %s2320 = sor.u32 256, 40
    %2321 = vbcast.lane.b32.xlu0 %v2299, %s2320
    %v2322 = vpop.permute.xlu0 %2321
    %s2324 = sor.u32 256, 48
    %2325 = vbcast.lane.b32.xlu0 %v2299, %s2324
    %v2326 = vpop.permute.xlu0 %2325
    %s2328 = sor.u32 256, 56
    %2329 = vbcast.lane.b32.xlu0 %v2299, %s2328
    %v2330 = vpop.permute.xlu0 %2329
    %v2331 = vmul.f32 %v754, %v2057
    %v2332 = vmul.f32 %v755, %v2061
    %v2333 = vmul.f32 %v756, %v2065
    %v2334 = vmul.f32 %v757, %v2069
    %v2335 = vmul.f32 %v758, %v2073
    %v2336 = vmul.f32 %v759, %v2077
    %v2337 = vmul.f32 %v760, %v2081
    %v2338 = vmul.f32 %v761, %v2085
    %v2339 = vmul.f32 %v762, %v2092
    %v2340 = vmul.f32 %v763, %v2096
    %v2341 = vmul.f32 %v764, %v2100
    %v2342 = vmul.f32 %v765, %v2104
    %v2343 = vmul.f32 %v766, %v2108
    %v2344 = vmul.f32 %v767, %v2112
    %v2345 = vmul.f32 %v768, %v2116
    %v2346 = vmul.f32 %v769, %v2120
    %v2347 = vmul.f32 %v770, %v2127
    %v2348 = vmul.f32 %v771, %v2131
    %v2349 = vmul.f32 %v772, %v2135
    %v2350 = vmul.f32 %v773, %v2139
    %v2351 = vmul.f32 %v774, %v2143
    %v2352 = vmul.f32 %v775, %v2147
    %v2353 = vmul.f32 %v776, %v2151
    %v2354 = vmul.f32 %v777, %v2155
    %v2355 = vmul.f32 %v778, %v2162
    %v2356 = vmul.f32 %v779, %v2166
    %v2357 = vmul.f32 %v780, %v2170
    %v2358 = vmul.f32 %v781, %v2174
    %v2359 = vmul.f32 %v782, %v2178
    %v2360 = vmul.f32 %v783, %v2182
    %v2361 = vmul.f32 %v784, %v2186
    %v2362 = vmul.f32 %v785, %v2190
    %v2363 = vmul.f32 %v786, %v2197
    %v2364 = vmul.f32 %v787, %v2201
    %v2365 = vmul.f32 %v788, %v2205
    %v2366 = vmul.f32 %v789, %v2209
    %v2367 = vmul.f32 %v790, %v2213
    %v2368 = vmul.f32 %v791, %v2217
    %v2369 = vmul.f32 %v792, %v2221
    %v2370 = vmul.f32 %v793, %v2225
    %v2371 = vmul.f32 %v794, %v2232
    %v2372 = vmul.f32 %v795, %v2236
    %v2373 = vmul.f32 %v796, %v2240
    %v2374 = vmul.f32 %v797, %v2244
    %v2375 = vmul.f32 %v798, %v2248
    %v2376 = vmul.f32 %v799, %v2252
    %v2377 = vmul.f32 %v800, %v2256
    %v2378 = vmul.f32 %v801, %v2260
    %v2379 = vmul.f32 %v802, %v2267
    %v2380 = vmul.f32 %v803, %v2271
    %v2381 = vmul.f32 %v804, %v2275
    %v2382 = vmul.f32 %v805, %v2279
    %v2383 = vmul.f32 %v806, %v2283
    %v2384 = vmul.f32 %v807, %v2287
    %v2385 = vmul.f32 %v808, %v2291
    %v2386 = vmul.f32 %v809, %v2295
    %v2387 = vmul.f32 %v810, %v2302
    %v2388 = vmul.f32 %v811, %v2306
    %v2389 = vmul.f32 %v812, %v2310
    %v2390 = vmul.f32 %v813, %v2314
    %v2391 = vmul.f32 %v814, %v2318
    %v2392 = vmul.f32 %v815, %v2322
    %v2393 = vmul.f32 %v816, %v2326
    %v2394 = vmul.f32 %v817, %v2330
    %v2395 = vadd.f32 %v2331, %v2332
    %v2396 = vadd.f32 %v2395, %v2333
    %v2397 = vadd.f32 %v2396, %v2334
    %v2398 = vadd.f32 %v2397, %v2335
    %v2399 = vadd.f32 %v2398, %v2336
    %v2400 = vadd.f32 %v2399, %v2337
    %v2401 = vadd.f32 %v2400, %v2338
    %v2402 = vrot.slane %v2401, 4
    %v2403 = vadd.f32 %v2401, %v2402
    %v2404 = vrot.slane %v2403, 2
    %v2405 = vadd.f32 %v2403, %v2404
    %v2406 = vrot.slane %v2405, 1
    %v2407 = vadd.f32 %v2405, %v2406
    %v2408 = vadd.f32 %v2339, %v2340
    %v2409 = vadd.f32 %v2408, %v2341
    %v2410 = vadd.f32 %v2409, %v2342
    %v2411 = vadd.f32 %v2410, %v2343
    %v2412 = vadd.f32 %v2411, %v2344
    %v2413 = vadd.f32 %v2412, %v2345
    %v2414 = vadd.f32 %v2413, %v2346
    %v2415 = vrot.slane %v2414, 4
    %v2416 = vadd.f32 %v2414, %v2415
    %v2417 = vrot.slane %v2416, 2
    %v2418 = vadd.f32 %v2416, %v2417
    %v2419 = vrot.slane %v2418, 1
    %v2420 = vadd.f32 %v2418, %v2419
    %v2421 = vadd.f32 %v2347, %v2348
    %v2422 = vadd.f32 %v2421, %v2349
    %v2423 = vadd.f32 %v2422, %v2350
    %v2424 = vadd.f32 %v2423, %v2351
    %v2425 = vadd.f32 %v2424, %v2352
    %v2426 = vadd.f32 %v2425, %v2353
    %v2427 = vadd.f32 %v2426, %v2354
    %v2428 = vrot.slane %v2427, 4
    %v2429 = vadd.f32 %v2427, %v2428
    %v2430 = vrot.slane %v2429, 2
    %v2431 = vadd.f32 %v2429, %v2430
    %v2432 = vrot.slane %v2431, 1
    %v2433 = vadd.f32 %v2431, %v2432
    %v2434 = vadd.f32 %v2355, %v2356
    %v2435 = vadd.f32 %v2434, %v2357
    %v2436 = vadd.f32 %v2435, %v2358
    %v2437 = vadd.f32 %v2436, %v2359
    %v2438 = vadd.f32 %v2437, %v2360
    %v2439 = vadd.f32 %v2438, %v2361
    %v2440 = vadd.f32 %v2439, %v2362
    %v2441 = vrot.slane %v2440, 4
    %v2442 = vadd.f32 %v2440, %v2441
    %v2443 = vrot.slane %v2442, 2
    %v2444 = vadd.f32 %v2442, %v2443
    %v2445 = vrot.slane %v2444, 1
    %v2446 = vadd.f32 %v2444, %v2445
    %v2447 = vadd.f32 %v2363, %v2364
    %v2448 = vadd.f32 %v2447, %v2365
    %v2449 = vadd.f32 %v2448, %v2366
    %v2450 = vadd.f32 %v2449, %v2367
    %v2451 = vadd.f32 %v2450, %v2368
    %v2452 = vadd.f32 %v2451, %v2369
    %v2453 = vadd.f32 %v2452, %v2370
    %v2454 = vrot.slane %v2453, 4
    %v2455 = vadd.f32 %v2453, %v2454
    %v2456 = vrot.slane %v2455, 2
    %v2457 = vadd.f32 %v2455, %v2456
    %v2458 = vrot.slane %v2457, 1
    %v2459 = vadd.f32 %v2457, %v2458
    %v2460 = vadd.f32 %v2371, %v2372
    %v2461 = vadd.f32 %v2460, %v2373
    %v2462 = vadd.f32 %v2461, %v2374
    %v2463 = vadd.f32 %v2462, %v2375
    %v2464 = vadd.f32 %v2463, %v2376
    %v2465 = vadd.f32 %v2464, %v2377
    %v2466 = vadd.f32 %v2465, %v2378
    %v2467 = vrot.slane %v2466, 4
    %v2468 = vadd.f32 %v2466, %v2467
    %v2469 = vrot.slane %v2468, 2
    %v2470 = vadd.f32 %v2468, %v2469
    %v2471 = vrot.slane %v2470, 1
    %v2472 = vadd.f32 %v2470, %v2471
    %v2473 = vadd.f32 %v2379, %v2380
    %v2474 = vadd.f32 %v2473, %v2381
    %v2475 = vadd.f32 %v2474, %v2382
    %v2476 = vadd.f32 %v2475, %v2383
    %v2477 = vadd.f32 %v2476, %v2384
    %v2478 = vadd.f32 %v2477, %v2385
    %v2479 = vadd.f32 %v2478, %v2386
    %v2480 = vrot.slane %v2479, 4
    %v2481 = vadd.f32 %v2479, %v2480
    %v2482 = vrot.slane %v2481, 2
    %v2483 = vadd.f32 %v2481, %v2482
    %v2484 = vrot.slane %v2483, 1
    %v2485 = vadd.f32 %v2483, %v2484
    %v2486 = vadd.f32 %v2387, %v2388
    %v2487 = vadd.f32 %v2486, %v2389
    %v2488 = vadd.f32 %v2487, %v2390
    %v2489 = vadd.f32 %v2488, %v2391
    %v2490 = vadd.f32 %v2489, %v2392
    %v2491 = vadd.f32 %v2490, %v2393
    %v2492 = vadd.f32 %v2491, %v2394
    %v2493 = vrot.slane %v2492, 4
    %v2494 = vadd.f32 %v2492, %v2493
    %v2495 = vrot.slane %v2494, 2
    %v2496 = vadd.f32 %v2494, %v2495
    %v2497 = vrot.slane %v2496, 1
    %v2498 = vadd.f32 %v2496, %v2497
    %v2499 = vmul.f32 %v2407, %v343
    %v2500 = vmul.f32 %v2420, %v343
    %v2501 = vmul.f32 %v2433, %v343
    %v2502 = vmul.f32 %v2446, %v343
    %v2503 = vmul.f32 %v2459, %v343
    %v2504 = vmul.f32 %v2472, %v343
    %v2505 = vmul.f32 %v2485, %v343
    %v2506 = vmul.f32 %v2498, %v343
    %v2507 = vpack.c.bf16 %v2499, %v2499
    %v2508 = vpack.c.bf16 %v2500, %v2500
    %v2509 = vpack.c.bf16 %v2501, %v2501
    %v2510 = vpack.c.bf16 %v2502, %v2502
    %v2511 = vpack.c.bf16 %v2503, %v2503
    %v2512 = vpack.c.bf16 %v2504, %v2504
    %v2513 = vpack.c.bf16 %v2505, %v2505
    %v2514 = vpack.c.bf16 %v2506, %v2506
    %v2515 = vld [vmem:[#allocation5] sm:$0xff]
    %v2516 = vld [vmem:[#allocation5 + $0x8] sm:$0xff]
    %v2517 = vld [vmem:[#allocation5 + $0x10] sm:$0xff]
    %v2518 = vld [vmem:[#allocation5 + $0x18] sm:$0xff]
    %v2519 = vld [vmem:[#allocation5 + $0x20] sm:$0xff]
    %v2520 = vld [vmem:[#allocation5 + $0x28] sm:$0xff]
    %v2521 = vld [vmem:[#allocation5 + $0x30] sm:$0xff]
    %v2522 = vld [vmem:[#allocation5 + $0x38] sm:$0xff]
    %v2523 = vld [vmem:[#allocation5 + $0x40] sm:$0xff]
    %v2524 = vld [vmem:[#allocation5 + $0x48] sm:$0xff]
    %v2525 = vld [vmem:[#allocation5 + $0x50] sm:$0xff]
    %v2526 = vld [vmem:[#allocation5 + $0x58] sm:$0xff]
    %v2527 = vld [vmem:[#allocation5 + $0x60] sm:$0xff]
    %v2528 = vld [vmem:[#allocation5 + $0x68] sm:$0xff]
    %v2529 = vld [vmem:[#allocation5 + $0x70] sm:$0xff]
    %v2530 = vld [vmem:[#allocation5 + $0x78] sm:$0xff]
    %v2531 = vld [vmem:[#allocation5 + $0x80] sm:$0xff]
    %v2532 = vld [vmem:[#allocation5 + $0x88] sm:$0xff]
    %v2533 = vld [vmem:[#allocation5 + $0x90] sm:$0xff]
    %v2534 = vld [vmem:[#allocation5 + $0x98] sm:$0xff]
    %v2535 = vld [vmem:[#allocation5 + $0xa0] sm:$0xff]
    %v2536 = vld [vmem:[#allocation5 + $0xa8] sm:$0xff]
    %v2537 = vld [vmem:[#allocation5 + $0xb0] sm:$0xff]
    %v2538 = vld [vmem:[#allocation5 + $0xb8] sm:$0xff]
    %v2539 = vld [vmem:[#allocation5 + $0xc0] sm:$0xff]
    %v2540 = vld [vmem:[#allocation5 + $0xc8] sm:$0xff]
    %v2541 = vld [vmem:[#allocation5 + $0xd0] sm:$0xff]
    %v2542 = vld [vmem:[#allocation5 + $0xd8] sm:$0xff]
    %v2543 = vld [vmem:[#allocation5 + $0xe0] sm:$0xff]
    %v2544 = vld [vmem:[#allocation5 + $0xe8] sm:$0xff]
    %v2545 = vld [vmem:[#allocation5 + $0xf0] sm:$0xff]
    %v2546 = vld [vmem:[#allocation5 + $0xf8] sm:$0xff]
    %v2547 = vld [vmem:[#allocation5 + $0x100] sm:$0xff]
    %v2548 = vld [vmem:[#allocation5 + $0x108] sm:$0xff]
    %v2549 = vld [vmem:[#allocation5 + $0x110] sm:$0xff]
    %v2550 = vld [vmem:[#allocation5 + $0x118] sm:$0xff]
    %v2551 = vld [vmem:[#allocation5 + $0x120] sm:$0xff]
    %v2552 = vld [vmem:[#allocation5 + $0x128] sm:$0xff]
    %v2553 = vld [vmem:[#allocation5 + $0x130] sm:$0xff]
    %v2554 = vld [vmem:[#allocation5 + $0x138] sm:$0xff]
    %v2555 = vld [vmem:[#allocation5 + $0x140] sm:$0xff]
    %v2556 = vld [vmem:[#allocation5 + $0x148] sm:$0xff]
    %v2557 = vld [vmem:[#allocation5 + $0x150] sm:$0xff]
    %v2558 = vld [vmem:[#allocation5 + $0x158] sm:$0xff]
    %v2559 = vld [vmem:[#allocation5 + $0x160] sm:$0xff]
    %v2560 = vld [vmem:[#allocation5 + $0x168] sm:$0xff]
    %v2561 = vld [vmem:[#allocation5 + $0x170] sm:$0xff]
    %v2562 = vld [vmem:[#allocation5 + $0x178] sm:$0xff]
    %v2563 = vld [vmem:[#allocation5 + $0x180] sm:$0xff]
    %v2564 = vld [vmem:[#allocation5 + $0x188] sm:$0xff]
    %v2565 = vld [vmem:[#allocation5 + $0x190] sm:$0xff]
    %v2566 = vld [vmem:[#allocation5 + $0x198] sm:$0xff]
    %v2567 = vld [vmem:[#allocation5 + $0x1a0] sm:$0xff]
    %v2568 = vld [vmem:[#allocation5 + $0x1a8] sm:$0xff]
    %v2569 = vld [vmem:[#allocation5 + $0x1b0] sm:$0xff]
    %v2570 = vld [vmem:[#allocation5 + $0x1b8] sm:$0xff]
    %v2571 = vld [vmem:[#allocation5 + $0x1c0] sm:$0xff]
    %v2572 = vld [vmem:[#allocation5 + $0x1c8] sm:$0xff]
    %v2573 = vld [vmem:[#allocation5 + $0x1d0] sm:$0xff]
    %v2574 = vld [vmem:[#allocation5 + $0x1d8] sm:$0xff]
    %v2575 = vld [vmem:[#allocation5 + $0x1e0] sm:$0xff]
    %v2576 = vld [vmem:[#allocation5 + $0x1e8] sm:$0xff]
    %v2577 = vld [vmem:[#allocation5 + $0x1f0] sm:$0xff]
    %v2578 = vld [vmem:[#allocation5 + $0x1f8] sm:$0xff]
    %v2579 = vld [vmem:[#allocation5 + $0x200] sm:$0xff]
    %v2580 = vld [vmem:[#allocation5 + $0x208] sm:$0xff]
    %v2581 = vld [vmem:[#allocation5 + $0x210] sm:$0xff]
    %v2582 = vld [vmem:[#allocation5 + $0x218] sm:$0xff]
    %v2583 = vld [vmem:[#allocation5 + $0x220] sm:$0xff]
    %v2584 = vld [vmem:[#allocation5 + $0x228] sm:$0xff]
    %v2585 = vld [vmem:[#allocation5 + $0x230] sm:$0xff]
    %v2586 = vld [vmem:[#allocation5 + $0x238] sm:$0xff]
    %v2587 = vld [vmem:[#allocation5 + $0x240] sm:$0xff]
    %v2588 = vld [vmem:[#allocation5 + $0x248] sm:$0xff]
    %v2589 = vld [vmem:[#allocation5 + $0x250] sm:$0xff]
    %v2590 = vld [vmem:[#allocation5 + $0x258] sm:$0xff]
    %v2591 = vld [vmem:[#allocation5 + $0x260] sm:$0xff]
    %v2592 = vld [vmem:[#allocation5 + $0x268] sm:$0xff]
    %v2593 = vld [vmem:[#allocation5 + $0x270] sm:$0xff]
    %v2594 = vld [vmem:[#allocation5 + $0x278] sm:$0xff]
    %v2595 = vld [vmem:[#allocation5 + $0x280] sm:$0xff]
    %v2596 = vld [vmem:[#allocation5 + $0x288] sm:$0xff]
    %v2597 = vld [vmem:[#allocation5 + $0x290] sm:$0xff]
    %v2598 = vld [vmem:[#allocation5 + $0x298] sm:$0xff]
    %v2599 = vld [vmem:[#allocation5 + $0x2a0] sm:$0xff]
    %v2600 = vld [vmem:[#allocation5 + $0x2a8] sm:$0xff]
    %v2601 = vld [vmem:[#allocation5 + $0x2b0] sm:$0xff]
    %v2602 = vld [vmem:[#allocation5 + $0x2b8] sm:$0xff]
    %v2603 = vld [vmem:[#allocation5 + $0x2c0] sm:$0xff]
    %v2604 = vld [vmem:[#allocation5 + $0x2c8] sm:$0xff]
    %v2605 = vld [vmem:[#allocation5 + $0x2d0] sm:$0xff]
    %v2606 = vld [vmem:[#allocation5 + $0x2d8] sm:$0xff]
    %v2607 = vld [vmem:[#allocation5 + $0x2e0] sm:$0xff]
    %v2608 = vld [vmem:[#allocation5 + $0x2e8] sm:$0xff]
    %v2609 = vld [vmem:[#allocation5 + $0x2f0] sm:$0xff]
    %v2610 = vld [vmem:[#allocation5 + $0x2f8] sm:$0xff]
    %v2611 = vld [vmem:[#allocation5 + $0x300] sm:$0xff]
    %v2612 = vld [vmem:[#allocation5 + $0x308] sm:$0xff]
    %v2613 = vld [vmem:[#allocation5 + $0x310] sm:$0xff]
    %v2614 = vld [vmem:[#allocation5 + $0x318] sm:$0xff]
    %v2615 = vld [vmem:[#allocation5 + $0x320] sm:$0xff]
    %v2616 = vld [vmem:[#allocation5 + $0x328] sm:$0xff]
    %v2617 = vld [vmem:[#allocation5 + $0x330] sm:$0xff]
    %v2618 = vld [vmem:[#allocation5 + $0x338] sm:$0xff]
    %v2619 = vld [vmem:[#allocation5 + $0x340] sm:$0xff]
    %v2620 = vld [vmem:[#allocation5 + $0x348] sm:$0xff]
    %v2621 = vld [vmem:[#allocation5 + $0x350] sm:$0xff]
    %v2622 = vld [vmem:[#allocation5 + $0x358] sm:$0xff]
    %v2623 = vld [vmem:[#allocation5 + $0x360] sm:$0xff]
    %v2624 = vld [vmem:[#allocation5 + $0x368] sm:$0xff]
    %v2625 = vld [vmem:[#allocation5 + $0x370] sm:$0xff]
    %v2626 = vld [vmem:[#allocation5 + $0x378] sm:$0xff]
    %v2627 = vld [vmem:[#allocation5 + $0x380] sm:$0xff]
    %v2628 = vld [vmem:[#allocation5 + $0x388] sm:$0xff]
    %v2629 = vld [vmem:[#allocation5 + $0x390] sm:$0xff]
    %v2630 = vld [vmem:[#allocation5 + $0x398] sm:$0xff]
    %v2631 = vld [vmem:[#allocation5 + $0x3a0] sm:$0xff]
    %v2632 = vld [vmem:[#allocation5 + $0x3a8] sm:$0xff]
    %v2633 = vld [vmem:[#allocation5 + $0x3b0] sm:$0xff]
    %v2634 = vld [vmem:[#allocation5 + $0x3b8] sm:$0xff]
    %v2635 = vld [vmem:[#allocation5 + $0x3c0] sm:$0xff]
    %v2636 = vld [vmem:[#allocation5 + $0x3c8] sm:$0xff]
    %v2637 = vld [vmem:[#allocation5 + $0x3d0] sm:$0xff]
    %v2638 = vld [vmem:[#allocation5 + $0x3d8] sm:$0xff]
    %v2639 = vld [vmem:[#allocation5 + $0x3e0] sm:$0xff]
    %v2640 = vld [vmem:[#allocation5 + $0x3e8] sm:$0xff]
    %v2641 = vld [vmem:[#allocation5 + $0x3f0] sm:$0xff]
    %v2642 = vld [vmem:[#allocation5 + $0x3f8] sm:$0xff]
    %v2643 = vld [vmem:[%s5] sm:$0xff]
    %v2644 = vld [vmem:[%s5 + $0x8] sm:$0xff]
    %v2647 = vlaneseq
    %v2648 = vshrl.u32 %v2647, 7
    %v2649 = vsub.s32 0, %v2648
    %v2650 = vrot.slane %v2643, %v2649
    %v2651 = vlaneseq
    %v2652 = vshrl.u32 %v2651, 7
    %v2653 = vsub.s32 1, %v2652
    %v2654 = vrot.slane %v2643, %v2653
    %v2655 = vlaneseq
    %v2656 = vshrl.u32 %v2655, 7
    %v2657 = vsub.s32 2, %v2656
    %v2658 = vrot.slane %v2643, %v2657
    %v2659 = vlaneseq
    %v2660 = vshrl.u32 %v2659, 7
    %v2661 = vsub.s32 3, %v2660
    %v2662 = vrot.slane %v2643, %v2661
    %v2663 = vlaneseq
    %v2664 = vshrl.u32 %v2663, 7
    %v2665 = vsub.s32 4, %v2664
    %v2666 = vrot.slane %v2643, %v2665
    %v2667 = vlaneseq
    %v2668 = vshrl.u32 %v2667, 7
    %v2669 = vsub.s32 5, %v2668
    %v2670 = vrot.slane %v2643, %v2669
    %v2671 = vlaneseq
    %v2672 = vshrl.u32 %v2671, 7
    %v2673 = vsub.s32 6, %v2672
    %v2674 = vrot.slane %v2643, %v2673
    %v2675 = vlaneseq
    %v2676 = vshrl.u32 %v2675, 7
    %v2677 = vsub.s32 7, %v2676
    %v2678 = vrot.slane %v2643, %v2677
    %v2679 = vlaneseq
    %v2680 = vshrl.u32 %v2679, 7
    %v2681 = vsub.s32 0, %v2680
    %v2682 = vrot.slane %v2644, %v2681
    %v2683 = vlaneseq
    %v2684 = vshrl.u32 %v2683, 7
    %v2685 = vsub.s32 1, %v2684
    %v2686 = vrot.slane %v2644, %v2685
    %v2687 = vlaneseq
    %v2688 = vshrl.u32 %v2687, 7
    %v2689 = vsub.s32 2, %v2688
    %v2690 = vrot.slane %v2644, %v2689
    %v2691 = vlaneseq
    %v2692 = vshrl.u32 %v2691, 7
    %v2693 = vsub.s32 3, %v2692
    %v2694 = vrot.slane %v2644, %v2693
    %v2695 = vlaneseq
    %v2696 = vshrl.u32 %v2695, 7
    %v2697 = vsub.s32 4, %v2696
    %v2698 = vrot.slane %v2644, %v2697
    %v2699 = vlaneseq
    %v2700 = vshrl.u32 %v2699, 7
    %v2701 = vsub.s32 5, %v2700
    %v2702 = vrot.slane %v2644, %v2701
    %v2703 = vlaneseq
    %v2704 = vshrl.u32 %v2703, 7
    %v2705 = vsub.s32 6, %v2704
    %v2706 = vrot.slane %v2644, %v2705
    %v2707 = vlaneseq
    %v2708 = vshrl.u32 %v2707, 7
    %v2709 = vsub.s32 7, %v2708
    %v2710 = vrot.slane %v2644, %v2709
    %v2735 = vunpack.c.l.b16 %v2507
    %v2736 = vunpack.c.l.b16 %v2508
    %v2737 = vunpack.c.l.b16 %v2509
    %v2738 = vunpack.c.l.b16 %v2510
    %v2739 = vunpack.c.l.b16 %v2511
    %v2740 = vunpack.c.l.b16 %v2512
    %v2741 = vunpack.c.l.b16 %v2513
    %v2742 = vunpack.c.l.b16 %v2514
    %v2743 = vsel %vm464, %v2736, %v2735
    %v2744 = vsel %vm466, %v2737, %v2743
    %v2745 = vsel %vm468, %v2738, %v2744
    %v2746 = vsel %vm470, %v2739, %v2745
    %v2747 = vsel %vm472, %v2740, %v2746
    %v2748 = vsel %vm474, %v2741, %v2747
    %v2749 = vsel %vm476, %v2742, %v2748
    %v2750 = vpack.c.b16 %v2749, %v2749
    %v2880 = vunpack.c.l.b16 %v2515
    %v2881 = vunpack.c.h.b16 %v2515
    %v2882 = vunpack.c.l.b16 %v2516
    %v2883 = vunpack.c.h.b16 %v2516
    %v2884 = vunpack.c.l.b16 %v2517
    %v2885 = vunpack.c.h.b16 %v2517
    %v2886 = vunpack.c.l.b16 %v2518
    %v2887 = vunpack.c.h.b16 %v2518
    %v2888 = vunpack.c.l.b16 %v2519
    %v2889 = vunpack.c.h.b16 %v2519
    %v2890 = vunpack.c.l.b16 %v2520
    %v2891 = vunpack.c.h.b16 %v2520
    %v2892 = vunpack.c.l.b16 %v2521
    %v2893 = vunpack.c.h.b16 %v2521
    %v2894 = vunpack.c.l.b16 %v2522
    %v2895 = vunpack.c.h.b16 %v2522
    %v2896 = vunpack.c.l.b16 %v2523
    %v2897 = vunpack.c.h.b16 %v2523
    %v2898 = vunpack.c.l.b16 %v2524
    %v2899 = vunpack.c.h.b16 %v2524
    %v2900 = vunpack.c.l.b16 %v2525
    %v2901 = vunpack.c.h.b16 %v2525
    %v2902 = vunpack.c.l.b16 %v2526
    %v2903 = vunpack.c.h.b16 %v2526
    %v2904 = vunpack.c.l.b16 %v2527
    %v2905 = vunpack.c.h.b16 %v2527
    %v2906 = vunpack.c.l.b16 %v2528
    %v2907 = vunpack.c.h.b16 %v2528
    %v2908 = vunpack.c.l.b16 %v2529
    %v2909 = vunpack.c.h.b16 %v2529
    %v2910 = vunpack.c.l.b16 %v2530
    %v2911 = vunpack.c.h.b16 %v2530
    %v2912 = vunpack.c.l.b16 %v2531
    %v2913 = vunpack.c.h.b16 %v2531
    %v2914 = vunpack.c.l.b16 %v2532
    %v2915 = vunpack.c.h.b16 %v2532
    %v2916 = vunpack.c.l.b16 %v2533
    %v2917 = vunpack.c.h.b16 %v2533
    %v2918 = vunpack.c.l.b16 %v2534
    %v2919 = vunpack.c.h.b16 %v2534
    %v2920 = vunpack.c.l.b16 %v2535
    %v2921 = vunpack.c.h.b16 %v2535
    %v2922 = vunpack.c.l.b16 %v2536
    %v2923 = vunpack.c.h.b16 %v2536
    %v2924 = vunpack.c.l.b16 %v2537
    %v2925 = vunpack.c.h.b16 %v2537
    %v2926 = vunpack.c.l.b16 %v2538
    %v2927 = vunpack.c.h.b16 %v2538
    %v2928 = vunpack.c.l.b16 %v2539
    %v2929 = vunpack.c.h.b16 %v2539
    %v2930 = vunpack.c.l.b16 %v2540
    %v2931 = vunpack.c.h.b16 %v2540
    %v2932 = vunpack.c.l.b16 %v2541
    %v2933 = vunpack.c.h.b16 %v2541
    %v2934 = vunpack.c.l.b16 %v2542
    %v2935 = vunpack.c.h.b16 %v2542
    %v2936 = vunpack.c.l.b16 %v2543
    %v2937 = vunpack.c.h.b16 %v2543
    %v2938 = vunpack.c.l.b16 %v2544
    %v2939 = vunpack.c.h.b16 %v2544
    %v2940 = vunpack.c.l.b16 %v2545
    %v2941 = vunpack.c.h.b16 %v2545
    %v2942 = vunpack.c.l.b16 %v2546
    %v2943 = vunpack.c.h.b16 %v2546
    %v2944 = vunpack.c.l.b16 %v2547
    %v2945 = vunpack.c.h.b16 %v2547
    %v2946 = vunpack.c.l.b16 %v2548
    %v2947 = vunpack.c.h.b16 %v2548
    %v2948 = vunpack.c.l.b16 %v2549
    %v2949 = vunpack.c.h.b16 %v2549
    %v2950 = vunpack.c.l.b16 %v2550
    %v2951 = vunpack.c.h.b16 %v2550
    %v2952 = vunpack.c.l.b16 %v2551
    %v2953 = vunpack.c.h.b16 %v2551
    %v2954 = vunpack.c.l.b16 %v2552
    %v2955 = vunpack.c.h.b16 %v2552
    %v2956 = vunpack.c.l.b16 %v2553
    %v2957 = vunpack.c.h.b16 %v2553
    %v2958 = vunpack.c.l.b16 %v2554
    %v2959 = vunpack.c.h.b16 %v2554
    %v2960 = vunpack.c.l.b16 %v2555
    %v2961 = vunpack.c.h.b16 %v2555
    %v2962 = vunpack.c.l.b16 %v2556
    %v2963 = vunpack.c.h.b16 %v2556
    %v2964 = vunpack.c.l.b16 %v2557
    %v2965 = vunpack.c.h.b16 %v2557
    %v2966 = vunpack.c.l.b16 %v2558
    %v2967 = vunpack.c.h.b16 %v2558
    %v2968 = vunpack.c.l.b16 %v2559
    %v2969 = vunpack.c.h.b16 %v2559
    %v2970 = vunpack.c.l.b16 %v2560
    %v2971 = vunpack.c.h.b16 %v2560
    %v2972 = vunpack.c.l.b16 %v2561
    %v2973 = vunpack.c.h.b16 %v2561
    %v2974 = vunpack.c.l.b16 %v2562
    %v2975 = vunpack.c.h.b16 %v2562
    %v2976 = vunpack.c.l.b16 %v2563
    %v2977 = vunpack.c.h.b16 %v2563
    %v2978 = vunpack.c.l.b16 %v2564
    %v2979 = vunpack.c.h.b16 %v2564
    %v2980 = vunpack.c.l.b16 %v2565
    %v2981 = vunpack.c.h.b16 %v2565
    %v2982 = vunpack.c.l.b16 %v2566
    %v2983 = vunpack.c.h.b16 %v2566
    %v2984 = vunpack.c.l.b16 %v2567
    %v2985 = vunpack.c.h.b16 %v2567
    %v2986 = vunpack.c.l.b16 %v2568
    %v2987 = vunpack.c.h.b16 %v2568
    %v2988 = vunpack.c.l.b16 %v2569
    %v2989 = vunpack.c.h.b16 %v2569
    %v2990 = vunpack.c.l.b16 %v2570
    %v2991 = vunpack.c.h.b16 %v2570
    %v2992 = vunpack.c.l.b16 %v2571
    %v2993 = vunpack.c.h.b16 %v2571
    %v2994 = vunpack.c.l.b16 %v2572
    %v2995 = vunpack.c.h.b16 %v2572
    %v2996 = vunpack.c.l.b16 %v2573
    %v2997 = vunpack.c.h.b16 %v2573
    %v2998 = vunpack.c.l.b16 %v2574
    %v2999 = vunpack.c.h.b16 %v2574
    %v3000 = vunpack.c.l.b16 %v2575
    %v3001 = vunpack.c.h.b16 %v2575
    %v3002 = vunpack.c.l.b16 %v2576
    %v3003 = vunpack.c.h.b16 %v2576
    %v3004 = vunpack.c.l.b16 %v2577
    %v3005 = vunpack.c.h.b16 %v2577
    %v3006 = vunpack.c.l.b16 %v2578
    %v3007 = vunpack.c.h.b16 %v2578
    %v3008 = vunpack.c.l.b16 %v2579
    %v3009 = vunpack.c.h.b16 %v2579
    %v3010 = vunpack.c.l.b16 %v2580
    %v3011 = vunpack.c.h.b16 %v2580
    %v3012 = vunpack.c.l.b16 %v2581
    %v3013 = vunpack.c.h.b16 %v2581
    %v3014 = vunpack.c.l.b16 %v2582
    %v3015 = vunpack.c.h.b16 %v2582
    %v3016 = vunpack.c.l.b16 %v2583
    %v3017 = vunpack.c.h.b16 %v2583
    %v3018 = vunpack.c.l.b16 %v2584
    %v3019 = vunpack.c.h.b16 %v2584
    %v3020 = vunpack.c.l.b16 %v2585
    %v3021 = vunpack.c.h.b16 %v2585
    %v3022 = vunpack.c.l.b16 %v2586
    %v3023 = vunpack.c.h.b16 %v2586
    %v3024 = vunpack.c.l.b16 %v2587
    %v3025 = vunpack.c.h.b16 %v2587
    %v3026 = vunpack.c.l.b16 %v2588
    %v3027 = vunpack.c.h.b16 %v2588
    %v3028 = vunpack.c.l.b16 %v2589
    %v3029 = vunpack.c.h.b16 %v2589
    %v3030 = vunpack.c.l.b16 %v2590
    %v3031 = vunpack.c.h.b16 %v2590
    %v3032 = vunpack.c.l.b16 %v2591
    %v3033 = vunpack.c.h.b16 %v2591
    %v3034 = vunpack.c.l.b16 %v2592
    %v3035 = vunpack.c.h.b16 %v2592
    %v3036 = vunpack.c.l.b16 %v2593
    %v3037 = vunpack.c.h.b16 %v2593
    %v3038 = vunpack.c.l.b16 %v2594
    %v3039 = vunpack.c.h.b16 %v2594
    %v3040 = vunpack.c.l.b16 %v2595
    %v3041 = vunpack.c.h.b16 %v2595
    %v3042 = vunpack.c.l.b16 %v2596
    %v3043 = vunpack.c.h.b16 %v2596
    %v3044 = vunpack.c.l.b16 %v2597
    %v3045 = vunpack.c.h.b16 %v2597
    %v3046 = vunpack.c.l.b16 %v2598
    %v3047 = vunpack.c.h.b16 %v2598
    %v3048 = vunpack.c.l.b16 %v2599
    %v3049 = vunpack.c.h.b16 %v2599
    %v3050 = vunpack.c.l.b16 %v2600
    %v3051 = vunpack.c.h.b16 %v2600
    %v3052 = vunpack.c.l.b16 %v2601
    %v3053 = vunpack.c.h.b16 %v2601
    %v3054 = vunpack.c.l.b16 %v2602
    %v3055 = vunpack.c.h.b16 %v2602
    %v3056 = vunpack.c.l.b16 %v2603
    %v3057 = vunpack.c.h.b16 %v2603
    %v3058 = vunpack.c.l.b16 %v2604
    %v3059 = vunpack.c.h.b16 %v2604
    %v3060 = vunpack.c.l.b16 %v2605
    %v3061 = vunpack.c.h.b16 %v2605
    %v3062 = vunpack.c.l.b16 %v2606
    %v3063 = vunpack.c.h.b16 %v2606
    %v3064 = vunpack.c.l.b16 %v2607
    %v3065 = vunpack.c.h.b16 %v2607
    %v3066 = vunpack.c.l.b16 %v2608
    %v3067 = vunpack.c.h.b16 %v2608
    %v3068 = vunpack.c.l.b16 %v2609
    %v3069 = vunpack.c.h.b16 %v2609
    %v3070 = vunpack.c.l.b16 %v2610
    %v3071 = vunpack.c.h.b16 %v2610
    %v3072 = vunpack.c.l.b16 %v2611
    %v3073 = vunpack.c.h.b16 %v2611
    %v3074 = vunpack.c.l.b16 %v2612
    %v3075 = vunpack.c.h.b16 %v2612
    %v3076 = vunpack.c.l.b16 %v2613
    %v3077 = vunpack.c.h.b16 %v2613
    %v3078 = vunpack.c.l.b16 %v2614
    %v3079 = vunpack.c.h.b16 %v2614
    %v3080 = vunpack.c.l.b16 %v2615
    %v3081 = vunpack.c.h.b16 %v2615
    %v3082 = vunpack.c.l.b16 %v2616
    %v3083 = vunpack.c.h.b16 %v2616
    %v3084 = vunpack.c.l.b16 %v2617
    %v3085 = vunpack.c.h.b16 %v2617
    %v3086 = vunpack.c.l.b16 %v2618
    %v3087 = vunpack.c.h.b16 %v2618
    %v3088 = vunpack.c.l.b16 %v2619
    %v3089 = vunpack.c.h.b16 %v2619
    %v3090 = vunpack.c.l.b16 %v2620
    %v3091 = vunpack.c.h.b16 %v2620
    %v3092 = vunpack.c.l.b16 %v2621
    %v3093 = vunpack.c.h.b16 %v2621
    %v3094 = vunpack.c.l.b16 %v2622
    %v3095 = vunpack.c.h.b16 %v2622
    %v3096 = vunpack.c.l.b16 %v2623
    %v3097 = vunpack.c.h.b16 %v2623
    %v3098 = vunpack.c.l.b16 %v2624
    %v3099 = vunpack.c.h.b16 %v2624
    %v3100 = vunpack.c.l.b16 %v2625
    %v3101 = vunpack.c.h.b16 %v2625
    %v3102 = vunpack.c.l.b16 %v2626
    %v3103 = vunpack.c.h.b16 %v2626
    %v3104 = vunpack.c.l.b16 %v2627
    %v3105 = vunpack.c.h.b16 %v2627
    %v3106 = vunpack.c.l.b16 %v2628
    %v3107 = vunpack.c.h.b16 %v2628
    %v3108 = vunpack.c.l.b16 %v2629
    %v3109 = vunpack.c.h.b16 %v2629
    %v3110 = vunpack.c.l.b16 %v2630
    %v3111 = vunpack.c.h.b16 %v2630
    %v3112 = vunpack.c.l.b16 %v2631
    %v3113 = vunpack.c.h.b16 %v2631
    %v3114 = vunpack.c.l.b16 %v2632
    %v3115 = vunpack.c.h.b16 %v2632
    %v3116 = vunpack.c.l.b16 %v2633
    %v3117 = vunpack.c.h.b16 %v2633
    %v3118 = vunpack.c.l.b16 %v2634
    %v3119 = vunpack.c.h.b16 %v2634
    %v3120 = vunpack.c.l.b16 %v2635
    %v3121 = vunpack.c.h.b16 %v2635
    %v3122 = vunpack.c.l.b16 %v2636
    %v3123 = vunpack.c.h.b16 %v2636
    %v3124 = vunpack.c.l.b16 %v2637
    %v3125 = vunpack.c.h.b16 %v2637
    %v3126 = vunpack.c.l.b16 %v2638
    %v3127 = vunpack.c.h.b16 %v2638
    %v3128 = vunpack.c.l.b16 %v2639
    %v3129 = vunpack.c.h.b16 %v2639
    %v3130 = vunpack.c.l.b16 %v2640
    %v3131 = vunpack.c.h.b16 %v2640
    %v3132 = vunpack.c.l.b16 %v2641
    %v3133 = vunpack.c.h.b16 %v2641
    %v3134 = vunpack.c.l.b16 %v2642
    %v3135 = vunpack.c.h.b16 %v2642
    %v3136 = vpack.c.b16 %v2896, %v2880
    %v3137 = vpack.c.b16 %v2897, %v2881
    %v3138 = vpack.c.b16 %v2898, %v2882
    %v3139 = vpack.c.b16 %v2899, %v2883
    %v3140 = vpack.c.b16 %v2900, %v2884
    %v3141 = vpack.c.b16 %v2901, %v2885
    %v3142 = vpack.c.b16 %v2902, %v2886
    %v3143 = vpack.c.b16 %v2903, %v2887
    %v3144 = vpack.c.b16 %v2904, %v2888
    %v3145 = vpack.c.b16 %v2905, %v2889
    %v3146 = vpack.c.b16 %v2906, %v2890
    %v3147 = vpack.c.b16 %v2907, %v2891
    %v3148 = vpack.c.b16 %v2908, %v2892
    %v3149 = vpack.c.b16 %v2909, %v2893
    %v3150 = vpack.c.b16 %v2910, %v2894
    %v3151 = vpack.c.b16 %v2911, %v2895
    %v3152 = vpack.c.b16 %v2928, %v2912
    %v3153 = vpack.c.b16 %v2929, %v2913
    %v3154 = vpack.c.b16 %v2930, %v2914
    %v3155 = vpack.c.b16 %v2931, %v2915
    %v3156 = vpack.c.b16 %v2932, %v2916
    %v3157 = vpack.c.b16 %v2933, %v2917
    %v3158 = vpack.c.b16 %v2934, %v2918
    %v3159 = vpack.c.b16 %v2935, %v2919
    %v3160 = vpack.c.b16 %v2936, %v2920
    %v3161 = vpack.c.b16 %v2937, %v2921
    %v3162 = vpack.c.b16 %v2938, %v2922
    %v3163 = vpack.c.b16 %v2939, %v2923
    %v3164 = vpack.c.b16 %v2940, %v2924
    %v3165 = vpack.c.b16 %v2941, %v2925
    %v3166 = vpack.c.b16 %v2942, %v2926
    %v3167 = vpack.c.b16 %v2943, %v2927
    %v3168 = vpack.c.b16 %v2960, %v2944
    %v3169 = vpack.c.b16 %v2961, %v2945
    %v3170 = vpack.c.b16 %v2962, %v2946
    %v3171 = vpack.c.b16 %v2963, %v2947
    %v3172 = vpack.c.b16 %v2964, %v2948
    %v3173 = vpack.c.b16 %v2965, %v2949
    %v3174 = vpack.c.b16 %v2966, %v2950
    %v3175 = vpack.c.b16 %v2967, %v2951
    %v3176 = vpack.c.b16 %v2968, %v2952
    %v3177 = vpack.c.b16 %v2969, %v2953
    %v3178 = vpack.c.b16 %v2970, %v2954
    %v3179 = vpack.c.b16 %v2971, %v2955
    %v3180 = vpack.c.b16 %v2972, %v2956
    %v3181 = vpack.c.b16 %v2973, %v2957
    %v3182 = vpack.c.b16 %v2974, %v2958
    %v3183 = vpack.c.b16 %v2975, %v2959
    %v3184 = vpack.c.b16 %v2992, %v2976
    %v3185 = vpack.c.b16 %v2993, %v2977
    %v3186 = vpack.c.b16 %v2994, %v2978
    %v3187 = vpack.c.b16 %v2995, %v2979
    %v3188 = vpack.c.b16 %v2996, %v2980
    %v3189 = vpack.c.b16 %v2997, %v2981
    %v3190 = vpack.c.b16 %v2998, %v2982
    %v3191 = vpack.c.b16 %v2999, %v2983
    %v3192 = vpack.c.b16 %v3000, %v2984
    %v3193 = vpack.c.b16 %v3001, %v2985
    %v3194 = vpack.c.b16 %v3002, %v2986
    %v3195 = vpack.c.b16 %v3003, %v2987
    %v3196 = vpack.c.b16 %v3004, %v2988
    %v3197 = vpack.c.b16 %v3005, %v2989
    %v3198 = vpack.c.b16 %v3006, %v2990
    %v3199 = vpack.c.b16 %v3007, %v2991
    %v3200 = vpack.c.b16 %v3024, %v3008
    %v3201 = vpack.c.b16 %v3025, %v3009
    %v3202 = vpack.c.b16 %v3026, %v3010
    %v3203 = vpack.c.b16 %v3027, %v3011
    %v3204 = vpack.c.b16 %v3028, %v3012
    %v3205 = vpack.c.b16 %v3029, %v3013
    %v3206 = vpack.c.b16 %v3030, %v3014
    %v3207 = vpack.c.b16 %v3031, %v3015
    %v3208 = vpack.c.b16 %v3032, %v3016
    %v3209 = vpack.c.b16 %v3033, %v3017
    %v3210 = vpack.c.b16 %v3034, %v3018
    %v3211 = vpack.c.b16 %v3035, %v3019
    %v3212 = vpack.c.b16 %v3036, %v3020
    %v3213 = vpack.c.b16 %v3037, %v3021
    %v3214 = vpack.c.b16 %v3038, %v3022
    %v3215 = vpack.c.b16 %v3039, %v3023
    %v3216 = vpack.c.b16 %v3056, %v3040
    %v3217 = vpack.c.b16 %v3057, %v3041
    %v3218 = vpack.c.b16 %v3058, %v3042
    %v3219 = vpack.c.b16 %v3059, %v3043
    %v3220 = vpack.c.b16 %v3060, %v3044
    %v3221 = vpack.c.b16 %v3061, %v3045
    %v3222 = vpack.c.b16 %v3062, %v3046
    %v3223 = vpack.c.b16 %v3063, %v3047
    %v3224 = vpack.c.b16 %v3064, %v3048
    %v3225 = vpack.c.b16 %v3065, %v3049
    %v3226 = vpack.c.b16 %v3066, %v3050
    %v3227 = vpack.c.b16 %v3067, %v3051
    %v3228 = vpack.c.b16 %v3068, %v3052
    %v3229 = vpack.c.b16 %v3069, %v3053
    %v3230 = vpack.c.b16 %v3070, %v3054
    %v3231 = vpack.c.b16 %v3071, %v3055
    %v3232 = vpack.c.b16 %v3088, %v3072
    %v3233 = vpack.c.b16 %v3089, %v3073
    %v3234 = vpack.c.b16 %v3090, %v3074
    %v3235 = vpack.c.b16 %v3091, %v3075
    %v3236 = vpack.c.b16 %v3092, %v3076
    %v3237 = vpack.c.b16 %v3093, %v3077
    %v3238 = vpack.c.b16 %v3094, %v3078
    %v3239 = vpack.c.b16 %v3095, %v3079
    %v3240 = vpack.c.b16 %v3096, %v3080
    %v3241 = vpack.c.b16 %v3097, %v3081
    %v3242 = vpack.c.b16 %v3098, %v3082
    %v3243 = vpack.c.b16 %v3099, %v3083
    %v3244 = vpack.c.b16 %v3100, %v3084
    %v3245 = vpack.c.b16 %v3101, %v3085
    %v3246 = vpack.c.b16 %v3102, %v3086
    %v3247 = vpack.c.b16 %v3103, %v3087
    %v3248 = vpack.c.b16 %v3120, %v3104
    %v3249 = vpack.c.b16 %v3121, %v3105
    %v3250 = vpack.c.b16 %v3122, %v3106
    %v3251 = vpack.c.b16 %v3123, %v3107
    %v3252 = vpack.c.b16 %v3124, %v3108
    %v3253 = vpack.c.b16 %v3125, %v3109
    %v3254 = vpack.c.b16 %v3126, %v3110
    %v3255 = vpack.c.b16 %v3127, %v3111
    %v3256 = vpack.c.b16 %v3128, %v3112
    %v3257 = vpack.c.b16 %v3129, %v3113
    %v3258 = vpack.c.b16 %v3130, %v3114
    %v3259 = vpack.c.b16 %v3131, %v3115
    %v3260 = vpack.c.b16 %v3132, %v3116
    %v3261 = vpack.c.b16 %v3133, %v3117
    %v3262 = vpack.c.b16 %v3134, %v3118
    %v3263 = vpack.c.b16 %v3135, %v3119
    %3392 = vmatprep.subr.bf16.mxu0 %v3137
    %3393 = vmatpush1.bf16.msra.mxu0 %v3136
    %3394 = vmatprep.subr.bf16.mxu0 %v3153
    %3395 = vmatpush1.bf16.msra.mxu0 %v3152
    %3396 = vmatprep.subr.bf16.mxu0 %v3169
    %3397 = vmatpush1.bf16.msra.mxu0 %v3168
    %3398 = vmatprep.subr.bf16.mxu0 %v3185
    %3399 = vmatpush1.bf16.msra.mxu0 %v3184
    %3400 = vmatprep.subr.bf16.mxu0 %v3201
    %3401 = vmatpush1.bf16.msra.mxu0 %v3200
    %3402 = vmatprep.subr.bf16.mxu0 %v3217
    %3403 = vmatpush1.bf16.msra.mxu0 %v3216
    %3404 = vmatprep.subr.bf16.mxu0 %v3233
    %3405 = vmatpush1.bf16.msra.mxu0 %v3232
    %3406 = vmatprep.subr.bf16.mxu0 %v3249
    %3407 = vmatpush1.bf16.msra.mxu0 %v3248
    %3408 = vmatprep.subr.bf16.mxu0 0
    %3409 = vmatpush1.bf16.msra.mxu0 0
    %3410 = vmatprep.subr.bf16.mxu0 0
    %3411 = vmatpush1.bf16.msra.mxu0 0
    %3412 = vmatprep.subr.bf16.mxu0 0
    %3413 = vmatpush1.bf16.msra.mxu0 0
    %3414 = vmatprep.subr.bf16.mxu0 0
    %3415 = vmatpush1.bf16.msra.mxu0 0
    %3416 = vmatprep.subr.bf16.mxu0 0
    %3417 = vmatpush1.bf16.msra.mxu0 0
    %3418 = vmatprep.subr.bf16.mxu0 0
    %3419 = vmatpush1.bf16.msra.mxu0 0
    %3420 = vmatprep.subr.bf16.mxu0 0
    %3421 = vmatpush1.bf16.msra.mxu0 0
    %3422 = vmatprep.subr.bf16.mxu0 0
    %3423 = vmatpush1.bf16.msra.mxu0 0
    %3424 = vmatprep.mubr.bf16.mxu0 0
    %3425 = vmatmul.mubr.bf16.gmra.mrb[0].mxu0 %v2750
    %v3426 = vpop.f32.mrb[0].mxu0
    %v3427 = vadd.f32 %v2650, %v3426
    %v3428 = vpop.f32.mrb[0].mxu0
    %v3429 = vadd.f32 %v2654, %v3428
    %v3430 = vpop.f32.mrb[0].mxu0
    %v3431 = vpop.f32.mrb[0].mxu0
    %3432 = vdwg.mxu0
    %3433 = vmatprep.subr.bf16.mxu0 %v3139
    %3434 = vmatpush1.bf16.msra.mxu0 %v3138
    %3435 = vmatprep.subr.bf16.mxu0 %v3155
    %3436 = vmatpush1.bf16.msra.mxu0 %v3154
    %3437 = vmatprep.subr.bf16.mxu0 %v3171
    %3438 = vmatpush1.bf16.msra.mxu0 %v3170
    %3439 = vmatprep.subr.bf16.mxu0 %v3187
    %3440 = vmatpush1.bf16.msra.mxu0 %v3186
    %3441 = vmatprep.subr.bf16.mxu0 %v3203
    %3442 = vmatpush1.bf16.msra.mxu0 %v3202
    %3443 = vmatprep.subr.bf16.mxu0 %v3219
    %3444 = vmatpush1.bf16.msra.mxu0 %v3218
    %3445 = vmatprep.subr.bf16.mxu0 %v3235
    %3446 = vmatpush1.bf16.msra.mxu0 %v3234
    %3447 = vmatprep.subr.bf16.mxu0 %v3251
    %3448 = vmatpush1.bf16.msra.mxu0 %v3250
    %3449 = vmatprep.subr.bf16.mxu0 0
    %3450 = vmatpush1.bf16.msra.mxu0 0
    %3451 = vmatprep.subr.bf16.mxu0 0
    %3452 = vmatpush1.bf16.msra.mxu0 0
    %3453 = vmatprep.subr.bf16.mxu0 0
    %3454 = vmatpush1.bf16.msra.mxu0 0
    %3455 = vmatprep.subr.bf16.mxu0 0
    %3456 = vmatpush1.bf16.msra.mxu0 0
    %3457 = vmatprep.subr.bf16.mxu0 0
    %3458 = vmatpush1.bf16.msra.mxu0 0
    %3459 = vmatprep.subr.bf16.mxu0 0
    %3460 = vmatpush1.bf16.msra.mxu0 0
    %3461 = vmatprep.subr.bf16.mxu0 0
    %3462 = vmatpush1.bf16.msra.mxu0 0
    %3463 = vmatprep.subr.bf16.mxu0 0
    %3464 = vmatpush1.bf16.msra.mxu0 0
    %3465 = vmatprep.mubr.bf16.mxu0 0
    %3466 = vmatmul.mubr.bf16.gmra.mrb[0].mxu0 %v2750
    %v3467 = vpop.f32.mrb[0].mxu0
    %v3468 = vadd.f32 %v2658, %v3467
    %v3469 = vpop.f32.mrb[0].mxu0
    %v3470 = vadd.f32 %v2662, %v3469
    %v3471 = vpop.f32.mrb[0].mxu0
    %v3472 = vpop.f32.mrb[0].mxu0
    %3473 = vdwg.mxu0
    %3474 = vmatprep.subr.bf16.mxu0 %v3141
    %3475 = vmatpush1.bf16.msra.mxu0 %v3140
    %3476 = vmatprep.subr.bf16.mxu0 %v3157
    %3477 = vmatpush1.bf16.msra.mxu0 %v3156
    %3478 = vmatprep.subr.bf16.mxu0 %v3173
    %3479 = vmatpush1.bf16.msra.mxu0 %v3172
    %3480 = vmatprep.subr.bf16.mxu0 %v3189
    %3481 = vmatpush1.bf16.msra.mxu0 %v3188
    %3482 = vmatprep.subr.bf16.mxu0 %v3205
    %3483 = vmatpush1.bf16.msra.mxu0 %v3204
    %3484 = vmatprep.subr.bf16.mxu0 %v3221
    %3485 = vmatpush1.bf16.msra.mxu0 %v3220
    %3486 = vmatprep.subr.bf16.mxu0 %v3237
    %3487 = vmatpush1.bf16.msra.mxu0 %v3236
    %3488 = vmatprep.subr.bf16.mxu0 %v3253
    %3489 = vmatpush1.bf16.msra.mxu0 %v3252
    %3490 = vmatprep.subr.bf16.mxu0 0
    %3491 = vmatpush1.bf16.msra.mxu0 0
    %3492 = vmatprep.subr.bf16.mxu0 0
    %3493 = vmatpush1.bf16.msra.mxu0 0
    %3494 = vmatprep.subr.bf16.mxu0 0
    %3495 = vmatpush1.bf16.msra.mxu0 0
    %3496 = vmatprep.subr.bf16.mxu0 0
    %3497 = vmatpush1.bf16.msra.mxu0 0
    %3498 = vmatprep.subr.bf16.mxu0 0
    %3499 = vmatpush1.bf16.msra.mxu0 0
    %3500 = vmatprep.subr.bf16.mxu0 0
    %3501 = vmatpush1.bf16.msra.mxu0 0
    %3502 = vmatprep.subr.bf16.mxu0 0
    %3503 = vmatpush1.bf16.msra.mxu0 0
    %3504 = vmatprep.subr.bf16.mxu0 0
    %3505 = vmatpush1.bf16.msra.mxu0 0
    %3506 = vmatprep.mubr.bf16.mxu0 0
    %3507 = vmatmul.mubr.bf16.gmra.mrb[0].mxu0 %v2750
    %v3508 = vpop.f32.mrb[0].mxu0
    %v3509 = vadd.f32 %v2666, %v3508
    %v3510 = vpop.f32.mrb[0].mxu0
    %v3511 = vadd.f32 %v2670, %v3510
    %v3512 = vpop.f32.mrb[0].mxu0
    %v3513 = vpop.f32.mrb[0].mxu0
    %3514 = vdwg.mxu0
    %3515 = vmatprep.subr.bf16.mxu0 %v3143
    %3516 = vmatpush1.bf16.msra.mxu0 %v3142
    %3517 = vmatprep.subr.bf16.mxu0 %v3159
    %3518 = vmatpush1.bf16.msra.mxu0 %v3158
    %3519 = vmatprep.subr.bf16.mxu0 %v3175
    %3520 = vmatpush1.bf16.msra.mxu0 %v3174
    %3521 = vmatprep.subr.bf16.mxu0 %v3191
    %3522 = vmatpush1.bf16.msra.mxu0 %v3190
    %3523 = vmatprep.subr.bf16.mxu0 %v3207
    %3524 = vmatpush1.bf16.msra.mxu0 %v3206
    %3525 = vmatprep.subr.bf16.mxu0 %v3223
    %3526 = vmatpush1.bf16.msra.mxu0 %v3222
    %3527 = vmatprep.subr.bf16.mxu0 %v3239
    %3528 = vmatpush1.bf16.msra.mxu0 %v3238
    %3529 = vmatprep.subr.bf16.mxu0 %v3255
    %3530 = vmatpush1.bf16.msra.mxu0 %v3254
    %3531 = vmatprep.subr.bf16.mxu0 0
    %3532 = vmatpush1.bf16.msra.mxu0 0
    %3533 = vmatprep.subr.bf16.mxu0 0
    %3534 = vmatpush1.bf16.msra.mxu0 0
    %3535 = vmatprep.subr.bf16.mxu0 0
    %3536 = vmatpush1.bf16.msra.mxu0 0
    %3537 = vmatprep.subr.bf16.mxu0 0
    %3538 = vmatpush1.bf16.msra.mxu0 0
    %3539 = vmatprep.subr.bf16.mxu0 0
    %3540 = vmatpush1.bf16.msra.mxu0 0
    %3541 = vmatprep.subr.bf16.mxu0 0
    %3542 = vmatpush1.bf16.msra.mxu0 0
    %3543 = vmatprep.subr.bf16.mxu0 0
    %3544 = vmatpush1.bf16.msra.mxu0 0
    %3545 = vmatprep.subr.bf16.mxu0 0
    %3546 = vmatpush1.bf16.msra.mxu0 0
    %3547 = vmatprep.mubr.bf16.mxu0 0
    %3548 = vmatmul.mubr.bf16.gmra.mrb[0].mxu0 %v2750
    %v3549 = vpop.f32.mrb[0].mxu0
    %v3550 = vadd.f32 %v2674, %v3549
    %v3551 = vpop.f32.mrb[0].mxu0
    %v3552 = vadd.f32 %v2678, %v3551
    %v3553 = vpop.f32.mrb[0].mxu0
    %v3554 = vpop.f32.mrb[0].mxu0
    %3555 = vdwg.mxu0
    %3556 = vmatprep.subr.bf16.mxu0 %v3145
    %3557 = vmatpush1.bf16.msra.mxu0 %v3144
    %3558 = vmatprep.subr.bf16.mxu0 %v3161
    %3559 = vmatpush1.bf16.msra.mxu0 %v3160
    %3560 = vmatprep.subr.bf16.mxu0 %v3177
    %3561 = vmatpush1.bf16.msra.mxu0 %v3176
    %3562 = vmatprep.subr.bf16.mxu0 %v3193
    %3563 = vmatpush1.bf16.msra.mxu0 %v3192
    %3564 = vmatprep.subr.bf16.mxu0 %v3209
    %3565 = vmatpush1.bf16.msra.mxu0 %v3208
    %3566 = vmatprep.subr.bf16.mxu0 %v3225
    %3567 = vmatpush1.bf16.msra.mxu0 %v3224
    %3568 = vmatprep.subr.bf16.mxu0 %v3241
    %3569 = vmatpush1.bf16.msra.mxu0 %v3240
    %3570 = vmatprep.subr.bf16.mxu0 %v3257
    %3571 = vmatpush1.bf16.msra.mxu0 %v3256
    %3572 = vmatprep.subr.bf16.mxu0 0
    %3573 = vmatpush1.bf16.msra.mxu0 0
    %3574 = vmatprep.subr.bf16.mxu0 0
    %3575 = vmatpush1.bf16.msra.mxu0 0
    %3576 = vmatprep.subr.bf16.mxu0 0
    %3577 = vmatpush1.bf16.msra.mxu0 0
    %3578 = vmatprep.subr.bf16.mxu0 0
    %3579 = vmatpush1.bf16.msra.mxu0 0
    %3580 = vmatprep.subr.bf16.mxu0 0
    %3581 = vmatpush1.bf16.msra.mxu0 0
    %3582 = vmatprep.subr.bf16.mxu0 0
    %3583 = vmatpush1.bf16.msra.mxu0 0
    %3584 = vmatprep.subr.bf16.mxu0 0
    %3585 = vmatpush1.bf16.msra.mxu0 0
    %3586 = vmatprep.subr.bf16.mxu0 0
    %3587 = vmatpush1.bf16.msra.mxu0 0
    %3588 = vmatprep.mubr.bf16.mxu0 0
    %3589 = vmatmul.mubr.bf16.gmra.mrb[0].mxu0 %v2750
    %v3590 = vpop.f32.mrb[0].mxu0
    %v3591 = vadd.f32 %v2682, %v3590
    %v3592 = vpop.f32.mrb[0].mxu0
    %v3593 = vadd.f32 %v2686, %v3592
    %v3594 = vpop.f32.mrb[0].mxu0
    %v3595 = vpop.f32.mrb[0].mxu0
    %3596 = vdwg.mxu0
    %3597 = vmatprep.subr.bf16.mxu0 %v3147
    %3598 = vmatpush1.bf16.msra.mxu0 %v3146
    %3599 = vmatprep.subr.bf16.mxu0 %v3163
    %3600 = vmatpush1.bf16.msra.mxu0 %v3162
    %3601 = vmatprep.subr.bf16.mxu0 %v3179
    %3602 = vmatpush1.bf16.msra.mxu0 %v3178
    %3603 = vmatprep.subr.bf16.mxu0 %v3195
    %3604 = vmatpush1.bf16.msra.mxu0 %v3194
    %3605 = vmatprep.subr.bf16.mxu0 %v3211
    %3606 = vmatpush1.bf16.msra.mxu0 %v3210
    %3607 = vmatprep.subr.bf16.mxu0 %v3227
    %3608 = vmatpush1.bf16.msra.mxu0 %v3226
    %3609 = vmatprep.subr.bf16.mxu0 %v3243
    %3610 = vmatpush1.bf16.msra.mxu0 %v3242
    %3611 = vmatprep.subr.bf16.mxu0 %v3259
    %3612 = vmatpush1.bf16.msra.mxu0 %v3258
    %3613 = vmatprep.subr.bf16.mxu0 0
    %3614 = vmatpush1.bf16.msra.mxu0 0
    %3615 = vmatprep.subr.bf16.mxu0 0
    %3616 = vmatpush1.bf16.msra.mxu0 0
    %3617 = vmatprep.subr.bf16.mxu0 0
    %3618 = vmatpush1.bf16.msra.mxu0 0
    %3619 = vmatprep.subr.bf16.mxu0 0
    %3620 = vmatpush1.bf16.msra.mxu0 0
    %3621 = vmatprep.subr.bf16.mxu0 0
    %3622 = vmatpush1.bf16.msra.mxu0 0
    %3623 = vmatprep.subr.bf16.mxu0 0
    %3624 = vmatpush1.bf16.msra.mxu0 0
    %3625 = vmatprep.subr.bf16.mxu0 0
    %3626 = vmatpush1.bf16.msra.mxu0 0
    %3627 = vmatprep.subr.bf16.mxu0 0
    %3628 = vmatpush1.bf16.msra.mxu0 0
    %3629 = vmatprep.mubr.bf16.mxu0 0
    %3630 = vmatmul.mubr.bf16.gmra.mrb[0].mxu0 %v2750
    %v3631 = vpop.f32.mrb[0].mxu0
    %v3632 = vadd.f32 %v2690, %v3631
    %v3633 = vpop.f32.mrb[0].mxu0
    %v3634 = vadd.f32 %v2694, %v3633
    %v3635 = vpop.f32.mrb[0].mxu0
    %v3636 = vpop.f32.mrb[0].mxu0
    %3637 = vdwg.mxu0
    %3638 = vmatprep.subr.bf16.mxu0 %v3149
    %3639 = vmatpush1.bf16.msra.mxu0 %v3148
    %3640 = vmatprep.subr.bf16.mxu0 %v3165
    %3641 = vmatpush1.bf16.msra.mxu0 %v3164
    %3642 = vmatprep.subr.bf16.mxu0 %v3181
    %3643 = vmatpush1.bf16.msra.mxu0 %v3180
    %3644 = vmatprep.subr.bf16.mxu0 %v3197
    %3645 = vmatpush1.bf16.msra.mxu0 %v3196
    %3646 = vmatprep.subr.bf16.mxu0 %v3213
    %3647 = vmatpush1.bf16.msra.mxu0 %v3212
    %3648 = vmatprep.subr.bf16.mxu0 %v3229
    %3649 = vmatpush1.bf16.msra.mxu0 %v3228
    %3650 = vmatprep.subr.bf16.mxu0 %v3245
    %3651 = vmatpush1.bf16.msra.mxu0 %v3244
    %3652 = vmatprep.subr.bf16.mxu0 %v3261
    %3653 = vmatpush1.bf16.msra.mxu0 %v3260
    %3654 = vmatprep.subr.bf16.mxu0 0
    %3655 = vmatpush1.bf16.msra.mxu0 0
    %3656 = vmatprep.subr.bf16.mxu0 0
    %3657 = vmatpush1.bf16.msra.mxu0 0
    %3658 = vmatprep.subr.bf16.mxu0 0
    %3659 = vmatpush1.bf16.msra.mxu0 0
    %3660 = vmatprep.subr.bf16.mxu0 0
    %3661 = vmatpush1.bf16.msra.mxu0 0
    %3662 = vmatprep.subr.bf16.mxu0 0
    %3663 = vmatpush1.bf16.msra.mxu0 0
    %3664 = vmatprep.subr.bf16.mxu0 0
    %3665 = vmatpush1.bf16.msra.mxu0 0
    %3666 = vmatprep.subr.bf16.mxu0 0
    %3667 = vmatpush1.bf16.msra.mxu0 0
    %3668 = vmatprep.subr.bf16.mxu0 0
    %3669 = vmatpush1.bf16.msra.mxu0 0
    %3670 = vmatprep.mubr.bf16.mxu0 0
    %3671 = vmatmul.mubr.bf16.gmra.mrb[0].mxu0 %v2750
    %v3672 = vpop.f32.mrb[0].mxu0
    %v3673 = vadd.f32 %v2698, %v3672
    %v3674 = vpop.f32.mrb[0].mxu0
    %v3675 = vadd.f32 %v2702, %v3674
    %v3676 = vpop.f32.mrb[0].mxu0
    %v3677 = vpop.f32.mrb[0].mxu0
    %3678 = vdwg.mxu0
    %3679 = vmatprep.subr.bf16.mxu0 %v3151
    %3680 = vmatpush1.bf16.msra.mxu0 %v3150
    %3681 = vmatprep.subr.bf16.mxu0 %v3167
    %3682 = vmatpush1.bf16.msra.mxu0 %v3166
    %3683 = vmatprep.subr.bf16.mxu0 %v3183
    %3684 = vmatpush1.bf16.msra.mxu0 %v3182
    %3685 = vmatprep.subr.bf16.mxu0 %v3199
    %3686 = vmatpush1.bf16.msra.mxu0 %v3198
    %3687 = vmatprep.subr.bf16.mxu0 %v3215
    %3688 = vmatpush1.bf16.msra.mxu0 %v3214
    %3689 = vmatprep.subr.bf16.mxu0 %v3231
    %3690 = vmatpush1.bf16.msra.mxu0 %v3230
    %3691 = vmatprep.subr.bf16.mxu0 %v3247
    %3692 = vmatpush1.bf16.msra.mxu0 %v3246
    %3693 = vmatprep.subr.bf16.mxu0 %v3263
    %3694 = vmatpush1.bf16.msra.mxu0 %v3262
    %3695 = vmatprep.subr.bf16.mxu0 0
    %3696 = vmatpush1.bf16.msra.mxu0 0
    %3697 = vmatprep.subr.bf16.mxu0 0
    %3698 = vmatpush1.bf16.msra.mxu0 0
    %3699 = vmatprep.subr.bf16.mxu0 0
    %3700 = vmatpush1.bf16.msra.mxu0 0
    %3701 = vmatprep.subr.bf16.mxu0 0
    %3702 = vmatpush1.bf16.msra.mxu0 0
    %3703 = vmatprep.subr.bf16.mxu0 0
    %3704 = vmatpush1.bf16.msra.mxu0 0
    %3705 = vmatprep.subr.bf16.mxu0 0
    %3706 = vmatpush1.bf16.msra.mxu0 0
    %3707 = vmatprep.subr.bf16.mxu0 0
    %3708 = vmatpush1.bf16.msra.mxu0 0
    %3709 = vmatprep.subr.bf16.mxu0 0
    %3710 = vmatpush1.bf16.msra.mxu0 0
    %3711 = vmatprep.mubr.bf16.mxu0 0
    %3712 = vmatmul.mubr.bf16.gmra.mrb[0].mxu0 %v2750
    %v3713 = vpop.f32.mrb[0].mxu0
    %v3714 = vadd.f32 %v2706, %v3713
    %v3715 = vpop.f32.mrb[0].mxu0
    %v3716 = vadd.f32 %v2710, %v3715
    %v3717 = vpop.f32.mrb[0].mxu0
    %v3718 = vpop.f32.mrb[0].mxu0
    %3719 = vdwg.mxu0
    %v3720 = vmul.f32 %v3427, 0.5
    %v3721 = vmul.f32 %v3429, 0.5
    %v3722 = vmul.f32 %v3468, 0.5
    %v3723 = vmul.f32 %v3470, 0.5
    %v3724 = vmul.f32 %v3509, 0.5
    %v3725 = vmul.f32 %v3511, 0.5
    %v3726 = vmul.f32 %v3550, 0.5
    %v3727 = vmul.f32 %v3552, 0.5
    %v3728 = vmul.f32 %v3591, 0.5
    %v3729 = vmul.f32 %v3593, 0.5
    %v3730 = vmul.f32 %v3632, 0.5
    %v3731 = vmul.f32 %v3634, 0.5
    %v3732 = vmul.f32 %v3673, 0.5
    %v3733 = vmul.f32 %v3675, 0.5
    %v3734 = vmul.f32 %v3427, 0.70710677
    %v3735 = vmul.f32 %v3429, 0.70710677
    %v3736 = vmul.f32 %v3468, 0.70710677
    %v3737 = vmul.f32 %v3470, 0.70710677
    %v3738 = vmul.f32 %v3509, 0.70710677
    %v3739 = vmul.f32 %v3511, 0.70710677
    %v3740 = vmul.f32 %v3550, 0.70710677
    %v3741 = vmul.f32 %v3552, 0.70710677
    %v3742 = vmul.f32 %v3591, 0.70710677
    %v3743 = vmul.f32 %v3593, 0.70710677
    %v3744 = vmul.f32 %v3632, 0.70710677
    %v3745 = vmul.f32 %v3634, 0.70710677
    %v3746 = vmul.f32 %v3673, 0.70710677
    %v3747 = vmul.f32 %v3675, 0.70710677
    %vm3748 = vcmp.ge.f32.partialorder %v3734, 0.0
    %vm3749 = vcmp.ge.f32.partialorder %v3735, 0.0
    %vm3750 = vcmp.ge.f32.partialorder %v3736, 0.0
    %vm3751 = vcmp.ge.f32.partialorder %v3737, 0.0
    %vm3752 = vcmp.ge.f32.partialorder %v3738, 0.0
    %vm3753 = vcmp.ge.f32.partialorder %v3739, 0.0
    %vm3754 = vcmp.ge.f32.partialorder %v3740, 0.0
    %vm3755 = vcmp.ge.f32.partialorder %v3741, 0.0
    %vm3756 = vcmp.ge.f32.partialorder %v3742, 0.0
    %vm3757 = vcmp.ge.f32.partialorder %v3743, 0.0
    %vm3758 = vcmp.ge.f32.partialorder %v3744, 0.0
    %vm3759 = vcmp.ge.f32.partialorder %v3745, 0.0
    %vm3760 = vcmp.ge.f32.partialorder %v3746, 0.0
    %vm3761 = vcmp.ge.f32.partialorder %v3747, 0.0
    %v3762 = vsel %vm3748, 1.0, -1.0
    %v3763 = vsel %vm3749, 1.0, -1.0
    %v3764 = vsel %vm3750, 1.0, -1.0
    %v3765 = vsel %vm3751, 1.0, -1.0
    %v3766 = vsel %vm3752, 1.0, -1.0
    %v3767 = vsel %vm3753, 1.0, -1.0
    %v3768 = vsel %vm3754, 1.0, -1.0
    %v3769 = vsel %vm3755, 1.0, -1.0
    %v3770 = vsel %vm3756, 1.0, -1.0
    %v3771 = vsel %vm3757, 1.0, -1.0
    %v3772 = vsel %vm3758, 1.0, -1.0
    %v3773 = vsel %vm3759, 1.0, -1.0
    %v3774 = vsel %vm3760, 1.0, -1.0
    %v3775 = vsel %vm3761, 1.0, -1.0
    %v3776 = vand.u32 2147483647, %v3734
    %v3777 = vand.u32 2147483647, %v3735
    %v3778 = vand.u32 2147483647, %v3736
    %v3779 = vand.u32 2147483647, %v3737
    %v3780 = vand.u32 2147483647, %v3738
    %v3781 = vand.u32 2147483647, %v3739
    %v3782 = vand.u32 2147483647, %v3740
    %v3783 = vand.u32 2147483647, %v3741
    %v3784 = vand.u32 2147483647, %v3742
    %v3785 = vand.u32 2147483647, %v3743
    %v3786 = vand.u32 2147483647, %v3744
    %v3787 = vand.u32 2147483647, %v3745
    %v3788 = vand.u32 2147483647, %v3746
    %v3789 = vand.u32 2147483647, %v3747
    %v3790 = vmul.f32 %v3776, 0.3275911
    %v3791 = vmul.f32 %v3777, 0.3275911
    %v3792 = vmul.f32 %v3778, 0.3275911
    %v3793 = vmul.f32 %v3779, 0.3275911
    %v3794 = vmul.f32 %v3780, 0.3275911
    %v3795 = vmul.f32 %v3781, 0.3275911
    %v3796 = vmul.f32 %v3782, 0.3275911
    %v3797 = vmul.f32 %v3783, 0.3275911
    %v3798 = vmul.f32 %v3784, 0.3275911
    %v3799 = vmul.f32 %v3785, 0.3275911
    %v3800 = vmul.f32 %v3786, 0.3275911
    %v3801 = vmul.f32 %v3787, 0.3275911
    %v3802 = vmul.f32 %v3788, 0.3275911
    %v3803 = vmul.f32 %v3789, 0.3275911
    %v3804 = vadd.f32 %v3790, 1.0
    %v3805 = vadd.f32 %v3791, 1.0
    %v3806 = vadd.f32 %v3792, 1.0
    %v3807 = vadd.f32 %v3793, 1.0
    %v3808 = vadd.f32 %v3794, 1.0
    %v3809 = vadd.f32 %v3795, 1.0
    %v3810 = vadd.f32 %v3796, 1.0
    %v3811 = vadd.f32 %v3797, 1.0
    %v3812 = vadd.f32 %v3798, 1.0
    %v3813 = vadd.f32 %v3799, 1.0
    %v3814 = vadd.f32 %v3800, 1.0
    %v3815 = vadd.f32 %v3801, 1.0
    %v3816 = vadd.f32 %v3802, 1.0
    %v3817 = vadd.f32 %v3803, 1.0
    %v3818 = vrcp.pop %v3804
    %v3819 = vmul.f32 1.0, %v3818
    %v3820 = vrcp.pop %v3805
    %v3821 = vmul.f32 1.0, %v3820
    %v3822 = vrcp.pop %v3806
    %v3823 = vmul.f32 1.0, %v3822
    %v3824 = vrcp.pop %v3807
    %v3825 = vmul.f32 1.0, %v3824
    %v3826 = vrcp.pop %v3808
    %v3827 = vmul.f32 1.0, %v3826
    %v3828 = vrcp.pop %v3809
    %v3829 = vmul.f32 1.0, %v3828
    %v3830 = vrcp.pop %v3810
    %v3831 = vmul.f32 1.0, %v3830
    %v3832 = vrcp.pop %v3811
    %v3833 = vmul.f32 1.0, %v3832
    %v3834 = vrcp.pop %v3812
    %v3835 = vmul.f32 1.0, %v3834
    %v3836 = vrcp.pop %v3813
    %v3837 = vmul.f32 1.0, %v3836
    %v3838 = vrcp.pop %v3814
    %v3839 = vmul.f32 1.0, %v3838
    %v3840 = vrcp.pop %v3815
    %v3841 = vmul.f32 1.0, %v3840
    %v3842 = vrcp.pop %v3816
    %v3843 = vmul.f32 1.0, %v3842
    %v3844 = vrcp.pop %v3817
    %v3845 = vmul.f32 1.0, %v3844
    %v3846 = vmul.f32 %v3819, 1.0614054
    %v3847 = vmul.f32 %v3821, 1.0614054
    %v3848 = vmul.f32 %v3823, 1.0614054
    %v3849 = vmul.f32 %v3825, 1.0614054
    %v3850 = vmul.f32 %v3827, 1.0614054
    %v3851 = vmul.f32 %v3829, 1.0614054
    %v3852 = vmul.f32 %v3831, 1.0614054
    %v3853 = vmul.f32 %v3833, 1.0614054
    %v3854 = vmul.f32 %v3835, 1.0614054
    %v3855 = vmul.f32 %v3837, 1.0614054
    %v3856 = vmul.f32 %v3839, 1.0614054
    %v3857 = vmul.f32 %v3841, 1.0614054
    %v3858 = vmul.f32 %v3843, 1.0614054
    %v3859 = vmul.f32 %v3845, 1.0614054
    %v3860 = vadd.f32 %v3846, -1.4531521
    %v3861 = vadd.f32 %v3847, -1.4531521
    %v3862 = vadd.f32 %v3848, -1.4531521
    %v3863 = vadd.f32 %v3849, -1.4531521
    %v3864 = vadd.f32 %v3850, -1.4531521
    %v3865 = vadd.f32 %v3851, -1.4531521
    %v3866 = vadd.f32 %v3852, -1.4531521
    %v3867 = vadd.f32 %v3853, -1.4531521
    %v3868 = vadd.f32 %v3854, -1.4531521
    %v3869 = vadd.f32 %v3855, -1.4531521
    %v3870 = vadd.f32 %v3856, -1.4531521
    %v3871 = vadd.f32 %v3857, -1.4531521
    %v3872 = vadd.f32 %v3858, -1.4531521
    %v3873 = vadd.f32 %v3859, -1.4531521
    %v3874 = vmul.f32 %v3860, %v3819
    %v3875 = vmul.f32 %v3861, %v3821
    %v3876 = vmul.f32 %v3862, %v3823
    %v3877 = vmul.f32 %v3863, %v3825
    %v3878 = vmul.f32 %v3864, %v3827
    %v3879 = vmul.f32 %v3865, %v3829
    %v3880 = vmul.f32 %v3866, %v3831
    %v3881 = vmul.f32 %v3867, %v3833
    %v3882 = vmul.f32 %v3868, %v3835
    %v3883 = vmul.f32 %v3869, %v3837
    %v3884 = vmul.f32 %v3870, %v3839
    %v3885 = vmul.f32 %v3871, %v3841
    %v3886 = vmul.f32 %v3872, %v3843
    %v3887 = vmul.f32 %v3873, %v3845
    %v3888 = vadd.f32 %v3874, 1.4214138
    %v3889 = vadd.f32 %v3875, 1.4214138
    %v3890 = vadd.f32 %v3876, 1.4214138
    %v3891 = vadd.f32 %v3877, 1.4214138
    %v3892 = vadd.f32 %v3878, 1.4214138
    %v3893 = vadd.f32 %v3879, 1.4214138
    %v3894 = vadd.f32 %v3880, 1.4214138
    %v3895 = vadd.f32 %v3881, 1.4214138
    %v3896 = vadd.f32 %v3882, 1.4214138
    %v3897 = vadd.f32 %v3883, 1.4214138
    %v3898 = vadd.f32 %v3884, 1.4214138
    %v3899 = vadd.f32 %v3885, 1.4214138
    %v3900 = vadd.f32 %v3886, 1.4214138
    %v3901 = vadd.f32 %v3887, 1.4214138
    %v3902 = vmul.f32 %v3888, %v3819
    %v3903 = vmul.f32 %v3889, %v3821
    %v3904 = vmul.f32 %v3890, %v3823
    %v3905 = vmul.f32 %v3891, %v3825
    %v3906 = vmul.f32 %v3892, %v3827
    %v3907 = vmul.f32 %v3893, %v3829
    %v3908 = vmul.f32 %v3894, %v3831
    %v3909 = vmul.f32 %v3895, %v3833
    %v3910 = vmul.f32 %v3896, %v3835
    %v3911 = vmul.f32 %v3897, %v3837
    %v3912 = vmul.f32 %v3898, %v3839
    %v3913 = vmul.f32 %v3899, %v3841
    %v3914 = vmul.f32 %v3900, %v3843
    %v3915 = vmul.f32 %v3901, %v3845
    %v3916 = vadd.f32 %v3902, -0.28449672
    %v3917 = vadd.f32 %v3903, -0.28449672
    %v3918 = vadd.f32 %v3904, -0.28449672
    %v3919 = vadd.f32 %v3905, -0.28449672
    %v3920 = vadd.f32 %v3906, -0.28449672
    %v3921 = vadd.f32 %v3907, -0.28449672
    %v3922 = vadd.f32 %v3908, -0.28449672
    %v3923 = vadd.f32 %v3909, -0.28449672
    %v3924 = vadd.f32 %v3910, -0.28449672
    %v3925 = vadd.f32 %v3911, -0.28449672
    %v3926 = vadd.f32 %v3912, -0.28449672
    %v3927 = vadd.f32 %v3913, -0.28449672
    %v3928 = vadd.f32 %v3914, -0.28449672
    %v3929 = vadd.f32 %v3915, -0.28449672
    %v3930 = vmul.f32 %v3916, %v3819
    %v3931 = vmul.f32 %v3917, %v3821
    %v3932 = vmul.f32 %v3918, %v3823
    %v3933 = vmul.f32 %v3919, %v3825
    %v3934 = vmul.f32 %v3920, %v3827
    %v3935 = vmul.f32 %v3921, %v3829
    %v3936 = vmul.f32 %v3922, %v3831
    %v3937 = vmul.f32 %v3923, %v3833
    %v3938 = vmul.f32 %v3924, %v3835
    %v3939 = vmul.f32 %v3925, %v3837
    %v3940 = vmul.f32 %v3926, %v3839
    %v3941 = vmul.f32 %v3927, %v3841
    %v3942 = vmul.f32 %v3928, %v3843
    %v3943 = vmul.f32 %v3929, %v3845
    %v3944 = vadd.f32 %v3930, 0.2548296
    %v3945 = vadd.f32 %v3931, 0.2548296
    %v3946 = vadd.f32 %v3932, 0.2548296
    %v3947 = vadd.f32 %v3933, 0.2548296
    %v3948 = vadd.f32 %v3934, 0.2548296
    %v3949 = vadd.f32 %v3935, 0.2548296
    %v3950 = vadd.f32 %v3936, 0.2548296
    %v3951 = vadd.f32 %v3937, 0.2548296
    %v3952 = vadd.f32 %v3938, 0.2548296
    %v3953 = vadd.f32 %v3939, 0.2548296
    %v3954 = vadd.f32 %v3940, 0.2548296
    %v3955 = vadd.f32 %v3941, 0.2548296
    %v3956 = vadd.f32 %v3942, 0.2548296
    %v3957 = vadd.f32 %v3943, 0.2548296
    %v3958 = vmul.f32 %v3944, %v3819
    %v3959 = vmul.f32 %v3945, %v3821
    %v3960 = vmul.f32 %v3946, %v3823
    %v3961 = vmul.f32 %v3947, %v3825
    %v3962 = vmul.f32 %v3948, %v3827
    %v3963 = vmul.f32 %v3949, %v3829
    %v3964 = vmul.f32 %v3950, %v3831
    %v3965 = vmul.f32 %v3951, %v3833
    %v3966 = vmul.f32 %v3952, %v3835
    %v3967 = vmul.f32 %v3953, %v3837
    %v3968 = vmul.f32 %v3954, %v3839
    %v3969 = vmul.f32 %v3955, %v3841
    %v3970 = vmul.f32 %v3956, %v3843
    %v3971 = vmul.f32 %v3957, %v3845
    %v3972 = vsub.f32 0.0, %v3776
    %v3973 = vsub.f32 0.0, %v3777
    %v3974 = vsub.f32 0.0, %v3778
    %v3975 = vsub.f32 0.0, %v3779
    %v3976 = vsub.f32 0.0, %v3780
    %v3977 = vsub.f32 0.0, %v3781
    %v3978 = vsub.f32 0.0, %v3782
    %v3979 = vsub.f32 0.0, %v3783
    %v3980 = vsub.f32 0.0, %v3784
    %v3981 = vsub.f32 0.0, %v3785
    %v3982 = vsub.f32 0.0, %v3786
    %v3983 = vsub.f32 0.0, %v3787
    %v3984 = vsub.f32 0.0, %v3788
    %v3985 = vsub.f32 0.0, %v3789
    %v3986 = vmul.f32 %v3972, %v3776
    %v3987 = vmul.f32 %v3973, %v3777
    %v3988 = vmul.f32 %v3974, %v3778
    %v3989 = vmul.f32 %v3975, %v3779
    %v3990 = vmul.f32 %v3976, %v3780
    %v3991 = vmul.f32 %v3977, %v3781
    %v3992 = vmul.f32 %v3978, %v3782
    %v3993 = vmul.f32 %v3979, %v3783
    %v3994 = vmul.f32 %v3980, %v3784
    %v3995 = vmul.f32 %v3981, %v3785
    %v3996 = vmul.f32 %v3982, %v3786
    %v3997 = vmul.f32 %v3983, %v3787
    %v3998 = vmul.f32 %v3984, %v3788
    %v3999 = vmul.f32 %v3985, %v3789
    %v4000 = vmul.f32 %v3986, 1.442695
    %v4001 = vpow.pop %v4000
    %v4002 = vmul.f32 %v3987, 1.442695
    %v4003 = vpow.pop %v4002
    %v4004 = vmul.f32 %v3988, 1.442695
    %v4005 = vpow.pop %v4004
    %v4006 = vmul.f32 %v3989, 1.442695
    %v4007 = vpow.pop %v4006
    %v4008 = vmul.f32 %v3990, 1.442695
    %v4009 = vpow.pop %v4008
    %v4010 = vmul.f32 %v3991, 1.442695
    %v4011 = vpow.pop %v4010
    %v4012 = vmul.f32 %v3992, 1.442695
    %v4013 = vpow.pop %v4012
    %v4014 = vmul.f32 %v3993, 1.442695
    %v4015 = vpow.pop %v4014
    %v4016 = vmul.f32 %v3994, 1.442695
    %v4017 = vpow.pop %v4016
    %v4018 = vmul.f32 %v3995, 1.442695
    %v4019 = vpow.pop %v4018
    %v4020 = vmul.f32 %v3996, 1.442695
    %v4021 = vpow.pop %v4020
    %v4022 = vmul.f32 %v3997, 1.442695
    %v4023 = vpow.pop %v4022
    %v4024 = vmul.f32 %v3998, 1.442695
    %v4025 = vpow.pop %v4024
    %v4026 = vmul.f32 %v3999, 1.442695
    %v4027 = vpow.pop %v4026
    %v4028 = vmul.f32 %v3958, %v4001
    %v4029 = vmul.f32 %v3959, %v4003
    %v4030 = vmul.f32 %v3960, %v4005
    %v4031 = vmul.f32 %v3961, %v4007
    %v4032 = vmul.f32 %v3962, %v4009
    %v4033 = vmul.f32 %v3963, %v4011
    %v4034 = vmul.f32 %v3964, %v4013
    %v4035 = vmul.f32 %v3965, %v4015
    %v4036 = vmul.f32 %v3966, %v4017
    %v4037 = vmul.f32 %v3967, %v4019
    %v4038 = vmul.f32 %v3968, %v4021
    %v4039 = vmul.f32 %v3969, %v4023
    %v4040 = vmul.f32 %v3970, %v4025
    %v4041 = vmul.f32 %v3971, %v4027
    %v4042 = vsub.f32 1.0, %v4028
    %v4043 = vsub.f32 1.0, %v4029
    %v4044 = vsub.f32 1.0, %v4030
    %v4045 = vsub.f32 1.0, %v4031
    %v4046 = vsub.f32 1.0, %v4032
    %v4047 = vsub.f32 1.0, %v4033
    %v4048 = vsub.f32 1.0, %v4034
    %v4049 = vsub.f32 1.0, %v4035
    %v4050 = vsub.f32 1.0, %v4036
    %v4051 = vsub.f32 1.0, %v4037
    %v4052 = vsub.f32 1.0, %v4038
    %v4053 = vsub.f32 1.0, %v4039
    %v4054 = vsub.f32 1.0, %v4040
    %v4055 = vsub.f32 1.0, %v4041
    %v4056 = vmul.f32 %v3762, %v4042
    %v4057 = vmul.f32 %v3763, %v4043
    %v4058 = vmul.f32 %v3764, %v4044
    %v4059 = vmul.f32 %v3765, %v4045
    %v4060 = vmul.f32 %v3766, %v4046
    %v4061 = vmul.f32 %v3767, %v4047
    %v4062 = vmul.f32 %v3768, %v4048
    %v4063 = vmul.f32 %v3769, %v4049
    %v4064 = vmul.f32 %v3770, %v4050
    %v4065 = vmul.f32 %v3771, %v4051
    %v4066 = vmul.f32 %v3772, %v4052
    %v4067 = vmul.f32 %v3773, %v4053
    %v4068 = vmul.f32 %v3774, %v4054
    %v4069 = vmul.f32 %v3775, %v4055
    %v4070 = vadd.f32 %v4056, 1.0
    %v4071 = vadd.f32 %v4057, 1.0
    %v4072 = vadd.f32 %v4058, 1.0
    %v4073 = vadd.f32 %v4059, 1.0
    %v4074 = vadd.f32 %v4060, 1.0
    %v4075 = vadd.f32 %v4061, 1.0
    %v4076 = vadd.f32 %v4062, 1.0
    %v4077 = vadd.f32 %v4063, 1.0
    %v4078 = vadd.f32 %v4064, 1.0
    %v4079 = vadd.f32 %v4065, 1.0
    %v4080 = vadd.f32 %v4066, 1.0
    %v4081 = vadd.f32 %v4067, 1.0
    %v4082 = vadd.f32 %v4068, 1.0
    %v4083 = vadd.f32 %v4069, 1.0
    %v4084 = vmul.f32 %v3720, %v4070
    %v4085 = vmul.f32 %v3721, %v4071
    %v4086 = vmul.f32 %v3722, %v4072
    %v4087 = vmul.f32 %v3723, %v4073
    %v4088 = vmul.f32 %v3724, %v4074
    %v4089 = vmul.f32 %v3725, %v4075
    %v4090 = vmul.f32 %v3726, %v4076
    %v4091 = vmul.f32 %v3727, %v4077
    %v4092 = vmul.f32 %v3728, %v4078
    %v4093 = vmul.f32 %v3729, %v4079
    %v4094 = vmul.f32 %v3730, %v4080
    %v4095 = vmul.f32 %v3731, %v4081
    %v4096 = vmul.f32 %v3732, %v4082
    %v4097 = vmul.f32 %v3733, %v4083
    %v4098 = vmax.f32 %v3714, 0.0
    %v4099 = vmax.f32 %v3716, 0.0
    %v4100 = vpack.c.bf16 %v4084, %v4084
    %v4101 = vpack.c.bf16 %v4085, %v4085
    %v4102 = vpack.c.bf16 %v4086, %v4086
    %v4103 = vpack.c.bf16 %v4087, %v4087
    %v4104 = vpack.c.bf16 %v4088, %v4088
    %v4105 = vpack.c.bf16 %v4089, %v4089
    %v4106 = vpack.c.bf16 %v4090, %v4090
    %v4107 = vpack.c.bf16 %v4091, %v4091
    %v4108 = vld [vmem:[#allocation7] sm:$0xff]
    %v4109 = vld [vmem:[#allocation7 + $0x8] sm:$0xff]
    %v4110 = vld [vmem:[#allocation7 + $0x10] sm:$0xff]
    %v4111 = vld [vmem:[#allocation7 + $0x18] sm:$0xff]
    %v4112 = vld [vmem:[#allocation7 + $0x20] sm:$0xff]
    %v4113 = vld [vmem:[#allocation7 + $0x28] sm:$0xff]
    %v4114 = vld [vmem:[#allocation7 + $0x30] sm:$0xff]
    %v4115 = vld [vmem:[#allocation7 + $0x38] sm:$0xff]
    %v4116 = vld [vmem:[#allocation7 + $0x40] sm:$0xff]
    %v4117 = vld [vmem:[#allocation7 + $0x48] sm:$0xff]
    %v4118 = vld [vmem:[#allocation7 + $0x50] sm:$0xff]
    %v4119 = vld [vmem:[#allocation7 + $0x58] sm:$0xff]
    %v4120 = vld [vmem:[#allocation7 + $0x60] sm:$0xff]
    %v4121 = vld [vmem:[#allocation7 + $0x68] sm:$0xff]
    %v4122 = vld [vmem:[#allocation7 + $0x70] sm:$0xff]
    %v4123 = vld [vmem:[#allocation7 + $0x78] sm:$0xff]
    %v4124 = vld [vmem:[#allocation7 + $0x80] sm:$0xff]
    %v4125 = vld [vmem:[#allocation7 + $0x88] sm:$0xff]
    %v4126 = vld [vmem:[#allocation7 + $0x90] sm:$0xff]
    %v4127 = vld [vmem:[#allocation7 + $0x98] sm:$0xff]
    %v4128 = vld [vmem:[#allocation7 + $0xa0] sm:$0xff]
    %v4129 = vld [vmem:[#allocation7 + $0xa8] sm:$0xff]
    %v4130 = vld [vmem:[#allocation7 + $0xb0] sm:$0xff]
    %v4131 = vld [vmem:[#allocation7 + $0xb8] sm:$0xff]
    %v4132 = vld [vmem:[#allocation7 + $0xc0] sm:$0xff]
    %v4133 = vld [vmem:[#allocation7 + $0xc8] sm:$0xff]
    %v4134 = vld [vmem:[#allocation7 + $0xd0] sm:$0xff]
    %v4135 = vld [vmem:[#allocation7 + $0xd8] sm:$0xff]
    %v4136 = vld [vmem:[#allocation7 + $0xe0] sm:$0xff]
    %v4137 = vld [vmem:[#allocation7 + $0xe8] sm:$0xff]
    %v4138 = vld [vmem:[#allocation7 + $0xf0] sm:$0xff]
    %v4139 = vld [vmem:[#allocation7 + $0xf8] sm:$0xff]
    %v4140 = vld [vmem:[#allocation7 + $0x100] sm:$0xff]
    %v4141 = vld [vmem:[#allocation7 + $0x108] sm:$0xff]
    %v4142 = vld [vmem:[#allocation7 + $0x110] sm:$0xff]
    %v4143 = vld [vmem:[#allocation7 + $0x118] sm:$0xff]
    %v4144 = vld [vmem:[#allocation7 + $0x120] sm:$0xff]
    %v4145 = vld [vmem:[#allocation7 + $0x128] sm:$0xff]
    %v4146 = vld [vmem:[#allocation7 + $0x130] sm:$0xff]
    %v4147 = vld [vmem:[#allocation7 + $0x138] sm:$0xff]
    %v4148 = vld [vmem:[#allocation7 + $0x140] sm:$0xff]
    %v4149 = vld [vmem:[#allocation7 + $0x148] sm:$0xff]
    %v4150 = vld [vmem:[#allocation7 + $0x150] sm:$0xff]
    %v4151 = vld [vmem:[#allocation7 + $0x158] sm:$0xff]
    %v4152 = vld [vmem:[#allocation7 + $0x160] sm:$0xff]
    %v4153 = vld [vmem:[#allocation7 + $0x168] sm:$0xff]
    %v4154 = vld [vmem:[#allocation7 + $0x170] sm:$0xff]
    %v4155 = vld [vmem:[#allocation7 + $0x178] sm:$0xff]
    %v4156 = vld [vmem:[#allocation7 + $0x180] sm:$0xff]
    %v4157 = vld [vmem:[#allocation7 + $0x188] sm:$0xff]
    %v4158 = vld [vmem:[#allocation7 + $0x190] sm:$0xff]
    %v4159 = vld [vmem:[#allocation7 + $0x198] sm:$0xff]
    %v4160 = vld [vmem:[#allocation7 + $0x1a0] sm:$0xff]
    %v4161 = vld [vmem:[#allocation7 + $0x1a8] sm:$0xff]
    %v4162 = vld [vmem:[#allocation7 + $0x1b0] sm:$0xff]
    %v4163 = vld [vmem:[#allocation7 + $0x1b8] sm:$0xff]
    %v4164 = vld [vmem:[#allocation7 + $0x1c0] sm:$0xff]
    %v4165 = vld [vmem:[#allocation7 + $0x1c8] sm:$0xff]
    %v4166 = vld [vmem:[#allocation7 + $0x1d0] sm:$0xff]
    %v4167 = vld [vmem:[#allocation7 + $0x1d8] sm:$0xff]
    %v4168 = vld [vmem:[#allocation7 + $0x1e0] sm:$0xff]
    %v4169 = vld [vmem:[#allocation7 + $0x1e8] sm:$0xff]
    %v4170 = vld [vmem:[#allocation7 + $0x1f0] sm:$0xff]
    %v4171 = vld [vmem:[#allocation7 + $0x1f8] sm:$0xff]
    %v4172 = vld [vmem:[#allocation7 + $0x200] sm:$0xff]
    %v4173 = vld [vmem:[#allocation7 + $0x208] sm:$0xff]
    %v4174 = vld [vmem:[#allocation7 + $0x210] sm:$0xff]
    %v4175 = vld [vmem:[#allocation7 + $0x218] sm:$0xff]
    %v4176 = vld [vmem:[#allocation7 + $0x220] sm:$0xff]
    %v4177 = vld [vmem:[#allocation7 + $0x228] sm:$0xff]
    %v4178 = vld [vmem:[#allocation7 + $0x230] sm:$0xff]
    %v4179 = vld [vmem:[#allocation7 + $0x238] sm:$0xff]
    %v4180 = vld [vmem:[#allocation7 + $0x240] sm:$0xff]
    %v4181 = vld [vmem:[#allocation7 + $0x248] sm:$0xff]
    %v4182 = vld [vmem:[#allocation7 + $0x250] sm:$0xff]
    %v4183 = vld [vmem:[#allocation7 + $0x258] sm:$0xff]
    %v4184 = vld [vmem:[#allocation7 + $0x260] sm:$0xff]
    %v4185 = vld [vmem:[#allocation7 + $0x268] sm:$0xff]
    %v4186 = vld [vmem:[#allocation7 + $0x270] sm:$0xff]
    %v4187 = vld [vmem:[#allocation7 + $0x278] sm:$0xff]
    %v4188 = vld [vmem:[#allocation7 + $0x280] sm:$0xff]
    %v4189 = vld [vmem:[#allocation7 + $0x288] sm:$0xff]
    %v4190 = vld [vmem:[#allocation7 + $0x290] sm:$0xff]
    %v4191 = vld [vmem:[#allocation7 + $0x298] sm:$0xff]
    %v4192 = vld [vmem:[#allocation7 + $0x2a0] sm:$0xff]
    %v4193 = vld [vmem:[#allocation7 + $0x2a8] sm:$0xff]
    %v4194 = vld [vmem:[#allocation7 + $0x2b0] sm:$0xff]
    %v4195 = vld [vmem:[#allocation7 + $0x2b8] sm:$0xff]
    %v4196 = vld [vmem:[#allocation7 + $0x2c0] sm:$0xff]
    %v4197 = vld [vmem:[#allocation7 + $0x2c8] sm:$0xff]
    %v4198 = vld [vmem:[#allocation7 + $0x2d0] sm:$0xff]
    %v4199 = vld [vmem:[#allocation7 + $0x2d8] sm:$0xff]
    %v4200 = vld [vmem:[#allocation7 + $0x2e0] sm:$0xff]
    %v4201 = vld [vmem:[#allocation7 + $0x2e8] sm:$0xff]
    %v4202 = vld [vmem:[#allocation7 + $0x2f0] sm:$0xff]
    %v4203 = vld [vmem:[#allocation7 + $0x2f8] sm:$0xff]
    %v4204 = vld [vmem:[#allocation7 + $0x300] sm:$0xff]
    %v4205 = vld [vmem:[#allocation7 + $0x308] sm:$0xff]
    %v4206 = vld [vmem:[#allocation7 + $0x310] sm:$0xff]
    %v4207 = vld [vmem:[#allocation7 + $0x318] sm:$0xff]
    %v4208 = vld [vmem:[#allocation7 + $0x320] sm:$0xff]
    %v4209 = vld [vmem:[#allocation7 + $0x328] sm:$0xff]
    %v4210 = vld [vmem:[#allocation7 + $0x330] sm:$0xff]
    %v4211 = vld [vmem:[#allocation7 + $0x338] sm:$0xff]
    %v4212 = vld [vmem:[#allocation7 + $0x340] sm:$0xff]
    %v4213 = vld [vmem:[#allocation7 + $0x348] sm:$0xff]
    %v4214 = vld [vmem:[#allocation7 + $0x350] sm:$0xff]
    %v4215 = vld [vmem:[#allocation7 + $0x358] sm:$0xff]
    %v4216 = vld [vmem:[#allocation7 + $0x360] sm:$0xff]
    %v4217 = vld [vmem:[#allocation7 + $0x368] sm:$0xff]
    %v4218 = vld [vmem:[#allocation7 + $0x370] sm:$0xff]
    %v4219 = vld [vmem:[#allocation7 + $0x378] sm:$0xff]
    %v4220 = vld [vmem:[#allocation7 + $0x380] sm:$0xff]
    %v4221 = vld [vmem:[#allocation7 + $0x388] sm:$0xff]
    %v4222 = vld [vmem:[#allocation7 + $0x390] sm:$0xff]
    %v4223 = vld [vmem:[#allocation7 + $0x398] sm:$0xff]
    %v4224 = vld [vmem:[#allocation7 + $0x3a0] sm:$0xff]
    %v4225 = vld [vmem:[#allocation7 + $0x3a8] sm:$0xff]
    %v4226 = vld [vmem:[#allocation7 + $0x3b0] sm:$0xff]
    %v4227 = vld [vmem:[#allocation7 + $0x3b8] sm:$0xff]
    %v4228 = vld [vmem:[#allocation7 + $0x3c0] sm:$0xff]
    %v4229 = vld [vmem:[#allocation7 + $0x3c8] sm:$0xff]
    %v4230 = vld [vmem:[#allocation7 + $0x3d0] sm:$0xff]
    %v4231 = vld [vmem:[#allocation7 + $0x3d8] sm:$0xff]
    %v4232 = vld [vmem:[#allocation7 + $0x3e0] sm:$0xff]
    %v4233 = vld [vmem:[#allocation7 + $0x3e8] sm:$0xff]
    %v4234 = vld [vmem:[#allocation7 + $0x3f0] sm:$0xff]
    %v4235 = vld [vmem:[#allocation7 + $0x3f8] sm:$0xff]
    %v4236 = vld [vmem:[#allocation7 + $0x400] sm:$0xff]
    %v4237 = vld [vmem:[#allocation7 + $0x408] sm:$0xff]
    %v4238 = vld [vmem:[#allocation7 + $0x410] sm:$0xff]
    %v4239 = vld [vmem:[#allocation7 + $0x418] sm:$0xff]
    %v4240 = vld [vmem:[#allocation7 + $0x420] sm:$0xff]
    %v4241 = vld [vmem:[#allocation7 + $0x428] sm:$0xff]
    %v4242 = vld [vmem:[#allocation7 + $0x430] sm:$0xff]
    %v4243 = vld [vmem:[#allocation7 + $0x438] sm:$0xff]
    %v4244 = vld [vmem:[#allocation7 + $0x440] sm:$0xff]
    %v4245 = vld [vmem:[#allocation7 + $0x448] sm:$0xff]
    %v4246 = vld [vmem:[#allocation7 + $0x450] sm:$0xff]
    %v4247 = vld [vmem:[#allocation7 + $0x458] sm:$0xff]
    %v4248 = vld [vmem:[#allocation7 + $0x460] sm:$0xff]
    %v4249 = vld [vmem:[#allocation7 + $0x468] sm:$0xff]
    %v4250 = vld [vmem:[#allocation7 + $0x470] sm:$0xff]
    %v4251 = vld [vmem:[#allocation7 + $0x478] sm:$0xff]
    %v4252 = vld [vmem:[#allocation7 + $0x480] sm:$0xff]
    %v4253 = vld [vmem:[#allocation7 + $0x488] sm:$0xff]
    %v4254 = vld [vmem:[#allocation7 + $0x490] sm:$0xff]
    %v4255 = vld [vmem:[#allocation7 + $0x498] sm:$0xff]
    %v4256 = vld [vmem:[#allocation7 + $0x4a0] sm:$0xff]
    %v4257 = vld [vmem:[#allocation7 + $0x4a8] sm:$0xff]
    %v4258 = vld [vmem:[#allocation7 + $0x4b0] sm:$0xff]
    %v4259 = vld [vmem:[#allocation7 + $0x4b8] sm:$0xff]
    %v4260 = vld [vmem:[#allocation7 + $0x4c0] sm:$0xff]
    %v4261 = vld [vmem:[#allocation7 + $0x4c8] sm:$0xff]
    %v4262 = vld [vmem:[#allocation7 + $0x4d0] sm:$0xff]
    %v4263 = vld [vmem:[#allocation7 + $0x4d8] sm:$0xff]
    %v4264 = vld [vmem:[#allocation7 + $0x4e0] sm:$0xff]
    %v4265 = vld [vmem:[#allocation7 + $0x4e8] sm:$0xff]
    %v4266 = vld [vmem:[#allocation7 + $0x4f0] sm:$0xff]
    %v4267 = vld [vmem:[#allocation7 + $0x4f8] sm:$0xff]
    %v4268 = vld [vmem:[#allocation7 + $0x500] sm:$0xff]
    %v4269 = vld [vmem:[#allocation7 + $0x508] sm:$0xff]
    %v4270 = vld [vmem:[#allocation7 + $0x510] sm:$0xff]
    %v4271 = vld [vmem:[#allocation7 + $0x518] sm:$0xff]
    %v4272 = vld [vmem:[#allocation7 + $0x520] sm:$0xff]
    %v4273 = vld [vmem:[#allocation7 + $0x528] sm:$0xff]
    %v4274 = vld [vmem:[#allocation7 + $0x530] sm:$0xff]
    %v4275 = vld [vmem:[#allocation7 + $0x538] sm:$0xff]
    %v4276 = vld [vmem:[#allocation7 + $0x540] sm:$0xff]
    %v4277 = vld [vmem:[#allocation7 + $0x548] sm:$0xff]
    %v4278 = vld [vmem:[#allocation7 + $0x550] sm:$0xff]
    %v4279 = vld [vmem:[#allocation7 + $0x558] sm:$0xff]
    %v4280 = vld [vmem:[#allocation7 + $0x560] sm:$0xff]
    %v4281 = vld [vmem:[#allocation7 + $0x568] sm:$0xff]
    %v4282 = vld [vmem:[#allocation7 + $0x570] sm:$0xff]
    %v4283 = vld [vmem:[#allocation7 + $0x578] sm:$0xff]
    %v4284 = vld [vmem:[#allocation7 + $0x580] sm:$0xff]
    %v4285 = vld [vmem:[#allocation7 + $0x588] sm:$0xff]
    %v4286 = vld [vmem:[#allocation7 + $0x590] sm:$0xff]
    %v4287 = vld [vmem:[#allocation7 + $0x598] sm:$0xff]
    %v4288 = vld [vmem:[#allocation7 + $0x5a0] sm:$0xff]
    %v4289 = vld [vmem:[#allocation7 + $0x5a8] sm:$0xff]
    %v4290 = vld [vmem:[#allocation7 + $0x5b0] sm:$0xff]
    %v4291 = vld [vmem:[#allocation7 + $0x5b8] sm:$0xff]
    %v4292 = vld [vmem:[#allocation7 + $0x5c0] sm:$0xff]
    %v4293 = vld [vmem:[#allocation7 + $0x5c8] sm:$0xff]
    %v4294 = vld [vmem:[#allocation7 + $0x5d0] sm:$0xff]
    %v4295 = vld [vmem:[#allocation7 + $0x5d8] sm:$0xff]
    %v4296 = vld [vmem:[#allocation7 + $0x5e0] sm:$0xff]
    %v4297 = vld [vmem:[#allocation7 + $0x5e8] sm:$0xff]
    %v4298 = vld [vmem:[#allocation7 + $0x5f0] sm:$0xff]
    %v4299 = vld [vmem:[#allocation7 + $0x5f8] sm:$0xff]
    %v4300 = vld [vmem:[#allocation7 + $0x600] sm:$0xff]
    %v4301 = vld [vmem:[#allocation7 + $0x608] sm:$0xff]
    %v4302 = vld [vmem:[#allocation7 + $0x610] sm:$0xff]
    %v4303 = vld [vmem:[#allocation7 + $0x618] sm:$0xff]
    %v4304 = vld [vmem:[#allocation7 + $0x620] sm:$0xff]
    %v4305 = vld [vmem:[#allocation7 + $0x628] sm:$0xff]
    %v4306 = vld [vmem:[#allocation7 + $0x630] sm:$0xff]
    %v4307 = vld [vmem:[#allocation7 + $0x638] sm:$0xff]
    %v4308 = vld [vmem:[#allocation7 + $0x640] sm:$0xff]
    %v4309 = vld [vmem:[#allocation7 + $0x648] sm:$0xff]
    %v4310 = vld [vmem:[#allocation7 + $0x650] sm:$0xff]
    %v4311 = vld [vmem:[#allocation7 + $0x658] sm:$0xff]
    %v4312 = vld [vmem:[#allocation7 + $0x660] sm:$0xff]
    %v4313 = vld [vmem:[#allocation7 + $0x668] sm:$0xff]
    %v4314 = vld [vmem:[#allocation7 + $0x670] sm:$0xff]
    %v4315 = vld [vmem:[#allocation7 + $0x678] sm:$0xff]
    %v4316 = vld [vmem:[#allocation7 + $0x680] sm:$0xff]
    %v4317 = vld [vmem:[#allocation7 + $0x688] sm:$0xff]
    %v4318 = vld [vmem:[#allocation7 + $0x690] sm:$0xff]
    %v4319 = vld [vmem:[#allocation7 + $0x698] sm:$0xff]
    %v4320 = vld [vmem:[#allocation7 + $0x6a0] sm:$0xff]
    %v4321 = vld [vmem:[#allocation7 + $0x6a8] sm:$0xff]
    %v4322 = vld [vmem:[#allocation7 + $0x6b0] sm:$0xff]
    %v4323 = vld [vmem:[#allocation7 + $0x6b8] sm:$0xff]
    %v4324 = vld [vmem:[#allocation7 + $0x6c0] sm:$0xff]
    %v4325 = vld [vmem:[#allocation7 + $0x6c8] sm:$0xff]
    %v4326 = vld [vmem:[#allocation7 + $0x6d0] sm:$0xff]
    %v4327 = vld [vmem:[#allocation7 + $0x6d8] sm:$0xff]
    %v4328 = vld [vmem:[#allocation7 + $0x6e0] sm:$0xff]
    %v4329 = vld [vmem:[#allocation7 + $0x6e8] sm:$0xff]
    %v4330 = vld [vmem:[#allocation7 + $0x6f0] sm:$0xff]
    %v4331 = vld [vmem:[#allocation7 + $0x6f8] sm:$0xff]
    %v4332 = vld [vmem:[#allocation7 + $0x700] sm:$0xff]
    %v4333 = vld [vmem:[#allocation7 + $0x708] sm:$0xff]
    %v4334 = vld [vmem:[#allocation7 + $0x710] sm:$0xff]
    %v4335 = vld [vmem:[#allocation7 + $0x718] sm:$0xff]
    %v4336 = vld [vmem:[#allocation7 + $0x720] sm:$0xff]
    %v4337 = vld [vmem:[#allocation7 + $0x728] sm:$0xff]
    %v4338 = vld [vmem:[#allocation7 + $0x730] sm:$0xff]
    %v4339 = vld [vmem:[#allocation7 + $0x738] sm:$0xff]
    %v4340 = vld [vmem:[#allocation7 + $0x740] sm:$0xff]
    %v4341 = vld [vmem:[#allocation7 + $0x748] sm:$0xff]
    %v4342 = vld [vmem:[#allocation7 + $0x750] sm:$0xff]
    %v4343 = vld [vmem:[#allocation7 + $0x758] sm:$0xff]
    %v4344 = vld [vmem:[#allocation7 + $0x760] sm:$0xff]
    %v4345 = vld [vmem:[#allocation7 + $0x768] sm:$0xff]
    %v4346 = vld [vmem:[#allocation7 + $0x770] sm:$0xff]
    %v4347 = vld [vmem:[#allocation7 + $0x778] sm:$0xff]
    %v4348 = vld [vmem:[#allocation7 + $0x780] sm:$0xff]
    %v4349 = vld [vmem:[#allocation7 + $0x788] sm:$0xff]
    %v4350 = vld [vmem:[#allocation7 + $0x790] sm:$0xff]
    %v4351 = vld [vmem:[#allocation7 + $0x798] sm:$0xff]
    %v4352 = vld [vmem:[#allocation7 + $0x7a0] sm:$0xff]
    %v4353 = vld [vmem:[#allocation7 + $0x7a8] sm:$0xff]
    %v4354 = vld [vmem:[#allocation7 + $0x7b0] sm:$0xff]
    %v4355 = vld [vmem:[#allocation7 + $0x7b8] sm:$0xff]
    %v4356 = vld [vmem:[#allocation7 + $0x7c0] sm:$0xff]
    %v4357 = vld [vmem:[#allocation7 + $0x7c8] sm:$0xff]
    %v4358 = vld [vmem:[#allocation7 + $0x7d0] sm:$0xff]
    %v4359 = vld [vmem:[#allocation7 + $0x7d8] sm:$0xff]
    %v4360 = vld [vmem:[#allocation7 + $0x7e0] sm:$0xff]
    %v4361 = vld [vmem:[#allocation7 + $0x7e8] sm:$0xff]
    %v4362 = vld [vmem:[#allocation7 + $0x7f0] sm:$0xff]
    %v4363 = vld [vmem:[#allocation7 + $0x7f8] sm:$0xff]
    %v4364 = vld [vmem:[%s7] sm:$0xf]
    %v4366 = vlaneseq
    %v4367 = vshrl.u32 %v4366, 7
    %v4368 = vsub.s32 0, %v4367
    %v4369 = vrot.slane %v4364, %v4368
    %v4370 = vlaneseq
    %v4371 = vshrl.u32 %v4370, 7
    %v4372 = vsub.s32 1, %v4371
    %v4373 = vrot.slane %v4364, %v4372
    %v4374 = vlaneseq
    %v4375 = vshrl.u32 %v4374, 7
    %v4376 = vsub.s32 2, %v4375
    %v4377 = vrot.slane %v4364, %v4376
    %v4378 = vlaneseq
    %v4379 = vshrl.u32 %v4378, 7
    %v4380 = vsub.s32 3, %v4379
    %v4381 = vrot.slane %v4364, %v4380
    %v4642 = vunpack.c.l.b16 %v4108
    %v4643 = vunpack.c.h.b16 %v4108
    %v4644 = vunpack.c.l.b16 %v4109
    %v4645 = vunpack.c.h.b16 %v4109
    %v4646 = vunpack.c.l.b16 %v4110
    %v4647 = vunpack.c.h.b16 %v4110
    %v4648 = vunpack.c.l.b16 %v4111
    %v4649 = vunpack.c.h.b16 %v4111
    %v4650 = vunpack.c.l.b16 %v4112
    %v4651 = vunpack.c.h.b16 %v4112
    %v4652 = vunpack.c.l.b16 %v4113
    %v4653 = vunpack.c.h.b16 %v4113
    %v4654 = vunpack.c.l.b16 %v4114
    %v4655 = vunpack.c.h.b16 %v4114
    %v4656 = vunpack.c.l.b16 %v4115
    %v4657 = vunpack.c.h.b16 %v4115
    %v4658 = vunpack.c.l.b16 %v4116
    %v4659 = vunpack.c.h.b16 %v4116
    %v4660 = vunpack.c.l.b16 %v4117
    %v4661 = vunpack.c.h.b16 %v4117
    %v4662 = vunpack.c.l.b16 %v4118
    %v4663 = vunpack.c.h.b16 %v4118
    %v4664 = vunpack.c.l.b16 %v4119
    %v4665 = vunpack.c.h.b16 %v4119
    %v4666 = vunpack.c.l.b16 %v4120
    %v4667 = vunpack.c.h.b16 %v4120
    %v4668 = vunpack.c.l.b16 %v4121
    %v4669 = vunpack.c.h.b16 %v4121
    %v4670 = vunpack.c.l.b16 %v4122
    %v4671 = vunpack.c.h.b16 %v4122
    %v4672 = vunpack.c.l.b16 %v4123
    %v4673 = vunpack.c.h.b16 %v4123
    %v4674 = vunpack.c.l.b16 %v4124
    %v4675 = vunpack.c.h.b16 %v4124
    %v4676 = vunpack.c.l.b16 %v4125
    %v4677 = vunpack.c.h.b16 %v4125
    %v4678 = vunpack.c.l.b16 %v4126
    %v4679 = vunpack.c.h.b16 %v4126
    %v4680 = vunpack.c.l.b16 %v4127
    %v4681 = vunpack.c.h.b16 %v4127
    %v4682 = vunpack.c.l.b16 %v4128
    %v4683 = vunpack.c.h.b16 %v4128
    %v4684 = vunpack.c.l.b16 %v4129
    %v4685 = vunpack.c.h.b16 %v4129
    %v4686 = vunpack.c.l.b16 %v4130
    %v4687 = vunpack.c.h.b16 %v4130
    %v4688 = vunpack.c.l.b16 %v4131
    %v4689 = vunpack.c.h.b16 %v4131
    %v4690 = vunpack.c.l.b16 %v4132
    %v4691 = vunpack.c.h.b16 %v4132
    %v4692 = vunpack.c.l.b16 %v4133
    %v4693 = vunpack.c.h.b16 %v4133
    %v4694 = vunpack.c.l.b16 %v4134
    %v4695 = vunpack.c.h.b16 %v4134
    %v4696 = vunpack.c.l.b16 %v4135
    %v4697 = vunpack.c.h.b16 %v4135
    %v4698 = vunpack.c.l.b16 %v4136
    %v4699 = vunpack.c.h.b16 %v4136
    %v4700 = vunpack.c.l.b16 %v4137
    %v4701 = vunpack.c.h.b16 %v4137
    %v4702 = vunpack.c.l.b16 %v4138
    %v4703 = vunpack.c.h.b16 %v4138
    %v4704 = vunpack.c.l.b16 %v4139
    %v4705 = vunpack.c.h.b16 %v4139
    %v4706 = vunpack.c.l.b16 %v4140
    %v4707 = vunpack.c.h.b16 %v4140
    %v4708 = vunpack.c.l.b16 %v4141
    %v4709 = vunpack.c.h.b16 %v4141
    %v4710 = vunpack.c.l.b16 %v4142
    %v4711 = vunpack.c.h.b16 %v4142
    %v4712 = vunpack.c.l.b16 %v4143
    %v4713 = vunpack.c.h.b16 %v4143
    %v4714 = vunpack.c.l.b16 %v4144
    %v4715 = vunpack.c.h.b16 %v4144
    %v4716 = vunpack.c.l.b16 %v4145
    %v4717 = vunpack.c.h.b16 %v4145
    %v4718 = vunpack.c.l.b16 %v4146
    %v4719 = vunpack.c.h.b16 %v4146
    %v4720 = vunpack.c.l.b16 %v4147
    %v4721 = vunpack.c.h.b16 %v4147
    %v4722 = vunpack.c.l.b16 %v4148
    %v4723 = vunpack.c.h.b16 %v4148
    %v4724 = vunpack.c.l.b16 %v4149
    %v4725 = vunpack.c.h.b16 %v4149
    %v4726 = vunpack.c.l.b16 %v4150
    %v4727 = vunpack.c.h.b16 %v4150
    %v4728 = vunpack.c.l.b16 %v4151
    %v4729 = vunpack.c.h.b16 %v4151
    %v4730 = vunpack.c.l.b16 %v4152
    %v4731 = vunpack.c.h.b16 %v4152
    %v4732 = vunpack.c.l.b16 %v4153
    %v4733 = vunpack.c.h.b16 %v4153
    %v4734 = vunpack.c.l.b16 %v4154
    %v4735 = vunpack.c.h.b16 %v4154
    %v4736 = vunpack.c.l.b16 %v4155
    %v4737 = vunpack.c.h.b16 %v4155
    %v4738 = vunpack.c.l.b16 %v4156
    %v4739 = vunpack.c.h.b16 %v4156
    %v4740 = vunpack.c.l.b16 %v4157
    %v4741 = vunpack.c.h.b16 %v4157
    %v4742 = vunpack.c.l.b16 %v4158
    %v4743 = vunpack.c.h.b16 %v4158
    %v4744 = vunpack.c.l.b16 %v4159
    %v4745 = vunpack.c.h.b16 %v4159
    %v4746 = vunpack.c.l.b16 %v4160
    %v4747 = vunpack.c.h.b16 %v4160
    %v4748 = vunpack.c.l.b16 %v4161
    %v4749 = vunpack.c.h.b16 %v4161
    %v4750 = vunpack.c.l.b16 %v4162
    %v4751 = vunpack.c.h.b16 %v4162
    %v4752 = vunpack.c.l.b16 %v4163
    %v4753 = vunpack.c.h.b16 %v4163
    %v4754 = vunpack.c.l.b16 %v4164
    %v4755 = vunpack.c.h.b16 %v4164
    %v4756 = vunpack.c.l.b16 %v4165
    %v4757 = vunpack.c.h.b16 %v4165
    %v4758 = vunpack.c.l.b16 %v4166
    %v4759 = vunpack.c.h.b16 %v4166
    %v4760 = vunpack.c.l.b16 %v4167
    %v4761 = vunpack.c.h.b16 %v4167
    %v4762 = vunpack.c.l.b16 %v4168
    %v4763 = vunpack.c.h.b16 %v4168
    %v4764 = vunpack.c.l.b16 %v4169
    %v4765 = vunpack.c.h.b16 %v4169
    %v4766 = vunpack.c.l.b16 %v4170
    %v4767 = vunpack.c.h.b16 %v4170
    %v4768 = vunpack.c.l.b16 %v4171
    %v4769 = vunpack.c.h.b16 %v4171
    %v4770 = vunpack.c.l.b16 %v4172
    %v4771 = vunpack.c.h.b16 %v4172
    %v4772 = vunpack.c.l.b16 %v4173
    %v4773 = vunpack.c.h.b16 %v4173
    %v4774 = vunpack.c.l.b16 %v4174
    %v4775 = vunpack.c.h.b16 %v4174
    %v4776 = vunpack.c.l.b16 %v4175
    %v4777 = vunpack.c.h.b16 %v4175
    %v4778 = vunpack.c.l.b16 %v4176
    %v4779 = vunpack.c.h.b16 %v4176
    %v4780 = vunpack.c.l.b16 %v4177
    %v4781 = vunpack.c.h.b16 %v4177
    %v4782 = vunpack.c.l.b16 %v4178
    %v4783 = vunpack.c.h.b16 %v4178
    %v4784 = vunpack.c.l.b16 %v4179
    %v4785 = vunpack.c.h.b16 %v4179
    %v4786 = vunpack.c.l.b16 %v4180
    %v4787 = vunpack.c.h.b16 %v4180
    %v4788 = vunpack.c.l.b16 %v4181
    %v4789 = vunpack.c.h.b16 %v4181
    %v4790 = vunpack.c.l.b16 %v4182
    %v4791 = vunpack.c.h.b16 %v4182
    %v4792 = vunpack.c.l.b16 %v4183
    %v4793 = vunpack.c.h.b16 %v4183
    %v4794 = vunpack.c.l.b16 %v4184
    %v4795 = vunpack.c.h.b16 %v4184
    %v4796 = vunpack.c.l.b16 %v4185
    %v4797 = vunpack.c.h.b16 %v4185
    %v4798 = vunpack.c.l.b16 %v4186
    %v4799 = vunpack.c.h.b16 %v4186
    %v4800 = vunpack.c.l.b16 %v4187
    %v4801 = vunpack.c.h.b16 %v4187
    %v4802 = vunpack.c.l.b16 %v4188
    %v4803 = vunpack.c.h.b16 %v4188
    %v4804 = vunpack.c.l.b16 %v4189
    %v4805 = vunpack.c.h.b16 %v4189
    %v4806 = vunpack.c.l.b16 %v4190
    %v4807 = vunpack.c.h.b16 %v4190
    %v4808 = vunpack.c.l.b16 %v4191
    %v4809 = vunpack.c.h.b16 %v4191
    %v4810 = vunpack.c.l.b16 %v4192
    %v4811 = vunpack.c.h.b16 %v4192
    %v4812 = vunpack.c.l.b16 %v4193
    %v4813 = vunpack.c.h.b16 %v4193
    %v4814 = vunpack.c.l.b16 %v4194
    %v4815 = vunpack.c.h.b16 %v4194
    %v4816 = vunpack.c.l.b16 %v4195
    %v4817 = vunpack.c.h.b16 %v4195
    %v4818 = vunpack.c.l.b16 %v4196
    %v4819 = vunpack.c.h.b16 %v4196
    %v4820 = vunpack.c.l.b16 %v4197
    %v4821 = vunpack.c.h.b16 %v4197
    %v4822 = vunpack.c.l.b16 %v4198
    %v4823 = vunpack.c.h.b16 %v4198
    %v4824 = vunpack.c.l.b16 %v4199
    %v4825 = vunpack.c.h.b16 %v4199
    %v4826 = vunpack.c.l.b16 %v4200
    %v4827 = vunpack.c.h.b16 %v4200
    %v4828 = vunpack.c.l.b16 %v4201
    %v4829 = vunpack.c.h.b16 %v4201
    %v4830 = vunpack.c.l.b16 %v4202
    %v4831 = vunpack.c.h.b16 %v4202
    %v4832 = vunpack.c.l.b16 %v4203
    %v4833 = vunpack.c.h.b16 %v4203
    %v4834 = vunpack.c.l.b16 %v4204
    %v4835 = vunpack.c.h.b16 %v4204
    %v4836 = vunpack.c.l.b16 %v4205
    %v4837 = vunpack.c.h.b16 %v4205
    %v4838 = vunpack.c.l.b16 %v4206
    %v4839 = vunpack.c.h.b16 %v4206
    %v4840 = vunpack.c.l.b16 %v4207
    %v4841 = vunpack.c.h.b16 %v4207
    %v4842 = vunpack.c.l.b16 %v4208
    %v4843 = vunpack.c.h.b16 %v4208
    %v4844 = vunpack.c.l.b16 %v4209
    %v4845 = vunpack.c.h.b16 %v4209
    %v4846 = vunpack.c.l.b16 %v4210
    %v4847 = vunpack.c.h.b16 %v4210
    %v4848 = vunpack.c.l.b16 %v4211
    %v4849 = vunpack.c.h.b16 %v4211
    %v4850 = vunpack.c.l.b16 %v4212
    %v4851 = vunpack.c.h.b16 %v4212
    %v4852 = vunpack.c.l.b16 %v4213
    %v4853 = vunpack.c.h.b16 %v4213
    %v4854 = vunpack.c.l.b16 %v4214
    %v4855 = vunpack.c.h.b16 %v4214
    %v4856 = vunpack.c.l.b16 %v4215
    %v4857 = vunpack.c.h.b16 %v4215
    %v4858 = vunpack.c.l.b16 %v4216
    %v4859 = vunpack.c.h.b16 %v4216
    %v4860 = vunpack.c.l.b16 %v4217
    %v4861 = vunpack.c.h.b16 %v4217
    %v4862 = vunpack.c.l.b16 %v4218
    %v4863 = vunpack.c.h.b16 %v4218
    %v4864 = vunpack.c.l.b16 %v4219
    %v4865 = vunpack.c.h.b16 %v4219
    %v4866 = vunpack.c.l.b16 %v4220
    %v4867 = vunpack.c.h.b16 %v4220
    %v4868 = vunpack.c.l.b16 %v4221
    %v4869 = vunpack.c.h.b16 %v4221
    %v4870 = vunpack.c.l.b16 %v4222
    %v4871 = vunpack.c.h.b16 %v4222
    %v4872 = vunpack.c.l.b16 %v4223
    %v4873 = vunpack.c.h.b16 %v4223
    %v4874 = vunpack.c.l.b16 %v4224
    %v4875 = vunpack.c.h.b16 %v4224
    %v4876 = vunpack.c.l.b16 %v4225
    %v4877 = vunpack.c.h.b16 %v4225
    %v4878 = vunpack.c.l.b16 %v4226
    %v4879 = vunpack.c.h.b16 %v4226
    %v4880 = vunpack.c.l.b16 %v4227
    %v4881 = vunpack.c.h.b16 %v4227
    %v4882 = vunpack.c.l.b16 %v4228
    %v4883 = vunpack.c.h.b16 %v4228
    %v4884 = vunpack.c.l.b16 %v4229
    %v4885 = vunpack.c.h.b16 %v4229
    %v4886 = vunpack.c.l.b16 %v4230
    %v4887 = vunpack.c.h.b16 %v4230
    %v4888 = vunpack.c.l.b16 %v4231
    %v4889 = vunpack.c.h.b16 %v4231
    %v4890 = vunpack.c.l.b16 %v4232
    %v4891 = vunpack.c.h.b16 %v4232
    %v4892 = vunpack.c.l.b16 %v4233
    %v4893 = vunpack.c.h.b16 %v4233
    %v4894 = vunpack.c.l.b16 %v4234
    %v4895 = vunpack.c.h.b16 %v4234
    %v4896 = vunpack.c.l.b16 %v4235
    %v4897 = vunpack.c.h.b16 %v4235
    %v4898 = vunpack.c.l.b16 %v4236
    %v4899 = vunpack.c.h.b16 %v4236
    %v4900 = vunpack.c.l.b16 %v4237
    %v4901 = vunpack.c.h.b16 %v4237
    %v4902 = vunpack.c.l.b16 %v4238
    %v4903 = vunpack.c.h.b16 %v4238
    %v4904 = vunpack.c.l.b16 %v4239
    %v4905 = vunpack.c.h.b16 %v4239
    %v4906 = vunpack.c.l.b16 %v4240
    %v4907 = vunpack.c.h.b16 %v4240
    %v4908 = vunpack.c.l.b16 %v4241
    %v4909 = vunpack.c.h.b16 %v4241
    %v4910 = vunpack.c.l.b16 %v4242
    %v4911 = vunpack.c.h.b16 %v4242
    %v4912 = vunpack.c.l.b16 %v4243
    %v4913 = vunpack.c.h.b16 %v4243
    %v4914 = vunpack.c.l.b16 %v4244
    %v4915 = vunpack.c.h.b16 %v4244
    %v4916 = vunpack.c.l.b16 %v4245
    %v4917 = vunpack.c.h.b16 %v4245
    %v4918 = vunpack.c.l.b16 %v4246
    %v4919 = vunpack.c.h.b16 %v4246
    %v4920 = vunpack.c.l.b16 %v4247
    %v4921 = vunpack.c.h.b16 %v4247
    %v4922 = vunpack.c.l.b16 %v4248
    %v4923 = vunpack.c.h.b16 %v4248
    %v4924 = vunpack.c.l.b16 %v4249
    %v4925 = vunpack.c.h.b16 %v4249
    %v4926 = vunpack.c.l.b16 %v4250
    %v4927 = vunpack.c.h.b16 %v4250
    %v4928 = vunpack.c.l.b16 %v4251
    %v4929 = vunpack.c.h.b16 %v4251
    %v4930 = vunpack.c.l.b16 %v4252
    %v4931 = vunpack.c.h.b16 %v4252
    %v4932 = vunpack.c.l.b16 %v4253
    %v4933 = vunpack.c.h.b16 %v4253
    %v4934 = vunpack.c.l.b16 %v4254
    %v4935 = vunpack.c.h.b16 %v4254
    %v4936 = vunpack.c.l.b16 %v4255
    %v4937 = vunpack.c.h.b16 %v4255
    %v4938 = vunpack.c.l.b16 %v4256
    %v4939 = vunpack.c.h.b16 %v4256
    %v4940 = vunpack.c.l.b16 %v4257
    %v4941 = vunpack.c.h.b16 %v4257
    %v4942 = vunpack.c.l.b16 %v4258
    %v4943 = vunpack.c.h.b16 %v4258
    %v4944 = vunpack.c.l.b16 %v4259
    %v4945 = vunpack.c.h.b16 %v4259
    %v4946 = vunpack.c.l.b16 %v4260
    %v4947 = vunpack.c.h.b16 %v4260
    %v4948 = vunpack.c.l.b16 %v4261
    %v4949 = vunpack.c.h.b16 %v4261
    %v4950 = vunpack.c.l.b16 %v4262
    %v4951 = vunpack.c.h.b16 %v4262
    %v4952 = vunpack.c.l.b16 %v4263
    %v4953 = vunpack.c.h.b16 %v4263
    %v4954 = vunpack.c.l.b16 %v4264
    %v4955 = vunpack.c.h.b16 %v4264
    %v4956 = vunpack.c.l.b16 %v4265
    %v4957 = vunpack.c.h.b16 %v4265
    %v4958 = vunpack.c.l.b16 %v4266
    %v4959 = vunpack.c.h.b16 %v4266
    %v4960 = vunpack.c.l.b16 %v4267
    %v4961 = vunpack.c.h.b16 %v4267
    %v4962 = vunpack.c.l.b16 %v4268
    %v4963 = vunpack.c.h.b16 %v4268
    %v4964 = vunpack.c.l.b16 %v4269
    %v4965 = vunpack.c.h.b16 %v4269
    %v4966 = vunpack.c.l.b16 %v4270
    %v4967 = vunpack.c.h.b16 %v4270
    %v4968 = vunpack.c.l.b16 %v4271
    %v4969 = vunpack.c.h.b16 %v4271
    %v4970 = vunpack.c.l.b16 %v4272
    %v4971 = vunpack.c.h.b16 %v4272
    %v4972 = vunpack.c.l.b16 %v4273
    %v4973 = vunpack.c.h.b16 %v4273
    %v4974 = vunpack.c.l.b16 %v4274
    %v4975 = vunpack.c.h.b16 %v4274
    %v4976 = vunpack.c.l.b16 %v4275
    %v4977 = vunpack.c.h.b16 %v4275
    %v4978 = vunpack.c.l.b16 %v4276
    %v4979 = vunpack.c.h.b16 %v4276
    %v4980 = vunpack.c.l.b16 %v4277
    %v4981 = vunpack.c.h.b16 %v4277
    %v4982 = vunpack.c.l.b16 %v4278
    %v4983 = vunpack.c.h.b16 %v4278
    %v4984 = vunpack.c.l.b16 %v4279
    %v4985 = vunpack.c.h.b16 %v4279
    %v4986 = vunpack.c.l.b16 %v4280
    %v4987 = vunpack.c.h.b16 %v4280
    %v4988 = vunpack.c.l.b16 %v4281
    %v4989 = vunpack.c.h.b16 %v4281
    %v4990 = vunpack.c.l.b16 %v4282
    %v4991 = vunpack.c.h.b16 %v4282
    %v4992 = vunpack.c.l.b16 %v4283
    %v4993 = vunpack.c.h.b16 %v4283
    %v4994 = vunpack.c.l.b16 %v4284
    %v4995 = vunpack.c.h.b16 %v4284
    %v4996 = vunpack.c.l.b16 %v4285
    %v4997 = vunpack.c.h.b16 %v4285
    %v4998 = vunpack.c.l.b16 %v4286
    %v4999 = vunpack.c.h.b16 %v4286
    %v5000 = vunpack.c.l.b16 %v4287
    %v5001 = vunpack.c.h.b16 %v4287
    %v5002 = vunpack.c.l.b16 %v4288
    %v5003 = vunpack.c.h.b16 %v4288
    %v5004 = vunpack.c.l.b16 %v4289
    %v5005 = vunpack.c.h.b16 %v4289
    %v5006 = vunpack.c.l.b16 %v4290
    %v5007 = vunpack.c.h.b16 %v4290
    %v5008 = vunpack.c.l.b16 %v4291
    %v5009 = vunpack.c.h.b16 %v4291
    %v5010 = vunpack.c.l.b16 %v4292
    %v5011 = vunpack.c.h.b16 %v4292
    %v5012 = vunpack.c.l.b16 %v4293
    %v5013 = vunpack.c.h.b16 %v4293
    %v5014 = vunpack.c.l.b16 %v4294
    %v5015 = vunpack.c.h.b16 %v4294
    %v5016 = vunpack.c.l.b16 %v4295
    %v5017 = vunpack.c.h.b16 %v4295
    %v5018 = vunpack.c.l.b16 %v4296
    %v5019 = vunpack.c.h.b16 %v4296
    %v5020 = vunpack.c.l.b16 %v4297
    %v5021 = vunpack.c.h.b16 %v4297
    %v5022 = vunpack.c.l.b16 %v4298
    %v5023 = vunpack.c.h.b16 %v4298
    %v5024 = vunpack.c.l.b16 %v4299
    %v5025 = vunpack.c.h.b16 %v4299
    %v5026 = vunpack.c.l.b16 %v4300
    %v5027 = vunpack.c.h.b16 %v4300
    %v5028 = vunpack.c.l.b16 %v4301
    %v5029 = vunpack.c.h.b16 %v4301
    %v5030 = vunpack.c.l.b16 %v4302
    %v5031 = vunpack.c.h.b16 %v4302
    %v5032 = vunpack.c.l.b16 %v4303
    %v5033 = vunpack.c.h.b16 %v4303
    %v5034 = vunpack.c.l.b16 %v4304
    %v5035 = vunpack.c.h.b16 %v4304
    %v5036 = vunpack.c.l.b16 %v4305
    %v5037 = vunpack.c.h.b16 %v4305
    %v5038 = vunpack.c.l.b16 %v4306
    %v5039 = vunpack.c.h.b16 %v4306
    %v5040 = vunpack.c.l.b16 %v4307
    %v5041 = vunpack.c.h.b16 %v4307
    %v5042 = vunpack.c.l.b16 %v4308
    %v5043 = vunpack.c.h.b16 %v4308
    %v5044 = vunpack.c.l.b16 %v4309
    %v5045 = vunpack.c.h.b16 %v4309
    %v5046 = vunpack.c.l.b16 %v4310
    %v5047 = vunpack.c.h.b16 %v4310
    %v5048 = vunpack.c.l.b16 %v4311
    %v5049 = vunpack.c.h.b16 %v4311
    %v5050 = vunpack.c.l.b16 %v4312
    %v5051 = vunpack.c.h.b16 %v4312
    %v5052 = vunpack.c.l.b16 %v4313
    %v5053 = vunpack.c.h.b16 %v4313
    %v5054 = vunpack.c.l.b16 %v4314
    %v5055 = vunpack.c.h.b16 %v4314
    %v5056 = vunpack.c.l.b16 %v4315
    %v5057 = vunpack.c.h.b16 %v4315
    %v5058 = vunpack.c.l.b16 %v4316
    %v5059 = vunpack.c.h.b16 %v4316
    %v5060 = vunpack.c.l.b16 %v4317
    %v5061 = vunpack.c.h.b16 %v4317
    %v5062 = vunpack.c.l.b16 %v4318
    %v5063 = vunpack.c.h.b16 %v4318
    %v5064 = vunpack.c.l.b16 %v4319
    %v5065 = vunpack.c.h.b16 %v4319
    %v5066 = vunpack.c.l.b16 %v4320
    %v5067 = vunpack.c.h.b16 %v4320
    %v5068 = vunpack.c.l.b16 %v4321
    %v5069 = vunpack.c.h.b16 %v4321
    %v5070 = vunpack.c.l.b16 %v4322
    %v5071 = vunpack.c.h.b16 %v4322
    %v5072 = vunpack.c.l.b16 %v4323
    %v5073 = vunpack.c.h.b16 %v4323
    %v5074 = vunpack.c.l.b16 %v4324
    %v5075 = vunpack.c.h.b16 %v4324
    %v5076 = vunpack.c.l.b16 %v4325
    %v5077 = vunpack.c.h.b16 %v4325
    %v5078 = vunpack.c.l.b16 %v4326
    %v5079 = vunpack.c.h.b16 %v4326
    %v5080 = vunpack.c.l.b16 %v4327
    %v5081 = vunpack.c.h.b16 %v4327
    %v5082 = vunpack.c.l.b16 %v4328
    %v5083 = vunpack.c.h.b16 %v4328
    %v5084 = vunpack.c.l.b16 %v4329
    %v5085 = vunpack.c.h.b16 %v4329
    %v5086 = vunpack.c.l.b16 %v4330
    %v5087 = vunpack.c.h.b16 %v4330
    %v5088 = vunpack.c.l.b16 %v4331
    %v5089 = vunpack.c.h.b16 %v4331
    %v5090 = vunpack.c.l.b16 %v4332
    %v5091 = vunpack.c.h.b16 %v4332
    %v5092 = vunpack.c.l.b16 %v4333
    %v5093 = vunpack.c.h.b16 %v4333
    %v5094 = vunpack.c.l.b16 %v4334
    %v5095 = vunpack.c.h.b16 %v4334
    %v5096 = vunpack.c.l.b16 %v4335
    %v5097 = vunpack.c.h.b16 %v4335
    %v5098 = vunpack.c.l.b16 %v4336
    %v5099 = vunpack.c.h.b16 %v4336
    %v5100 = vunpack.c.l.b16 %v4337
    %v5101 = vunpack.c.h.b16 %v4337
    %v5102 = vunpack.c.l.b16 %v4338
    %v5103 = vunpack.c.h.b16 %v4338
    %v5104 = vunpack.c.l.b16 %v4339
    %v5105 = vunpack.c.h.b16 %v4339
    %v5106 = vunpack.c.l.b16 %v4340
    %v5107 = vunpack.c.h.b16 %v4340
    %v5108 = vunpack.c.l.b16 %v4341
    %v5109 = vunpack.c.h.b16 %v4341
    %v5110 = vunpack.c.l.b16 %v4342
    %v5111 = vunpack.c.h.b16 %v4342
    %v5112 = vunpack.c.l.b16 %v4343
    %v5113 = vunpack.c.h.b16 %v4343
    %v5114 = vunpack.c.l.b16 %v4344
    %v5115 = vunpack.c.h.b16 %v4344
    %v5116 = vunpack.c.l.b16 %v4345
    %v5117 = vunpack.c.h.b16 %v4345
    %v5118 = vunpack.c.l.b16 %v4346
    %v5119 = vunpack.c.h.b16 %v4346
    %v5120 = vunpack.c.l.b16 %v4347
    %v5121 = vunpack.c.h.b16 %v4347
    %v5122 = vunpack.c.l.b16 %v4348
    %v5123 = vunpack.c.h.b16 %v4348
    %v5124 = vunpack.c.l.b16 %v4349
    %v5125 = vunpack.c.h.b16 %v4349
    %v5126 = vunpack.c.l.b16 %v4350
    %v5127 = vunpack.c.h.b16 %v4350
    %v5128 = vunpack.c.l.b16 %v4351
    %v5129 = vunpack.c.h.b16 %v4351
    %v5130 = vunpack.c.l.b16 %v4352
    %v5131 = vunpack.c.h.b16 %v4352
    %v5132 = vunpack.c.l.b16 %v4353
    %v5133 = vunpack.c.h.b16 %v4353
    %v5134 = vunpack.c.l.b16 %v4354
    %v5135 = vunpack.c.h.b16 %v4354
    %v5136 = vunpack.c.l.b16 %v4355
    %v5137 = vunpack.c.h.b16 %v4355
    %v5138 = vunpack.c.l.b16 %v4356
    %v5139 = vunpack.c.h.b16 %v4356
    %v5140 = vunpack.c.l.b16 %v4357
    %v5141 = vunpack.c.h.b16 %v4357
    %v5142 = vunpack.c.l.b16 %v4358
    %v5143 = vunpack.c.h.b16 %v4358
    %v5144 = vunpack.c.l.b16 %v4359
    %v5145 = vunpack.c.h.b16 %v4359
    %v5146 = vunpack.c.l.b16 %v4360
    %v5147 = vunpack.c.h.b16 %v4360
    %v5148 = vunpack.c.l.b16 %v4361
    %v5149 = vunpack.c.h.b16 %v4361
    %v5150 = vunpack.c.l.b16 %v4362
    %v5151 = vunpack.c.h.b16 %v4362
    %v5152 = vunpack.c.l.b16 %v4363
    %v5153 = vunpack.c.h.b16 %v4363
    %v5154 = vpack.c.b16 %v4646, %v4642
    %v5155 = vpack.c.b16 %v4647, %v4643
    %v5156 = vpack.c.b16 %v4648, %v4644
    %v5157 = vpack.c.b16 %v4649, %v4645
    %v5158 = vpack.c.b16 %v4654, %v4650
    %v5159 = vpack.c.b16 %v4655, %v4651
    %v5160 = vpack.c.b16 %v4656, %v4652
    %v5161 = vpack.c.b16 %v4657, %v4653
    %v5162 = vpack.c.b16 %v4662, %v4658
    %v5163 = vpack.c.b16 %v4663, %v4659
    %v5164 = vpack.c.b16 %v4664, %v4660
    %v5165 = vpack.c.b16 %v4665, %v4661
    %v5166 = vpack.c.b16 %v4670, %v4666
    %v5167 = vpack.c.b16 %v4671, %v4667
    %v5168 = vpack.c.b16 %v4672, %v4668
    %v5169 = vpack.c.b16 %v4673, %v4669
    %v5170 = vpack.c.b16 %v4678, %v4674
    %v5171 = vpack.c.b16 %v4679, %v4675
    %v5172 = vpack.c.b16 %v4680, %v4676
    %v5173 = vpack.c.b16 %v4681, %v4677
    %v5174 = vpack.c.b16 %v4686, %v4682
    %v5175 = vpack.c.b16 %v4687, %v4683
    %v5176 = vpack.c.b16 %v4688, %v4684
    %v5177 = vpack.c.b16 %v4689, %v4685
    %v5178 = vpack.c.b16 %v4694, %v4690
    %v5179 = vpack.c.b16 %v4695, %v4691
    %v5180 = vpack.c.b16 %v4696, %v4692
    %v5181 = vpack.c.b16 %v4697, %v4693
    %v5182 = vpack.c.b16 %v4702, %v4698
    %v5183 = vpack.c.b16 %v4703, %v4699
    %v5184 = vpack.c.b16 %v4704, %v4700
    %v5185 = vpack.c.b16 %v4705, %v4701
    %v5186 = vpack.c.b16 %v4710, %v4706
    %v5187 = vpack.c.b16 %v4711, %v4707
    %v5188 = vpack.c.b16 %v4712, %v4708
    %v5189 = vpack.c.b16 %v4713, %v4709
    %v5190 = vpack.c.b16 %v4718, %v4714
    %v5191 = vpack.c.b16 %v4719, %v4715
    %v5192 = vpack.c.b16 %v4720, %v4716
    %v5193 = vpack.c.b16 %v4721, %v4717
    %v5194 = vpack.c.b16 %v4726, %v4722
    %v5195 = vpack.c.b16 %v4727, %v4723
    %v5196 = vpack.c.b16 %v4728, %v4724
    %v5197 = vpack.c.b16 %v4729, %v4725
    %v5198 = vpack.c.b16 %v4734, %v4730
    %v5199 = vpack.c.b16 %v4735, %v4731
    %v5200 = vpack.c.b16 %v4736, %v4732
    %v5201 = vpack.c.b16 %v4737, %v4733
    %v5202 = vpack.c.b16 %v4742, %v4738
    %v5203 = vpack.c.b16 %v4743, %v4739
    %v5204 = vpack.c.b16 %v4744, %v4740
    %v5205 = vpack.c.b16 %v4745, %v4741
    %v5206 = vpack.c.b16 %v4750, %v4746
    %v5207 = vpack.c.b16 %v4751, %v4747
    %v5208 = vpack.c.b16 %v4752, %v4748
    %v5209 = vpack.c.b16 %v4753, %v4749
    %v5210 = vpack.c.b16 %v4758, %v4754
    %v5211 = vpack.c.b16 %v4759, %v4755
    %v5212 = vpack.c.b16 %v4760, %v4756
    %v5213 = vpack.c.b16 %v4761, %v4757
    %v5214 = vpack.c.b16 %v4766, %v4762
    %v5215 = vpack.c.b16 %v4767, %v4763
    %v5216 = vpack.c.b16 %v4768, %v4764
    %v5217 = vpack.c.b16 %v4769, %v4765
    %v5218 = vpack.c.b16 %v4774, %v4770
    %v5219 = vpack.c.b16 %v4775, %v4771
    %v5220 = vpack.c.b16 %v4776, %v4772
    %v5221 = vpack.c.b16 %v4777, %v4773
    %v5222 = vpack.c.b16 %v4782, %v4778
    %v5223 = vpack.c.b16 %v4783, %v4779
    %v5224 = vpack.c.b16 %v4784, %v4780
    %v5225 = vpack.c.b16 %v4785, %v4781
    %v5226 = vpack.c.b16 %v4790, %v4786
    %v5227 = vpack.c.b16 %v4791, %v4787
    %v5228 = vpack.c.b16 %v4792, %v4788
    %v5229 = vpack.c.b16 %v4793, %v4789
    %v5230 = vpack.c.b16 %v4798, %v4794
    %v5231 = vpack.c.b16 %v4799, %v4795
    %v5232 = vpack.c.b16 %v4800, %v4796
    %v5233 = vpack.c.b16 %v4801, %v4797
    %v5234 = vpack.c.b16 %v4806, %v4802
    %v5235 = vpack.c.b16 %v4807, %v4803
    %v5236 = vpack.c.b16 %v4808, %v4804
    %v5237 = vpack.c.b16 %v4809, %v4805
    %v5238 = vpack.c.b16 %v4814, %v4810
    %v5239 = vpack.c.b16 %v4815, %v4811
    %v5240 = vpack.c.b16 %v4816, %v4812
    %v5241 = vpack.c.b16 %v4817, %v4813
    %v5242 = vpack.c.b16 %v4822, %v4818
    %v5243 = vpack.c.b16 %v4823, %v4819
    %v5244 = vpack.c.b16 %v4824, %v4820
    %v5245 = vpack.c.b16 %v4825, %v4821
    %v5246 = vpack.c.b16 %v4830, %v4826
    %v5247 = vpack.c.b16 %v4831, %v4827
    %v5248 = vpack.c.b16 %v4832, %v4828
    %v5249 = vpack.c.b16 %v4833, %v4829
    %v5250 = vpack.c.b16 %v4838, %v4834
    %v5251 = vpack.c.b16 %v4839, %v4835
    %v5252 = vpack.c.b16 %v4840, %v4836
    %v5253 = vpack.c.b16 %v4841, %v4837
    %v5254 = vpack.c.b16 %v4846, %v4842
    %v5255 = vpack.c.b16 %v4847, %v4843
    %v5256 = vpack.c.b16 %v4848, %v4844
    %v5257 = vpack.c.b16 %v4849, %v4845
    %v5258 = vpack.c.b16 %v4854, %v4850
    %v5259 = vpack.c.b16 %v4855, %v4851
    %v5260 = vpack.c.b16 %v4856, %v4852
    %v5261 = vpack.c.b16 %v4857, %v4853
    %v5262 = vpack.c.b16 %v4862, %v4858
    %v5263 = vpack.c.b16 %v4863, %v4859
    %v5264 = vpack.c.b16 %v4864, %v4860
    %v5265 = vpack.c.b16 %v4865, %v4861
    %v5266 = vpack.c.b16 %v4870, %v4866
    %v5267 = vpack.c.b16 %v4871, %v4867
    %v5268 = vpack.c.b16 %v4872, %v4868
    %v5269 = vpack.c.b16 %v4873, %v4869
    %v5270 = vpack.c.b16 %v4878, %v4874
    %v5271 = vpack.c.b16 %v4879, %v4875
    %v5272 = vpack.c.b16 %v4880, %v4876
    %v5273 = vpack.c.b16 %v4881, %v4877
    %v5274 = vpack.c.b16 %v4886, %v4882
    %v5275 = vpack.c.b16 %v4887, %v4883
    %v5276 = vpack.c.b16 %v4888, %v4884
    %v5277 = vpack.c.b16 %v4889, %v4885
    %v5278 = vpack.c.b16 %v4894, %v4890
    %v5279 = vpack.c.b16 %v4895, %v4891
    %v5280 = vpack.c.b16 %v4896, %v4892
    %v5281 = vpack.c.b16 %v4897, %v4893
    %v5282 = vpack.c.b16 %v4902, %v4898
    %v5283 = vpack.c.b16 %v4903, %v4899
    %v5284 = vpack.c.b16 %v4904, %v4900
    %v5285 = vpack.c.b16 %v4905, %v4901
    %v5286 = vpack.c.b16 %v4910, %v4906
    %v5287 = vpack.c.b16 %v4911, %v4907
    %v5288 = vpack.c.b16 %v4912, %v4908
    %v5289 = vpack.c.b16 %v4913, %v4909
    %v5290 = vpack.c.b16 %v4918, %v4914
    %v5291 = vpack.c.b16 %v4919, %v4915
    %v5292 = vpack.c.b16 %v4920, %v4916
    %v5293 = vpack.c.b16 %v4921, %v4917
    %v5294 = vpack.c.b16 %v4926, %v4922
    %v5295 = vpack.c.b16 %v4927, %v4923
    %v5296 = vpack.c.b16 %v4928, %v4924
    %v5297 = vpack.c.b16 %v4929, %v4925
    %v5298 = vpack.c.b16 %v4934, %v4930
    %v5299 = vpack.c.b16 %v4935, %v4931
    %v5300 = vpack.c.b16 %v4936, %v4932
    %v5301 = vpack.c.b16 %v4937, %v4933
    %v5302 = vpack.c.b16 %v4942, %v4938
    %v5303 = vpack.c.b16 %v4943, %v4939
    %v5304 = vpack.c.b16 %v4944, %v4940
    %v5305 = vpack.c.b16 %v4945, %v4941
    %v5306 = vpack.c.b16 %v4950, %v4946
    %v5307 = vpack.c.b16 %v4951, %v4947
    %v5308 = vpack.c.b16 %v4952, %v4948
    %v5309 = vpack.c.b16 %v4953, %v4949
    %v5310 = vpack.c.b16 %v4958, %v4954
    %v5311 = vpack.c.b16 %v4959, %v4955
    %v5312 = vpack.c.b16 %v4960, %v4956
    %v5313 = vpack.c.b16 %v4961, %v4957
    %v5314 = vpack.c.b16 %v4966, %v4962
    %v5315 = vpack.c.b16 %v4967, %v4963
    %v5316 = vpack.c.b16 %v4968, %v4964
    %v5317 = vpack.c.b16 %v4969, %v4965
    %v5318 = vpack.c.b16 %v4974, %v4970
    %v5319 = vpack.c.b16 %v4975, %v4971
    %v5320 = vpack.c.b16 %v4976, %v4972
    %v5321 = vpack.c.b16 %v4977, %v4973
    %v5322 = vpack.c.b16 %v4982, %v4978
    %v5323 = vpack.c.b16 %v4983, %v4979
    %v5324 = vpack.c.b16 %v4984, %v4980
    %v5325 = vpack.c.b16 %v4985, %v4981
    %v5326 = vpack.c.b16 %v4990, %v4986
    %v5327 = vpack.c.b16 %v4991, %v4987
    %v5328 = vpack.c.b16 %v4992, %v4988
    %v5329 = vpack.c.b16 %v4993, %v4989
    %v5330 = vpack.c.b16 %v4998, %v4994
    %v5331 = vpack.c.b16 %v4999, %v4995
    %v5332 = vpack.c.b16 %v5000, %v4996
    %v5333 = vpack.c.b16 %v5001, %v4997
    %v5334 = vpack.c.b16 %v5006, %v5002
    %v5335 = vpack.c.b16 %v5007, %v5003
    %v5336 = vpack.c.b16 %v5008, %v5004
    %v5337 = vpack.c.b16 %v5009, %v5005
    %v5338 = vpack.c.b16 %v5014, %v5010
    %v5339 = vpack.c.b16 %v5015, %v5011
    %v5340 = vpack.c.b16 %v5016, %v5012
    %v5341 = vpack.c.b16 %v5017, %v5013
    %v5342 = vpack.c.b16 %v5022, %v5018
    %v5343 = vpack.c.b16 %v5023, %v5019
    %v5344 = vpack.c.b16 %v5024, %v5020
    %v5345 = vpack.c.b16 %v5025, %v5021
    %v5346 = vpack.c.b16 %v5030, %v5026
    %v5347 = vpack.c.b16 %v5031, %v5027
    %v5348 = vpack.c.b16 %v5032, %v5028
    %v5349 = vpack.c.b16 %v5033, %v5029
    %v5350 = vpack.c.b16 %v5038, %v5034
    %v5351 = vpack.c.b16 %v5039, %v5035
    %v5352 = vpack.c.b16 %v5040, %v5036
    %v5353 = vpack.c.b16 %v5041, %v5037
    %v5354 = vpack.c.b16 %v5046, %v5042
    %v5355 = vpack.c.b16 %v5047, %v5043
    %v5356 = vpack.c.b16 %v5048, %v5044
    %v5357 = vpack.c.b16 %v5049, %v5045
    %v5358 = vpack.c.b16 %v5054, %v5050
    %v5359 = vpack.c.b16 %v5055, %v5051
    %v5360 = vpack.c.b16 %v5056, %v5052
    %v5361 = vpack.c.b16 %v5057, %v5053
    %v5362 = vpack.c.b16 %v5062, %v5058
    %v5363 = vpack.c.b16 %v5063, %v5059
    %v5364 = vpack.c.b16 %v5064, %v5060
    %v5365 = vpack.c.b16 %v5065, %v5061
    %v5366 = vpack.c.b16 %v5070, %v5066
    %v5367 = vpack.c.b16 %v5071, %v5067
    %v5368 = vpack.c.b16 %v5072, %v5068
    %v5369 = vpack.c.b16 %v5073, %v5069
    %v5370 = vpack.c.b16 %v5078, %v5074
    %v5371 = vpack.c.b16 %v5079, %v5075
    %v5372 = vpack.c.b16 %v5080, %v5076
    %v5373 = vpack.c.b16 %v5081, %v5077
    %v5374 = vpack.c.b16 %v5086, %v5082
    %v5375 = vpack.c.b16 %v5087, %v5083
    %v5376 = vpack.c.b16 %v5088, %v5084
    %v5377 = vpack.c.b16 %v5089, %v5085
    %v5378 = vpack.c.b16 %v5094, %v5090
    %v5379 = vpack.c.b16 %v5095, %v5091
    %v5380 = vpack.c.b16 %v5096, %v5092
    %v5381 = vpack.c.b16 %v5097, %v5093
    %v5382 = vpack.c.b16 %v5102, %v5098
    %v5383 = vpack.c.b16 %v5103, %v5099
    %v5384 = vpack.c.b16 %v5104, %v5100
    %v5385 = vpack.c.b16 %v5105, %v5101
    %v5386 = vpack.c.b16 %v5110, %v5106
    %v5387 = vpack.c.b16 %v5111, %v5107
    %v5388 = vpack.c.b16 %v5112, %v5108
    %v5389 = vpack.c.b16 %v5113, %v5109
    %v5390 = vpack.c.b16 %v5118, %v5114
    %v5391 = vpack.c.b16 %v5119, %v5115
    %v5392 = vpack.c.b16 %v5120, %v5116
    %v5393 = vpack.c.b16 %v5121, %v5117
    %v5394 = vpack.c.b16 %v5126, %v5122
    %v5395 = vpack.c.b16 %v5127, %v5123
    %v5396 = vpack.c.b16 %v5128, %v5124
    %v5397 = vpack.c.b16 %v5129, %v5125
    %v5398 = vpack.c.b16 %v5134, %v5130
    %v5399 = vpack.c.b16 %v5135, %v5131
    %v5400 = vpack.c.b16 %v5136, %v5132
    %v5401 = vpack.c.b16 %v5137, %v5133
    %v5402 = vpack.c.b16 %v5142, %v5138
    %v5403 = vpack.c.b16 %v5143, %v5139
    %v5404 = vpack.c.b16 %v5144, %v5140
    %v5405 = vpack.c.b16 %v5145, %v5141
    %v5406 = vpack.c.b16 %v5150, %v5146
    %v5407 = vpack.c.b16 %v5151, %v5147
    %v5408 = vpack.c.b16 %v5152, %v5148
    %v5409 = vpack.c.b16 %v5153, %v5149
    %5666 = vmatprep.subr.bf16.mxu0 %v5155
    %5667 = vmatpush1.bf16.msra.mxu0 %v5154
    %5668 = vmatprep.subr.bf16.mxu0 %v5159
    %5669 = vmatpush1.bf16.msra.mxu0 %v5158
    %5670 = vmatprep.subr.bf16.mxu0 %v5163
    %5671 = vmatpush1.bf16.msra.mxu0 %v5162
    %5672 = vmatprep.subr.bf16.mxu0 %v5167
    %5673 = vmatpush1.bf16.msra.mxu0 %v5166
    %5674 = vmatprep.subr.bf16.mxu0 %v5171
    %5675 = vmatpush1.bf16.msra.mxu0 %v5170
    %5676 = vmatprep.subr.bf16.mxu0 %v5175
    %5677 = vmatpush1.bf16.msra.mxu0 %v5174
    %5678 = vmatprep.subr.bf16.mxu0 %v5179
    %5679 = vmatpush1.bf16.msra.mxu0 %v5178
    %5680 = vmatprep.subr.bf16.mxu0 %v5183
    %5681 = vmatpush1.bf16.msra.mxu0 %v5182
    %5682 = vmatprep.subr.bf16.mxu0 %v5187
    %5683 = vmatpush1.bf16.msra.mxu0 %v5186
    %5684 = vmatprep.subr.bf16.mxu0 %v5191
    %5685 = vmatpush1.bf16.msra.mxu0 %v5190
    %5686 = vmatprep.subr.bf16.mxu0 %v5195
    %5687 = vmatpush1.bf16.msra.mxu0 %v5194
    %5688 = vmatprep.subr.bf16.mxu0 %v5199
    %5689 = vmatpush1.bf16.msra.mxu0 %v5198
    %5690 = vmatprep.subr.bf16.mxu0 %v5203
    %5691 = vmatpush1.bf16.msra.mxu0 %v5202
    %5692 = vmatprep.subr.bf16.mxu0 %v5207
    %5693 = vmatpush1.bf16.msra.mxu0 %v5206
    %5694 = vmatprep.subr.bf16.mxu0 %v5211
    %5695 = vmatpush1.bf16.msra.mxu0 %v5210
    %5696 = vmatprep.subr.bf16.mxu0 %v5215
    %5697 = vmatpush1.bf16.msra.mxu0 %v5214
    %5698 = vmatprep.mubr.bf16.mxu0 %v4101
    %5699 = vmatmul.mubr.bf16.gmra.mrb[0].mxu0 %v4100
    %v5700 = vpop.f32.mrb[0].mxu0
    %v5701 = vadd.f32 %v4369, %v5700
    %v5702 = vpop.f32.mrb[0].mxu0
    %v5703 = vadd.f32 %v4373, %v5702
    %v5704 = vpop.f32.mrb[0].mxu0
    %v5705 = vpop.f32.mrb[0].mxu0
    %5706 = vdwg.mxu0
    %5707 = vmatprep.subr.bf16.mxu0 %v5219
    %5708 = vmatpush1.bf16.msra.mxu0 %v5218
    %5709 = vmatprep.subr.bf16.mxu0 %v5223
    %5710 = vmatpush1.bf16.msra.mxu0 %v5222
    %5711 = vmatprep.subr.bf16.mxu0 %v5227
    %5712 = vmatpush1.bf16.msra.mxu0 %v5226
    %5713 = vmatprep.subr.bf16.mxu0 %v5231
    %5714 = vmatpush1.bf16.msra.mxu0 %v5230
    %5715 = vmatprep.subr.bf16.mxu0 %v5235
    %5716 = vmatpush1.bf16.msra.mxu0 %v5234
    %5717 = vmatprep.subr.bf16.mxu0 %v5239
    %5718 = vmatpush1.bf16.msra.mxu0 %v5238
    %5719 = vmatprep.subr.bf16.mxu0 %v5243
    %5720 = vmatpush1.bf16.msra.mxu0 %v5242
    %5721 = vmatprep.subr.bf16.mxu0 %v5247
    %5722 = vmatpush1.bf16.msra.mxu0 %v5246
    %5723 = vmatprep.subr.bf16.mxu0 %v5251
    %5724 = vmatpush1.bf16.msra.mxu0 %v5250
    %5725 = vmatprep.subr.bf16.mxu0 %v5255
    %5726 = vmatpush1.bf16.msra.mxu0 %v5254
    %5727 = vmatprep.subr.bf16.mxu0 %v5259
    %5728 = vmatpush1.bf16.msra.mxu0 %v5258
    %5729 = vmatprep.subr.bf16.mxu0 %v5263
    %5730 = vmatpush1.bf16.msra.mxu0 %v5262
    %5731 = vmatprep.subr.bf16.mxu0 %v5267
    %5732 = vmatpush1.bf16.msra.mxu0 %v5266
    %5733 = vmatprep.subr.bf16.mxu0 %v5271
    %5734 = vmatpush1.bf16.msra.mxu0 %v5270
    %5735 = vmatprep.subr.bf16.mxu0 %v5275
    %5736 = vmatpush1.bf16.msra.mxu0 %v5274
    %5737 = vmatprep.subr.bf16.mxu0 %v5279
    %5738 = vmatpush1.bf16.msra.mxu0 %v5278
    %5739 = vmatprep.mubr.bf16.mxu0 %v4103
    %5740 = vmatmul.mubr.bf16.gmra.mrb[0].mxu0 %v4102
    %v5741 = vpop.f32.mrb[0].mxu0
    %v5742 = vadd.f32 %v5701, %v5741
    %v5743 = vpop.f32.mrb[0].mxu0
    %v5744 = vadd.f32 %v5703, %v5743
    %v5745 = vpop.f32.mrb[0].mxu0
    %v5746 = vpop.f32.mrb[0].mxu0
    %5747 = vdwg.mxu0
    %5748 = vmatprep.subr.bf16.mxu0 %v5283
    %5749 = vmatpush1.bf16.msra.mxu0 %v5282
    %5750 = vmatprep.subr.bf16.mxu0 %v5287
    %5751 = vmatpush1.bf16.msra.mxu0 %v5286
    %5752 = vmatprep.subr.bf16.mxu0 %v5291
    %5753 = vmatpush1.bf16.msra.mxu0 %v5290
    %5754 = vmatprep.subr.bf16.mxu0 %v5295
    %5755 = vmatpush1.bf16.msra.mxu0 %v5294
    %5756 = vmatprep.subr.bf16.mxu0 %v5299
    %5757 = vmatpush1.bf16.msra.mxu0 %v5298
    %5758 = vmatprep.subr.bf16.mxu0 %v5303
    %5759 = vmatpush1.bf16.msra.mxu0 %v5302
    %5760 = vmatprep.subr.bf16.mxu0 %v5307
    %5761 = vmatpush1.bf16.msra.mxu0 %v5306
    %5762 = vmatprep.subr.bf16.mxu0 %v5311
    %5763 = vmatpush1.bf16.msra.mxu0 %v5310
    %5764 = vmatprep.subr.bf16.mxu0 %v5315
    %5765 = vmatpush1.bf16.msra.mxu0 %v5314
    %5766 = vmatprep.subr.bf16.mxu0 %v5319
    %5767 = vmatpush1.bf16.msra.mxu0 %v5318
    %5768 = vmatprep.subr.bf16.mxu0 %v5323
    %5769 = vmatpush1.bf16.msra.mxu0 %v5322
    %5770 = vmatprep.subr.bf16.mxu0 %v5327
    %5771 = vmatpush1.bf16.msra.mxu0 %v5326
    %5772 = vmatprep.subr.bf16.mxu0 %v5331
    %5773 = vmatpush1.bf16.msra.mxu0 %v5330
    %5774 = vmatprep.subr.bf16.mxu0 %v5335
    %5775 = vmatpush1.bf16.msra.mxu0 %v5334
    %5776 = vmatprep.subr.bf16.mxu0 %v5339
    %5777 = vmatpush1.bf16.msra.mxu0 %v5338
    %5778 = vmatprep.subr.bf16.mxu0 %v5343
    %5779 = vmatpush1.bf16.msra.mxu0 %v5342
    %5780 = vmatprep.mubr.bf16.mxu0 %v4105
    %5781 = vmatmul.mubr.bf16.gmra.mrb[0].mxu0 %v4104
    %v5782 = vpop.f32.mrb[0].mxu0
    %v5783 = vadd.f32 %v5742, %v5782
    %v5784 = vpop.f32.mrb[0].mxu0
    %v5785 = vadd.f32 %v5744, %v5784
    %v5786 = vpop.f32.mrb[0].mxu0
    %v5787 = vpop.f32.mrb[0].mxu0
    %5788 = vdwg.mxu0
    %5789 = vmatprep.subr.bf16.mxu0 %v5347
    %5790 = vmatpush1.bf16.msra.mxu0 %v5346
    %5791 = vmatprep.subr.bf16.mxu0 %v5351
    %5792 = vmatpush1.bf16.msra.mxu0 %v5350
    %5793 = vmatprep.subr.bf16.mxu0 %v5355
    %5794 = vmatpush1.bf16.msra.mxu0 %v5354
    %5795 = vmatprep.subr.bf16.mxu0 %v5359
    %5796 = vmatpush1.bf16.msra.mxu0 %v5358
    %5797 = vmatprep.subr.bf16.mxu0 %v5363
    %5798 = vmatpush1.bf16.msra.mxu0 %v5362
    %5799 = vmatprep.subr.bf16.mxu0 %v5367
    %5800 = vmatpush1.bf16.msra.mxu0 %v5366
    %5801 = vmatprep.subr.bf16.mxu0 %v5371
    %5802 = vmatpush1.bf16.msra.mxu0 %v5370
    %5803 = vmatprep.subr.bf16.mxu0 %v5375
    %5804 = vmatpush1.bf16.msra.mxu0 %v5374
    %5805 = vmatprep.subr.bf16.mxu0 %v5379
    %5806 = vmatpush1.bf16.msra.mxu0 %v5378
    %5807 = vmatprep.subr.bf16.mxu0 %v5383
    %5808 = vmatpush1.bf16.msra.mxu0 %v5382
    %5809 = vmatprep.subr.bf16.mxu0 %v5387
    %5810 = vmatpush1.bf16.msra.mxu0 %v5386
    %5811 = vmatprep.subr.bf16.mxu0 %v5391
    %5812 = vmatpush1.bf16.msra.mxu0 %v5390
    %5813 = vmatprep.subr.bf16.mxu0 %v5395
    %5814 = vmatpush1.bf16.msra.mxu0 %v5394
    %5815 = vmatprep.subr.bf16.mxu0 %v5399
    %5816 = vmatpush1.bf16.msra.mxu0 %v5398
    %5817 = vmatprep.subr.bf16.mxu0 %v5403
    %5818 = vmatpush1.bf16.msra.mxu0 %v5402
    %5819 = vmatprep.subr.bf16.mxu0 %v5407
    %5820 = vmatpush1.bf16.msra.mxu0 %v5406
    %5821 = vmatprep.mubr.bf16.mxu0 %v4107
    %5822 = vmatmul.mubr.bf16.gmra.mrb[0].mxu0 %v4106
    %v5823 = vpop.f32.mrb[0].mxu0
    %v5824 = vadd.f32 %v5783, %v5823
    %v5825 = vpop.f32.mrb[0].mxu0
    %v5826 = vadd.f32 %v5785, %v5825
    %v5827 = vpop.f32.mrb[0].mxu0
    %v5828 = vpop.f32.mrb[0].mxu0
    %5829 = vdwg.mxu0
    %5830 = vmatprep.subr.bf16.mxu0 %v5157
    %5831 = vmatpush1.bf16.msra.mxu0 %v5156
    %5832 = vmatprep.subr.bf16.mxu0 %v5161
    %5833 = vmatpush1.bf16.msra.mxu0 %v5160
    %5834 = vmatprep.subr.bf16.mxu0 %v5165
    %5835 = vmatpush1.bf16.msra.mxu0 %v5164
    %5836 = vmatprep.subr.bf16.mxu0 %v5169
    %5837 = vmatpush1.bf16.msra.mxu0 %v5168
    %5838 = vmatprep.subr.bf16.mxu0 %v5173
    %5839 = vmatpush1.bf16.msra.mxu0 %v5172
    %5840 = vmatprep.subr.bf16.mxu0 %v5177
    %5841 = vmatpush1.bf16.msra.mxu0 %v5176
    %5842 = vmatprep.subr.bf16.mxu0 %v5181
    %5843 = vmatpush1.bf16.msra.mxu0 %v5180
    %5844 = vmatprep.subr.bf16.mxu0 %v5185
    %5845 = vmatpush1.bf16.msra.mxu0 %v5184
    %5846 = vmatprep.subr.bf16.mxu0 %v5189
    %5847 = vmatpush1.bf16.msra.mxu0 %v5188
    %5848 = vmatprep.subr.bf16.mxu0 %v5193
    %5849 = vmatpush1.bf16.msra.mxu0 %v5192
    %5850 = vmatprep.subr.bf16.mxu0 %v5197
    %5851 = vmatpush1.bf16.msra.mxu0 %v5196
    %5852 = vmatprep.subr.bf16.mxu0 %v5201
    %5853 = vmatpush1.bf16.msra.mxu0 %v5200
    %5854 = vmatprep.subr.bf16.mxu0 %v5205
    %5855 = vmatpush1.bf16.msra.mxu0 %v5204
    %5856 = vmatprep.subr.bf16.mxu0 %v5209
    %5857 = vmatpush1.bf16.msra.mxu0 %v5208
    %5858 = vmatprep.subr.bf16.mxu0 %v5213
    %5859 = vmatpush1.bf16.msra.mxu0 %v5212
    %5860 = vmatprep.subr.bf16.mxu0 %v5217
    %5861 = vmatpush1.bf16.msra.mxu0 %v5216
    %5862 = vmatprep.mubr.bf16.mxu0 %v4101
    %5863 = vmatmul.mubr.bf16.gmra.mrb[0].mxu0 %v4100
    %v5864 = vpop.f32.mrb[0].mxu0
    %v5865 = vadd.f32 %v4377, %v5864
    %v5866 = vpop.f32.mrb[0].mxu0
    %v5867 = vadd.f32 %v4381, %v5866
    %v5868 = vpop.f32.mrb[0].mxu0
    %v5869 = vpop.f32.mrb[0].mxu0
    %5870 = vdwg.mxu0
    %5871 = vmatprep.subr.bf16.mxu0 %v5221
    %5872 = vmatpush1.bf16.msra.mxu0 %v5220
    %5873 = vmatprep.subr.bf16.mxu0 %v5225
    %5874 = vmatpush1.bf16.msra.mxu0 %v5224
    %5875 = vmatprep.subr.bf16.mxu0 %v5229
    %5876 = vmatpush1.bf16.msra.mxu0 %v5228
    %5877 = vmatprep.subr.bf16.mxu0 %v5233
    %5878 = vmatpush1.bf16.msra.mxu0 %v5232
    %5879 = vmatprep.subr.bf16.mxu0 %v5237
    %5880 = vmatpush1.bf16.msra.mxu0 %v5236
    %5881 = vmatprep.subr.bf16.mxu0 %v5241
    %5882 = vmatpush1.bf16.msra.mxu0 %v5240
    %5883 = vmatprep.subr.bf16.mxu0 %v5245
    %5884 = vmatpush1.bf16.msra.mxu0 %v5244
    %5885 = vmatprep.subr.bf16.mxu0 %v5249
    %5886 = vmatpush1.bf16.msra.mxu0 %v5248
    %5887 = vmatprep.subr.bf16.mxu0 %v5253
    %5888 = vmatpush1.bf16.msra.mxu0 %v5252
    %5889 = vmatprep.subr.bf16.mxu0 %v5257
    %5890 = vmatpush1.bf16.msra.mxu0 %v5256
    %5891 = vmatprep.subr.bf16.mxu0 %v5261
    %5892 = vmatpush1.bf16.msra.mxu0 %v5260
    %5893 = vmatprep.subr.bf16.mxu0 %v5265
    %5894 = vmatpush1.bf16.msra.mxu0 %v5264
    %5895 = vmatprep.subr.bf16.mxu0 %v5269
    %5896 = vmatpush1.bf16.msra.mxu0 %v5268
    %5897 = vmatprep.subr.bf16.mxu0 %v5273
    %5898 = vmatpush1.bf16.msra.mxu0 %v5272
    %5899 = vmatprep.subr.bf16.mxu0 %v5277
    %5900 = vmatpush1.bf16.msra.mxu0 %v5276
    %5901 = vmatprep.subr.bf16.mxu0 %v5281
    %5902 = vmatpush1.bf16.msra.mxu0 %v5280
    %5903 = vmatprep.mubr.bf16.mxu0 %v4103
    %5904 = vmatmul.mubr.bf16.gmra.mrb[0].mxu0 %v4102
    %v5905 = vpop.f32.mrb[0].mxu0
    %v5906 = vadd.f32 %v5865, %v5905
    %v5907 = vpop.f32.mrb[0].mxu0
    %v5908 = vadd.f32 %v5867, %v5907
    %v5909 = vpop.f32.mrb[0].mxu0
    %v5910 = vpop.f32.mrb[0].mxu0
    %5911 = vdwg.mxu0
    %5912 = vmatprep.subr.bf16.mxu0 %v5285
    %5913 = vmatpush1.bf16.msra.mxu0 %v5284
    %5914 = vmatprep.subr.bf16.mxu0 %v5289
    %5915 = vmatpush1.bf16.msra.mxu0 %v5288
    %5916 = vmatprep.subr.bf16.mxu0 %v5293
    %5917 = vmatpush1.bf16.msra.mxu0 %v5292
    %5918 = vmatprep.subr.bf16.mxu0 %v5297
    %5919 = vmatpush1.bf16.msra.mxu0 %v5296
    %5920 = vmatprep.subr.bf16.mxu0 %v5301
    %5921 = vmatpush1.bf16.msra.mxu0 %v5300
    %5922 = vmatprep.subr.bf16.mxu0 %v5305
    %5923 = vmatpush1.bf16.msra.mxu0 %v5304
    %5924 = vmatprep.subr.bf16.mxu0 %v5309
    %5925 = vmatpush1.bf16.msra.mxu0 %v5308
    %5926 = vmatprep.subr.bf16.mxu0 %v5313
    %5927 = vmatpush1.bf16.msra.mxu0 %v5312
    %5928 = vmatprep.subr.bf16.mxu0 %v5317
    %5929 = vmatpush1.bf16.msra.mxu0 %v5316
    %5930 = vmatprep.subr.bf16.mxu0 %v5321
    %5931 = vmatpush1.bf16.msra.mxu0 %v5320
    %5932 = vmatprep.subr.bf16.mxu0 %v5325
    %5933 = vmatpush1.bf16.msra.mxu0 %v5324
    %5934 = vmatprep.subr.bf16.mxu0 %v5329
    %5935 = vmatpush1.bf16.msra.mxu0 %v5328
    %5936 = vmatprep.subr.bf16.mxu0 %v5333
    %5937 = vmatpush1.bf16.msra.mxu0 %v5332
    %5938 = vmatprep.subr.bf16.mxu0 %v5337
    %5939 = vmatpush1.bf16.msra.mxu0 %v5336
    %5940 = vmatprep.subr.bf16.mxu0 %v5341
    %5941 = vmatpush1.bf16.msra.mxu0 %v5340
    %5942 = vmatprep.subr.bf16.mxu0 %v5345
    %5943 = vmatpush1.bf16.msra.mxu0 %v5344
    %5944 = vmatprep.mubr.bf16.mxu0 %v4105
    %5945 = vmatmul.mubr.bf16.gmra.mrb[0].mxu0 %v4104
    %v5946 = vpop.f32.mrb[0].mxu0
    %v5947 = vadd.f32 %v5906, %v5946
    %v5948 = vpop.f32.mrb[0].mxu0
    %v5949 = vadd.f32 %v5908, %v5948
    %v5950 = vpop.f32.mrb[0].mxu0
    %v5951 = vpop.f32.mrb[0].mxu0
    %5952 = vdwg.mxu0
    %5953 = vmatprep.subr.bf16.mxu0 %v5349
    %5954 = vmatpush1.bf16.msra.mxu0 %v5348
    %5955 = vmatprep.subr.bf16.mxu0 %v5353
    %5956 = vmatpush1.bf16.msra.mxu0 %v5352
    %5957 = vmatprep.subr.bf16.mxu0 %v5357
    %5958 = vmatpush1.bf16.msra.mxu0 %v5356
    %5959 = vmatprep.subr.bf16.mxu0 %v5361
    %5960 = vmatpush1.bf16.msra.mxu0 %v5360
    %5961 = vmatprep.subr.bf16.mxu0 %v5365
    %5962 = vmatpush1.bf16.msra.mxu0 %v5364
    %5963 = vmatprep.subr.bf16.mxu0 %v5369
    %5964 = vmatpush1.bf16.msra.mxu0 %v5368
    %5965 = vmatprep.subr.bf16.mxu0 %v5373
    %5966 = vmatpush1.bf16.msra.mxu0 %v5372
    %5967 = vmatprep.subr.bf16.mxu0 %v5377
    %5968 = vmatpush1.bf16.msra.mxu0 %v5376
    %5969 = vmatprep.subr.bf16.mxu0 %v5381
    %5970 = vmatpush1.bf16.msra.mxu0 %v5380
    %5971 = vmatprep.subr.bf16.mxu0 %v5385
    %5972 = vmatpush1.bf16.msra.mxu0 %v5384
    %5973 = vmatprep.subr.bf16.mxu0 %v5389
    %5974 = vmatpush1.bf16.msra.mxu0 %v5388
    %5975 = vmatprep.subr.bf16.mxu0 %v5393
    %5976 = vmatpush1.bf16.msra.mxu0 %v5392
    %5977 = vmatprep.subr.bf16.mxu0 %v5397
    %5978 = vmatpush1.bf16.msra.mxu0 %v5396
    %5979 = vmatprep.subr.bf16.mxu0 %v5401
    %5980 = vmatpush1.bf16.msra.mxu0 %v5400
    %5981 = vmatprep.subr.bf16.mxu0 %v5405
    %5982 = vmatpush1.bf16.msra.mxu0 %v5404
    %5983 = vmatprep.subr.bf16.mxu0 %v5409
    %5984 = vmatpush1.bf16.msra.mxu0 %v5408
    %5985 = vmatprep.mubr.bf16.mxu0 %v4107
    %5986 = vmatmul.mubr.bf16.gmra.mrb[0].mxu0 %v4106
    %v5987 = vpop.f32.mrb[0].mxu0
    %v5988 = vadd.f32 %v5947, %v5987
    %v5989 = vpop.f32.mrb[0].mxu0
    %v5990 = vadd.f32 %v5949, %v5989
    %v5991 = vpop.f32.mrb[0].mxu0
    %v5992 = vpop.f32.mrb[0].mxu0
    %5993 = vdwg.mxu0
    %v5994 = vpack.c.bf16 %v4092, %v4092
    %v5995 = vpack.c.bf16 %v4093, %v4093
    %v5996 = vpack.c.bf16 %v4094, %v4094
    %v5997 = vpack.c.bf16 %v4095, %v4095
    %v5998 = vld [vmem:[#allocation8] sm:$0xff]
    %v5999 = vld [vmem:[#allocation8 + $0x8] sm:$0xff]
    %v6000 = vld [vmem:[#allocation8 + $0x10] sm:$0xff]
    %v6001 = vld [vmem:[#allocation8 + $0x18] sm:$0xff]
    %v6002 = vld [vmem:[#allocation8 + $0x20] sm:$0xff]
    %v6003 = vld [vmem:[#allocation8 + $0x28] sm:$0xff]
    %v6004 = vld [vmem:[#allocation8 + $0x30] sm:$0xff]
    %v6005 = vld [vmem:[#allocation8 + $0x38] sm:$0xff]
    %v6006 = vld [vmem:[#allocation8 + $0x40] sm:$0xff]
    %v6007 = vld [vmem:[#allocation8 + $0x48] sm:$0xff]
    %v6008 = vld [vmem:[#allocation8 + $0x50] sm:$0xff]
    %v6009 = vld [vmem:[#allocation8 + $0x58] sm:$0xff]
    %v6010 = vld [vmem:[#allocation8 + $0x60] sm:$0xff]
    %v6011 = vld [vmem:[#allocation8 + $0x68] sm:$0xff]
    %v6012 = vld [vmem:[#allocation8 + $0x70] sm:$0xff]
    %v6013 = vld [vmem:[#allocation8 + $0x78] sm:$0xff]
    %v6014 = vld [vmem:[#allocation8 + $0x80] sm:$0xff]
    %v6015 = vld [vmem:[#allocation8 + $0x88] sm:$0xff]
    %v6016 = vld [vmem:[#allocation8 + $0x90] sm:$0xff]
    %v6017 = vld [vmem:[#allocation8 + $0x98] sm:$0xff]
    %v6018 = vld [vmem:[#allocation8 + $0xa0] sm:$0xff]
    %v6019 = vld [vmem:[#allocation8 + $0xa8] sm:$0xff]
    %v6020 = vld [vmem:[#allocation8 + $0xb0] sm:$0xff]
    %v6021 = vld [vmem:[#allocation8 + $0xb8] sm:$0xff]
    %v6022 = vld [vmem:[#allocation8 + $0xc0] sm:$0xff]
    %v6023 = vld [vmem:[#allocation8 + $0xc8] sm:$0xff]
    %v6024 = vld [vmem:[#allocation8 + $0xd0] sm:$0xff]
    %v6025 = vld [vmem:[#allocation8 + $0xd8] sm:$0xff]
    %v6026 = vld [vmem:[#allocation8 + $0xe0] sm:$0xff]
    %v6027 = vld [vmem:[#allocation8 + $0xe8] sm:$0xff]
    %v6028 = vld [vmem:[#allocation8 + $0xf0] sm:$0xff]
    %v6029 = vld [vmem:[#allocation8 + $0xf8] sm:$0xff]
    %v6030 = vld [vmem:[#allocation8 + $0x100] sm:$0xff]
    %v6031 = vld [vmem:[#allocation8 + $0x108] sm:$0xff]
    %v6032 = vld [vmem:[#allocation8 + $0x110] sm:$0xff]
    %v6033 = vld [vmem:[#allocation8 + $0x118] sm:$0xff]
    %v6034 = vld [vmem:[#allocation8 + $0x120] sm:$0xff]
    %v6035 = vld [vmem:[#allocation8 + $0x128] sm:$0xff]
    %v6036 = vld [vmem:[#allocation8 + $0x130] sm:$0xff]
    %v6037 = vld [vmem:[#allocation8 + $0x138] sm:$0xff]
    %v6038 = vld [vmem:[#allocation8 + $0x140] sm:$0xff]
    %v6039 = vld [vmem:[#allocation8 + $0x148] sm:$0xff]
    %v6040 = vld [vmem:[#allocation8 + $0x150] sm:$0xff]
    %v6041 = vld [vmem:[#allocation8 + $0x158] sm:$0xff]
    %v6042 = vld [vmem:[#allocation8 + $0x160] sm:$0xff]
    %v6043 = vld [vmem:[#allocation8 + $0x168] sm:$0xff]
    %v6044 = vld [vmem:[#allocation8 + $0x170] sm:$0xff]
    %v6045 = vld [vmem:[#allocation8 + $0x178] sm:$0xff]
    %v6046 = vld [vmem:[#allocation8 + $0x180] sm:$0xff]
    %v6047 = vld [vmem:[#allocation8 + $0x188] sm:$0xff]
    %v6048 = vld [vmem:[#allocation8 + $0x190] sm:$0xff]
    %v6049 = vld [vmem:[#allocation8 + $0x198] sm:$0xff]
    %v6050 = vld [vmem:[#allocation8 + $0x1a0] sm:$0xff]
    %v6051 = vld [vmem:[#allocation8 + $0x1a8] sm:$0xff]
    %v6052 = vld [vmem:[#allocation8 + $0x1b0] sm:$0xff]
    %v6053 = vld [vmem:[#allocation8 + $0x1b8] sm:$0xff]
    %v6054 = vld [vmem:[#allocation8 + $0x1c0] sm:$0xff]
    %v6055 = vld [vmem:[#allocation8 + $0x1c8] sm:$0xff]
    %v6056 = vld [vmem:[#allocation8 + $0x1d0] sm:$0xff]
    %v6057 = vld [vmem:[#allocation8 + $0x1d8] sm:$0xff]
    %v6058 = vld [vmem:[#allocation8 + $0x1e0] sm:$0xff]
    %v6059 = vld [vmem:[#allocation8 + $0x1e8] sm:$0xff]
    %v6060 = vld [vmem:[#allocation8 + $0x1f0] sm:$0xff]
    %v6061 = vld [vmem:[#allocation8 + $0x1f8] sm:$0xff]
    %v6062 = vld [vmem:[%s9] sm:$0x3]
    %v6064 = vlaneseq
    %v6065 = vshrl.u32 %v6064, 7
    %v6066 = vsub.s32 0, %v6065
    %v6067 = vrot.slane %v6062, %v6066
    %v6068 = vlaneseq
    %v6069 = vshrl.u32 %v6068, 7
    %v6070 = vsub.s32 1, %v6069
    %v6071 = vrot.slane %v6062, %v6070
    %v6138 = vunpack.c.l.b16 %v5998
    %v6139 = vunpack.c.h.b16 %v5998
    %v6140 = vunpack.c.l.b16 %v5999
    %v6141 = vunpack.c.h.b16 %v5999
    %v6142 = vunpack.c.l.b16 %v6000
    %v6143 = vunpack.c.h.b16 %v6000
    %v6144 = vunpack.c.l.b16 %v6001
    %v6145 = vunpack.c.h.b16 %v6001
    %v6146 = vunpack.c.l.b16 %v6002
    %v6147 = vunpack.c.h.b16 %v6002
    %v6148 = vunpack.c.l.b16 %v6003
    %v6149 = vunpack.c.h.b16 %v6003
    %v6150 = vunpack.c.l.b16 %v6004
    %v6151 = vunpack.c.h.b16 %v6004
    %v6152 = vunpack.c.l.b16 %v6005
    %v6153 = vunpack.c.h.b16 %v6005
    %v6154 = vunpack.c.l.b16 %v6006
    %v6155 = vunpack.c.h.b16 %v6006
    %v6156 = vunpack.c.l.b16 %v6007
    %v6157 = vunpack.c.h.b16 %v6007
    %v6158 = vunpack.c.l.b16 %v6008
    %v6159 = vunpack.c.h.b16 %v6008
    %v6160 = vunpack.c.l.b16 %v6009
    %v6161 = vunpack.c.h.b16 %v6009
    %v6162 = vunpack.c.l.b16 %v6010
    %v6163 = vunpack.c.h.b16 %v6010
    %v6164 = vunpack.c.l.b16 %v6011
    %v6165 = vunpack.c.h.b16 %v6011
    %v6166 = vunpack.c.l.b16 %v6012
    %v6167 = vunpack.c.h.b16 %v6012
    %v6168 = vunpack.c.l.b16 %v6013
    %v6169 = vunpack.c.h.b16 %v6013
    %v6170 = vunpack.c.l.b16 %v6014
    %v6171 = vunpack.c.h.b16 %v6014
    %v6172 = vunpack.c.l.b16 %v6015
    %v6173 = vunpack.c.h.b16 %v6015
    %v6174 = vunpack.c.l.b16 %v6016
    %v6175 = vunpack.c.h.b16 %v6016
    %v6176 = vunpack.c.l.b16 %v6017
    %v6177 = vunpack.c.h.b16 %v6017
    %v6178 = vunpack.c.l.b16 %v6018
    %v6179 = vunpack.c.h.b16 %v6018
    %v6180 = vunpack.c.l.b16 %v6019
    %v6181 = vunpack.c.h.b16 %v6019
    %v6182 = vunpack.c.l.b16 %v6020
    %v6183 = vunpack.c.h.b16 %v6020
    %v6184 = vunpack.c.l.b16 %v6021
    %v6185 = vunpack.c.h.b16 %v6021
    %v6186 = vunpack.c.l.b16 %v6022
    %v6187 = vunpack.c.h.b16 %v6022
    %v6188 = vunpack.c.l.b16 %v6023
    %v6189 = vunpack.c.h.b16 %v6023
    %v6190 = vunpack.c.l.b16 %v6024
    %v6191 = vunpack.c.h.b16 %v6024
    %v6192 = vunpack.c.l.b16 %v6025
    %v6193 = vunpack.c.h.b16 %v6025
    %v6194 = vunpack.c.l.b16 %v6026
    %v6195 = vunpack.c.h.b16 %v6026
    %v6196 = vunpack.c.l.b16 %v6027
    %v6197 = vunpack.c.h.b16 %v6027
    %v6198 = vunpack.c.l.b16 %v6028
    %v6199 = vunpack.c.h.b16 %v6028
    %v6200 = vunpack.c.l.b16 %v6029
    %v6201 = vunpack.c.h.b16 %v6029
    %v6202 = vunpack.c.l.b16 %v6030
    %v6203 = vunpack.c.h.b16 %v6030
    %v6204 = vunpack.c.l.b16 %v6031
    %v6205 = vunpack.c.h.b16 %v6031
    %v6206 = vunpack.c.l.b16 %v6032
    %v6207 = vunpack.c.h.b16 %v6032
    %v6208 = vunpack.c.l.b16 %v6033
    %v6209 = vunpack.c.h.b16 %v6033
    %v6210 = vunpack.c.l.b16 %v6034
    %v6211 = vunpack.c.h.b16 %v6034
    %v6212 = vunpack.c.l.b16 %v6035
    %v6213 = vunpack.c.h.b16 %v6035
    %v6214 = vunpack.c.l.b16 %v6036
    %v6215 = vunpack.c.h.b16 %v6036
    %v6216 = vunpack.c.l.b16 %v6037
    %v6217 = vunpack.c.h.b16 %v6037
    %v6218 = vunpack.c.l.b16 %v6038
    %v6219 = vunpack.c.h.b16 %v6038
    %v6220 = vunpack.c.l.b16 %v6039
    %v6221 = vunpack.c.h.b16 %v6039
    %v6222 = vunpack.c.l.b16 %v6040
    %v6223 = vunpack.c.h.b16 %v6040
    %v6224 = vunpack.c.l.b16 %v6041
    %v6225 = vunpack.c.h.b16 %v6041
    %v6226 = vunpack.c.l.b16 %v6042
    %v6227 = vunpack.c.h.b16 %v6042
    %v6228 = vunpack.c.l.b16 %v6043
    %v6229 = vunpack.c.h.b16 %v6043
    %v6230 = vunpack.c.l.b16 %v6044
    %v6231 = vunpack.c.h.b16 %v6044
    %v6232 = vunpack.c.l.b16 %v6045
    %v6233 = vunpack.c.h.b16 %v6045
    %v6234 = vunpack.c.l.b16 %v6046
    %v6235 = vunpack.c.h.b16 %v6046
    %v6236 = vunpack.c.l.b16 %v6047
    %v6237 = vunpack.c.h.b16 %v6047
    %v6238 = vunpack.c.l.b16 %v6048
    %v6239 = vunpack.c.h.b16 %v6048
    %v6240 = vunpack.c.l.b16 %v6049
    %v6241 = vunpack.c.h.b16 %v6049
    %v6242 = vunpack.c.l.b16 %v6050
    %v6243 = vunpack.c.h.b16 %v6050
    %v6244 = vunpack.c.l.b16 %v6051
    %v6245 = vunpack.c.h.b16 %v6051
    %v6246 = vunpack.c.l.b16 %v6052
    %v6247 = vunpack.c.h.b16 %v6052
    %v6248 = vunpack.c.l.b16 %v6053
    %v6249 = vunpack.c.h.b16 %v6053
    %v6250 = vunpack.c.l.b16 %v6054
    %v6251 = vunpack.c.h.b16 %v6054
    %v6252 = vunpack.c.l.b16 %v6055
    %v6253 = vunpack.c.h.b16 %v6055
    %v6254 = vunpack.c.l.b16 %v6056
    %v6255 = vunpack.c.h.b16 %v6056
    %v6256 = vunpack.c.l.b16 %v6057
    %v6257 = vunpack.c.h.b16 %v6057
    %v6258 = vunpack.c.l.b16 %v6058
    %v6259 = vunpack.c.h.b16 %v6058
    %v6260 = vunpack.c.l.b16 %v6059
    %v6261 = vunpack.c.h.b16 %v6059
    %v6262 = vunpack.c.l.b16 %v6060
    %v6263 = vunpack.c.h.b16 %v6060
    %v6264 = vunpack.c.l.b16 %v6061
    %v6265 = vunpack.c.h.b16 %v6061
    %v6266 = vpack.c.b16 %v6140, %v6138
    %v6267 = vpack.c.b16 %v6141, %v6139
    %v6268 = vpack.c.b16 %v6144, %v6142
    %v6269 = vpack.c.b16 %v6145, %v6143
    %v6270 = vpack.c.b16 %v6148, %v6146
    %v6271 = vpack.c.b16 %v6149, %v6147
    %v6272 = vpack.c.b16 %v6152, %v6150
    %v6273 = vpack.c.b16 %v6153, %v6151
    %v6274 = vpack.c.b16 %v6156, %v6154
    %v6275 = vpack.c.b16 %v6157, %v6155
    %v6276 = vpack.c.b16 %v6160, %v6158
    %v6277 = vpack.c.b16 %v6161, %v6159
    %v6278 = vpack.c.b16 %v6164, %v6162
    %v6279 = vpack.c.b16 %v6165, %v6163
    %v6280 = vpack.c.b16 %v6168, %v6166
    %v6281 = vpack.c.b16 %v6169, %v6167
    %v6282 = vpack.c.b16 %v6172, %v6170
    %v6283 = vpack.c.b16 %v6173, %v6171
    %v6284 = vpack.c.b16 %v6176, %v6174
    %v6285 = vpack.c.b16 %v6177, %v6175
    %v6286 = vpack.c.b16 %v6180, %v6178
    %v6287 = vpack.c.b16 %v6181, %v6179
    %v6288 = vpack.c.b16 %v6184, %v6182
    %v6289 = vpack.c.b16 %v6185, %v6183
    %v6290 = vpack.c.b16 %v6188, %v6186
    %v6291 = vpack.c.b16 %v6189, %v6187
    %v6292 = vpack.c.b16 %v6192, %v6190
    %v6293 = vpack.c.b16 %v6193, %v6191
    %v6294 = vpack.c.b16 %v6196, %v6194
    %v6295 = vpack.c.b16 %v6197, %v6195
    %v6296 = vpack.c.b16 %v6200, %v6198
    %v6297 = vpack.c.b16 %v6201, %v6199
    %v6298 = vpack.c.b16 %v6204, %v6202
    %v6299 = vpack.c.b16 %v6205, %v6203
    %v6300 = vpack.c.b16 %v6208, %v6206
    %v6301 = vpack.c.b16 %v6209, %v6207
    %v6302 = vpack.c.b16 %v6212, %v6210
    %v6303 = vpack.c.b16 %v6213, %v6211
    %v6304 = vpack.c.b16 %v6216, %v6214
    %v6305 = vpack.c.b16 %v6217, %v6215
    %v6306 = vpack.c.b16 %v6220, %v6218
    %v6307 = vpack.c.b16 %v6221, %v6219
    %v6308 = vpack.c.b16 %v6224, %v6222
    %v6309 = vpack.c.b16 %v6225, %v6223
    %v6310 = vpack.c.b16 %v6228, %v6226
    %v6311 = vpack.c.b16 %v6229, %v6227
    %v6312 = vpack.c.b16 %v6232, %v6230
    %v6313 = vpack.c.b16 %v6233, %v6231
    %v6314 = vpack.c.b16 %v6236, %v6234
    %v6315 = vpack.c.b16 %v6237, %v6235
    %v6316 = vpack.c.b16 %v6240, %v6238
    %v6317 = vpack.c.b16 %v6241, %v6239
    %v6318 = vpack.c.b16 %v6244, %v6242
    %v6319 = vpack.c.b16 %v6245, %v6243
    %v6320 = vpack.c.b16 %v6248, %v6246
    %v6321 = vpack.c.b16 %v6249, %v6247
    %v6322 = vpack.c.b16 %v6252, %v6250
    %v6323 = vpack.c.b16 %v6253, %v6251
    %v6324 = vpack.c.b16 %v6256, %v6254
    %v6325 = vpack.c.b16 %v6257, %v6255
    %v6326 = vpack.c.b16 %v6260, %v6258
    %v6327 = vpack.c.b16 %v6261, %v6259
    %v6328 = vpack.c.b16 %v6264, %v6262
    %v6329 = vpack.c.b16 %v6265, %v6263
    %6394 = vmatprep.subr.bf16.mxu0 %v6267
    %6395 = vmatpush1.bf16.msra.mxu0 %v6266
    %6396 = vmatprep.subr.bf16.mxu0 %v6269
    %6397 = vmatpush1.bf16.msra.mxu0 %v6268
    %6398 = vmatprep.subr.bf16.mxu0 %v6271
    %6399 = vmatpush1.bf16.msra.mxu0 %v6270
    %6400 = vmatprep.subr.bf16.mxu0 %v6273
    %6401 = vmatpush1.bf16.msra.mxu0 %v6272
    %6402 = vmatprep.subr.bf16.mxu0 %v6275
    %6403 = vmatpush1.bf16.msra.mxu0 %v6274
    %6404 = vmatprep.subr.bf16.mxu0 %v6277
    %6405 = vmatpush1.bf16.msra.mxu0 %v6276
    %6406 = vmatprep.subr.bf16.mxu0 %v6279
    %6407 = vmatpush1.bf16.msra.mxu0 %v6278
    %6408 = vmatprep.subr.bf16.mxu0 %v6281
    %6409 = vmatpush1.bf16.msra.mxu0 %v6280
    %6410 = vmatprep.subr.bf16.mxu0 %v6283
    %6411 = vmatpush1.bf16.msra.mxu0 %v6282
    %6412 = vmatprep.subr.bf16.mxu0 %v6285
    %6413 = vmatpush1.bf16.msra.mxu0 %v6284
    %6414 = vmatprep.subr.bf16.mxu0 %v6287
    %6415 = vmatpush1.bf16.msra.mxu0 %v6286
    %6416 = vmatprep.subr.bf16.mxu0 %v6289
    %6417 = vmatpush1.bf16.msra.mxu0 %v6288
    %6418 = vmatprep.subr.bf16.mxu0 %v6291
    %6419 = vmatpush1.bf16.msra.mxu0 %v6290
    %6420 = vmatprep.subr.bf16.mxu0 %v6293
    %6421 = vmatpush1.bf16.msra.mxu0 %v6292
    %6422 = vmatprep.subr.bf16.mxu0 %v6295
    %6423 = vmatpush1.bf16.msra.mxu0 %v6294
    %6424 = vmatprep.subr.bf16.mxu0 %v6297
    %6425 = vmatpush1.bf16.msra.mxu0 %v6296
    %6426 = vmatprep.mubr.bf16.mxu0 %v5995
    %6427 = vmatmul.mubr.bf16.gmra.mrb[0].mxu0 %v5994
    %v6428 = vpop.f32.mrb[0].mxu0
    %v6429 = vadd.f32 %v6067, %v6428
    %v6430 = vpop.f32.mrb[0].mxu0
    %v6431 = vadd.f32 %v6071, %v6430
    %v6432 = vpop.f32.mrb[0].mxu0
    %v6433 = vpop.f32.mrb[0].mxu0
    %6434 = vdwg.mxu0
    %6435 = vmatprep.subr.bf16.mxu0 %v6299
    %6436 = vmatpush1.bf16.msra.mxu0 %v6298
    %6437 = vmatprep.subr.bf16.mxu0 %v6301
    %6438 = vmatpush1.bf16.msra.mxu0 %v6300
    %6439 = vmatprep.subr.bf16.mxu0 %v6303
    %6440 = vmatpush1.bf16.msra.mxu0 %v6302
    %6441 = vmatprep.subr.bf16.mxu0 %v6305
    %6442 = vmatpush1.bf16.msra.mxu0 %v6304
    %6443 = vmatprep.subr.bf16.mxu0 %v6307
    %6444 = vmatpush1.bf16.msra.mxu0 %v6306
    %6445 = vmatprep.subr.bf16.mxu0 %v6309
    %6446 = vmatpush1.bf16.msra.mxu0 %v6308
    %6447 = vmatprep.subr.bf16.mxu0 %v6311
    %6448 = vmatpush1.bf16.msra.mxu0 %v6310
    %6449 = vmatprep.subr.bf16.mxu0 %v6313
    %6450 = vmatpush1.bf16.msra.mxu0 %v6312
    %6451 = vmatprep.subr.bf16.mxu0 %v6315
    %6452 = vmatpush1.bf16.msra.mxu0 %v6314
    %6453 = vmatprep.subr.bf16.mxu0 %v6317
    %6454 = vmatpush1.bf16.msra.mxu0 %v6316
    %6455 = vmatprep.subr.bf16.mxu0 %v6319
    %6456 = vmatpush1.bf16.msra.mxu0 %v6318
    %6457 = vmatprep.subr.bf16.mxu0 %v6321
    %6458 = vmatpush1.bf16.msra.mxu0 %v6320
    %6459 = vmatprep.subr.bf16.mxu0 %v6323
    %6460 = vmatpush1.bf16.msra.mxu0 %v6322
    %6461 = vmatprep.subr.bf16.mxu0 %v6325
    %6462 = vmatpush1.bf16.msra.mxu0 %v6324
    %6463 = vmatprep.subr.bf16.mxu0 %v6327
    %6464 = vmatpush1.bf16.msra.mxu0 %v6326
    %6465 = vmatprep.subr.bf16.mxu0 %v6329
    %6466 = vmatpush1.bf16.msra.mxu0 %v6328
    %6467 = vmatprep.mubr.bf16.mxu0 %v5997
    %6468 = vmatmul.mubr.bf16.gmra.mrb[0].mxu0 %v5996
    %v6469 = vpop.f32.mrb[0].mxu0
    %v6470 = vadd.f32 %v6429, %v6469
    %v6471 = vpop.f32.mrb[0].mxu0
    %v6472 = vadd.f32 %v6431, %v6471
    %v6473 = vpop.f32.mrb[0].mxu0
    %v6474 = vpop.f32.mrb[0].mxu0
    %6475 = vdwg.mxu0
    %v6476 = vmul.f32 %v5824, 0.5
    %v6477 = vmul.f32 %v5826, 0.5
    %v6478 = vmul.f32 %v5988, 0.5
    %v6479 = vmul.f32 %v5990, 0.5
    %v6480 = vmul.f32 %v6470, 0.5
    %v6481 = vmul.f32 %v6472, 0.5
    %v6482 = vmul.f32 %v5824, 0.70710677
    %v6483 = vmul.f32 %v5826, 0.70710677
    %v6484 = vmul.f32 %v5988, 0.70710677
    %v6485 = vmul.f32 %v5990, 0.70710677
    %v6486 = vmul.f32 %v6470, 0.70710677
    %v6487 = vmul.f32 %v6472, 0.70710677
    %vm6488 = vcmp.ge.f32.partialorder %v6482, 0.0
    %vm6489 = vcmp.ge.f32.partialorder %v6483, 0.0
    %vm6490 = vcmp.ge.f32.partialorder %v6484, 0.0
    %vm6491 = vcmp.ge.f32.partialorder %v6485, 0.0
    %vm6492 = vcmp.ge.f32.partialorder %v6486, 0.0
    %vm6493 = vcmp.ge.f32.partialorder %v6487, 0.0
    %v6494 = vsel %vm6488, 1.0, -1.0
    %v6495 = vsel %vm6489, 1.0, -1.0
    %v6496 = vsel %vm6490, 1.0, -1.0
    %v6497 = vsel %vm6491, 1.0, -1.0
    %v6498 = vsel %vm6492, 1.0, -1.0
    %v6499 = vsel %vm6493, 1.0, -1.0
    %v6500 = vand.u32 2147483647, %v6482
    %v6501 = vand.u32 2147483647, %v6483
    %v6502 = vand.u32 2147483647, %v6484
    %v6503 = vand.u32 2147483647, %v6485
    %v6504 = vand.u32 2147483647, %v6486
    %v6505 = vand.u32 2147483647, %v6487
    %v6506 = vmul.f32 %v6500, 0.3275911
    %v6507 = vmul.f32 %v6501, 0.3275911
    %v6508 = vmul.f32 %v6502, 0.3275911
    %v6509 = vmul.f32 %v6503, 0.3275911
    %v6510 = vmul.f32 %v6504, 0.3275911
    %v6511 = vmul.f32 %v6505, 0.3275911
    %v6512 = vadd.f32 %v6506, 1.0
    %v6513 = vadd.f32 %v6507, 1.0
    %v6514 = vadd.f32 %v6508, 1.0
    %v6515 = vadd.f32 %v6509, 1.0
    %v6516 = vadd.f32 %v6510, 1.0
    %v6517 = vadd.f32 %v6511, 1.0
    %v6518 = vrcp.pop %v6512
    %v6519 = vmul.f32 1.0, %v6518
    %v6520 = vrcp.pop %v6513
    %v6521 = vmul.f32 1.0, %v6520
    %v6522 = vrcp.pop %v6514
    %v6523 = vmul.f32 1.0, %v6522
    %v6524 = vrcp.pop %v6515
    %v6525 = vmul.f32 1.0, %v6524
    %v6526 = vrcp.pop %v6516
    %v6527 = vmul.f32 1.0, %v6526
    %v6528 = vrcp.pop %v6517
    %v6529 = vmul.f32 1.0, %v6528
    %v6530 = vmul.f32 %v6519, 1.0614054
    %v6531 = vmul.f32 %v6521, 1.0614054
    %v6532 = vmul.f32 %v6523, 1.0614054
    %v6533 = vmul.f32 %v6525, 1.0614054
    %v6534 = vmul.f32 %v6527, 1.0614054
    %v6535 = vmul.f32 %v6529, 1.0614054
    %v6536 = vadd.f32 %v6530, -1.4531521
    %v6537 = vadd.f32 %v6531, -1.4531521
    %v6538 = vadd.f32 %v6532, -1.4531521
    %v6539 = vadd.f32 %v6533, -1.4531521
    %v6540 = vadd.f32 %v6534, -1.4531521
    %v6541 = vadd.f32 %v6535, -1.4531521
    %v6542 = vmul.f32 %v6536, %v6519
    %v6543 = vmul.f32 %v6537, %v6521
    %v6544 = vmul.f32 %v6538, %v6523
    %v6545 = vmul.f32 %v6539, %v6525
    %v6546 = vmul.f32 %v6540, %v6527
    %v6547 = vmul.f32 %v6541, %v6529
    %v6548 = vadd.f32 %v6542, 1.4214138
    %v6549 = vadd.f32 %v6543, 1.4214138
    %v6550 = vadd.f32 %v6544, 1.4214138
    %v6551 = vadd.f32 %v6545, 1.4214138
    %v6552 = vadd.f32 %v6546, 1.4214138
    %v6553 = vadd.f32 %v6547, 1.4214138
    %v6554 = vmul.f32 %v6548, %v6519
    %v6555 = vmul.f32 %v6549, %v6521
    %v6556 = vmul.f32 %v6550, %v6523
    %v6557 = vmul.f32 %v6551, %v6525
    %v6558 = vmul.f32 %v6552, %v6527
    %v6559 = vmul.f32 %v6553, %v6529
    %v6560 = vadd.f32 %v6554, -0.28449672
    %v6561 = vadd.f32 %v6555, -0.28449672
    %v6562 = vadd.f32 %v6556, -0.28449672
    %v6563 = vadd.f32 %v6557, -0.28449672
    %v6564 = vadd.f32 %v6558, -0.28449672
    %v6565 = vadd.f32 %v6559, -0.28449672
    %v6566 = vmul.f32 %v6560, %v6519
    %v6567 = vmul.f32 %v6561, %v6521
    %v6568 = vmul.f32 %v6562, %v6523
    %v6569 = vmul.f32 %v6563, %v6525
    %v6570 = vmul.f32 %v6564, %v6527
    %v6571 = vmul.f32 %v6565, %v6529
    %v6572 = vadd.f32 %v6566, 0.2548296
    %v6573 = vadd.f32 %v6567, 0.2548296
    %v6574 = vadd.f32 %v6568, 0.2548296
    %v6575 = vadd.f32 %v6569, 0.2548296
    %v6576 = vadd.f32 %v6570, 0.2548296
    %v6577 = vadd.f32 %v6571, 0.2548296
    %v6578 = vmul.f32 %v6572, %v6519
    %v6579 = vmul.f32 %v6573, %v6521
    %v6580 = vmul.f32 %v6574, %v6523
    %v6581 = vmul.f32 %v6575, %v6525
    %v6582 = vmul.f32 %v6576, %v6527
    %v6583 = vmul.f32 %v6577, %v6529
    %v6584 = vsub.f32 0.0, %v6500
    %v6585 = vsub.f32 0.0, %v6501
    %v6586 = vsub.f32 0.0, %v6502
    %v6587 = vsub.f32 0.0, %v6503
    %v6588 = vsub.f32 0.0, %v6504
    %v6589 = vsub.f32 0.0, %v6505
    %v6590 = vmul.f32 %v6584, %v6500
    %v6591 = vmul.f32 %v6585, %v6501
    %v6592 = vmul.f32 %v6586, %v6502
    %v6593 = vmul.f32 %v6587, %v6503
    %v6594 = vmul.f32 %v6588, %v6504
    %v6595 = vmul.f32 %v6589, %v6505
    %v6596 = vmul.f32 %v6590, 1.442695
    %v6597 = vpow.pop %v6596
    %v6598 = vmul.f32 %v6591, 1.442695
    %v6599 = vpow.pop %v6598
    %v6600 = vmul.f32 %v6592, 1.442695
    %v6601 = vpow.pop %v6600
    %v6602 = vmul.f32 %v6593, 1.442695
    %v6603 = vpow.pop %v6602
    %v6604 = vmul.f32 %v6594, 1.442695
    %v6605 = vpow.pop %v6604
    %v6606 = vmul.f32 %v6595, 1.442695
    %v6607 = vpow.pop %v6606
    %v6608 = vmul.f32 %v6578, %v6597
    %v6609 = vmul.f32 %v6579, %v6599
    %v6610 = vmul.f32 %v6580, %v6601
    %v6611 = vmul.f32 %v6581, %v6603
    %v6612 = vmul.f32 %v6582, %v6605
    %v6613 = vmul.f32 %v6583, %v6607
    %v6614 = vsub.f32 1.0, %v6608
    %v6615 = vsub.f32 1.0, %v6609
    %v6616 = vsub.f32 1.0, %v6610
    %v6617 = vsub.f32 1.0, %v6611
    %v6618 = vsub.f32 1.0, %v6612
    %v6619 = vsub.f32 1.0, %v6613
    %v6620 = vmul.f32 %v6494, %v6614
    %v6621 = vmul.f32 %v6495, %v6615
    %v6622 = vmul.f32 %v6496, %v6616
    %v6623 = vmul.f32 %v6497, %v6617
    %v6624 = vmul.f32 %v6498, %v6618
    %v6625 = vmul.f32 %v6499, %v6619
    %v6626 = vadd.f32 %v6620, 1.0
    %v6627 = vadd.f32 %v6621, 1.0
    %v6628 = vadd.f32 %v6622, 1.0
    %v6629 = vadd.f32 %v6623, 1.0
    %v6630 = vadd.f32 %v6624, 1.0
    %v6631 = vadd.f32 %v6625, 1.0
    %v6632 = vmul.f32 %v6476, %v6626
    %v6633 = vmul.f32 %v6477, %v6627
    %v6634 = vmul.f32 %v6478, %v6628
    %v6635 = vmul.f32 %v6479, %v6629
    %v6636 = vmul.f32 %v6480, %v6630
    %v6637 = vmul.f32 %v6481, %v6631
    %v6638 = vpack.c.bf16 %v6632, %v6632
    %v6639 = vpack.c.bf16 %v6633, %v6633
    %v6640 = vpack.c.bf16 %v6634, %v6634
    %v6641 = vpack.c.bf16 %v6635, %v6635
    %v6642 = vpack.c.bf16 %v6636, %v6636
    %v6643 = vpack.c.bf16 %v6637, %v6637
    %v6644 = vpack.c.bf16 %v4096, %v4096
    %v6645 = vpack.c.bf16 %v4097, %v4097
    %v6646 = vpack.c.bf16 %v4098, %v4098
    %v6647 = vpack.c.bf16 %v4099, %v4099
    %v6648 = vld [vmem:[#allocation10] sm:$0xf]
    %v6649 = vld [vmem:[#allocation10 + $0x4] sm:$0xf]
    %v6650 = vld [vmem:[#allocation10 + $0x8] sm:$0xf]
    %v6651 = vld [vmem:[#allocation10 + $0xc] sm:$0xf]
    %v6652 = vld [vmem:[#allocation10 + $0x10] sm:$0xf]
    %v6653 = vld [vmem:[#allocation10 + $0x14] sm:$0xf]
    %v6654 = vld [vmem:[#allocation10 + $0x18] sm:$0xf]
    %v6655 = vld [vmem:[#allocation10 + $0x1c] sm:$0xf]
    %v6656 = vld [vmem:[#allocation10 + $0x20] sm:$0xf]
    %v6657 = vld [vmem:[#allocation10 + $0x24] sm:$0xf]
    %v6658 = vld [vmem:[#allocation10 + $0x28] sm:$0xf]
    %v6659 = vld [vmem:[#allocation10 + $0x2c] sm:$0xf]
    %v6660 = vld [vmem:[#allocation10 + $0x30] sm:$0xf]
    %v6661 = vld [vmem:[#allocation10 + $0x34] sm:$0xf]
    %v6662 = vld [vmem:[#allocation10 + $0x38] sm:$0xf]
    %v6663 = vld [vmem:[#allocation10 + $0x3c] sm:$0xf]
    %v6664 = vld [vmem:[#allocation10 + $0x40] sm:$0xf]
    %v6665 = vld [vmem:[#allocation10 + $0x44] sm:$0xf]
    %v6666 = vld [vmem:[#allocation10 + $0x48] sm:$0xf]
    %v6667 = vld [vmem:[#allocation10 + $0x4c] sm:$0xf]
    %v6668 = vld [vmem:[#allocation10 + $0x50] sm:$0xf]
    %v6669 = vld [vmem:[#allocation10 + $0x54] sm:$0xf]
    %v6670 = vld [vmem:[#allocation10 + $0x58] sm:$0xf]
    %v6671 = vld [vmem:[#allocation10 + $0x5c] sm:$0xf]
    %v6672 = vld [vmem:[#allocation10 + $0x60] sm:$0xf]
    %v6673 = vld [vmem:[#allocation10 + $0x64] sm:$0xf]
    %v6674 = vld [vmem:[#allocation10 + $0x68] sm:$0xf]
    %v6675 = vld [vmem:[#allocation10 + $0x6c] sm:$0xf]
    %v6676 = vld [vmem:[#allocation10 + $0x70] sm:$0xf]
    %v6677 = vld [vmem:[#allocation10 + $0x74] sm:$0xf]
    %v6678 = vld [vmem:[#allocation10 + $0x78] sm:$0xf]
    %v6679 = vld [vmem:[#allocation10 + $0x7c] sm:$0xf]
    %v6680 = vld [vmem:[#allocation10 + $0x80] sm:$0xf]
    %v6681 = vld [vmem:[#allocation10 + $0x84] sm:$0xf]
    %v6682 = vld [vmem:[#allocation10 + $0x88] sm:$0xf]
    %v6683 = vld [vmem:[#allocation10 + $0x8c] sm:$0xf]
    %v6684 = vld [vmem:[#allocation10 + $0x90] sm:$0xf]
    %v6685 = vld [vmem:[#allocation10 + $0x94] sm:$0xf]
    %v6686 = vld [vmem:[#allocation10 + $0x98] sm:$0xf]
    %v6687 = vld [vmem:[#allocation10 + $0x9c] sm:$0xf]
    %v6688 = vld [vmem:[#allocation10 + $0xa0] sm:$0xf]
    %v6689 = vld [vmem:[#allocation10 + $0xa4] sm:$0xf]
    %v6690 = vld [vmem:[#allocation10 + $0xa8] sm:$0xf]
    %v6691 = vld [vmem:[#allocation10 + $0xac] sm:$0xf]
    %v6692 = vld [vmem:[#allocation10 + $0xb0] sm:$0xf]
    %v6693 = vld [vmem:[#allocation10 + $0xb4] sm:$0xf]
    %v6694 = vld [vmem:[#allocation10 + $0xb8] sm:$0xf]
    %v6695 = vld [vmem:[#allocation10 + $0xbc] sm:$0xf]
    %v6696 = vld [vmem:[#allocation10 + $0xc0] sm:$0xf]
    %v6697 = vld [vmem:[#allocation10 + $0xc4] sm:$0xf]
    %v6698 = vld [vmem:[#allocation10 + $0xc8] sm:$0xf]
    %v6699 = vld [vmem:[#allocation10 + $0xcc] sm:$0xf]
    %v6700 = vld [vmem:[#allocation10 + $0xd0] sm:$0xf]
    %v6701 = vld [vmem:[#allocation10 + $0xd4] sm:$0xf]
    %v6702 = vld [vmem:[#allocation10 + $0xd8] sm:$0xf]
    %v6703 = vld [vmem:[#allocation10 + $0xdc] sm:$0xf]
    %v6704 = vld [vmem:[#allocation10 + $0xe0] sm:$0xf]
    %v6705 = vld [vmem:[#allocation10 + $0xe4] sm:$0xf]
    %v6706 = vld [vmem:[#allocation10 + $0xe8] sm:$0xf]
    %v6707 = vld [vmem:[#allocation10 + $0xec] sm:$0xf]
    %v6708 = vld [vmem:[#allocation10 + $0xf0] sm:$0xf]
    %v6709 = vld [vmem:[#allocation10 + $0xf4] sm:$0xf]
    %v6710 = vld [vmem:[#allocation10 + $0xf8] sm:$0xf]
    %v6711 = vld [vmem:[#allocation10 + $0xfc] sm:$0xf]
    %v6712 = vld [vmem:[#allocation10 + $0x100] sm:$0xf]
    %v6713 = vld [vmem:[#allocation10 + $0x104] sm:$0xf]
    %v6714 = vld [vmem:[#allocation10 + $0x108] sm:$0xf]
    %v6715 = vld [vmem:[#allocation10 + $0x10c] sm:$0xf]
    %v6716 = vld [vmem:[#allocation10 + $0x110] sm:$0xf]
    %v6717 = vld [vmem:[#allocation10 + $0x114] sm:$0xf]
    %v6718 = vld [vmem:[#allocation10 + $0x118] sm:$0xf]
    %v6719 = vld [vmem:[#allocation10 + $0x11c] sm:$0xf]
    %v6720 = vld [vmem:[#allocation10 + $0x120] sm:$0xf]
    %v6721 = vld [vmem:[#allocation10 + $0x124] sm:$0xf]
    %v6722 = vld [vmem:[#allocation10 + $0x128] sm:$0xf]
    %v6723 = vld [vmem:[#allocation10 + $0x12c] sm:$0xf]
    %v6724 = vld [vmem:[#allocation10 + $0x130] sm:$0xf]
    %v6725 = vld [vmem:[#allocation10 + $0x134] sm:$0xf]
    %v6726 = vld [vmem:[#allocation10 + $0x138] sm:$0xf]
    %v6727 = vld [vmem:[#allocation10 + $0x13c] sm:$0xf]
    %v6728 = vld [vmem:[#allocation10 + $0x140] sm:$0xf]
    %v6729 = vld [vmem:[#allocation10 + $0x144] sm:$0xf]
    %v6730 = vld [vmem:[#allocation10 + $0x148] sm:$0xf]
    %v6731 = vld [vmem:[#allocation10 + $0x14c] sm:$0xf]
    %v6732 = vld [vmem:[#allocation10 + $0x150] sm:$0xf]
    %v6733 = vld [vmem:[#allocation10 + $0x154] sm:$0xf]
    %v6734 = vld [vmem:[#allocation10 + $0x158] sm:$0xf]
    %v6735 = vld [vmem:[#allocation10 + $0x15c] sm:$0xf]
    %v6736 = vld [vmem:[#allocation10 + $0x160] sm:$0xf]
    %v6737 = vld [vmem:[#allocation10 + $0x164] sm:$0xf]
    %v6738 = vld [vmem:[#allocation10 + $0x168] sm:$0xf]
    %v6739 = vld [vmem:[#allocation10 + $0x16c] sm:$0xf]
    %v6740 = vld [vmem:[#allocation10 + $0x170] sm:$0xf]
    %v6741 = vld [vmem:[#allocation10 + $0x174] sm:$0xf]
    %v6742 = vld [vmem:[#allocation10 + $0x178] sm:$0xf]
    %v6743 = vld [vmem:[#allocation10 + $0x17c] sm:$0xf]
    %v6744 = vld [vmem:[#allocation10 + $0x180] sm:$0xf]
    %v6745 = vld [vmem:[#allocation10 + $0x184] sm:$0xf]
    %v6746 = vld [vmem:[#allocation10 + $0x188] sm:$0xf]
    %v6747 = vld [vmem:[#allocation10 + $0x18c] sm:$0xf]
    %v6748 = vld [vmem:[#allocation10 + $0x190] sm:$0xf]
    %v6749 = vld [vmem:[#allocation10 + $0x194] sm:$0xf]
    %v6750 = vld [vmem:[#allocation10 + $0x198] sm:$0xf]
    %v6751 = vld [vmem:[#allocation10 + $0x19c] sm:$0xf]
    %v6752 = vld [vmem:[#allocation10 + $0x1a0] sm:$0xf]
    %v6753 = vld [vmem:[#allocation10 + $0x1a4] sm:$0xf]
    %v6754 = vld [vmem:[#allocation10 + $0x1a8] sm:$0xf]
    %v6755 = vld [vmem:[#allocation10 + $0x1ac] sm:$0xf]
    %v6756 = vld [vmem:[#allocation10 + $0x1b0] sm:$0xf]
    %v6757 = vld [vmem:[#allocation10 + $0x1b4] sm:$0xf]
    %v6758 = vld [vmem:[#allocation10 + $0x1b8] sm:$0xf]
    %v6759 = vld [vmem:[#allocation10 + $0x1bc] sm:$0xf]
    %v6760 = vld [vmem:[#allocation10 + $0x1c0] sm:$0xf]
    %v6761 = vld [vmem:[#allocation10 + $0x1c4] sm:$0xf]
    %v6762 = vld [vmem:[#allocation10 + $0x1c8] sm:$0xf]
    %v6763 = vld [vmem:[#allocation10 + $0x1cc] sm:$0xf]
    %v6764 = vld [vmem:[#allocation10 + $0x1d0] sm:$0xf]
    %v6765 = vld [vmem:[#allocation10 + $0x1d4] sm:$0xf]
    %v6766 = vld [vmem:[#allocation10 + $0x1d8] sm:$0xf]
    %v6767 = vld [vmem:[#allocation10 + $0x1dc] sm:$0xf]
    %v6768 = vld [vmem:[#allocation10 + $0x1e0] sm:$0xf]
    %v6769 = vld [vmem:[#allocation10 + $0x1e4] sm:$0xf]
    %v6770 = vld [vmem:[#allocation10 + $0x1e8] sm:$0xf]
    %v6771 = vld [vmem:[#allocation10 + $0x1ec] sm:$0xf]
    %v6772 = vld [vmem:[#allocation10 + $0x1f0] sm:$0xf]
    %v6773 = vld [vmem:[#allocation10 + $0x1f4] sm:$0xf]
    %v6774 = vld [vmem:[#allocation10 + $0x1f8] sm:$0xf]
    %v6775 = vld [vmem:[#allocation10 + $0x1fc] sm:$0xf]
    %v6776 = vld [vmem:[#allocation10 + $0x200] sm:$0xf]
    %v6777 = vld [vmem:[#allocation10 + $0x204] sm:$0xf]
    %v6778 = vld [vmem:[#allocation10 + $0x208] sm:$0xf]
    %v6779 = vld [vmem:[#allocation10 + $0x20c] sm:$0xf]
    %v6780 = vld [vmem:[#allocation10 + $0x210] sm:$0xf]
    %v6781 = vld [vmem:[#allocation10 + $0x214] sm:$0xf]
    %v6782 = vld [vmem:[#allocation10 + $0x218] sm:$0xf]
    %v6783 = vld [vmem:[#allocation10 + $0x21c] sm:$0xf]
    %v6784 = vld [vmem:[#allocation10 + $0x220] sm:$0xf]
    %v6785 = vld [vmem:[#allocation10 + $0x224] sm:$0xf]
    %v6786 = vld [vmem:[#allocation10 + $0x228] sm:$0xf]
    %v6787 = vld [vmem:[#allocation10 + $0x22c] sm:$0xf]
    %v6788 = vld [vmem:[#allocation10 + $0x230] sm:$0xf]
    %v6789 = vld [vmem:[#allocation10 + $0x234] sm:$0xf]
    %v6790 = vld [vmem:[#allocation10 + $0x238] sm:$0xf]
    %v6791 = vld [vmem:[#allocation10 + $0x23c] sm:$0xf]
    %v6792 = vld [vmem:[#allocation10 + $0x240] sm:$0xf]
    %v6793 = vld [vmem:[#allocation10 + $0x244] sm:$0xf]
    %v6794 = vld [vmem:[#allocation10 + $0x248] sm:$0xf]
    %v6795 = vld [vmem:[#allocation10 + $0x24c] sm:$0xf]
    %v6796 = vld [vmem:[#allocation10 + $0x250] sm:$0xf]
    %v6797 = vld [vmem:[#allocation10 + $0x254] sm:$0xf]
    %v6798 = vld [vmem:[#allocation10 + $0x258] sm:$0xf]
    %v6799 = vld [vmem:[#allocation10 + $0x25c] sm:$0xf]
    %v6800 = vld [vmem:[#allocation10 + $0x260] sm:$0xf]
    %v6801 = vld [vmem:[#allocation10 + $0x264] sm:$0xf]
    %v6802 = vld [vmem:[#allocation10 + $0x268] sm:$0xf]
    %v6803 = vld [vmem:[#allocation10 + $0x26c] sm:$0xf]
    %v6804 = vld [vmem:[#allocation10 + $0x270] sm:$0xf]
    %v6805 = vld [vmem:[#allocation10 + $0x274] sm:$0xf]
    %v6806 = vld [vmem:[#allocation10 + $0x278] sm:$0xf]
    %v6807 = vld [vmem:[#allocation10 + $0x27c] sm:$0xf]
    %v6808 = vld [vmem:[%s11] sm:$0x1]
    %v6810 = vlaneseq
    %v6811 = vshrl.u32 %v6810, 7
    %v6812 = vsub.s32 0, %v6811
    %v6813 = vrot.slane %v6808, %v6812
    %v6975 = vunpack.c.l.b16 %v6648
    %v6976 = vunpack.c.l.b16 %v6649
    %v6977 = vunpack.c.l.b16 %v6650
    %v6978 = vunpack.c.l.b16 %v6651
    %v6979 = vunpack.c.l.b16 %v6652
    %v6980 = vunpack.c.l.b16 %v6653
    %v6981 = vunpack.c.l.b16 %v6654
    %v6982 = vunpack.c.l.b16 %v6655
    %v6983 = vunpack.c.l.b16 %v6656
    %v6984 = vunpack.c.l.b16 %v6657
    %v6985 = vunpack.c.l.b16 %v6658
    %v6986 = vunpack.c.l.b16 %v6659
    %v6987 = vunpack.c.l.b16 %v6660
    %v6988 = vunpack.c.l.b16 %v6661
    %v6989 = vunpack.c.l.b16 %v6662
    %v6990 = vunpack.c.l.b16 %v6663
    %v6991 = vunpack.c.l.b16 %v6664
    %v6992 = vunpack.c.l.b16 %v6665
    %v6993 = vunpack.c.l.b16 %v6666
    %v6994 = vunpack.c.l.b16 %v6667
    %v6995 = vunpack.c.l.b16 %v6668
    %v6996 = vunpack.c.l.b16 %v6669
    %v6997 = vunpack.c.l.b16 %v6670
    %v6998 = vunpack.c.l.b16 %v6671
    %v6999 = vunpack.c.l.b16 %v6672
    %v7000 = vunpack.c.l.b16 %v6673
    %v7001 = vunpack.c.l.b16 %v6674
    %v7002 = vunpack.c.l.b16 %v6675
    %v7003 = vunpack.c.l.b16 %v6676
    %v7004 = vunpack.c.l.b16 %v6677
    %v7005 = vunpack.c.l.b16 %v6678
    %v7006 = vunpack.c.l.b16 %v6679
    %v7007 = vunpack.c.l.b16 %v6680
    %v7008 = vunpack.c.l.b16 %v6681
    %v7009 = vunpack.c.l.b16 %v6682
    %v7010 = vunpack.c.l.b16 %v6683
    %v7011 = vunpack.c.l.b16 %v6684
    %v7012 = vunpack.c.l.b16 %v6685
    %v7013 = vunpack.c.l.b16 %v6686
    %v7014 = vunpack.c.l.b16 %v6687
    %v7015 = vunpack.c.l.b16 %v6688
    %v7016 = vunpack.c.l.b16 %v6689
    %v7017 = vunpack.c.l.b16 %v6690
    %v7018 = vunpack.c.l.b16 %v6691
    %v7019 = vunpack.c.l.b16 %v6692
    %v7020 = vunpack.c.l.b16 %v6693
    %v7021 = vunpack.c.l.b16 %v6694
    %v7022 = vunpack.c.l.b16 %v6695
    %v7023 = vunpack.c.l.b16 %v6696
    %v7024 = vunpack.c.l.b16 %v6697
    %v7025 = vunpack.c.l.b16 %v6698
    %v7026 = vunpack.c.l.b16 %v6699
    %v7027 = vunpack.c.l.b16 %v6700
    %v7028 = vunpack.c.l.b16 %v6701
    %v7029 = vunpack.c.l.b16 %v6702
    %v7030 = vunpack.c.l.b16 %v6703
    %v7031 = vunpack.c.l.b16 %v6704
    %v7032 = vunpack.c.l.b16 %v6705
    %v7033 = vunpack.c.l.b16 %v6706
    %v7034 = vunpack.c.l.b16 %v6707
    %v7035 = vunpack.c.l.b16 %v6708
    %v7036 = vunpack.c.l.b16 %v6709
    %v7037 = vunpack.c.l.b16 %v6710
    %v7038 = vunpack.c.l.b16 %v6711
    %v7039 = vunpack.c.l.b16 %v6712
    %v7040 = vunpack.c.l.b16 %v6713
    %v7041 = vunpack.c.l.b16 %v6714
    %v7042 = vunpack.c.l.b16 %v6715
    %v7043 = vunpack.c.l.b16 %v6716
    %v7044 = vunpack.c.l.b16 %v6717
    %v7045 = vunpack.c.l.b16 %v6718
    %v7046 = vunpack.c.l.b16 %v6719
    %v7047 = vunpack.c.l.b16 %v6720
    %v7048 = vunpack.c.l.b16 %v6721
    %v7049 = vunpack.c.l.b16 %v6722
    %v7050 = vunpack.c.l.b16 %v6723
    %v7051 = vunpack.c.l.b16 %v6724
    %v7052 = vunpack.c.l.b16 %v6725
    %v7053 = vunpack.c.l.b16 %v6726
    %v7054 = vunpack.c.l.b16 %v6727
    %v7055 = vunpack.c.l.b16 %v6728
    %v7056 = vunpack.c.l.b16 %v6729
    %v7057 = vunpack.c.l.b16 %v6730
    %v7058 = vunpack.c.l.b16 %v6731
    %v7059 = vunpack.c.l.b16 %v6732
    %v7060 = vunpack.c.l.b16 %v6733
    %v7061 = vunpack.c.l.b16 %v6734
    %v7062 = vunpack.c.l.b16 %v6735
    %v7063 = vunpack.c.l.b16 %v6736
    %v7064 = vunpack.c.l.b16 %v6737
    %v7065 = vunpack.c.l.b16 %v6738
    %v7066 = vunpack.c.l.b16 %v6739
    %v7067 = vunpack.c.l.b16 %v6740
    %v7068 = vunpack.c.l.b16 %v6741
    %v7069 = vunpack.c.l.b16 %v6742
    %v7070 = vunpack.c.l.b16 %v6743
    %v7071 = vunpack.c.l.b16 %v6744
    %v7072 = vunpack.c.l.b16 %v6745
    %v7073 = vunpack.c.l.b16 %v6746
    %v7074 = vunpack.c.l.b16 %v6747
    %v7075 = vunpack.c.l.b16 %v6748
    %v7076 = vunpack.c.l.b16 %v6749
    %v7077 = vunpack.c.l.b16 %v6750
    %v7078 = vunpack.c.l.b16 %v6751
    %v7079 = vunpack.c.l.b16 %v6752
    %v7080 = vunpack.c.l.b16 %v6753
    %v7081 = vunpack.c.l.b16 %v6754
    %v7082 = vunpack.c.l.b16 %v6755
    %v7083 = vunpack.c.l.b16 %v6756
    %v7084 = vunpack.c.l.b16 %v6757
    %v7085 = vunpack.c.l.b16 %v6758
    %v7086 = vunpack.c.l.b16 %v6759
    %v7087 = vunpack.c.l.b16 %v6760
    %v7088 = vunpack.c.l.b16 %v6761
    %v7089 = vunpack.c.l.b16 %v6762
    %v7090 = vunpack.c.l.b16 %v6763
    %v7091 = vunpack.c.l.b16 %v6764
    %v7092 = vunpack.c.l.b16 %v6765
    %v7093 = vunpack.c.l.b16 %v6766
    %v7094 = vunpack.c.l.b16 %v6767
    %v7095 = vunpack.c.l.b16 %v6768
    %v7096 = vunpack.c.l.b16 %v6769
    %v7097 = vunpack.c.l.b16 %v6770
    %v7098 = vunpack.c.l.b16 %v6771
    %v7099 = vunpack.c.l.b16 %v6772
    %v7100 = vunpack.c.l.b16 %v6773
    %v7101 = vunpack.c.l.b16 %v6774
    %v7102 = vunpack.c.l.b16 %v6775
    %v7103 = vunpack.c.l.b16 %v6776
    %v7104 = vunpack.c.l.b16 %v6777
    %v7105 = vunpack.c.l.b16 %v6778
    %v7106 = vunpack.c.l.b16 %v6779
    %v7107 = vunpack.c.l.b16 %v6780
    %v7108 = vunpack.c.l.b16 %v6781
    %v7109 = vunpack.c.l.b16 %v6782
    %v7110 = vunpack.c.l.b16 %v6783
    %v7111 = vunpack.c.l.b16 %v6784
    %v7112 = vunpack.c.l.b16 %v6785
    %v7113 = vunpack.c.l.b16 %v6786
    %v7114 = vunpack.c.l.b16 %v6787
    %v7115 = vunpack.c.l.b16 %v6788
    %v7116 = vunpack.c.l.b16 %v6789
    %v7117 = vunpack.c.l.b16 %v6790
    %v7118 = vunpack.c.l.b16 %v6791
    %v7119 = vunpack.c.l.b16 %v6792
    %v7120 = vunpack.c.l.b16 %v6793
    %v7121 = vunpack.c.l.b16 %v6794
    %v7122 = vunpack.c.l.b16 %v6795
    %v7123 = vunpack.c.l.b16 %v6796
    %v7124 = vunpack.c.l.b16 %v6797
    %v7125 = vunpack.c.l.b16 %v6798
    %v7126 = vunpack.c.l.b16 %v6799
    %v7127 = vunpack.c.l.b16 %v6800
    %v7128 = vunpack.c.l.b16 %v6801
    %v7129 = vunpack.c.l.b16 %v6802
    %v7130 = vunpack.c.l.b16 %v6803
    %v7131 = vunpack.c.l.b16 %v6804
    %v7132 = vunpack.c.l.b16 %v6805
    %v7133 = vunpack.c.l.b16 %v6806
    %v7134 = vunpack.c.l.b16 %v6807
    %v7135 = vpack.c.b16 %v6976, %v6975
    %v7136 = vpack.c.b16 %v6978, %v6977
    %v7137 = vpack.c.b16 %v6980, %v6979
    %v7138 = vpack.c.b16 %v6982, %v6981
    %v7139 = vpack.c.b16 %v6984, %v6983
    %v7140 = vpack.c.b16 %v6986, %v6985
    %v7141 = vpack.c.b16 %v6988, %v6987
    %v7142 = vpack.c.b16 %v6990, %v6989
    %v7143 = vpack.c.b16 %v6992, %v6991
    %v7144 = vpack.c.b16 %v6994, %v6993
    %v7145 = vpack.c.b16 %v6996, %v6995
    %v7146 = vpack.c.b16 %v6998, %v6997
    %v7147 = vpack.c.b16 %v7000, %v6999
    %v7148 = vpack.c.b16 %v7002, %v7001
    %v7149 = vpack.c.b16 %v7004, %v7003
    %v7150 = vpack.c.b16 %v7006, %v7005
    %v7151 = vpack.c.b16 %v7008, %v7007
    %v7152 = vpack.c.b16 %v7010, %v7009
    %v7153 = vpack.c.b16 %v7012, %v7011
    %v7154 = vpack.c.b16 %v7014, %v7013
    %v7155 = vpack.c.b16 %v7016, %v7015
    %v7156 = vpack.c.b16 %v7018, %v7017
    %v7157 = vpack.c.b16 %v7020, %v7019
    %v7158 = vpack.c.b16 %v7022, %v7021
    %v7159 = vpack.c.b16 %v7024, %v7023
    %v7160 = vpack.c.b16 %v7026, %v7025
    %v7161 = vpack.c.b16 %v7028, %v7027
    %v7162 = vpack.c.b16 %v7030, %v7029
    %v7163 = vpack.c.b16 %v7032, %v7031
    %v7164 = vpack.c.b16 %v7034, %v7033
    %v7165 = vpack.c.b16 %v7036, %v7035
    %v7166 = vpack.c.b16 %v7038, %v7037
    %v7167 = vpack.c.b16 %v7040, %v7039
    %v7168 = vpack.c.b16 %v7042, %v7041
    %v7169 = vpack.c.b16 %v7044, %v7043
    %v7170 = vpack.c.b16 %v7046, %v7045
    %v7171 = vpack.c.b16 %v7048, %v7047
    %v7172 = vpack.c.b16 %v7050, %v7049
    %v7173 = vpack.c.b16 %v7052, %v7051
    %v7174 = vpack.c.b16 %v7054, %v7053
    %v7175 = vpack.c.b16 %v7056, %v7055
    %v7176 = vpack.c.b16 %v7058, %v7057
    %v7177 = vpack.c.b16 %v7060, %v7059
    %v7178 = vpack.c.b16 %v7062, %v7061
    %v7179 = vpack.c.b16 %v7064, %v7063
    %v7180 = vpack.c.b16 %v7066, %v7065
    %v7181 = vpack.c.b16 %v7068, %v7067
    %v7182 = vpack.c.b16 %v7070, %v7069
    %v7183 = vpack.c.b16 %v7072, %v7071
    %v7184 = vpack.c.b16 %v7074, %v7073
    %v7185 = vpack.c.b16 %v7076, %v7075
    %v7186 = vpack.c.b16 %v7078, %v7077
    %v7187 = vpack.c.b16 %v7080, %v7079
    %v7188 = vpack.c.b16 %v7082, %v7081
    %v7189 = vpack.c.b16 %v7084, %v7083
    %v7190 = vpack.c.b16 %v7086, %v7085
    %v7191 = vpack.c.b16 %v7088, %v7087
    %v7192 = vpack.c.b16 %v7090, %v7089
    %v7193 = vpack.c.b16 %v7092, %v7091
    %v7194 = vpack.c.b16 %v7094, %v7093
    %v7195 = vpack.c.b16 %v7096, %v7095
    %v7196 = vpack.c.b16 %v7098, %v7097
    %v7197 = vpack.c.b16 %v7100, %v7099
    %v7198 = vpack.c.b16 %v7102, %v7101
    %v7199 = vpack.c.b16 %v7104, %v7103
    %v7200 = vpack.c.b16 %v7106, %v7105
    %v7201 = vpack.c.b16 %v7108, %v7107
    %v7202 = vpack.c.b16 %v7110, %v7109
    %v7203 = vpack.c.b16 %v7112, %v7111
    %v7204 = vpack.c.b16 %v7114, %v7113
    %v7205 = vpack.c.b16 %v7116, %v7115
    %v7206 = vpack.c.b16 %v7118, %v7117
    %v7207 = vpack.c.b16 %v7120, %v7119
    %v7208 = vpack.c.b16 %v7122, %v7121
    %v7209 = vpack.c.b16 %v7124, %v7123
    %v7210 = vpack.c.b16 %v7126, %v7125
    %v7211 = vpack.c.b16 %v7128, %v7127
    %v7212 = vpack.c.b16 %v7130, %v7129
    %v7213 = vpack.c.b16 %v7132, %v7131
    %v7214 = vpack.c.b16 %v7134, %v7133
    %7295 = vmatprep.subr.bf16.mxu0 0
    %7296 = vmatpush1.bf16.msra.mxu0 %v7135
    %7297 = vmatprep.subr.bf16.mxu0 0
    %7298 = vmatpush1.bf16.msra.mxu0 %v7136
    %7299 = vmatprep.subr.bf16.mxu0 0
    %7300 = vmatpush1.bf16.msra.mxu0 %v7137
    %7301 = vmatprep.subr.bf16.mxu0 0
    %7302 = vmatpush1.bf16.msra.mxu0 %v7138
    %7303 = vmatprep.subr.bf16.mxu0 0
    %7304 = vmatpush1.bf16.msra.mxu0 %v7139
    %7305 = vmatprep.subr.bf16.mxu0 0
    %7306 = vmatpush1.bf16.msra.mxu0 %v7140
    %7307 = vmatprep.subr.bf16.mxu0 0
    %7308 = vmatpush1.bf16.msra.mxu0 %v7141
    %7309 = vmatprep.subr.bf16.mxu0 0
    %7310 = vmatpush1.bf16.msra.mxu0 %v7142
    %7311 = vmatprep.subr.bf16.mxu0 0
    %7312 = vmatpush1.bf16.msra.mxu0 %v7143
    %7313 = vmatprep.subr.bf16.mxu0 0
    %7314 = vmatpush1.bf16.msra.mxu0 %v7144
    %7315 = vmatprep.subr.bf16.mxu0 0
    %7316 = vmatpush1.bf16.msra.mxu0 %v7145
    %7317 = vmatprep.subr.bf16.mxu0 0
    %7318 = vmatpush1.bf16.msra.mxu0 %v7146
    %7319 = vmatprep.subr.bf16.mxu0 0
    %7320 = vmatpush1.bf16.msra.mxu0 %v7147
    %7321 = vmatprep.subr.bf16.mxu0 0
    %7322 = vmatpush1.bf16.msra.mxu0 %v7148
    %7323 = vmatprep.subr.bf16.mxu0 0
    %7324 = vmatpush1.bf16.msra.mxu0 %v7149
    %7325 = vmatprep.subr.bf16.mxu0 0
    %7326 = vmatpush1.bf16.msra.mxu0 %v7150
    %7327 = vmatprep.mubr.bf16.mxu0 %v6639
    %7328 = vmatmul.mubr.bf16.gmra.mrb[0].mxu0 %v6638
    %v7329 = vpop.f32.mrb[0].mxu0
    %v7330 = vadd.f32 %v6813, %v7329
    %v7331 = vpop.f32.mrb[0].mxu0
    %v7332 = vpop.f32.mrb[0].mxu0
    %v7333 = vpop.f32.mrb[0].mxu0
    %7334 = vdwg.mxu0
    %7335 = vmatprep.subr.bf16.mxu0 0
    %7336 = vmatpush1.bf16.msra.mxu0 %v7151
    %7337 = vmatprep.subr.bf16.mxu0 0
    %7338 = vmatpush1.bf16.msra.mxu0 %v7152
    %7339 = vmatprep.subr.bf16.mxu0 0
    %7340 = vmatpush1.bf16.msra.mxu0 %v7153
    %7341 = vmatprep.subr.bf16.mxu0 0
    %7342 = vmatpush1.bf16.msra.mxu0 %v7154
    %7343 = vmatprep.subr.bf16.mxu0 0
    %7344 = vmatpush1.bf16.msra.mxu0 %v7155
    %7345 = vmatprep.subr.bf16.mxu0 0
    %7346 = vmatpush1.bf16.msra.mxu0 %v7156
    %7347 = vmatprep.subr.bf16.mxu0 0
    %7348 = vmatpush1.bf16.msra.mxu0 %v7157
    %7349 = vmatprep.subr.bf16.mxu0 0
    %7350 = vmatpush1.bf16.msra.mxu0 %v7158
    %7351 = vmatprep.subr.bf16.mxu0 0
    %7352 = vmatpush1.bf16.msra.mxu0 %v7159
    %7353 = vmatprep.subr.bf16.mxu0 0
    %7354 = vmatpush1.bf16.msra.mxu0 %v7160
    %7355 = vmatprep.subr.bf16.mxu0 0
    %7356 = vmatpush1.bf16.msra.mxu0 %v7161
    %7357 = vmatprep.subr.bf16.mxu0 0
    %7358 = vmatpush1.bf16.msra.mxu0 %v7162
    %7359 = vmatprep.subr.bf16.mxu0 0
    %7360 = vmatpush1.bf16.msra.mxu0 %v7163
    %7361 = vmatprep.subr.bf16.mxu0 0
    %7362 = vmatpush1.bf16.msra.mxu0 %v7164
    %7363 = vmatprep.subr.bf16.mxu0 0
    %7364 = vmatpush1.bf16.msra.mxu0 %v7165
    %7365 = vmatprep.subr.bf16.mxu0 0
    %7366 = vmatpush1.bf16.msra.mxu0 %v7166
    %7367 = vmatprep.mubr.bf16.mxu0 %v6641
    %7368 = vmatmul.mubr.bf16.gmra.mrb[0].mxu0 %v6640
    %v7369 = vpop.f32.mrb[0].mxu0
    %v7370 = vadd.f32 %v7330, %v7369
    %v7371 = vpop.f32.mrb[0].mxu0
    %v7372 = vpop.f32.mrb[0].mxu0
    %v7373 = vpop.f32.mrb[0].mxu0
    %7374 = vdwg.mxu0
    %7375 = vmatprep.subr.bf16.mxu0 0
    %7376 = vmatpush1.bf16.msra.mxu0 %v7167
    %7377 = vmatprep.subr.bf16.mxu0 0
    %7378 = vmatpush1.bf16.msra.mxu0 %v7168
    %7379 = vmatprep.subr.bf16.mxu0 0
    %7380 = vmatpush1.bf16.msra.mxu0 %v7169
    %7381 = vmatprep.subr.bf16.mxu0 0
    %7382 = vmatpush1.bf16.msra.mxu0 %v7170
    %7383 = vmatprep.subr.bf16.mxu0 0
    %7384 = vmatpush1.bf16.msra.mxu0 %v7171
    %7385 = vmatprep.subr.bf16.mxu0 0
    %7386 = vmatpush1.bf16.msra.mxu0 %v7172
    %7387 = vmatprep.subr.bf16.mxu0 0
    %7388 = vmatpush1.bf16.msra.mxu0 %v7173
    %7389 = vmatprep.subr.bf16.mxu0 0
    %7390 = vmatpush1.bf16.msra.mxu0 %v7174
    %7391 = vmatprep.subr.bf16.mxu0 0
    %7392 = vmatpush1.bf16.msra.mxu0 %v7175
    %7393 = vmatprep.subr.bf16.mxu0 0
    %7394 = vmatpush1.bf16.msra.mxu0 %v7176
    %7395 = vmatprep.subr.bf16.mxu0 0
    %7396 = vmatpush1.bf16.msra.mxu0 %v7177
    %7397 = vmatprep.subr.bf16.mxu0 0
    %7398 = vmatpush1.bf16.msra.mxu0 %v7178
    %7399 = vmatprep.subr.bf16.mxu0 0
    %7400 = vmatpush1.bf16.msra.mxu0 %v7179
    %7401 = vmatprep.subr.bf16.mxu0 0
    %7402 = vmatpush1.bf16.msra.mxu0 %v7180
    %7403 = vmatprep.subr.bf16.mxu0 0
    %7404 = vmatpush1.bf16.msra.mxu0 %v7181
    %7405 = vmatprep.subr.bf16.mxu0 0
    %7406 = vmatpush1.bf16.msra.mxu0 %v7182
    %7407 = vmatprep.mubr.bf16.mxu0 %v6643
    %7408 = vmatmul.mubr.bf16.gmra.mrb[0].mxu0 %v6642
    %v7409 = vpop.f32.mrb[0].mxu0
    %v7410 = vadd.f32 %v7370, %v7409
    %v7411 = vpop.f32.mrb[0].mxu0
    %v7412 = vpop.f32.mrb[0].mxu0
    %v7413 = vpop.f32.mrb[0].mxu0
    %7414 = vdwg.mxu0
    %7415 = vmatprep.subr.bf16.mxu0 0
    %7416 = vmatpush1.bf16.msra.mxu0 %v7183
    %7417 = vmatprep.subr.bf16.mxu0 0
    %7418 = vmatpush1.bf16.msra.mxu0 %v7184
    %7419 = vmatprep.subr.bf16.mxu0 0
    %7420 = vmatpush1.bf16.msra.mxu0 %v7185
    %7421 = vmatprep.subr.bf16.mxu0 0
    %7422 = vmatpush1.bf16.msra.mxu0 %v7186
    %7423 = vmatprep.subr.bf16.mxu0 0
    %7424 = vmatpush1.bf16.msra.mxu0 %v7187
    %7425 = vmatprep.subr.bf16.mxu0 0
    %7426 = vmatpush1.bf16.msra.mxu0 %v7188
    %7427 = vmatprep.subr.bf16.mxu0 0
    %7428 = vmatpush1.bf16.msra.mxu0 %v7189
    %7429 = vmatprep.subr.bf16.mxu0 0
    %7430 = vmatpush1.bf16.msra.mxu0 %v7190
    %7431 = vmatprep.subr.bf16.mxu0 0
    %7432 = vmatpush1.bf16.msra.mxu0 %v7191
    %7433 = vmatprep.subr.bf16.mxu0 0
    %7434 = vmatpush1.bf16.msra.mxu0 %v7192
    %7435 = vmatprep.subr.bf16.mxu0 0
    %7436 = vmatpush1.bf16.msra.mxu0 %v7193
    %7437 = vmatprep.subr.bf16.mxu0 0
    %7438 = vmatpush1.bf16.msra.mxu0 %v7194
    %7439 = vmatprep.subr.bf16.mxu0 0
    %7440 = vmatpush1.bf16.msra.mxu0 %v7195
    %7441 = vmatprep.subr.bf16.mxu0 0
    %7442 = vmatpush1.bf16.msra.mxu0 %v7196
    %7443 = vmatprep.subr.bf16.mxu0 0
    %7444 = vmatpush1.bf16.msra.mxu0 %v7197
    %7445 = vmatprep.subr.bf16.mxu0 0
    %7446 = vmatpush1.bf16.msra.mxu0 %v7198
    %7447 = vmatprep.mubr.bf16.mxu0 %v6645
    %7448 = vmatmul.mubr.bf16.gmra.mrb[0].mxu0 %v6644
    %v7449 = vpop.f32.mrb[0].mxu0
    %v7450 = vadd.f32 %v7410, %v7449
    %v7451 = vpop.f32.mrb[0].mxu0
    %v7452 = vpop.f32.mrb[0].mxu0
    %v7453 = vpop.f32.mrb[0].mxu0
    %7454 = vdwg.mxu0
    %7455 = vmatprep.subr.bf16.mxu0 0
    %7456 = vmatpush1.bf16.msra.mxu0 %v7199
    %7457 = vmatprep.subr.bf16.mxu0 0
    %7458 = vmatpush1.bf16.msra.mxu0 %v7200
    %7459 = vmatprep.subr.bf16.mxu0 0
    %7460 = vmatpush1.bf16.msra.mxu0 %v7201
    %7461 = vmatprep.subr.bf16.mxu0 0
    %7462 = vmatpush1.bf16.msra.mxu0 %v7202
    %7463 = vmatprep.subr.bf16.mxu0 0
    %7464 = vmatpush1.bf16.msra.mxu0 %v7203
    %7465 = vmatprep.subr.bf16.mxu0 0
    %7466 = vmatpush1.bf16.msra.mxu0 %v7204
    %7467 = vmatprep.subr.bf16.mxu0 0
    %7468 = vmatpush1.bf16.msra.mxu0 %v7205
    %7469 = vmatprep.subr.bf16.mxu0 0
    %7470 = vmatpush1.bf16.msra.mxu0 %v7206
    %7471 = vmatprep.subr.bf16.mxu0 0
    %7472 = vmatpush1.bf16.msra.mxu0 %v7207
    %7473 = vmatprep.subr.bf16.mxu0 0
    %7474 = vmatpush1.bf16.msra.mxu0 %v7208
    %7475 = vmatprep.subr.bf16.mxu0 0
    %7476 = vmatpush1.bf16.msra.mxu0 %v7209
    %7477 = vmatprep.subr.bf16.mxu0 0
    %7478 = vmatpush1.bf16.msra.mxu0 %v7210
    %7479 = vmatprep.subr.bf16.mxu0 0
    %7480 = vmatpush1.bf16.msra.mxu0 %v7211
    %7481 = vmatprep.subr.bf16.mxu0 0
    %7482 = vmatpush1.bf16.msra.mxu0 %v7212
    %7483 = vmatprep.subr.bf16.mxu0 0
    %7484 = vmatpush1.bf16.msra.mxu0 %v7213
    %7485 = vmatprep.subr.bf16.mxu0 0
    %7486 = vmatpush1.bf16.msra.mxu0 %v7214
    %7487 = vmatprep.mubr.bf16.mxu0 %v6647
    %7488 = vmatmul.mubr.bf16.gmra.mrb[0].mxu0 %v6646
    %v7489 = vpop.f32.mrb[0].mxu0
    %v7490 = vadd.f32 %v7450, %v7489
    %v7491 = vpop.f32.mrb[0].mxu0
    %v7492 = vpop.f32.mrb[0].mxu0
    %v7493 = vpop.f32.mrb[0].mxu0
    %7494 = vdwg.mxu0
    %7495 = vst [vmem:[#allocation11] sm:$0xff] %v7490
    // Predicated region
    $region70: #{tpu_custom_call.1} parent=1 // pred_check
      _
    $region71: #{tpu_custom_call.1} parent=1 // pred_check_branch
      %7497 = sbr.rel (0) target = $region73
    $region72: #{tpu_custom_call.1} parent=1 // pred_region
      %s7499 = ssub.s32 128, 128
      %7500 = vsyncadd [#allocation4], %s7499
      %s7502 = sshll.u32 [#allocation11], 4
      %s7503 = int_to_ptr.vmem [resolvable:$true] %s7502
      %7505 = dma.vmem_to_hbm [thread:$0]  %s7503, 128, %s12, [#allocation4]
    $region73: #{tpu_custom_call.1} parent=1 // pred_fallthru
      _
    // Predicated region
    $region74: #{tpu_custom_call.1} parent=1 // pred_check
      _
    $region75: #{tpu_custom_call.1} parent=1 // pred_check_branch
      %7507 = sbr.rel (0) target = $region77
    $region76: #{tpu_custom_call.1} parent=1 // pred_region
      %7508 = dma.done [#allocation4], 128
    $region77: #{tpu_custom_call.1} parent=1 // pred_fallthru
      _
    %7509 = vsyncpa [#allocation3], 1
    %7510 = vsyncpa [#allocation6], 1
    %7511 = vsyncpa [#allocation9], 1
    %7512 = vsyncpa [#allocation4], 1

</llo_original>
